<compile_context>
chip_gen: v5e
topology: v5e:2x2
jax: 0.10.0
libtpu: 0.0.40
codegen_flags: <defaults>
</compile_context>

<pallas_src>
import functools
import numpy as np
import jax
import jax.numpy as jnp
from jax.experimental import pallas as pl
from jax.experimental.pallas import tpu as pltpu


# ----------------------------- helpers -----------------------------

_MM_DTYPE = jnp.bfloat16  # MXU operand dtype (f32 accumulation, f32 epilogue)


def _round_up(x, m):
    return (x + m - 1) // m * m


def _mm(x, w_ref):
    """MXU matmul: bf16 operands, f32 accumulation."""
    return jnp.dot(x.astype(_MM_DTYPE), w_ref[...].astype(_MM_DTYPE),
                   preferred_element_type=jnp.float32)


def _block_diag(w, k):
    """(a, b) -> (k*a, k*b) block-diagonal (per-neighbour weight packing)."""
    return jnp.kron(jnp.eye(k, dtype=jnp.float32), w.astype(jnp.float32))


# ----------------------------- Pallas kernels -----------------------------

def _mlp_kernel(*refs, relus, biases, residual):
    """Fused chain of linear layers: x -> [relu](x @ w + b) ... [+ residual]."""
    refs = list(refs)
    h = refs[0][...]
    pos = 1
    for li in range(len(relus)):
        w_ref = refs[pos]; pos += 1
        h = _mm(h, w_ref)
        if biases[li]:
            h = h + refs[pos][...]; pos += 1
        if relus[li]:
            h = jnp.maximum(h, 0.0)
    if residual:
        h = h + refs[pos][...]; pos += 1
    o_ref = refs[pos]
    o_ref[...] = h.astype(o_ref.dtype)


def _pt_attn_kernel(q_ref, kf_ref, v_ref, rel_ref, res_ref,
                    d1_ref, db1_ref, d2_ref, db2_ref,
                    g1_ref, gb1_ref, g2_ref, gb2_ref,
                    w2_ref, b2_ref, o_ref, *, k, d, scale):
    """Fused pos-enc MLP + gamma MLP + softmax over k neighbours + aggregation
    + fc2 + residual.

    Neighbour tensors are packed lane-dense as (tm, k*d); per-neighbour linears use
    block-diagonal weights so each layer is one 128-wide MXU matmul.  The aggregated
    (tm, d) features never touch HBM: fc2 + residual are fused in the epilogue and the
    stored tile is (tm, d_points), which is lane-denser than d."""
    # positional encoding (delta MLP) -- never touches HBM
    pe = jnp.maximum(_mm(rel_ref[...], d1_ref) + db1_ref[...], 0.0)
    pe = _mm(pe, d2_ref) + db2_ref[...]

    q = q_ref[...]
    q_tiled = jnp.concatenate([q] * k, axis=-1)           # broadcast q to each slab
    x = q_tiled - kf_ref[...] + pe                        # gamma_in, fused elementwise

    h = jnp.maximum(_mm(x, g1_ref) + gb1_ref[...], 0.0)
    a = (_mm(h, g2_ref) + gb2_ref[...]) * scale           # logits (tm, k*d)

    val = v_ref[...] + pe                                 # v + pos_enc, fused

    # softmax over the k neighbour slabs: elementwise VPU max/exp/add, EUP reciprocal
    a_slabs = [a[:, j * d:(j + 1) * d] for j in range(k)]
    v_slabs = [val[:, j * d:(j + 1) * d] for j in range(k)]
    m = a_slabs[0]
    for j in range(1, k):
        m = jnp.maximum(m, a_slabs[j])
    es = [jnp.exp(s - m) for s in a_slabs]
    denom = es[0]
    for j in range(1, k):
        denom = denom + es[j]
    inv = pl.reciprocal(denom, approx=True)
    acc = es[0] * v_slabs[0]
    for j in range(1, k):
        acc = acc + es[j] * v_slabs[j]
    agg = acc * inv                                        # (tm, d)

    # fc2 + residual epilogue (fused; avoids an (M, d) HBM round trip)
    out = _mm(agg, w2_ref) + b2_ref[...] + res_ref[...]
    o_ref[...] = out.astype(o_ref.dtype)


def _td_mlp_kernel(x_ref, w1_ref, b1_ref, w2_ref, b2_ref, o_ref, *, k):
    """TransitionDown: per-point 2-layer MLP (+ReLU) fused with max over k neighbours.
    x_ref is neighbour-major (k, tm, Cin)."""
    best = None
    for j in range(k):
        h = jnp.maximum(_mm(x_ref[j], w1_ref) + b1_ref[...], 0.0)
        h = jnp.maximum(_mm(h, w2_ref) + b2_ref[...], 0.0)
        best = h if best is None else jnp.maximum(best, h)
    o_ref[...] = best.astype(o_ref.dtype)


# ----------------------------- Pallas wrappers -----------------------------

_PARALLEL = pltpu.CompilerParams(dimension_semantics=("parallel",))


def pallas_mlp(x, layers, relus, residual=None, tile_m=512):
    """Fused chain of linears. layers: list of (w, b_or_None); relus: per-layer bool."""
    K = x.shape[-1]
    lead = x.shape[:-1]
    M = int(np.prod(lead)) if lead else 1
    Nout = layers[-1][0].shape[1]
    x2 = x.reshape(M, K)
    res2 = residual.reshape(M, Nout) if residual is not None else None

    tm = min(tile_m, _round_up(M, 8))
    Mp = _round_up(M, tm)
    if Mp != M:
        x2 = jnp.pad(x2, ((0, Mp - M), (0, 0)))
        if res2 is not None:
            res2 = jnp.pad(res2, ((0, Mp - M), (0, 0)))
    grid = (Mp // tm,)

    inputs = [x2]
    in_specs = [pl.BlockSpec((tm, K), lambda i: (i, 0))]
    biases = []
    for (w, b) in layers:
        inputs.append(w.astype(_MM_DTYPE))
        in_specs.append(pl.BlockSpec(w.shape, lambda i: (0, 0)))
        if b is not None:
            inputs.append(b.reshape(1, -1).astype(jnp.float32))
            in_specs.append(pl.BlockSpec((1, b.shape[-1]), lambda i: (0, 0)))
        biases.append(b is not None)
    if res2 is not None:
        inputs.append(res2)
        in_specs.append(pl.BlockSpec((tm, Nout), lambda i: (i, 0)))

    out = pl.pallas_call(
        functools.partial(_mlp_kernel, relus=tuple(relus), biases=tuple(biases),
                          residual=res2 is not None),
        grid=grid,
        out_shape=jax.ShapeDtypeStruct((Mp, Nout), jnp.float32),
        in_specs=in_specs,
        out_specs=pl.BlockSpec((tm, Nout), lambda i: (i, 0)),
        compiler_params=_PARALLEL,
    )(*inputs)
    if Mp != M:
        out = out[:M]
    return out.reshape(lead + (Nout,))


def pallas_pt_attention(q, kf, v, rel, residual, p, k, d, tile_m=512):
    """Fused Point-Transformer vector attention + fc2 + residual.
    q: (B,N,d); kf, v: (B,N,k,d); rel: (B,N,k,3); residual: (B,N,d_points)
    -> (B,N,d_points)."""
    B, N, dp = residual.shape
    M = B * N
    q2 = q.reshape(M, d)
    kf2 = kf.reshape(M, k * d)
    v2 = v.reshape(M, k * d)
    rel2 = rel.reshape(M, k * 3)
    res2 = residual.reshape(M, dp)

    # per-neighbour weights packed block-diagonally -> one lane-dense matmul per layer
    d1 = _block_diag(p['delta1_w'], k).astype(_MM_DTYPE)
    db1 = jnp.tile(p['delta1_b'], k).reshape(1, k * d)
    d2 = _block_diag(p['delta2_w'], k).astype(_MM_DTYPE)
    db2 = jnp.tile(p['delta2_b'], k).reshape(1, k * d)
    g1 = _block_diag(p['gamma1_w'], k).astype(_MM_DTYPE)
    gb1 = jnp.tile(p['gamma1_b'], k).reshape(1, k * d)
    g2 = _block_diag(p['gamma2_w'], k).astype(_MM_DTYPE)
    gb2 = jnp.tile(p['gamma2_b'], k).reshape(1, k * d)
    w2 = p['fc2_w'].astype(_MM_DTYPE)                      # (d, dp)
    b2 = p['fc2_b'].reshape(1, dp).astype(jnp.float32)

    tm = min(tile_m, _round_up(M, 8))
    Mp = _round_up(M, tm)
    if Mp != M:
        pad = lambda a: jnp.pad(a, ((0, Mp - M), (0, 0)))
        q2, kf2, v2, rel2, res2 = pad(q2), pad(kf2), pad(v2), pad(rel2), pad(res2)
    grid = (Mp // tm,)
    row = lambda i: (i, 0)
    full = lambda i: (0, 0)

    out = pl.pallas_call(
        functools.partial(_pt_attn_kernel, k=k, d=d, scale=1.0 / float(np.sqrt(d))),
        grid=grid,
        out_shape=jax.ShapeDtypeStruct((Mp, dp), jnp.float32),
        in_specs=[pl.BlockSpec((tm, d), row),
                  pl.BlockSpec((tm, k * d), row),
                  pl.BlockSpec((tm, k * d), row),
                  pl.BlockSpec((tm, k * 3), row),
                  pl.BlockSpec((tm, dp), row),
                  pl.BlockSpec((k * 3, k * d), full), pl.BlockSpec((1, k * d), full),
                  pl.BlockSpec((k * d, k * d), full), pl.BlockSpec((1, k * d), full),
                  pl.BlockSpec((k * d, k * d), full), pl.BlockSpec((1, k * d), full),
                  pl.BlockSpec((k * d, k * d), full), pl.BlockSpec((1, k * d), full),
                  pl.BlockSpec((d, dp), full), pl.BlockSpec((1, dp), full)],
        out_specs=pl.BlockSpec((tm, dp), row),
        compiler_params=_PARALLEL,
    )(q2, kf2, v2, rel2, res2, d1, db1, d2, db2, g1, gb1, g2, gb2, w2, b2)
    if Mp != M:
        out = out[:M]
    return out.reshape(B, N, dp)


def pallas_td_mlp(grouped, w1, b1, w2, b2, tile_m=512):
    """grouped: (B, S, k, Cin) -> 2-layer MLP (+ReLU) + max over neighbours -> (B, S, C2)."""
    B, S, k, Cin = grouped.shape
    C1 = w1.shape[1]
    C2 = w2.shape[1]
    M = B * S
    x = jnp.moveaxis(grouped, 2, 0).reshape(k, M, Cin)    # neighbour-major

    tm = min(tile_m, _round_up(M, 8))
    Mp = _round_up(M, tm)
    if Mp != M:
        x = jnp.pad(x, ((0, 0), (0, Mp - M), (0, 0)))
    grid = (Mp // tm,)

    out = pl.pallas_call(
        functools.partial(_td_mlp_kernel, k=k),
        grid=grid,
        out_shape=jax.ShapeDtypeStruct((Mp, C2), jnp.float32),
        in_specs=[pl.BlockSpec((k, tm, Cin), lambda i: (0, i, 0)),
                  pl.BlockSpec((Cin, C1), lambda i: (0, 0)),
                  pl.BlockSpec((1, C1), lambda i: (0, 0)),
                  pl.BlockSpec((C1, C2), lambda i: (0, 0)),
                  pl.BlockSpec((1, C2), lambda i: (0, 0))],
        out_specs=pl.BlockSpec((tm, C2), lambda i: (i, 0)),
        compiler_params=_PARALLEL,
    )(x, w1.astype(_MM_DTYPE), b1.reshape(1, -1), w2.astype(_MM_DTYPE), b2.reshape(1, -1))
    if Mp != M:
        out = out[:M]
    return out.reshape(B, S, C2)


# ----------------------------- point-cloud glue (plain JAX) -----------------------------

def square_distance(src, dst):
    # TODO(synk): at realistic N the full (B,N,N) matrix should be tiled/blocked.
    diff = src[:, :, None, :] - dst[:, None, :, :]
    return jnp.sum(diff * diff, axis=-1)


def knn_indices(query_xyz, ref_xyz, k):
    dists = square_distance(query_xyz, ref_xyz)
    return jax.lax.top_k(-dists, k)[1]                    # ascending distance


def index_points(points, idx):
    """points: (B, N, C); idx: (B, S) or (B, S, K) -> gather along N."""
    return jax.vmap(lambda p, i: p[i])(points, idx)


def farthest_point_sample(xyz, npoint):
    # TODO(synk): torch's FPS seeds `farthest` with randint; we use index 0 deterministically.
    B, N, _ = xyz.shape

    def step(carry, _):
        distance, farthest = carry
        centroid = jnp.take_along_axis(xyz, farthest[:, None, None], axis=1)  # (B,1,3)
        dist = jnp.sum((xyz - centroid) ** 2, axis=-1)
        distance = jnp.minimum(distance, dist)
        nxt = jnp.argmax(distance, axis=-1).astype(jnp.int32)
        return (distance, nxt), farthest

    init = (jnp.full((B, N), 1e10, dtype=xyz.dtype), jnp.zeros((B,), jnp.int32))
    _, cents = jax.lax.scan(step, init, None, length=npoint)
    return jnp.transpose(cents)                            # (B, npoint)


# ----------------------------- module blocks -----------------------------

def transformer_block(p, xyz, features, nneighbor):
    """Point_transformerBlock forward (vector attention over knn)."""
    d = p['fc1_w'].shape[1]
    knn_idx = knn_indices(xyz, xyz, nneighbor)             # (B, N, k)
    knn_xyz = index_points(xyz, knn_idx)                   # (B, N, k, 3)

    pre = features
    # fc1 -> [Wq | Wk | Wv] fused in one kernel (x = fc1(features) only feeds q/k/v)
    wqkv = jnp.concatenate([p['wq'], p['wk'], p['wv']], axis=1)        # (d, 3d), no bias
    qkv = pallas_mlp(features, [(p['fc1_w'], p['fc1_b']), (wqkv, None)],
                     relus=(False, False))
    q = qkv[..., :d]
    # TODO(synk): K/V gathers still materialize (B,N,k,d) via XLA gather; an in-kernel
    # scalar-prefetch gather (PrefetchScalarGridSpec) would remove this HBM round trip.
    kf = index_points(qkv[..., d:2 * d], knn_idx)
    v = index_points(qkv[..., 2 * d:], knn_idx)
    rel = xyz[:, :, None, :] - knn_xyz                      # (B, N, k, 3)

    # fused: pos-enc MLP + gamma MLP + softmax(k) + aggregation + fc2 + residual
    return pallas_pt_attention(q, kf, v, rel, pre, p, nneighbor, d)


def transition_down(p, xyz, points, npoint, nsample):
    """TransitionDown = PointNetSetAbstraction(knn=True); BN(eval) -> identity."""
    fps_idx = farthest_point_sample(xyz, npoint)            # (B, S)
    new_xyz = index_points(xyz, fps_idx)                    # (B, S, 3)
    idx = knn_indices(new_xyz, xyz, nsample)                # (B, S, k)
    grouped_xyz = index_points(xyz, idx)                    # (B, S, k, 3)
    grouped_xyz_norm = grouped_xyz - new_xyz[:, :, None, :]
    grouped_points = index_points(points, idx)              # (B, S, k, D)
    grouped = jnp.concatenate([grouped_xyz_norm, grouped_points], axis=-1)
    (w1, b1), (w2, b2) = p['mlp']
    new_points = pallas_td_mlp(grouped, w1, b1, w2, b2)      # MLP + max over neighbours
    return new_xyz, new_points


def icosa_backbone_forward(params, x, *, npoints, nblocks, nneighbor):
    xyz = x[..., :3]
    h = pallas_mlp(x, params['fc1'], relus=(True, False))    # Linear+ReLU+Linear fused
    points = transformer_block(params['tf_init'], xyz, h, nneighbor)
    for i in range(nblocks):
        xyz, points = transition_down(params['td'][i], xyz, points,
                                      npoints // 4 ** (i + 1), nneighbor)
        points = transformer_block(params['tf'][i], xyz, points, nneighbor)
    res = pallas_mlp(points, params['fc2'], relus=(True, True, False))  # 3-layer head fused
    return res, xyz


# ----------------------------- deterministic parameter init -----------------------------

class KeyGen:
    def __init__(self, key):
        self._key = key

    def normal(self, shape):
        self._key, sub = jax.random.split(self._key)
        return jax.random.normal(sub, shape, dtype=jnp.float32)


def _init_linear(gen, fan_in, fan_out, bias=True):
    w = gen.normal((fan_in, fan_out)) * (1.0 / np.sqrt(fan_in))
    b = gen.normal((fan_out,)) * 0.01 if bias else None
    return w, b


def init_transformer(gen, d_points, d_model):
    p = {}
    p['fc1_w'], p['fc1_b'] = _init_linear(gen, d_points, d_model)
    p['fc2_w'], p['fc2_b'] = _init_linear(gen, d_model, d_points)
    p['delta1_w'], p['delta1_b'] = _init_linear(gen, 3, d_model)
    p['delta2_w'], p['delta2_b'] = _init_linear(gen, d_model, d_model)
    p['gamma1_w'], p['gamma1_b'] = _init_linear(gen, d_model, d_model)
    p['gamma2_w'], p['gamma2_b'] = _init_linear(gen, d_model, d_model)
    p['wq'], _ = _init_linear(gen, d_model, d_model, bias=False)
    p['wk'], _ = _init_linear(gen, d_model, d_model, bias=False)
    p['wv'], _ = _init_linear(gen, d_model, d_model, bias=False)
    return p


def init_params(key, npoints, nblocks, nneighbor, input_dim, emb):
    gen = KeyGen(key)
    params = {}
    params['fc1'] = [_init_linear(gen, input_dim, emb), _init_linear(gen, emb, emb)]
    params['tf_init'] = init_transformer(gen, emb, emb)
    params['td'] = []
    params['tf'] = []
    for i in range(nblocks):
        channel = emb * 2 ** (i + 1)
        last = channel // 2 + 3
        mlp = []
        for out_ch in (channel, channel):
            mlp.append(_init_linear(gen, last, out_ch))
            last = out_ch
        params['td'].append({'mlp': mlp})
        params['tf'].append(init_transformer(gen, channel, emb))
    params['fc2'] = [_init_linear(gen, emb * 2 ** nblocks, 256),
                     _init_linear(gen, 256, 256),
                     _init_linear(gen, 256, emb)]
    return params


# ----------------------------- main -----------------------------

if __name__ == "__main__":
    npoints, nblocks, nneighbor = 64, 2, 4
    input_dim, embedding_dim = 6, 32
    B = 2

    key = jax.random.PRNGKey(0)
    kparam, kx = jax.random.split(key)
    params = init_params(kparam, npoints, nblocks, nneighbor, input_dim, embedding_dim)
    x = jax.random.normal(kx, (B, npoints, input_dim), dtype=jnp.float32)

    fwd = jax.jit(functools.partial(icosa_backbone_forward,
                                    npoints=npoints, nblocks=nblocks, nneighbor=nneighbor))
    res, xyz_out = fwd(params, x)
    jax.block_until_ready((res, xyz_out))

    assert res.shape == (B, npoints // 4 ** nblocks, embedding_dim), res.shape
    assert xyz_out.shape == (B, npoints // 4 ** nblocks, 3), xyz_out.shape
    assert jnp.all(jnp.isfinite(res))
    print("KERNEL_OK")
</pallas_src>

<mosaic_0001>
module attributes {stable_mosaic.version = 11 : i64} {
  func.func @_mlp_kernel(%arg0: i32, %arg1: memref<128x6xf32, #tpu.memory_space<vmem>>, %arg2: memref<6x32xbf16, #tpu.memory_space<vmem>>, %arg3: memref<1x32xf32, #tpu.memory_space<vmem>>, %arg4: memref<32x32xbf16, #tpu.memory_space<vmem>>, %arg5: memref<1x32xf32, #tpu.memory_space<vmem>>, %arg6: memref<128x32xf32, #tpu.memory_space<vmem>>) attributes {dimension_semantics = [#tpu.dimension_semantics<parallel>], iteration_bounds = array<i64: 1>, scalar_prefetch = 0 : i64, scratch_operands = 0 : i64, tpu.core_type = #tpu.core_type<tc>, window_params = [{transform_indices = @transform_0, window_bounds = array<i64: 128, 6>}, {pipeline_mode = #tpu.pipeline_mode<synchronous>, transform_indices = @transform_1, window_bounds = array<i64: 6, 32>}, {pipeline_mode = #tpu.pipeline_mode<synchronous>, transform_indices = @transform_2, window_bounds = array<i64: 1, 32>}, {pipeline_mode = #tpu.pipeline_mode<synchronous>, transform_indices = @transform_3, window_bounds = array<i64: 32, 32>}, {pipeline_mode = #tpu.pipeline_mode<synchronous>, transform_indices = @transform_4, window_bounds = array<i64: 1, 32>}, {transform_indices = @transform_5, window_bounds = array<i64: 128, 32>}]} {
    %c0 = arith.constant 0 : index
    %c0_0 = arith.constant 0 : index
    %0 = vector.load %arg1[%c0, %c0_0] : memref<128x6xf32, #tpu.memory_space<vmem>>, vector<128x6xf32>
    %1 = arith.truncf %0 : vector<128x6xf32> to vector<128x6xbf16>
    %c0_1 = arith.constant 0 : index
    %c0_2 = arith.constant 0 : index
    %2 = vector.load %arg2[%c0_1, %c0_2] : memref<6x32xbf16, #tpu.memory_space<vmem>>, vector<6x32xbf16>
    %cst = arith.constant dense<0.000000e+00> : vector<128x32xf32>
    %3 = tpu.matmul %1, %2, %cst {dimension_numbers = #tpu.dot_dimension_numbers<[1], [0], [0], [1], [0, 0, 1, 1], [], []>} : vector<128x6xbf16>, vector<6x32xbf16>, vector<128x32xf32> -> vector<128x32xf32>
    %c0_3 = arith.constant 0 : index
    %c0_4 = arith.constant 0 : index
    %4 = vector.load %arg3[%c0_3, %c0_4] : memref<1x32xf32, #tpu.memory_space<vmem>>, vector<1x32xf32>
    %5 = vector.broadcast %4 : vector<1x32xf32> to vector<128x32xf32>
    %6 = arith.addf %3, %5 : vector<128x32xf32>
    %cst_5 = arith.constant 0.000000e+00 : f32
    %7 = vector.broadcast %cst_5 : f32 to vector<128x32xf32>
    %8 = arith.maximumf %6, %7 : vector<128x32xf32>
    %9 = arith.truncf %8 : vector<128x32xf32> to vector<128x32xbf16>
    %c0_6 = arith.constant 0 : index
    %c0_7 = arith.constant 0 : index
    %10 = vector.load %arg4[%c0_6, %c0_7] : memref<32x32xbf16, #tpu.memory_space<vmem>>, vector<32x32xbf16>
    %cst_8 = arith.constant dense<0.000000e+00> : vector<128x32xf32>
    %11 = tpu.matmul %9, %10, %cst_8 {dimension_numbers = #tpu.dot_dimension_numbers<[1], [0], [0], [1], [0, 0, 1, 1], [], []>} : vector<128x32xbf16>, vector<32x32xbf16>, vector<128x32xf32> -> vector<128x32xf32>
    %c0_9 = arith.constant 0 : index
    %c0_10 = arith.constant 0 : index
    %12 = vector.load %arg5[%c0_9, %c0_10] : memref<1x32xf32, #tpu.memory_space<vmem>>, vector<1x32xf32>
    %13 = vector.broadcast %12 : vector<1x32xf32> to vector<128x32xf32>
    %14 = arith.addf %11, %13 : vector<128x32xf32>
    %c0_11 = arith.constant 0 : index
    %c0_12 = arith.constant 0 : index
    %15 = vector.load %arg6[%c0_11, %c0_12] : memref<128x32xf32, #tpu.memory_space<vmem>>, vector<128x32xf32>
    tpu.vector_store %arg6[%c0_11, %c0_12], %14 {strides = array<i32>} : memref<128x32xf32, #tpu.memory_space<vmem>>, vector<128x32xf32>,
    return
  }
  func.func @transform_0(%arg0: i32) -> (i32, i32) {
    %c0_i32 = arith.constant 0 : i32
    %c0_i32_0 = arith.constant 0 : i32
    return %arg0, %c0_i32 : i32, i32
  }
  func.func @transform_1(%arg0: i32) -> (i32, i32) {
    %c0_i32 = arith.constant 0 : i32
    %c0_i32_0 = arith.constant 0 : i32
    %c0_i32_1 = arith.constant 0 : i32
    return %c0_i32, %c0_i32_0 : i32, i32
  }
  func.func @transform_2(%arg0: i32) -> (i32, i32) {
    %c0_i32 = arith.constant 0 : i32
    %c0_i32_0 = arith.constant 0 : i32
    %c0_i32_1 = arith.constant 0 : i32
    return %c0_i32, %c0_i32_0 : i32, i32
  }
  func.func @transform_3(%arg0: i32) -> (i32, i32) {
    %c0_i32 = arith.constant 0 : i32
    %c0_i32_0 = arith.constant 0 : i32
    %c0_i32_1 = arith.constant 0 : i32
    return %c0_i32, %c0_i32_0 : i32, i32
  }
  func.func @transform_4(%arg0: i32) -> (i32, i32) {
    %c0_i32 = arith.constant 0 : i32
    %c0_i32_0 = arith.constant 0 : i32
    %c0_i32_1 = arith.constant 0 : i32
    return %c0_i32, %c0_i32_0 : i32, i32
  }
  func.func @transform_5(%arg0: i32) -> (i32, i32) {
    %c0_i32 = arith.constant 0 : i32
    %c0_i32_0 = arith.constant 0 : i32
    return %arg0, %c0_i32 : i32, i32
  }
}

module attributes {stable_mosaic.version = 11 : i64} {
  func.func @_mlp_kernel(%arg0: i32, %arg1: memref<128x32xf32, #tpu.memory_space<vmem>>, %arg2: memref<32x32xbf16, #tpu.memory_space<vmem>>, %arg3: memref<1x32xf32, #tpu.memory_space<vmem>>, %arg4: memref<32x96xbf16, #tpu.memory_space<vmem>>, %arg5: memref<128x96xf32, #tpu.memory_space<vmem>>) attributes {dimension_semantics = [#tpu.dimension_semantics<parallel>], iteration_bounds = array<i64: 1>, scalar_prefetch = 0 : i64, scratch_operands = 0 : i64, tpu.core_type = #tpu.core_type<tc>, window_params = [{transform_indices = @transform_0, window_bounds = array<i64: 128, 32>}, {pipeline_mode = #tpu.pipeline_mode<synchronous>, transform_indices = @transform_1, window_bounds = array<i64: 32, 32>}, {pipeline_mode = #tpu.pipeline_mode<synchronous>, transform_indices = @transform_2, window_bounds = array<i64: 1, 32>}, {pipeline_mode = #tpu.pipeline_mode<synchronous>, transform_indices = @transform_3, window_bounds = array<i64: 32, 96>}, {transform_indices = @transform_4, window_bounds = array<i64: 128, 96>}]} {
    %c0 = arith.constant 0 : index
    %c0_0 = arith.constant 0 : index
    %0 = vector.load %arg1[%c0, %c0_0] : memref<128x32xf32, #tpu.memory_space<vmem>>, vector<128x32xf32>
    %1 = arith.truncf %0 : vector<128x32xf32> to vector<128x32xbf16>
    %c0_1 = arith.constant 0 : index
    %c0_2 = arith.constant 0 : index
    %2 = vector.load %arg2[%c0_1, %c0_2] : memref<32x32xbf16, #tpu.memory_space<vmem>>, vector<32x32xbf16>
    %cst = arith.constant dense<0.000000e+00> : vector<128x32xf32>
    %3 = tpu.matmul %1, %2, %cst {dimension_numbers = #tpu.dot_dimension_numbers<[1], [0], [0], [1], [0, 0, 1, 1], [], []>} : vector<128x32xbf16>, vector<32x32xbf16>, vector<128x32xf32> -> vector<128x32xf32>
    %c0_3 = arith.constant 0 : index
    %c0_4 = arith.constant 0 : index
    %4 = vector.load %arg3[%c0_3, %c0_4] : memref<1x32xf32, #tpu.memory_space<vmem>>, vector<1x32xf32>
    %5 = vector.broadcast %4 : vector<1x32xf32> to vector<128x32xf32>
    %6 = arith.addf %3, %5 : vector<128x32xf32>
    %7 = arith.truncf %6 : vector<128x32xf32> to vector<128x32xbf16>
    %c0_5 = arith.constant 0 : index
    %c0_6 = arith.constant 0 : index
    %8 = vector.load %arg4[%c0_5, %c0_6] : memref<32x96xbf16, #tpu.memory_space<vmem>>, vector<32x96xbf16>
    %cst_7 = arith.constant dense<0.000000e+00> : vector<128x96xf32>
    %9 = tpu.matmul %7, %8, %cst_7 {dimension_numbers = #tpu.dot_dimension_numbers<[1], [0], [0], [1], [0, 0, 1, 1], [], []>} : vector<128x32xbf16>, vector<32x96xbf16>, vector<128x96xf32> -> vector<128x96xf32>
    %c0_8 = arith.constant 0 : index
    %c0_9 = arith.constant 0 : index
    %10 = vector.load %arg5[%c0_8, %c0_9] : memref<128x96xf32, #tpu.memory_space<vmem>>, vector<128x96xf32>
    tpu.vector_store %arg5[%c0_8, %c0_9], %9 {strides = array<i32>} : memref<128x96xf32, #tpu.memory_space<vmem>>, vector<128x96xf32>,
    return
  }
  func.func @transform_0(%arg0: i32) -> (i32, i32) {
    %c0_i32 = arith.constant 0 : i32
    %c0_i32_0 = arith.constant 0 : i32
    return %arg0, %c0_i32 : i32, i32
  }
  func.func @transform_1(%arg0: i32) -> (i32, i32) {
    %c0_i32 = arith.constant 0 : i32
    %c0_i32_0 = arith.constant 0 : i32
    %c0_i32_1 = arith.constant 0 : i32
    return %c0_i32, %c0_i32_0 : i32, i32
  }
  func.func @transform_2(%arg0: i32) -> (i32, i32) {
    %c0_i32 = arith.constant 0 : i32
    %c0_i32_0 = arith.constant 0 : i32
    %c0_i32_1 = arith.constant 0 : i32
    return %c0_i32, %c0_i32_0 : i32, i32
  }
  func.func @transform_3(%arg0: i32) -> (i32, i32) {
    %c0_i32 = arith.constant 0 : i32
    %c0_i32_0 = arith.constant 0 : i32
    %c0_i32_1 = arith.constant 0 : i32
    return %c0_i32, %c0_i32_0 : i32, i32
  }
  func.func @transform_4(%arg0: i32) -> (i32, i32) {
    %c0_i32 = arith.constant 0 : i32
    %c0_i32_0 = arith.constant 0 : i32
    return %arg0, %c0_i32 : i32, i32
  }
}

module attributes {stable_mosaic.version = 11 : i64} {
  func.func @_pt_attn_kernel(%arg0: i32, %arg1: memref<128x32xf32, #tpu.memory_space<vmem>>, %arg2: memref<128x128xf32, #tpu.memory_space<vmem>>, %arg3: memref<128x128xf32, #tpu.memory_space<vmem>>, %arg4: memref<128x12xf32, #tpu.memory_space<vmem>>, %arg5: memref<128x32xf32, #tpu.memory_space<vmem>>, %arg6: memref<12x128xbf16, #tpu.memory_space<vmem>>, %arg7: memref<1x128xf32, #tpu.memory_space<vmem>>, %arg8: memref<128x128xbf16, #tpu.memory_space<vmem>>, %arg9: memref<1x128xf32, #tpu.memory_space<vmem>>, %arg10: memref<128x128xbf16, #tpu.memory_space<vmem>>, %arg11: memref<1x128xf32, #tpu.memory_space<vmem>>, %arg12: memref<128x128xbf16, #tpu.memory_space<vmem>>, %arg13: memref<1x128xf32, #tpu.memory_space<vmem>>, %arg14: memref<32x32xbf16, #tpu.memory_space<vmem>>, %arg15: memref<1x32xf32, #tpu.memory_space<vmem>>, %arg16: memref<128x32xf32, #tpu.memory_space<vmem>>) attributes {dimension_semantics = [#tpu.dimension_semantics<parallel>], iteration_bounds = array<i64: 1>, scalar_prefetch = 0 : i64, scratch_operands = 0 : i64, tpu.core_type = #tpu.core_type<tc>, window_params = [{transform_indices = @transform_0, window_bounds = array<i64: 128, 32>}, {transform_indices = @transform_1, window_bounds = array<i64: 128, 128>}, {transform_indices = @transform_2, window_bounds = array<i64: 128, 128>}, {transform_indices = @transform_3, window_bounds = array<i64: 128, 12>}, {transform_indices = @transform_4, window_bounds = array<i64: 128, 32>}, {pipeline_mode = #tpu.pipeline_mode<synchronous>, transform_indices = @transform_5, window_bounds = array<i64: 12, 128>}, {pipeline_mode = #tpu.pipeline_mode<synchronous>, transform_indices = @transform_6, window_bounds = array<i64: 1, 128>}, {pipeline_mode = #tpu.pipeline_mode<synchronous>, transform_indices = @transform_7, window_bounds = array<i64: 128, 128>}, {pipeline_mode = #tpu.pipeline_mode<synchronous>, transform_indices = @transform_8, window_bounds = array<i64: 1, 128>}, {pipeline_mode = #tpu.pipeline_mode<synchronous>, transform_indices = @transform_9, window_bounds = array<i64: 128, 128>}, {pipeline_mode = #tpu.pipeline_mode<synchronous>, transform_indices = @transform_10, window_bounds = array<i64: 1, 128>}, {pipeline_mode = #tpu.pipeline_mode<synchronous>, transform_indices = @transform_11, window_bounds = array<i64: 128, 128>}, {pipeline_mode = #tpu.pipeline_mode<synchronous>, transform_indices = @transform_12, window_bounds = array<i64: 1, 128>}, {pipeline_mode = #tpu.pipeline_mode<synchronous>, transform_indices = @transform_13, window_bounds = array<i64: 32, 32>}, {pipeline_mode = #tpu.pipeline_mode<synchronous>, transform_indices = @transform_14, window_bounds = array<i64: 1, 32>}, {transform_indices = @transform_15, window_bounds = array<i64: 128, 32>}]} {
    %c0 = arith.constant 0 : index
    %c0_0 = arith.constant 0 : index
    %0 = vector.load %arg4[%c0, %c0_0] : memref<128x12xf32, #tpu.memory_space<vmem>>, vector<128x12xf32>
    %1 = arith.truncf %0 : vector<128x12xf32> to vector<128x12xbf16>
    %c0_1 = arith.constant 0 : index
    %c0_2 = arith.constant 0 : index
    %2 = vector.load %arg6[%c0_1, %c0_2] : memref<12x128xbf16, #tpu.memory_space<vmem>>, vector<12x128xbf16>
    %cst = arith.constant dense<0.000000e+00> : vector<128x128xf32>
    %3 = tpu.matmul %1, %2, %cst {dimension_numbers = #tpu.dot_dimension_numbers<[1], [0], [0], [1], [0, 0, 1, 1], [], []>} : vector<128x12xbf16>, vector<12x128xbf16>, vector<128x128xf32> -> vector<128x128xf32>
    %c0_3 = arith.constant 0 : index
    %c0_4 = arith.constant 0 : index
    %4 = vector.load %arg7[%c0_3, %c0_4] : memref<1x128xf32, #tpu.memory_space<vmem>>, vector<1x128xf32>
    %5 = vector.broadcast %4 : vector<1x128xf32> to vector<128x128xf32>
    %6 = arith.addf %3, %5 : vector<128x128xf32>
    %cst_5 = arith.constant 0.000000e+00 : f32
    %7 = vector.broadcast %cst_5 : f32 to vector<128x128xf32>
    %8 = arith.maximumf %6, %7 : vector<128x128xf32>
    %9 = arith.truncf %8 : vector<128x128xf32> to vector<128x128xbf16>
    %c0_6 = arith.constant 0 : index
    %c0_7 = arith.constant 0 : index
    %10 = vector.load %arg8[%c0_6, %c0_7] : memref<128x128xbf16, #tpu.memory_space<vmem>>, vector<128x128xbf16>
    %cst_8 = arith.constant dense<0.000000e+00> : vector<128x128xf32>
    %11 = tpu.matmul %9, %10, %cst_8 {dimension_numbers = #tpu.dot_dimension_numbers<[1], [0], [0], [1], [0, 0, 1, 1], [], []>} : vector<128x128xbf16>, vector<128x128xbf16>, vector<128x128xf32> -> vector<128x128xf32>
    %c0_9 = arith.constant 0 : index
    %c0_10 = arith.constant 0 : index
    %12 = vector.load %arg9[%c0_9, %c0_10] : memref<1x128xf32, #tpu.memory_space<vmem>>, vector<1x128xf32>
    %13 = vector.broadcast %12 : vector<1x128xf32> to vector<128x128xf32>
    %14 = arith.addf %11, %13 : vector<128x128xf32>
    %c0_11 = arith.constant 0 : index
    %c0_12 = arith.constant 0 : index
    %15 = vector.load %arg1[%c0_11, %c0_12] : memref<128x32xf32, #tpu.memory_space<vmem>>, vector<128x32xf32>
    %16 = tpu.concatenate %15, %15, %15, %15 in 1 : vector<128x32xf32>, vector<128x32xf32>, vector<128x32xf32>, vector<128x32xf32> -> vector<128x128xf32>
    %c0_13 = arith.constant 0 : index
    %c0_14 = arith.constant 0 : index
    %17 = vector.load %arg2[%c0_13, %c0_14] : memref<128x128xf32, #tpu.memory_space<vmem>>, vector<128x128xf32>
    %18 = arith.subf %16, %17 : vector<128x128xf32>
    %19 = arith.addf %18, %14 : vector<128x128xf32>
    %20 = arith.truncf %19 : vector<128x128xf32> to vector<128x128xbf16>
    %c0_15 = arith.constant 0 : index
    %c0_16 = arith.constant 0 : index
    %21 = vector.load %arg10[%c0_15, %c0_16] : memref<128x128xbf16, #tpu.memory_space<vmem>>, vector<128x128xbf16>
    %cst_17 = arith.constant dense<0.000000e+00> : vector<128x128xf32>
    %22 = tpu.matmul %20, %21, %cst_17 {dimension_numbers = #tpu.dot_dimension_numbers<[1], [0], [0], [1], [0, 0, 1, 1], [], []>} : vector<128x128xbf16>, vector<128x128xbf16>, vector<128x128xf32> -> vector<128x128xf32>
    %c0_18 = arith.constant 0 : index
    %c0_19 = arith.constant 0 : index
    %23 = vector.load %arg11[%c0_18, %c0_19] : memref<1x128xf32, #tpu.memory_space<vmem>>, vector<1x128xf32>
    %24 = vector.broadcast %23 : vector<1x128xf32> to vector<128x128xf32>
    %25 = arith.addf %22, %24 : vector<128x128xf32>
    %cst_20 = arith.constant 0.000000e+00 : f32
    %26 = vector.broadcast %cst_20 : f32 to vector<128x128xf32>
    %27 = arith.maximumf %25, %26 : vector<128x128xf32>
    %28 = arith.truncf %27 : vector<128x128xf32> to vector<128x128xbf16>
    %c0_21 = arith.constant 0 : index
    %c0_22 = arith.constant 0 : index
    %29 = vector.load %arg12[%c0_21, %c0_22] : memref<128x128xbf16, #tpu.memory_space<vmem>>, vector<128x128xbf16>
    %cst_23 = arith.constant dense<0.000000e+00> : vector<128x128xf32>
    %30 = tpu.matmul %28, %29, %cst_23 {dimension_numbers = #tpu.dot_dimension_numbers<[1], [0], [0], [1], [0, 0, 1, 1], [], []>} : vector<128x128xbf16>, vector<128x128xbf16>, vector<128x128xf32> -> vector<128x128xf32>
    %c0_24 = arith.constant 0 : index
    %c0_25 = arith.constant 0 : index
    %31 = vector.load %arg13[%c0_24, %c0_25] : memref<1x128xf32, #tpu.memory_space<vmem>>, vector<1x128xf32>
    %32 = vector.broadcast %31 : vector<1x128xf32> to vector<128x128xf32>
    %33 = arith.addf %30, %32 : vector<128x128xf32>
    %cst_26 = arith.constant 0.176776692 : f32
    %34 = vector.broadcast %cst_26 : f32 to vector<128x128xf32>
    %35 = arith.mulf %33, %34 : vector<128x128xf32>
    %c0_27 = arith.constant 0 : index
    %c0_28 = arith.constant 0 : index
    %36 = vector.load %arg3[%c0_27, %c0_28] : memref<128x128xf32, #tpu.memory_space<vmem>>, vector<128x128xf32>
    %37 = arith.addf %36, %14 : vector<128x128xf32>
    %38 = vector.extract_strided_slice %35 {offsets = [0, 0], sizes = [128, 32], strides = [1, 1]} : vector<128x128xf32> to vector<128x32xf32>
    %39 = vector.extract_strided_slice %35 {offsets = [0, 32], sizes = [128, 32], strides = [1, 1]} : vector<128x128xf32> to vector<128x32xf32>
    %40 = vector.extract_strided_slice %35 {offsets = [0, 64], sizes = [128, 32], strides = [1, 1]} : vector<128x128xf32> to vector<128x32xf32>
    %41 = vector.extract_strided_slice %35 {offsets = [0, 96], sizes = [128, 32], strides = [1, 1]} : vector<128x128xf32> to vector<128x32xf32>
    %42 = vector.extract_strided_slice %37 {offsets = [0, 0], sizes = [128, 32], strides = [1, 1]} : vector<128x128xf32> to vector<128x32xf32>
    %43 = vector.extract_strided_slice %37 {offsets = [0, 32], sizes = [128, 32], strides = [1, 1]} : vector<128x128xf32> to vector<128x32xf32>
    %44 = vector.extract_strided_slice %37 {offsets = [0, 64], sizes = [128, 32], strides = [1, 1]} : vector<128x128xf32> to vector<128x32xf32>
    %45 = vector.extract_strided_slice %37 {offsets = [0, 96], sizes = [128, 32], strides = [1, 1]} : vector<128x128xf32> to vector<128x32xf32>
    %46 = arith.maximumf %38, %39 : vector<128x32xf32>
    %47 = arith.maximumf %46, %40 : vector<128x32xf32>
    %48 = arith.maximumf %47, %41 : vector<128x32xf32>
    %49 = arith.subf %38, %48 : vector<128x32xf32>
    %50 = math.exp %49 : vector<128x32xf32>
    %51 = arith.subf %39, %48 : vector<128x32xf32>
    %52 = math.exp %51 : vector<128x32xf32>
    %53 = arith.subf %40, %48 : vector<128x32xf32>
    %54 = math.exp %53 : vector<128x32xf32>
    %55 = arith.subf %41, %48 : vector<128x32xf32>
    %56 = math.exp %55 : vector<128x32xf32>
    %57 = arith.addf %50, %52 : vector<128x32xf32>
    %58 = arith.addf %57, %54 : vector<128x32xf32>
    %59 = arith.addf %58, %56 : vector<128x32xf32>
    %60 = tpu.reciprocal %59 {approx = true} : vector<128x32xf32> -> vector<128x32xf32>
    %61 = arith.mulf %50, %42 : vector<128x32xf32>
    %62 = arith.mulf %52, %43 : vector<128x32xf32>
    %63 = arith.addf %61, %62 : vector<128x32xf32>
    %64 = arith.mulf %54, %44 : vector<128x32xf32>
    %65 = arith.addf %63, %64 : vector<128x32xf32>
    %66 = arith.mulf %56, %45 : vector<128x32xf32>
    %67 = arith.addf %65, %66 : vector<128x32xf32>
    %68 = arith.mulf %67, %60 : vector<128x32xf32>
    %69 = arith.truncf %68 : vector<128x32xf32> to vector<128x32xbf16>
    %c0_29 = arith.constant 0 : index
    %c0_30 = arith.constant 0 : index
    %70 = vector.load %arg14[%c0_29, %c0_30] : memref<32x32xbf16, #tpu.memory_space<vmem>>, vector<32x32xbf16>
    %cst_31 = arith.constant dense<0.000000e+00> : vector<128x32xf32>
    %71 = tpu.matmul %69, %70, %cst_31 {dimension_numbers = #tpu.dot_dimension_numbers<[1], [0], [0], [1], [0, 0, 1, 1], [], []>} : vector<128x32xbf16>, vector<32x32xbf16>, vector<128x32xf32> -> vector<128x32xf32>
    %c0_32 = arith.constant 0 : index
    %c0_33 = arith.constant 0 : index
    %72 = vector.load %arg15[%c0_32, %c0_33] : memref<1x32xf32, #tpu.memory_space<vmem>>, vector<1x32xf32>
    %73 = vector.broadcast %72 : vector<1x32xf32> to vector<128x32xf32>
    %74 = arith.addf %71, %73 : vector<128x32xf32>
    %c0_34 = arith.constant 0 : index
    %c0_35 = arith.constant 0 : index
    %75 = vector.load %arg5[%c0_34, %c0_35] : memref<128x32xf32, #tpu.memory_space<vmem>>, vector<128x32xf32>
    %76 = arith.addf %74, %75 : vector<128x32xf32>
    %c0_36 = arith.constant 0 : index
    %c0_37 = arith.constant 0 : index
    %77 = vector.load %arg16[%c0_36, %c0_37] : memref<128x32xf32, #tpu.memory_space<vmem>>, vector<128x32xf32>
    tpu.vector_store %arg16[%c0_36, %c0_37], %76 {strides = array<i32>} : memref<128x32xf32, #tpu.memory_space<vmem>>, vector<128x32xf32>,
    return
  }
  func.func @transform_0(%arg0: i32) -> (i32, i32) {
    %c0_i32 = arith.constant 0 : i32
    %c0_i32_0 = arith.constant 0 : i32
    return %arg0, %c0_i32 : i32, i32
  }
  func.func @transform_1(%arg0: i32) -> (i32, i32) {
    %c0_i32 = arith.constant 0 : i32
    %c0_i32_0 = arith.constant 0 : i32
    return %arg0, %c0_i32 : i32, i32
  }
  func.func @transform_2(%arg0: i32) -> (i32, i32) {
    %c0_i32 = arith.constant 0 : i32
    %c0_i32_0 = arith.constant 0 : i32
    return %arg0, %c0_i32 : i32, i32
  }
  func.func @transform_3(%arg0: i32) -> (i32, i32) {
    %c0_i32 = arith.constant 0 : i32
    %c0_i32_0 = arith.constant 0 : i32
    return %arg0, %c0_i32 : i32, i32
  }
  func.func @transform_4(%arg0: i32) -> (i32, i32) {
    %c0_i32 = arith.constant 0 : i32
    %c0_i32_0 = arith.constant 0 : i32
    return %arg0, %c0_i32 : i32, i32
  }
  func.func @transform_5(%arg0: i32) -> (i32, i32) {
    %c0_i32 = arith.constant 0 : i32
    %c0_i32_0 = arith.constant 0 : i32
    %c0_i32_1 = arith.constant 0 : i32
    return %c0_i32, %c0_i32_0 : i32, i32
  }
  func.func @transform_6(%arg0: i32) -> (i32, i32) {
    %c0_i32 = arith.constant 0 : i32
    %c0_i32_0 = arith.constant 0 : i32
    %c0_i32_1 = arith.constant 0 : i32
    return %c0_i32, %c0_i32_0 : i32, i32
  }
  func.func @transform_7(%arg0: i32) -> (i32, i32) {
    %c0_i32 = arith.constant 0 : i32
    %c0_i32_0 = arith.constant 0 : i32
    %c0_i32_1 = arith.constant 0 : i32
    return %c0_i32, %c0_i32_0 : i32, i32
  }
  func.func @transform_8(%arg0: i32) -> (i32, i32) {
    %c0_i32 = arith.constant 0 : i32
    %c0_i32_0 = arith.constant 0 : i32
    %c0_i32_1 = arith.constant 0 : i32
    return %c0_i32, %c0_i32_0 : i32, i32
  }
  func.func @transform_9(%arg0: i32) -> (i32, i32) {
    %c0_i32 = arith.constant 0 : i32
    %c0_i32_0 = arith.constant 0 : i32
    %c0_i32_1 = arith.constant 0 : i32
    return %c0_i32, %c0_i32_0 : i32, i32
  }
  func.func @transform_10(%arg0: i32) -> (i32, i32) {
    %c0_i32 = arith.constant 0 : i32
    %c0_i32_0 = arith.constant 0 : i32
    %c0_i32_1 = arith.constant 0 : i32
    return %c0_i32, %c0_i32_0 : i32, i32
  }
  func.func @transform_11(%arg0: i32) -> (i32, i32) {
    %c0_i32 = arith.constant 0 : i32
    %c0_i32_0 = arith.constant 0 : i32
    %c0_i32_1 = arith.constant 0 : i32
    return %c0_i32, %c0_i32_0 : i32, i32
  }
  func.func @transform_12(%arg0: i32) -> (i32, i32) {
    %c0_i32 = arith.constant 0 : i32
    %c0_i32_0 = arith.constant 0 : i32
    %c0_i32_1 = arith.constant 0 : i32
    return %c0_i32, %c0_i32_0 : i32, i32
  }
  func.func @transform_13(%arg0: i32) -> (i32, i32) {
    %c0_i32 = arith.constant 0 : i32
    %c0_i32_0 = arith.constant 0 : i32
    %c0_i32_1 = arith.constant 0 : i32
    return %c0_i32, %c0_i32_0 : i32, i32
  }
  func.func @transform_14(%arg0: i32) -> (i32, i32) {
    %c0_i32 = arith.constant 0 : i32
    %c0_i32_0 = arith.constant 0 : i32
    %c0_i32_1 = arith.constant 0 : i32
    return %c0_i32, %c0_i32_0 : i32, i32
  }
  func.func @transform_15(%arg0: i32) -> (i32, i32) {
    %c0_i32 = arith.constant 0 : i32
    %c0_i32_0 = arith.constant 0 : i32
    return %arg0, %c0_i32 : i32, i32
  }
}

module attributes {stable_mosaic.version = 11 : i64} {
  func.func @_td_mlp_kernel(%arg0: i32, %arg1: memref<4x32x35xf32, #tpu.memory_space<vmem>>, %arg2: memref<35x64xbf16, #tpu.memory_space<vmem>>, %arg3: memref<1x64xf32, #tpu.memory_space<vmem>>, %arg4: memref<64x64xbf16, #tpu.memory_space<vmem>>, %arg5: memref<1x64xf32, #tpu.memory_space<vmem>>, %arg6: memref<32x64xf32, #tpu.memory_space<vmem>>) attributes {dimension_semantics = [#tpu.dimension_semantics<parallel>], iteration_bounds = array<i64: 1>, scalar_prefetch = 0 : i64, scratch_operands = 0 : i64, tpu.core_type = #tpu.core_type<tc>, window_params = [{transform_indices = @transform_0, window_bounds = array<i64: 4, 32, 35>}, {pipeline_mode = #tpu.pipeline_mode<synchronous>, transform_indices = @transform_1, window_bounds = array<i64: 35, 64>}, {pipeline_mode = #tpu.pipeline_mode<synchronous>, transform_indices = @transform_2, window_bounds = array<i64: 1, 64>}, {pipeline_mode = #tpu.pipeline_mode<synchronous>, transform_indices = @transform_3, window_bounds = array<i64: 64, 64>}, {pipeline_mode = #tpu.pipeline_mode<synchronous>, transform_indices = @transform_4, window_bounds = array<i64: 1, 64>}, {transform_indices = @transform_5, window_bounds = array<i64: 32, 64>}]} {
    %c0 = arith.constant 0 : index
    %c0_0 = arith.constant 0 : index
    %c0_1 = arith.constant 0 : index
    %0 = vector.load %arg1[%c0, %c0_0, %c0_1] : memref<4x32x35xf32, #tpu.memory_space<vmem>>, vector<1x32x35xf32>
    %1 = vector.shape_cast %0 : vector<1x32x35xf32> to vector<32x35xf32>
    %2 = arith.truncf %1 : vector<32x35xf32> to vector<32x35xbf16>
    %c0_2 = arith.constant 0 : index
    %c0_3 = arith.constant 0 : index
    %3 = vector.load %arg2[%c0_2, %c0_3] : memref<35x64xbf16, #tpu.memory_space<vmem>>, vector<35x64xbf16>
    %cst = arith.constant dense<0.000000e+00> : vector<32x64xf32>
    %4 = tpu.matmul %2, %3, %cst {dimension_numbers = #tpu.dot_dimension_numbers<[1], [0], [0], [1], [0, 0, 1, 1], [], []>} : vector<32x35xbf16>, vector<35x64xbf16>, vector<32x64xf32> -> vector<32x64xf32>
    %c0_4 = arith.constant 0 : index
    %c0_5 = arith.constant 0 : index
    %5 = vector.load %arg3[%c0_4, %c0_5] : memref<1x64xf32, #tpu.memory_space<vmem>>, vector<1x64xf32>
    %6 = vector.broadcast %5 : vector<1x64xf32> to vector<32x64xf32>
    %7 = arith.addf %4, %6 : vector<32x64xf32>
    %cst_6 = arith.constant 0.000000e+00 : f32
    %8 = vector.broadcast %cst_6 : f32 to vector<32x64xf32>
    %9 = arith.maximumf %7, %8 : vector<32x64xf32>
    %10 = arith.truncf %9 : vector<32x64xf32> to vector<32x64xbf16>
    %c0_7 = arith.constant 0 : index
    %c0_8 = arith.constant 0 : index
    %11 = vector.load %arg4[%c0_7, %c0_8] : memref<64x64xbf16, #tpu.memory_space<vmem>>, vector<64x64xbf16>
    %cst_9 = arith.constant dense<0.000000e+00> : vector<32x64xf32>
    %12 = tpu.matmul %10, %11, %cst_9 {dimension_numbers = #tpu.dot_dimension_numbers<[1], [0], [0], [1], [0, 0, 1, 1], [], []>} : vector<32x64xbf16>, vector<64x64xbf16>, vector<32x64xf32> -> vector<32x64xf32>
    %c0_10 = arith.constant 0 : index
    %c0_11 = arith.constant 0 : index
    %13 = vector.load %arg5[%c0_10, %c0_11] : memref<1x64xf32, #tpu.memory_space<vmem>>, vector<1x64xf32>
    %14 = vector.broadcast %13 : vector<1x64xf32> to vector<32x64xf32>
    %15 = arith.addf %12, %14 : vector<32x64xf32>
    %cst_12 = arith.constant 0.000000e+00 : f32
    %16 = vector.broadcast %cst_12 : f32 to vector<32x64xf32>
    %17 = arith.maximumf %15, %16 : vector<32x64xf32>
    %c1 = arith.constant 1 : index
    %c0_13 = arith.constant 0 : index
    %c0_14 = arith.constant 0 : index
    %18 = vector.load %arg1[%c1, %c0_13, %c0_14] : memref<4x32x35xf32, #tpu.memory_space<vmem>>, vector<1x32x35xf32>
    %19 = vector.shape_cast %18 : vector<1x32x35xf32> to vector<32x35xf32>
    %20 = arith.truncf %19 : vector<32x35xf32> to vector<32x35xbf16>
    %c0_15 = arith.constant 0 : index
    %c0_16 = arith.constant 0 : index
    %21 = vector.load %arg2[%c0_15, %c0_16] : memref<35x64xbf16, #tpu.memory_space<vmem>>, vector<35x64xbf16>
    %cst_17 = arith.constant dense<0.000000e+00> : vector<32x64xf32>
    %22 = tpu.matmul %20, %21, %cst_17 {dimension_numbers = #tpu.dot_dimension_numbers<[1], [0], [0], [1], [0, 0, 1, 1], [], []>} : vector<32x35xbf16>, vector<35x64xbf16>, vector<32x64xf32> -> vector<32x64xf32>
    %c0_18 = arith.constant 0 : index
    %c0_19 = arith.constant 0 : index
    %23 = vector.load %arg3[%c0_18, %c0_19] : memref<1x64xf32, #tpu.memory_space<vmem>>, vector<1x64xf32>
    %24 = vector.broadcast %23 : vector<1x64xf32> to vector<32x64xf32>
    %25 = arith.addf %22, %24 : vector<32x64xf32>
    %cst_20 = arith.constant 0.000000e+00 : f32
    %26 = vector.broadcast %cst_20 : f32 to vector<32x64xf32>
    %27 = arith.maximumf %25, %26 : vector<32x64xf32>
    %28 = arith.truncf %27 : vector<32x64xf32> to vector<32x64xbf16>
    %c0_21 = arith.constant 0 : index
    %c0_22 = arith.constant 0 : index
    %29 = vector.load %arg4[%c0_21, %c0_22] : memref<64x64xbf16, #tpu.memory_space<vmem>>, vector<64x64xbf16>
    %cst_23 = arith.constant dense<0.000000e+00> : vector<32x64xf32>
    %30 = tpu.matmul %28, %29, %cst_23 {dimension_numbers = #tpu.dot_dimension_numbers<[1], [0], [0], [1], [0, 0, 1, 1], [], []>} : vector<32x64xbf16>, vector<64x64xbf16>, vector<32x64xf32> -> vector<32x64xf32>
    %c0_24 = arith.constant 0 : index
    %c0_25 = arith.constant 0 : index
    %31 = vector.load %arg5[%c0_24, %c0_25] : memref<1x64xf32, #tpu.memory_space<vmem>>, vector<1x64xf32>
    %32 = vector.broadcast %31 : vector<1x64xf32> to vector<32x64xf32>
    %33 = arith.addf %30, %32 : vector<32x64xf32>
    %cst_26 = arith.constant 0.000000e+00 : f32
    %34 = vector.broadcast %cst_26 : f32 to vector<32x64xf32>
    %35 = arith.maximumf %33, %34 : vector<32x64xf32>
    %36 = arith.maximumf %17, %35 : vector<32x64xf32>
    %c2 = arith.constant 2 : index
    %c0_27 = arith.constant 0 : index
    %c0_28 = arith.constant 0 : index
    %37 = vector.load %arg1[%c2, %c0_27, %c0_28] : memref<4x32x35xf32, #tpu.memory_space<vmem>>, vector<1x32x35xf32>
    %38 = vector.shape_cast %37 : vector<1x32x35xf32> to vector<32x35xf32>
    %39 = arith.truncf %38 : vector<32x35xf32> to vector<32x35xbf16>
    %c0_29 = arith.constant 0 : index
    %c0_30 = arith.constant 0 : index
    %40 = vector.load %arg2[%c0_29, %c0_30] : memref<35x64xbf16, #tpu.memory_space<vmem>>, vector<35x64xbf16>
    %cst_31 = arith.constant dense<0.000000e+00> : vector<32x64xf32>
    %41 = tpu.matmul %39, %40, %cst_31 {dimension_numbers = #tpu.dot_dimension_numbers<[1], [0], [0], [1], [0, 0, 1, 1], [], []>} : vector<32x35xbf16>, vector<35x64xbf16>, vector<32x64xf32> -> vector<32x64xf32>
    %c0_32 = arith.constant 0 : index
    %c0_33 = arith.constant 0 : index
    %42 = vector.load %arg3[%c0_32, %c0_33] : memref<1x64xf32, #tpu.memory_space<vmem>>, vector<1x64xf32>
    %43 = vector.broadcast %42 : vector<1x64xf32> to vector<32x64xf32>
    %44 = arith.addf %41, %43 : vector<32x64xf32>
    %cst_34 = arith.constant 0.000000e+00 : f32
    %45 = vector.broadcast %cst_34 : f32 to vector<32x64xf32>
    %46 = arith.maximumf %44, %45 : vector<32x64xf32>
    %47 = arith.truncf %46 : vector<32x64xf32> to vector<32x64xbf16>
    %c0_35 = arith.constant 0 : index
    %c0_36 = arith.constant 0 : index
    %48 = vector.load %arg4[%c0_35, %c0_36] : memref<64x64xbf16, #tpu.memory_space<vmem>>, vector<64x64xbf16>
    %cst_37 = arith.constant dense<0.000000e+00> : vector<32x64xf32>
    %49 = tpu.matmul %47, %48, %cst_37 {dimension_numbers = #tpu.dot_dimension_numbers<[1], [0], [0], [1], [0, 0, 1, 1], [], []>} : vector<32x64xbf16>, vector<64x64xbf16>, vector<32x64xf32> -> vector<32x64xf32>
    %c0_38 = arith.constant 0 : index
    %c0_39 = arith.constant 0 : index
    %50 = vector.load %arg5[%c0_38, %c0_39] : memref<1x64xf32, #tpu.memory_space<vmem>>, vector<1x64xf32>
    %51 = vector.broadcast %50 : vector<1x64xf32> to vector<32x64xf32>
    %52 = arith.addf %49, %51 : vector<32x64xf32>
    %cst_40 = arith.constant 0.000000e+00 : f32
    %53 = vector.broadcast %cst_40 : f32 to vector<32x64xf32>
    %54 = arith.maximumf %52, %53 : vector<32x64xf32>
    %55 = arith.maximumf %36, %54 : vector<32x64xf32>
    %c3 = arith.constant 3 : index
    %c0_41 = arith.constant 0 : index
    %c0_42 = arith.constant 0 : index
    %56 = vector.load %arg1[%c3, %c0_41, %c0_42] : memref<4x32x35xf32, #tpu.memory_space<vmem>>, vector<1x32x35xf32>
    %57 = vector.shape_cast %56 : vector<1x32x35xf32> to vector<32x35xf32>
    %58 = arith.truncf %57 : vector<32x35xf32> to vector<32x35xbf16>
    %c0_43 = arith.constant 0 : index
    %c0_44 = arith.constant 0 : index
    %59 = vector.load %arg2[%c0_43, %c0_44] : memref<35x64xbf16, #tpu.memory_space<vmem>>, vector<35x64xbf16>
    %cst_45 = arith.constant dense<0.000000e+00> : vector<32x64xf32>
    %60 = tpu.matmul %58, %59, %cst_45 {dimension_numbers = #tpu.dot_dimension_numbers<[1], [0], [0], [1], [0, 0, 1, 1], [], []>} : vector<32x35xbf16>, vector<35x64xbf16>, vector<32x64xf32> -> vector<32x64xf32>
    %c0_46 = arith.constant 0 : index
    %c0_47 = arith.constant 0 : index
    %61 = vector.load %arg3[%c0_46, %c0_47] : memref<1x64xf32, #tpu.memory_space<vmem>>, vector<1x64xf32>
    %62 = vector.broadcast %61 : vector<1x64xf32> to vector<32x64xf32>
    %63 = arith.addf %60, %62 : vector<32x64xf32>
    %cst_48 = arith.constant 0.000000e+00 : f32
    %64 = vector.broadcast %cst_48 : f32 to vector<32x64xf32>
    %65 = arith.maximumf %63, %64 : vector<32x64xf32>
    %66 = arith.truncf %65 : vector<32x64xf32> to vector<32x64xbf16>
    %c0_49 = arith.constant 0 : index
    %c0_50 = arith.constant 0 : index
    %67 = vector.load %arg4[%c0_49, %c0_50] : memref<64x64xbf16, #tpu.memory_space<vmem>>, vector<64x64xbf16>
    %cst_51 = arith.constant dense<0.000000e+00> : vector<32x64xf32>
    %68 = tpu.matmul %66, %67, %cst_51 {dimension_numbers = #tpu.dot_dimension_numbers<[1], [0], [0], [1], [0, 0, 1, 1], [], []>} : vector<32x64xbf16>, vector<64x64xbf16>, vector<32x64xf32> -> vector<32x64xf32>
    %c0_52 = arith.constant 0 : index
    %c0_53 = arith.constant 0 : index
    %69 = vector.load %arg5[%c0_52, %c0_53] : memref<1x64xf32, #tpu.memory_space<vmem>>, vector<1x64xf32>
    %70 = vector.broadcast %69 : vector<1x64xf32> to vector<32x64xf32>
    %71 = arith.addf %68, %70 : vector<32x64xf32>
    %cst_54 = arith.constant 0.000000e+00 : f32
    %72 = vector.broadcast %cst_54 : f32 to vector<32x64xf32>
    %73 = arith.maximumf %71, %72 : vector<32x64xf32>
    %74 = arith.maximumf %55, %73 : vector<32x64xf32>
    %c0_55 = arith.constant 0 : index
    %c0_56 = arith.constant 0 : index
    %75 = vector.load %arg6[%c0_55, %c0_56] : memref<32x64xf32, #tpu.memory_space<vmem>>, vector<32x64xf32>
    tpu.vector_store %arg6[%c0_55, %c0_56], %74 {strides = array<i32>} : memref<32x64xf32, #tpu.memory_space<vmem>>, vector<32x64xf32>,
    return
  }
  func.func @transform_0(%arg0: i32) -> (i32, i32, i32) {
    %c0_i32 = arith.constant 0 : i32
    %c0_i32_0 = arith.constant 0 : i32
    %c0_i32_1 = arith.constant 0 : i32
    return %c0_i32, %arg0, %c0_i32_0 : i32, i32, i32
  }
  func.func @transform_1(%arg0: i32) -> (i32, i32) {
    %c0_i32 = arith.constant 0 : i32
    %c0_i32_0 = arith.constant 0 : i32
    %c0_i32_1 = arith.constant 0 : i32
    return %c0_i32, %c0_i32_0 : i32, i32
  }
  func.func @transform_2(%arg0: i32) -> (i32, i32) {
    %c0_i32 = arith.constant 0 : i32
    %c0_i32_0 = arith.constant 0 : i32
    %c0_i32_1 = arith.constant 0 : i32
    return %c0_i32, %c0_i32_0 : i32, i32
  }
  func.func @transform_3(%arg0: i32) -> (i32, i32) {
    %c0_i32 = arith.constant 0 : i32
    %c0_i32_0 = arith.constant 0 : i32
    %c0_i32_1 = arith.constant 0 : i32
    return %c0_i32, %c0_i32_0 : i32, i32
  }
  func.func @transform_4(%arg0: i32) -> (i32, i32) {
    %c0_i32 = arith.constant 0 : i32
    %c0_i32_0 = arith.constant 0 : i32
    %c0_i32_1 = arith.constant 0 : i32
    return %c0_i32, %c0_i32_0 : i32, i32
  }
  func.func @transform_5(%arg0: i32) -> (i32, i32) {
    %c0_i32 = arith.constant 0 : i32
    %c0_i32_0 = arith.constant 0 : i32
    return %arg0, %c0_i32 : i32, i32
  }
}

module attributes {stable_mosaic.version = 11 : i64} {
  func.func @_mlp_kernel(%arg0: i32, %arg1: memref<32x64xf32, #tpu.memory_space<vmem>>, %arg2: memref<64x32xbf16, #tpu.memory_space<vmem>>, %arg3: memref<1x32xf32, #tpu.memory_space<vmem>>, %arg4: memref<32x96xbf16, #tpu.memory_space<vmem>>, %arg5: memref<32x96xf32, #tpu.memory_space<vmem>>) attributes {dimension_semantics = [#tpu.dimension_semantics<parallel>], iteration_bounds = array<i64: 1>, scalar_prefetch = 0 : i64, scratch_operands = 0 : i64, tpu.core_type = #tpu.core_type<tc>, window_params = [{transform_indices = @transform_0, window_bounds = array<i64: 32, 64>}, {pipeline_mode = #tpu.pipeline_mode<synchronous>, transform_indices = @transform_1, window_bounds = array<i64: 64, 32>}, {pipeline_mode = #tpu.pipeline_mode<synchronous>, transform_indices = @transform_2, window_bounds = array<i64: 1, 32>}, {pipeline_mode = #tpu.pipeline_mode<synchronous>, transform_indices = @transform_3, window_bounds = array<i64: 32, 96>}, {transform_indices = @transform_4, window_bounds = array<i64: 32, 96>}]} {
    %c0 = arith.constant 0 : index
    %c0_0 = arith.constant 0 : index
    %0 = vector.load %arg1[%c0, %c0_0] : memref<32x64xf32, #tpu.memory_space<vmem>>, vector<32x64xf32>
    %1 = arith.truncf %0 : vector<32x64xf32> to vector<32x64xbf16>
    %c0_1 = arith.constant 0 : index
    %c0_2 = arith.constant 0 : index
    %2 = vector.load %arg2[%c0_1, %c0_2] : memref<64x32xbf16, #tpu.memory_space<vmem>>, vector<64x32xbf16>
    %cst = arith.constant dense<0.000000e+00> : vector<32x32xf32>
    %3 = tpu.matmul %1, %2, %cst {dimension_numbers = #tpu.dot_dimension_numbers<[1], [0], [0], [1], [0, 0, 1, 1], [], []>} : vector<32x64xbf16>, vector<64x32xbf16>, vector<32x32xf32> -> vector<32x32xf32>
    %c0_3 = arith.constant 0 : index
    %c0_4 = arith.constant 0 : index
    %4 = vector.load %arg3[%c0_3, %c0_4] : memref<1x32xf32, #tpu.memory_space<vmem>>, vector<1x32xf32>
    %5 = vector.broadcast %4 : vector<1x32xf32> to vector<32x32xf32>
    %6 = arith.addf %3, %5 : vector<32x32xf32>
    %7 = arith.truncf %6 : vector<32x32xf32> to vector<32x32xbf16>
    %c0_5 = arith.constant 0 : index
    %c0_6 = arith.constant 0 : index
    %8 = vector.load %arg4[%c0_5, %c0_6] : memref<32x96xbf16, #tpu.memory_space<vmem>>, vector<32x96xbf16>
    %cst_7 = arith.constant dense<0.000000e+00> : vector<32x96xf32>
    %9 = tpu.matmul %7, %8, %cst_7 {dimension_numbers = #tpu.dot_dimension_numbers<[1], [0], [0], [1], [0, 0, 1, 1], [], []>} : vector<32x32xbf16>, vector<32x96xbf16>, vector<32x96xf32> -> vector<32x96xf32>
    %c0_8 = arith.constant 0 : index
    %c0_9 = arith.constant 0 : index
    %10 = vector.load %arg5[%c0_8, %c0_9] : memref<32x96xf32, #tpu.memory_space<vmem>>, vector<32x96xf32>
    tpu.vector_store %arg5[%c0_8, %c0_9], %9 {strides = array<i32>} : memref<32x96xf32, #tpu.memory_space<vmem>>, vector<32x96xf32>,
    return
  }
  func.func @transform_0(%arg0: i32) -> (i32, i32) {
    %c0_i32 = arith.constant 0 : i32
    %c0_i32_0 = arith.constant 0 : i32
    return %arg0, %c0_i32 : i32, i32
  }
  func.func @transform_1(%arg0: i32) -> (i32, i32) {
    %c0_i32 = arith.constant 0 : i32
    %c0_i32_0 = arith.constant 0 : i32
    %c0_i32_1 = arith.constant 0 : i32
    return %c0_i32, %c0_i32_0 : i32, i32
  }
  func.func @transform_2(%arg0: i32) -> (i32, i32) {
    %c0_i32 = arith.constant 0 : i32
    %c0_i32_0 = arith.constant 0 : i32
    %c0_i32_1 = arith.constant 0 : i32
    return %c0_i32, %c0_i32_0 : i32, i32
  }
  func.func @transform_3(%arg0: i32) -> (i32, i32) {
    %c0_i32 = arith.constant 0 : i32
    %c0_i32_0 = arith.constant 0 : i32
    %c0_i32_1 = arith.constant 0 : i32
    return %c0_i32, %c0_i32_0 : i32, i32
  }
  func.func @transform_4(%arg0: i32) -> (i32, i32) {
    %c0_i32 = arith.constant 0 : i32
    %c0_i32_0 = arith.constant 0 : i32
    return %arg0, %c0_i32 : i32, i32
  }
}

module attributes {stable_mosaic.version = 11 : i64} {
  func.func @_pt_attn_kernel(%arg0: i32, %arg1: memref<32x32xf32, #tpu.memory_space<vmem>>, %arg2: memref<32x128xf32, #tpu.memory_space<vmem>>, %arg3: memref<32x128xf32, #tpu.memory_space<vmem>>, %arg4: memref<32x12xf32, #tpu.memory_space<vmem>>, %arg5: memref<32x64xf32, #tpu.memory_space<vmem>>, %arg6: memref<12x128xbf16, #tpu.memory_space<vmem>>, %arg7: memref<1x128xf32, #tpu.memory_space<vmem>>, %arg8: memref<128x128xbf16, #tpu.memory_space<vmem>>, %arg9: memref<1x128xf32, #tpu.memory_space<vmem>>, %arg10: memref<128x128xbf16, #tpu.memory_space<vmem>>, %arg11: memref<1x128xf32, #tpu.memory_space<vmem>>, %arg12: memref<128x128xbf16, #tpu.memory_space<vmem>>, %arg13: memref<1x128xf32, #tpu.memory_space<vmem>>, %arg14: memref<32x64xbf16, #tpu.memory_space<vmem>>, %arg15: memref<1x64xf32, #tpu.memory_space<vmem>>, %arg16: memref<32x64xf32, #tpu.memory_space<vmem>>) attributes {dimension_semantics = [#tpu.dimension_semantics<parallel>], iteration_bounds = array<i64: 1>, scalar_prefetch = 0 : i64, scratch_operands = 0 : i64, tpu.core_type = #tpu.core_type<tc>, window_params = [{transform_indices = @transform_0, window_bounds = array<i64: 32, 32>}, {transform_indices = @transform_1, window_bounds = array<i64: 32, 128>}, {transform_indices = @transform_2, window_bounds = array<i64: 32, 128>}, {transform_indices = @transform_3, window_bounds = array<i64: 32, 12>}, {transform_indices = @transform_4, window_bounds = array<i64: 32, 64>}, {pipeline_mode = #tpu.pipeline_mode<synchronous>, transform_indices = @transform_5, window_bounds = array<i64: 12, 128>}, {pipeline_mode = #tpu.pipeline_mode<synchronous>, transform_indices = @transform_6, window_bounds = array<i64: 1, 128>}, {pipeline_mode = #tpu.pipeline_mode<synchronous>, transform_indices = @transform_7, window_bounds = array<i64: 128, 128>}, {pipeline_mode = #tpu.pipeline_mode<synchronous>, transform_indices = @transform_8, window_bounds = array<i64: 1, 128>}, {pipeline_mode = #tpu.pipeline_mode<synchronous>, transform_indices = @transform_9, window_bounds = array<i64: 128, 128>}, {pipeline_mode = #tpu.pipeline_mode<synchronous>, transform_indices = @transform_10, window_bounds = array<i64: 1, 128>}, {pipeline_mode = #tpu.pipeline_mode<synchronous>, transform_indices = @transform_11, window_bounds = array<i64: 128, 128>}, {pipeline_mode = #tpu.pipeline_mode<synchronous>, transform_indices = @transform_12, window_bounds = array<i64: 1, 128>}, {pipeline_mode = #tpu.pipeline_mode<synchronous>, transform_indices = @transform_13, window_bounds = array<i64: 32, 64>}, {pipeline_mode = #tpu.pipeline_mode<synchronous>, transform_indices = @transform_14, window_bounds = array<i64: 1, 64>}, {transform_indices = @transform_15, window_bounds = array<i64: 32, 64>}]} {
    %c0 = arith.constant 0 : index
    %c0_0 = arith.constant 0 : index
    %0 = vector.load %arg4[%c0, %c0_0] : memref<32x12xf32, #tpu.memory_space<vmem>>, vector<32x12xf32>
    %1 = arith.truncf %0 : vector<32x12xf32> to vector<32x12xbf16>
    %c0_1 = arith.constant 0 : index
    %c0_2 = arith.constant 0 : index
    %2 = vector.load %arg6[%c0_1, %c0_2] : memref<12x128xbf16, #tpu.memory_space<vmem>>, vector<12x128xbf16>
    %cst = arith.constant dense<0.000000e+00> : vector<32x128xf32>
    %3 = tpu.matmul %1, %2, %cst {dimension_numbers = #tpu.dot_dimension_numbers<[1], [0], [0], [1], [0, 0, 1, 1], [], []>} : vector<32x12xbf16>, vector<12x128xbf16>, vector<32x128xf32> -> vector<32x128xf32>
    %c0_3 = arith.constant 0 : index
    %c0_4 = arith.constant 0 : index
    %4 = vector.load %arg7[%c0_3, %c0_4] : memref<1x128xf32, #tpu.memory_space<vmem>>, vector<1x128xf32>
    %5 = vector.broadcast %4 : vector<1x128xf32> to vector<32x128xf32>
    %6 = arith.addf %3, %5 : vector<32x128xf32>
    %cst_5 = arith.constant 0.000000e+00 : f32
    %7 = vector.broadcast %cst_5 : f32 to vector<32x128xf32>
    %8 = arith.maximumf %6, %7 : vector<32x128xf32>
    %9 = arith.truncf %8 : vector<32x128xf32> to vector<32x128xbf16>
    %c0_6 = arith.constant 0 : index
    %c0_7 = arith.constant 0 : index
    %10 = vector.load %arg8[%c0_6, %c0_7] : memref<128x128xbf16, #tpu.memory_space<vmem>>, vector<128x128xbf16>
    %cst_8 = arith.constant dense<0.000000e+00> : vector<32x128xf32>
    %11 = tpu.matmul %9, %10, %cst_8 {dimension_numbers = #tpu.dot_dimension_numbers<[1], [0], [0], [1], [0, 0, 1, 1], [], []>} : vector<32x128xbf16>, vector<128x128xbf16>, vector<32x128xf32> -> vector<32x128xf32>
    %c0_9 = arith.constant 0 : index
    %c0_10 = arith.constant 0 : index
    %12 = vector.load %arg9[%c0_9, %c0_10] : memref<1x128xf32, #tpu.memory_space<vmem>>, vector<1x128xf32>
    %13 = vector.broadcast %12 : vector<1x128xf32> to vector<32x128xf32>
    %14 = arith.addf %11, %13 : vector<32x128xf32>
    %c0_11 = arith.constant 0 : index
    %c0_12 = arith.constant 0 : index
    %15 = vector.load %arg1[%c0_11, %c0_12] : memref<32x32xf32, #tpu.memory_space<vmem>>, vector<32x32xf32>
    %16 = tpu.concatenate %15, %15, %15, %15 in 1 : vector<32x32xf32>, vector<32x32xf32>, vector<32x32xf32>, vector<32x32xf32> -> vector<32x128xf32>
    %c0_13 = arith.constant 0 : index
    %c0_14 = arith.constant 0 : index
    %17 = vector.load %arg2[%c0_13, %c0_14] : memref<32x128xf32, #tpu.memory_space<vmem>>, vector<32x128xf32>
    %18 = arith.subf %16, %17 : vector<32x128xf32>
    %19 = arith.addf %18, %14 : vector<32x128xf32>
    %20 = arith.truncf %19 : vector<32x128xf32> to vector<32x128xbf16>
    %c0_15 = arith.constant 0 : index
    %c0_16 = arith.constant 0 : index
    %21 = vector.load %arg10[%c0_15, %c0_16] : memref<128x128xbf16, #tpu.memory_space<vmem>>, vector<128x128xbf16>
    %cst_17 = arith.constant dense<0.000000e+00> : vector<32x128xf32>
    %22 = tpu.matmul %20, %21, %cst_17 {dimension_numbers = #tpu.dot_dimension_numbers<[1], [0], [0], [1], [0, 0, 1, 1], [], []>} : vector<32x128xbf16>, vector<128x128xbf16>, vector<32x128xf32> -> vector<32x128xf32>
    %c0_18 = arith.constant 0 : index
    %c0_19 = arith.constant 0 : index
    %23 = vector.load %arg11[%c0_18, %c0_19] : memref<1x128xf32, #tpu.memory_space<vmem>>, vector<1x128xf32>
    %24 = vector.broadcast %23 : vector<1x128xf32> to vector<32x128xf32>
    %25 = arith.addf %22, %24 : vector<32x128xf32>
    %cst_20 = arith.constant 0.000000e+00 : f32
    %26 = vector.broadcast %cst_20 : f32 to vector<32x128xf32>
    %27 = arith.maximumf %25, %26 : vector<32x128xf32>
    %28 = arith.truncf %27 : vector<32x128xf32> to vector<32x128xbf16>
    %c0_21 = arith.constant 0 : index
    %c0_22 = arith.constant 0 : index
    %29 = vector.load %arg12[%c0_21, %c0_22] : memref<128x128xbf16, #tpu.memory_space<vmem>>, vector<128x128xbf16>
    %cst_23 = arith.constant dense<0.000000e+00> : vector<32x128xf32>
    %30 = tpu.matmul %28, %29, %cst_23 {dimension_numbers = #tpu.dot_dimension_numbers<[1], [0], [0], [1], [0, 0, 1, 1], [], []>} : vector<32x128xbf16>, vector<128x128xbf16>, vector<32x128xf32> -> vector<32x128xf32>
    %c0_24 = arith.constant 0 : index
    %c0_25 = arith.constant 0 : index
    %31 = vector.load %arg13[%c0_24, %c0_25] : memref<1x128xf32, #tpu.memory_space<vmem>>, vector<1x128xf32>
    %32 = vector.broadcast %31 : vector<1x128xf32> to vector<32x128xf32>
    %33 = arith.addf %30, %32 : vector<32x128xf32>
    %cst_26 = arith.constant 0.176776692 : f32
    %34 = vector.broadcast %cst_26 : f32 to vector<32x128xf32>
    %35 = arith.mulf %33, %34 : vector<32x128xf32>
    %c0_27 = arith.constant 0 : index
    %c0_28 = arith.constant 0 : index
    %36 = vector.load %arg3[%c0_27, %c0_28] : memref<32x128xf32, #tpu.memory_space<vmem>>, vector<32x128xf32>
    %37 = arith.addf %36, %14 : vector<32x128xf32>
    %38 = vector.extract_strided_slice %35 {offsets = [0, 0], sizes = [32, 32], strides = [1, 1]} : vector<32x128xf32> to vector<32x32xf32>
    %39 = vector.extract_strided_slice %35 {offsets = [0, 32], sizes = [32, 32], strides = [1, 1]} : vector<32x128xf32> to vector<32x32xf32>
    %40 = vector.extract_strided_slice %35 {offsets = [0, 64], sizes = [32, 32], strides = [1, 1]} : vector<32x128xf32> to vector<32x32xf32>
    %41 = vector.extract_strided_slice %35 {offsets = [0, 96], sizes = [32, 32], strides = [1, 1]} : vector<32x128xf32> to vector<32x32xf32>
    %42 = vector.extract_strided_slice %37 {offsets = [0, 0], sizes = [32, 32], strides = [1, 1]} : vector<32x128xf32> to vector<32x32xf32>
    %43 = vector.extract_strided_slice %37 {offsets = [0, 32], sizes = [32, 32], strides = [1, 1]} : vector<32x128xf32> to vector<32x32xf32>
    %44 = vector.extract_strided_slice %37 {offsets = [0, 64], sizes = [32, 32], strides = [1, 1]} : vector<32x128xf32> to vector<32x32xf32>
    %45 = vector.extract_strided_slice %37 {offsets = [0, 96], sizes = [32, 32], strides = [1, 1]} : vector<32x128xf32> to vector<32x32xf32>
    %46 = arith.maximumf %38, %39 : vector<32x32xf32>
    %47 = arith.maximumf %46, %40 : vector<32x32xf32>
    %48 = arith.maximumf %47, %41 : vector<32x32xf32>
    %49 = arith.subf %38, %48 : vector<32x32xf32>
    %50 = math.exp %49 : vector<32x32xf32>
    %51 = arith.subf %39, %48 : vector<32x32xf32>
    %52 = math.exp %51 : vector<32x32xf32>
    %53 = arith.subf %40, %48 : vector<32x32xf32>
    %54 = math.exp %53 : vector<32x32xf32>
    %55 = arith.subf %41, %48 : vector<32x32xf32>
    %56 = math.exp %55 : vector<32x32xf32>
    %57 = arith.addf %50, %52 : vector<32x32xf32>
    %58 = arith.addf %57, %54 : vector<32x32xf32>
    %59 = arith.addf %58, %56 : vector<32x32xf32>
    %60 = tpu.reciprocal %59 {approx = true} : vector<32x32xf32> -> vector<32x32xf32>
    %61 = arith.mulf %50, %42 : vector<32x32xf32>
    %62 = arith.mulf %52, %43 : vector<32x32xf32>
    %63 = arith.addf %61, %62 : vector<32x32xf32>
    %64 = arith.mulf %54, %44 : vector<32x32xf32>
    %65 = arith.addf %63, %64 : vector<32x32xf32>
    %66 = arith.mulf %56, %45 : vector<32x32xf32>
    %67 = arith.addf %65, %66 : vector<32x32xf32>
    %68 = arith.mulf %67, %60 : vector<32x32xf32>
    %69 = arith.truncf %68 : vector<32x32xf32> to vector<32x32xbf16>
    %c0_29 = arith.constant 0 : index
    %c0_30 = arith.constant 0 : index
    %70 = vector.load %arg14[%c0_29, %c0_30] : memref<32x64xbf16, #tpu.memory_space<vmem>>, vector<32x64xbf16>
    %cst_31 = arith.constant dense<0.000000e+00> : vector<32x64xf32>
    %71 = tpu.matmul %69, %70, %cst_31 {dimension_numbers = #tpu.dot_dimension_numbers<[1], [0], [0], [1], [0, 0, 1, 1], [], []>} : vector<32x32xbf16>, vector<32x64xbf16>, vector<32x64xf32> -> vector<32x64xf32>
    %c0_32 = arith.constant 0 : index
    %c0_33 = arith.constant 0 : index
    %72 = vector.load %arg15[%c0_32, %c0_33] : memref<1x64xf32, #tpu.memory_space<vmem>>, vector<1x64xf32>
    %73 = vector.broadcast %72 : vector<1x64xf32> to vector<32x64xf32>
    %74 = arith.addf %71, %73 : vector<32x64xf32>
    %c0_34 = arith.constant 0 : index
    %c0_35 = arith.constant 0 : index
    %75 = vector.load %arg5[%c0_34, %c0_35] : memref<32x64xf32, #tpu.memory_space<vmem>>, vector<32x64xf32>
    %76 = arith.addf %74, %75 : vector<32x64xf32>
    %c0_36 = arith.constant 0 : index
    %c0_37 = arith.constant 0 : index
    %77 = vector.load %arg16[%c0_36, %c0_37] : memref<32x64xf32, #tpu.memory_space<vmem>>, vector<32x64xf32>
    tpu.vector_store %arg16[%c0_36, %c0_37], %76 {strides = array<i32>} : memref<32x64xf32, #tpu.memory_space<vmem>>, vector<32x64xf32>,
    return
  }
  func.func @transform_0(%arg0: i32) -> (i32, i32) {
    %c0_i32 = arith.constant 0 : i32
    %c0_i32_0 = arith.constant 0 : i32
    return %arg0, %c0_i32 : i32, i32
  }
  func.func @transform_1(%arg0: i32) -> (i32, i32) {
    %c0_i32 = arith.constant 0 : i32
    %c0_i32_0 = arith.constant 0 : i32
    return %arg0, %c0_i32 : i32, i32
  }
  func.func @transform_2(%arg0: i32) -> (i32, i32) {
    %c0_i32 = arith.constant 0 : i32
    %c0_i32_0 = arith.constant 0 : i32
    return %arg0, %c0_i32 : i32, i32
  }
  func.func @transform_3(%arg0: i32) -> (i32, i32) {
    %c0_i32 = arith.constant 0 : i32
    %c0_i32_0 = arith.constant 0 : i32
    return %arg0, %c0_i32 : i32, i32
  }
  func.func @transform_4(%arg0: i32) -> (i32, i32) {
    %c0_i32 = arith.constant 0 : i32
    %c0_i32_0 = arith.constant 0 : i32
    return %arg0, %c0_i32 : i32, i32
  }
  func.func @transform_5(%arg0: i32) -> (i32, i32) {
    %c0_i32 = arith.constant 0 : i32
    %c0_i32_0 = arith.constant 0 : i32
    %c0_i32_1 = arith.constant 0 : i32
    return %c0_i32, %c0_i32_0 : i32, i32
  }
  func.func @transform_6(%arg0: i32) -> (i32, i32) {
    %c0_i32 = arith.constant 0 : i32
    %c0_i32_0 = arith.constant 0 : i32
    %c0_i32_1 = arith.constant 0 : i32
    return %c0_i32, %c0_i32_0 : i32, i32
  }
  func.func @transform_7(%arg0: i32) -> (i32, i32) {
    %c0_i32 = arith.constant 0 : i32
    %c0_i32_0 = arith.constant 0 : i32
    %c0_i32_1 = arith.constant 0 : i32
    return %c0_i32, %c0_i32_0 : i32, i32
  }
  func.func @transform_8(%arg0: i32) -> (i32, i32) {
    %c0_i32 = arith.constant 0 : i32
    %c0_i32_0 = arith.constant 0 : i32
    %c0_i32_1 = arith.constant 0 : i32
    return %c0_i32, %c0_i32_0 : i32, i32
  }
  func.func @transform_9(%arg0: i32) -> (i32, i32) {
    %c0_i32 = arith.constant 0 : i32
    %c0_i32_0 = arith.constant 0 : i32
    %c0_i32_1 = arith.constant 0 : i32
    return %c0_i32, %c0_i32_0 : i32, i32
  }
  func.func @transform_10(%arg0: i32) -> (i32, i32) {
    %c0_i32 = arith.constant 0 : i32
    %c0_i32_0 = arith.constant 0 : i32
    %c0_i32_1 = arith.constant 0 : i32
    return %c0_i32, %c0_i32_0 : i32, i32
  }
  func.func @transform_11(%arg0: i32) -> (i32, i32) {
    %c0_i32 = arith.constant 0 : i32
    %c0_i32_0 = arith.constant 0 : i32
    %c0_i32_1 = arith.constant 0 : i32
    return %c0_i32, %c0_i32_0 : i32, i32
  }
  func.func @transform_12(%arg0: i32) -> (i32, i32) {
    %c0_i32 = arith.constant 0 : i32
    %c0_i32_0 = arith.constant 0 : i32
    %c0_i32_1 = arith.constant 0 : i32
    return %c0_i32, %c0_i32_0 : i32, i32
  }
  func.func @transform_13(%arg0: i32) -> (i32, i32) {
    %c0_i32 = arith.constant 0 : i32
    %c0_i32_0 = arith.constant 0 : i32
    %c0_i32_1 = arith.constant 0 : i32
    return %c0_i32, %c0_i32_0 : i32, i32
  }
  func.func @transform_14(%arg0: i32) -> (i32, i32) {
    %c0_i32 = arith.constant 0 : i32
    %c0_i32_0 = arith.constant 0 : i32
    %c0_i32_1 = arith.constant 0 : i32
    return %c0_i32, %c0_i32_0 : i32, i32
  }
  func.func @transform_15(%arg0: i32) -> (i32, i32) {
    %c0_i32 = arith.constant 0 : i32
    %c0_i32_0 = arith.constant 0 : i32
    return %arg0, %c0_i32 : i32, i32
  }
}

module attributes {stable_mosaic.version = 11 : i64} {
  func.func @_td_mlp_kernel(%arg0: i32, %arg1: memref<4x8x67xf32, #tpu.memory_space<vmem>>, %arg2: memref<67x128xbf16, #tpu.memory_space<vmem>>, %arg3: memref<1x128xf32, #tpu.memory_space<vmem>>, %arg4: memref<128x128xbf16, #tpu.memory_space<vmem>>, %arg5: memref<1x128xf32, #tpu.memory_space<vmem>>, %arg6: memref<8x128xf32, #tpu.memory_space<vmem>>) attributes {dimension_semantics = [#tpu.dimension_semantics<parallel>], iteration_bounds = array<i64: 1>, scalar_prefetch = 0 : i64, scratch_operands = 0 : i64, tpu.core_type = #tpu.core_type<tc>, window_params = [{transform_indices = @transform_0, window_bounds = array<i64: 4, 8, 67>}, {pipeline_mode = #tpu.pipeline_mode<synchronous>, transform_indices = @transform_1, window_bounds = array<i64: 67, 128>}, {pipeline_mode = #tpu.pipeline_mode<synchronous>, transform_indices = @transform_2, window_bounds = array<i64: 1, 128>}, {pipeline_mode = #tpu.pipeline_mode<synchronous>, transform_indices = @transform_3, window_bounds = array<i64: 128, 128>}, {pipeline_mode = #tpu.pipeline_mode<synchronous>, transform_indices = @transform_4, window_bounds = array<i64: 1, 128>}, {transform_indices = @transform_5, window_bounds = array<i64: 8, 128>}]} {
    %c0 = arith.constant 0 : index
    %c0_0 = arith.constant 0 : index
    %c0_1 = arith.constant 0 : index
    %0 = vector.load %arg1[%c0, %c0_0, %c0_1] : memref<4x8x67xf32, #tpu.memory_space<vmem>>, vector<1x8x67xf32>
    %1 = vector.shape_cast %0 : vector<1x8x67xf32> to vector<8x67xf32>
    %2 = arith.truncf %1 : vector<8x67xf32> to vector<8x67xbf16>
    %c0_2 = arith.constant 0 : index
    %c0_3 = arith.constant 0 : index
    %3 = vector.load %arg2[%c0_2, %c0_3] : memref<67x128xbf16, #tpu.memory_space<vmem>>, vector<67x128xbf16>
    %cst = arith.constant dense<0.000000e+00> : vector<8x128xf32>
    %4 = tpu.matmul %2, %3, %cst {dimension_numbers = #tpu.dot_dimension_numbers<[1], [0], [0], [1], [0, 0, 1, 1], [], []>} : vector<8x67xbf16>, vector<67x128xbf16>, vector<8x128xf32> -> vector<8x128xf32>
    %c0_4 = arith.constant 0 : index
    %c0_5 = arith.constant 0 : index
    %5 = vector.load %arg3[%c0_4, %c0_5] : memref<1x128xf32, #tpu.memory_space<vmem>>, vector<1x128xf32>
    %6 = vector.broadcast %5 : vector<1x128xf32> to vector<8x128xf32>
    %7 = arith.addf %4, %6 : vector<8x128xf32>
    %cst_6 = arith.constant 0.000000e+00 : f32
    %8 = vector.broadcast %cst_6 : f32 to vector<8x128xf32>
    %9 = arith.maximumf %7, %8 : vector<8x128xf32>
    %10 = arith.truncf %9 : vector<8x128xf32> to vector<8x128xbf16>
    %c0_7 = arith.constant 0 : index
    %c0_8 = arith.constant 0 : index
    %11 = vector.load %arg4[%c0_7, %c0_8] : memref<128x128xbf16, #tpu.memory_space<vmem>>, vector<128x128xbf16>
    %cst_9 = arith.constant dense<0.000000e+00> : vector<8x128xf32>
    %12 = tpu.matmul %10, %11, %cst_9 {dimension_numbers = #tpu.dot_dimension_numbers<[1], [0], [0], [1], [0, 0, 1, 1], [], []>} : vector<8x128xbf16>, vector<128x128xbf16>, vector<8x128xf32> -> vector<8x128xf32>
    %c0_10 = arith.constant 0 : index
    %c0_11 = arith.constant 0 : index
    %13 = vector.load %arg5[%c0_10, %c0_11] : memref<1x128xf32, #tpu.memory_space<vmem>>, vector<1x128xf32>
    %14 = vector.broadcast %13 : vector<1x128xf32> to vector<8x128xf32>
    %15 = arith.addf %12, %14 : vector<8x128xf32>
    %cst_12 = arith.constant 0.000000e+00 : f32
    %16 = vector.broadcast %cst_12 : f32 to vector<8x128xf32>
    %17 = arith.maximumf %15, %16 : vector<8x128xf32>
    %c1 = arith.constant 1 : index
    %c0_13 = arith.constant 0 : index
    %c0_14 = arith.constant 0 : index
    %18 = vector.load %arg1[%c1, %c0_13, %c0_14] : memref<4x8x67xf32, #tpu.memory_space<vmem>>, vector<1x8x67xf32>
    %19 = vector.shape_cast %18 : vector<1x8x67xf32> to vector<8x67xf32>
    %20 = arith.truncf %19 : vector<8x67xf32> to vector<8x67xbf16>
    %c0_15 = arith.constant 0 : index
    %c0_16 = arith.constant 0 : index
    %21 = vector.load %arg2[%c0_15, %c0_16] : memref<67x128xbf16, #tpu.memory_space<vmem>>, vector<67x128xbf16>
    %cst_17 = arith.constant dense<0.000000e+00> : vector<8x128xf32>
    %22 = tpu.matmul %20, %21, %cst_17 {dimension_numbers = #tpu.dot_dimension_numbers<[1], [0], [0], [1], [0, 0, 1, 1], [], []>} : vector<8x67xbf16>, vector<67x128xbf16>, vector<8x128xf32> -> vector<8x128xf32>
    %c0_18 = arith.constant 0 : index
    %c0_19 = arith.constant 0 : index
    %23 = vector.load %arg3[%c0_18, %c0_19] : memref<1x128xf32, #tpu.memory_space<vmem>>, vector<1x128xf32>
    %24 = vector.broadcast %23 : vector<1x128xf32> to vector<8x128xf32>
    %25 = arith.addf %22, %24 : vector<8x128xf32>
    %cst_20 = arith.constant 0.000000e+00 : f32
    %26 = vector.broadcast %cst_20 : f32 to vector<8x128xf32>
    %27 = arith.maximumf %25, %26 : vector<8x128xf32>
    %28 = arith.truncf %27 : vector<8x128xf32> to vector<8x128xbf16>
    %c0_21 = arith.constant 0 : index
    %c0_22 = arith.constant 0 : index
    %29 = vector.load %arg4[%c0_21, %c0_22] : memref<128x128xbf16, #tpu.memory_space<vmem>>, vector<128x128xbf16>
    %cst_23 = arith.constant dense<0.000000e+00> : vector<8x128xf32>
    %30 = tpu.matmul %28, %29, %cst_23 {dimension_numbers = #tpu.dot_dimension_numbers<[1], [0], [0], [1], [0, 0, 1, 1], [], []>} : vector<8x128xbf16>, vector<128x128xbf16>, vector<8x128xf32> -> vector<8x128xf32>
    %c0_24 = arith.constant 0 : index
    %c0_25 = arith.constant 0 : index
    %31 = vector.load %arg5[%c0_24, %c0_25] : memref<1x128xf32, #tpu.memory_space<vmem>>, vector<1x128xf32>
    %32 = vector.broadcast %31 : vector<1x128xf32> to vector<8x128xf32>
    %33 = arith.addf %30, %32 : vector<8x128xf32>
    %cst_26 = arith.constant 0.000000e+00 : f32
    %34 = vector.broadcast %cst_26 : f32 to vector<8x128xf32>
    %35 = arith.maximumf %33, %34 : vector<8x128xf32>
    %36 = arith.maximumf %17, %35 : vector<8x128xf32>
    %c2 = arith.constant 2 : index
    %c0_27 = arith.constant 0 : index
    %c0_28 = arith.constant 0 : index
    %37 = vector.load %arg1[%c2, %c0_27, %c0_28] : memref<4x8x67xf32, #tpu.memory_space<vmem>>, vector<1x8x67xf32>
    %38 = vector.shape_cast %37 : vector<1x8x67xf32> to vector<8x67xf32>
    %39 = arith.truncf %38 : vector<8x67xf32> to vector<8x67xbf16>
    %c0_29 = arith.constant 0 : index
    %c0_30 = arith.constant 0 : index
    %40 = vector.load %arg2[%c0_29, %c0_30] : memref<67x128xbf16, #tpu.memory_space<vmem>>, vector<67x128xbf16>
    %cst_31 = arith.constant dense<0.000000e+00> : vector<8x128xf32>
    %41 = tpu.matmul %39, %40, %cst_31 {dimension_numbers = #tpu.dot_dimension_numbers<[1], [0], [0], [1], [0, 0, 1, 1], [], []>} : vector<8x67xbf16>, vector<67x128xbf16>, vector<8x128xf32> -> vector<8x128xf32>
    %c0_32 = arith.constant 0 : index
    %c0_33 = arith.constant 0 : index
    %42 = vector.load %arg3[%c0_32, %c0_33] : memref<1x128xf32, #tpu.memory_space<vmem>>, vector<1x128xf32>
    %43 = vector.broadcast %42 : vector<1x128xf32> to vector<8x128xf32>
    %44 = arith.addf %41, %43 : vector<8x128xf32>
    %cst_34 = arith.constant 0.000000e+00 : f32
    %45 = vector.broadcast %cst_34 : f32 to vector<8x128xf32>
    %46 = arith.maximumf %44, %45 : vector<8x128xf32>
    %47 = arith.truncf %46 : vector<8x128xf32> to vector<8x128xbf16>
    %c0_35 = arith.constant 0 : index
    %c0_36 = arith.constant 0 : index
    %48 = vector.load %arg4[%c0_35, %c0_36] : memref<128x128xbf16, #tpu.memory_space<vmem>>, vector<128x128xbf16>
    %cst_37 = arith.constant dense<0.000000e+00> : vector<8x128xf32>
    %49 = tpu.matmul %47, %48, %cst_37 {dimension_numbers = #tpu.dot_dimension_numbers<[1], [0], [0], [1], [0, 0, 1, 1], [], []>} : vector<8x128xbf16>, vector<128x128xbf16>, vector<8x128xf32> -> vector<8x128xf32>
    %c0_38 = arith.constant 0 : index
    %c0_39 = arith.constant 0 : index
    %50 = vector.load %arg5[%c0_38, %c0_39] : memref<1x128xf32, #tpu.memory_space<vmem>>, vector<1x128xf32>
    %51 = vector.broadcast %50 : vector<1x128xf32> to vector<8x128xf32>
    %52 = arith.addf %49, %51 : vector<8x128xf32>
    %cst_40 = arith.constant 0.000000e+00 : f32
    %53 = vector.broadcast %cst_40 : f32 to vector<8x128xf32>
    %54 = arith.maximumf %52, %53 : vector<8x128xf32>
    %55 = arith.maximumf %36, %54 : vector<8x128xf32>
    %c3 = arith.constant 3 : index
    %c0_41 = arith.constant 0 : index
    %c0_42 = arith.constant 0 : index
    %56 = vector.load %arg1[%c3, %c0_41, %c0_42] : memref<4x8x67xf32, #tpu.memory_space<vmem>>, vector<1x8x67xf32>
    %57 = vector.shape_cast %56 : vector<1x8x67xf32> to vector<8x67xf32>
    %58 = arith.truncf %57 : vector<8x67xf32> to vector<8x67xbf16>
    %c0_43 = arith.constant 0 : index
    %c0_44 = arith.constant 0 : index
    %59 = vector.load %arg2[%c0_43, %c0_44] : memref<67x128xbf16, #tpu.memory_space<vmem>>, vector<67x128xbf16>
    %cst_45 = arith.constant dense<0.000000e+00> : vector<8x128xf32>
    %60 = tpu.matmul %58, %59, %cst_45 {dimension_numbers = #tpu.dot_dimension_numbers<[1], [0], [0], [1], [0, 0, 1, 1], [], []>} : vector<8x67xbf16>, vector<67x128xbf16>, vector<8x128xf32> -> vector<8x128xf32>
    %c0_46 = arith.constant 0 : index
    %c0_47 = arith.constant 0 : index
    %61 = vector.load %arg3[%c0_46, %c0_47] : memref<1x128xf32, #tpu.memory_space<vmem>>, vector<1x128xf32>
    %62 = vector.broadcast %61 : vector<1x128xf32> to vector<8x128xf32>
    %63 = arith.addf %60, %62 : vector<8x128xf32>
    %cst_48 = arith.constant 0.000000e+00 : f32
    %64 = vector.broadcast %cst_48 : f32 to vector<8x128xf32>
    %65 = arith.maximumf %63, %64 : vector<8x128xf32>
    %66 = arith.truncf %65 : vector<8x128xf32> to vector<8x128xbf16>
    %c0_49 = arith.constant 0 : index
    %c0_50 = arith.constant 0 : index
    %67 = vector.load %arg4[%c0_49, %c0_50] : memref<128x128xbf16, #tpu.memory_space<vmem>>, vector<128x128xbf16>
    %cst_51 = arith.constant dense<0.000000e+00> : vector<8x128xf32>
    %68 = tpu.matmul %66, %67, %cst_51 {dimension_numbers = #tpu.dot_dimension_numbers<[1], [0], [0], [1], [0, 0, 1, 1], [], []>} : vector<8x128xbf16>, vector<128x128xbf16>, vector<8x128xf32> -> vector<8x128xf32>
    %c0_52 = arith.constant 0 : index
    %c0_53 = arith.constant 0 : index
    %69 = vector.load %arg5[%c0_52, %c0_53] : memref<1x128xf32, #tpu.memory_space<vmem>>, vector<1x128xf32>
    %70 = vector.broadcast %69 : vector<1x128xf32> to vector<8x128xf32>
    %71 = arith.addf %68, %70 : vector<8x128xf32>
    %cst_54 = arith.constant 0.000000e+00 : f32
    %72 = vector.broadcast %cst_54 : f32 to vector<8x128xf32>
    %73 = arith.maximumf %71, %72 : vector<8x128xf32>
    %74 = arith.maximumf %55, %73 : vector<8x128xf32>
    %c0_55 = arith.constant 0 : index
    %c0_56 = arith.constant 0 : index
    %75 = vector.load %arg6[%c0_55, %c0_56] : memref<8x128xf32, #tpu.memory_space<vmem>>, vector<8x128xf32>
    tpu.vector_store %arg6[%c0_55, %c0_56], %74 {strides = array<i32>} : memref<8x128xf32, #tpu.memory_space<vmem>>, vector<8x128xf32>,
    return
  }
  func.func @transform_0(%arg0: i32) -> (i32, i32, i32) {
    %c0_i32 = arith.constant 0 : i32
    %c0_i32_0 = arith.constant 0 : i32
    %c0_i32_1 = arith.constant 0 : i32
    return %c0_i32, %arg0, %c0_i32_0 : i32, i32, i32
  }
  func.func @transform_1(%arg0: i32) -> (i32, i32) {
    %c0_i32 = arith.constant 0 : i32
    %c0_i32_0 = arith.constant 0 : i32
    %c0_i32_1 = arith.constant 0 : i32
    return %c0_i32, %c0_i32_0 : i32, i32
  }
  func.func @transform_2(%arg0: i32) -> (i32, i32) {
    %c0_i32 = arith.constant 0 : i32
    %c0_i32_0 = arith.constant 0 : i32
    %c0_i32_1 = arith.constant 0 : i32
    return %c0_i32, %c0_i32_0 : i32, i32
  }
  func.func @transform_3(%arg0: i32) -> (i32, i32) {
    %c0_i32 = arith.constant 0 : i32
    %c0_i32_0 = arith.constant 0 : i32
    %c0_i32_1 = arith.constant 0 : i32
    return %c0_i32, %c0_i32_0 : i32, i32
  }
  func.func @transform_4(%arg0: i32) -> (i32, i32) {
    %c0_i32 = arith.constant 0 : i32
    %c0_i32_0 = arith.constant 0 : i32
    %c0_i32_1 = arith.constant 0 : i32
    return %c0_i32, %c0_i32_0 : i32, i32
  }
  func.func @transform_5(%arg0: i32) -> (i32, i32) {
    %c0_i32 = arith.constant 0 : i32
    %c0_i32_0 = arith.constant 0 : i32
    return %arg0, %c0_i32 : i32, i32
  }
}

module attributes {stable_mosaic.version = 11 : i64} {
  func.func @_mlp_kernel(%arg0: i32, %arg1: memref<8x128xf32, #tpu.memory_space<vmem>>, %arg2: memref<128x32xbf16, #tpu.memory_space<vmem>>, %arg3: memref<1x32xf32, #tpu.memory_space<vmem>>, %arg4: memref<32x96xbf16, #tpu.memory_space<vmem>>, %arg5: memref<8x96xf32, #tpu.memory_space<vmem>>) attributes {dimension_semantics = [#tpu.dimension_semantics<parallel>], iteration_bounds = array<i64: 1>, scalar_prefetch = 0 : i64, scratch_operands = 0 : i64, tpu.core_type = #tpu.core_type<tc>, window_params = [{transform_indices = @transform_0, window_bounds = array<i64: 8, 128>}, {pipeline_mode = #tpu.pipeline_mode<synchronous>, transform_indices = @transform_1, window_bounds = array<i64: 128, 32>}, {pipeline_mode = #tpu.pipeline_mode<synchronous>, transform_indices = @transform_2, window_bounds = array<i64: 1, 32>}, {pipeline_mode = #tpu.pipeline_mode<synchronous>, transform_indices = @transform_3, window_bounds = array<i64: 32, 96>}, {transform_indices = @transform_4, window_bounds = array<i64: 8, 96>}]} {
    %c0 = arith.constant 0 : index
    %c0_0 = arith.constant 0 : index
    %0 = vector.load %arg1[%c0, %c0_0] : memref<8x128xf32, #tpu.memory_space<vmem>>, vector<8x128xf32>
    %1 = arith.truncf %0 : vector<8x128xf32> to vector<8x128xbf16>
    %c0_1 = arith.constant 0 : index
    %c0_2 = arith.constant 0 : index
    %2 = vector.load %arg2[%c0_1, %c0_2] : memref<128x32xbf16, #tpu.memory_space<vmem>>, vector<128x32xbf16>
    %cst = arith.constant dense<0.000000e+00> : vector<8x32xf32>
    %3 = tpu.matmul %1, %2, %cst {dimension_numbers = #tpu.dot_dimension_numbers<[1], [0], [0], [1], [0, 0, 1, 1], [], []>} : vector<8x128xbf16>, vector<128x32xbf16>, vector<8x32xf32> -> vector<8x32xf32>
    %c0_3 = arith.constant 0 : index
    %c0_4 = arith.constant 0 : index
    %4 = vector.load %arg3[%c0_3, %c0_4] : memref<1x32xf32, #tpu.memory_space<vmem>>, vector<1x32xf32>
    %5 = vector.broadcast %4 : vector<1x32xf32> to vector<8x32xf32>
    %6 = arith.addf %3, %5 : vector<8x32xf32>
    %7 = arith.truncf %6 : vector<8x32xf32> to vector<8x32xbf16>
    %c0_5 = arith.constant 0 : index
    %c0_6 = arith.constant 0 : index
    %8 = vector.load %arg4[%c0_5, %c0_6] : memref<32x96xbf16, #tpu.memory_space<vmem>>, vector<32x96xbf16>
    %cst_7 = arith.constant dense<0.000000e+00> : vector<8x96xf32>
    %9 = tpu.matmul %7, %8, %cst_7 {dimension_numbers = #tpu.dot_dimension_numbers<[1], [0], [0], [1], [0, 0, 1, 1], [], []>} : vector<8x32xbf16>, vector<32x96xbf16>, vector<8x96xf32> -> vector<8x96xf32>
    %c0_8 = arith.constant 0 : index
    %c0_9 = arith.constant 0 : index
    %10 = vector.load %arg5[%c0_8, %c0_9] : memref<8x96xf32, #tpu.memory_space<vmem>>, vector<8x96xf32>
    tpu.vector_store %arg5[%c0_8, %c0_9], %9 {strides = array<i32>} : memref<8x96xf32, #tpu.memory_space<vmem>>, vector<8x96xf32>,
    return
  }
  func.func @transform_0(%arg0: i32) -> (i32, i32) {
    %c0_i32 = arith.constant 0 : i32
    %c0_i32_0 = arith.constant 0 : i32
    return %arg0, %c0_i32 : i32, i32
  }
  func.func @transform_1(%arg0: i32) -> (i32, i32) {
    %c0_i32 = arith.constant 0 : i32
    %c0_i32_0 = arith.constant 0 : i32
    %c0_i32_1 = arith.constant 0 : i32
    return %c0_i32, %c0_i32_0 : i32, i32
  }
  func.func @transform_2(%arg0: i32) -> (i32, i32) {
    %c0_i32 = arith.constant 0 : i32
    %c0_i32_0 = arith.constant 0 : i32
    %c0_i32_1 = arith.constant 0 : i32
    return %c0_i32, %c0_i32_0 : i32, i32
  }
  func.func @transform_3(%arg0: i32) -> (i32, i32) {
    %c0_i32 = arith.constant 0 : i32
    %c0_i32_0 = arith.constant 0 : i32
    %c0_i32_1 = arith.constant 0 : i32
    return %c0_i32, %c0_i32_0 : i32, i32
  }
  func.func @transform_4(%arg0: i32) -> (i32, i32) {
    %c0_i32 = arith.constant 0 : i32
    %c0_i32_0 = arith.constant 0 : i32
    return %arg0, %c0_i32 : i32, i32
  }
}

module attributes {stable_mosaic.version = 11 : i64} {
  func.func @_pt_attn_kernel(%arg0: i32, %arg1: memref<8x32xf32, #tpu.memory_space<vmem>>, %arg2: memref<8x128xf32, #tpu.memory_space<vmem>>, %arg3: memref<8x128xf32, #tpu.memory_space<vmem>>, %arg4: memref<8x12xf32, #tpu.memory_space<vmem>>, %arg5: memref<8x128xf32, #tpu.memory_space<vmem>>, %arg6: memref<12x128xbf16, #tpu.memory_space<vmem>>, %arg7: memref<1x128xf32, #tpu.memory_space<vmem>>, %arg8: memref<128x128xbf16, #tpu.memory_space<vmem>>, %arg9: memref<1x128xf32, #tpu.memory_space<vmem>>, %arg10: memref<128x128xbf16, #tpu.memory_space<vmem>>, %arg11: memref<1x128xf32, #tpu.memory_space<vmem>>, %arg12: memref<128x128xbf16, #tpu.memory_space<vmem>>, %arg13: memref<1x128xf32, #tpu.memory_space<vmem>>, %arg14: memref<32x128xbf16, #tpu.memory_space<vmem>>, %arg15: memref<1x128xf32, #tpu.memory_space<vmem>>, %arg16: memref<8x128xf32, #tpu.memory_space<vmem>>) attributes {dimension_semantics = [#tpu.dimension_semantics<parallel>], iteration_bounds = array<i64: 1>, scalar_prefetch = 0 : i64, scratch_operands = 0 : i64, tpu.core_type = #tpu.core_type<tc>, window_params = [{transform_indices = @transform_0, window_bounds = array<i64: 8, 32>}, {transform_indices = @transform_1, window_bounds = array<i64: 8, 128>}, {transform_indices = @transform_2, window_bounds = array<i64: 8, 128>}, {transform_indices = @transform_3, window_bounds = array<i64: 8, 12>}, {transform_indices = @transform_4, window_bounds = array<i64: 8, 128>}, {pipeline_mode = #tpu.pipeline_mode<synchronous>, transform_indices = @transform_5, window_bounds = array<i64: 12, 128>}, {pipeline_mode = #tpu.pipeline_mode<synchronous>, transform_indices = @transform_6, window_bounds = array<i64: 1, 128>}, {pipeline_mode = #tpu.pipeline_mode<synchronous>, transform_indices = @transform_7, window_bounds = array<i64: 128, 128>}, {pipeline_mode = #tpu.pipeline_mode<synchronous>, transform_indices = @transform_8, window_bounds = array<i64: 1, 128>}, {pipeline_mode = #tpu.pipeline_mode<synchronous>, transform_indices = @transform_9, window_bounds = array<i64: 128, 128>}, {pipeline_mode = #tpu.pipeline_mode<synchronous>, transform_indices = @transform_10, window_bounds = array<i64: 1, 128>}, {pipeline_mode = #tpu.pipeline_mode<synchronous>, transform_indices = @transform_11, window_bounds = array<i64: 128, 128>}, {pipeline_mode = #tpu.pipeline_mode<synchronous>, transform_indices = @transform_12, window_bounds = array<i64: 1, 128>}, {pipeline_mode = #tpu.pipeline_mode<synchronous>, transform_indices = @transform_13, window_bounds = array<i64: 32, 128>}, {pipeline_mode = #tpu.pipeline_mode<synchronous>, transform_indices = @transform_14, window_bounds = array<i64: 1, 128>}, {transform_indices = @transform_15, window_bounds = array<i64: 8, 128>}]} {
    %c0 = arith.constant 0 : index
    %c0_0 = arith.constant 0 : index
    %0 = vector.load %arg4[%c0, %c0_0] : memref<8x12xf32, #tpu.memory_space<vmem>>, vector<8x12xf32>
    %1 = arith.truncf %0 : vector<8x12xf32> to vector<8x12xbf16>
    %c0_1 = arith.constant 0 : index
    %c0_2 = arith.constant 0 : index
    %2 = vector.load %arg6[%c0_1, %c0_2] : memref<12x128xbf16, #tpu.memory_space<vmem>>, vector<12x128xbf16>
    %cst = arith.constant dense<0.000000e+00> : vector<8x128xf32>
    %3 = tpu.matmul %1, %2, %cst {dimension_numbers = #tpu.dot_dimension_numbers<[1], [0], [0], [1], [0, 0, 1, 1], [], []>} : vector<8x12xbf16>, vector<12x128xbf16>, vector<8x128xf32> -> vector<8x128xf32>
    %c0_3 = arith.constant 0 : index
    %c0_4 = arith.constant 0 : index
    %4 = vector.load %arg7[%c0_3, %c0_4] : memref<1x128xf32, #tpu.memory_space<vmem>>, vector<1x128xf32>
    %5 = vector.broadcast %4 : vector<1x128xf32> to vector<8x128xf32>
    %6 = arith.addf %3, %5 : vector<8x128xf32>
    %cst_5 = arith.constant 0.000000e+00 : f32
    %7 = vector.broadcast %cst_5 : f32 to vector<8x128xf32>
    %8 = arith.maximumf %6, %7 : vector<8x128xf32>
    %9 = arith.truncf %8 : vector<8x128xf32> to vector<8x128xbf16>
    %c0_6 = arith.constant 0 : index
    %c0_7 = arith.constant 0 : index
    %10 = vector.load %arg8[%c0_6, %c0_7] : memref<128x128xbf16, #tpu.memory_space<vmem>>, vector<128x128xbf16>
    %cst_8 = arith.constant dense<0.000000e+00> : vector<8x128xf32>
    %11 = tpu.matmul %9, %10, %cst_8 {dimension_numbers = #tpu.dot_dimension_numbers<[1], [0], [0], [1], [0, 0, 1, 1], [], []>} : vector<8x128xbf16>, vector<128x128xbf16>, vector<8x128xf32> -> vector<8x128xf32>
    %c0_9 = arith.constant 0 : index
    %c0_10 = arith.constant 0 : index
    %12 = vector.load %arg9[%c0_9, %c0_10] : memref<1x128xf32, #tpu.memory_space<vmem>>, vector<1x128xf32>
    %13 = vector.broadcast %12 : vector<1x128xf32> to vector<8x128xf32>
    %14 = arith.addf %11, %13 : vector<8x128xf32>
    %c0_11 = arith.constant 0 : index
    %c0_12 = arith.constant 0 : index
    %15 = vector.load %arg1[%c0_11, %c0_12] : memref<8x32xf32, #tpu.memory_space<vmem>>, vector<8x32xf32>
    %16 = tpu.concatenate %15, %15, %15, %15 in 1 : vector<8x32xf32>, vector<8x32xf32>, vector<8x32xf32>, vector<8x32xf32> -> vector<8x128xf32>
    %c0_13 = arith.constant 0 : index
    %c0_14 = arith.constant 0 : index
    %17 = vector.load %arg2[%c0_13, %c0_14] : memref<8x128xf32, #tpu.memory_space<vmem>>, vector<8x128xf32>
    %18 = arith.subf %16, %17 : vector<8x128xf32>
    %19 = arith.addf %18, %14 : vector<8x128xf32>
    %20 = arith.truncf %19 : vector<8x128xf32> to vector<8x128xbf16>
    %c0_15 = arith.constant 0 : index
    %c0_16 = arith.constant 0 : index
    %21 = vector.load %arg10[%c0_15, %c0_16] : memref<128x128xbf16, #tpu.memory_space<vmem>>, vector<128x128xbf16>
    %cst_17 = arith.constant dense<0.000000e+00> : vector<8x128xf32>
    %22 = tpu.matmul %20, %21, %cst_17 {dimension_numbers = #tpu.dot_dimension_numbers<[1], [0], [0], [1], [0, 0, 1, 1], [], []>} : vector<8x128xbf16>, vector<128x128xbf16>, vector<8x128xf32> -> vector<8x128xf32>
    %c0_18 = arith.constant 0 : index
    %c0_19 = arith.constant 0 : index
    %23 = vector.load %arg11[%c0_18, %c0_19] : memref<1x128xf32, #tpu.memory_space<vmem>>, vector<1x128xf32>
    %24 = vector.broadcast %23 : vector<1x128xf32> to vector<8x128xf32>
    %25 = arith.addf %22, %24 : vector<8x128xf32>
    %cst_20 = arith.constant 0.000000e+00 : f32
    %26 = vector.broadcast %cst_20 : f32 to vector<8x128xf32>
    %27 = arith.maximumf %25, %26 : vector<8x128xf32>
    %28 = arith.truncf %27 : vector<8x128xf32> to vector<8x128xbf16>
    %c0_21 = arith.constant 0 : index
    %c0_22 = arith.constant 0 : index
    %29 = vector.load %arg12[%c0_21, %c0_22] : memref<128x128xbf16, #tpu.memory_space<vmem>>, vector<128x128xbf16>
    %cst_23 = arith.constant dense<0.000000e+00> : vector<8x128xf32>
    %30 = tpu.matmul %28, %29, %cst_23 {dimension_numbers = #tpu.dot_dimension_numbers<[1], [0], [0], [1], [0, 0, 1, 1], [], []>} : vector<8x128xbf16>, vector<128x128xbf16>, vector<8x128xf32> -> vector<8x128xf32>
    %c0_24 = arith.constant 0 : index
    %c0_25 = arith.constant 0 : index
    %31 = vector.load %arg13[%c0_24, %c0_25] : memref<1x128xf32, #tpu.memory_space<vmem>>, vector<1x128xf32>
    %32 = vector.broadcast %31 : vector<1x128xf32> to vector<8x128xf32>
    %33 = arith.addf %30, %32 : vector<8x128xf32>
    %cst_26 = arith.constant 0.176776692 : f32
    %34 = vector.broadcast %cst_26 : f32 to vector<8x128xf32>
    %35 = arith.mulf %33, %34 : vector<8x128xf32>
    %c0_27 = arith.constant 0 : index
    %c0_28 = arith.constant 0 : index
    %36 = vector.load %arg3[%c0_27, %c0_28] : memref<8x128xf32, #tpu.memory_space<vmem>>, vector<8x128xf32>
    %37 = arith.addf %36, %14 : vector<8x128xf32>
    %38 = vector.extract_strided_slice %35 {offsets = [0, 0], sizes = [8, 32], strides = [1, 1]} : vector<8x128xf32> to vector<8x32xf32>
    %39 = vector.extract_strided_slice %35 {offsets = [0, 32], sizes = [8, 32], strides = [1, 1]} : vector<8x128xf32> to vector<8x32xf32>
    %40 = vector.extract_strided_slice %35 {offsets = [0, 64], sizes = [8, 32], strides = [1, 1]} : vector<8x128xf32> to vector<8x32xf32>
    %41 = vector.extract_strided_slice %35 {offsets = [0, 96], sizes = [8, 32], strides = [1, 1]} : vector<8x128xf32> to vector<8x32xf32>
    %42 = vector.extract_strided_slice %37 {offsets = [0, 0], sizes = [8, 32], strides = [1, 1]} : vector<8x128xf32> to vector<8x32xf32>
    %43 = vector.extract_strided_slice %37 {offsets = [0, 32], sizes = [8, 32], strides = [1, 1]} : vector<8x128xf32> to vector<8x32xf32>
    %44 = vector.extract_strided_slice %37 {offsets = [0, 64], sizes = [8, 32], strides = [1, 1]} : vector<8x128xf32> to vector<8x32xf32>
    %45 = vector.extract_strided_slice %37 {offsets = [0, 96], sizes = [8, 32], strides = [1, 1]} : vector<8x128xf32> to vector<8x32xf32>
    %46 = arith.maximumf %38, %39 : vector<8x32xf32>
    %47 = arith.maximumf %46, %40 : vector<8x32xf32>
    %48 = arith.maximumf %47, %41 : vector<8x32xf32>
    %49 = arith.subf %38, %48 : vector<8x32xf32>
    %50 = math.exp %49 : vector<8x32xf32>
    %51 = arith.subf %39, %48 : vector<8x32xf32>
    %52 = math.exp %51 : vector<8x32xf32>
    %53 = arith.subf %40, %48 : vector<8x32xf32>
    %54 = math.exp %53 : vector<8x32xf32>
    %55 = arith.subf %41, %48 : vector<8x32xf32>
    %56 = math.exp %55 : vector<8x32xf32>
    %57 = arith.addf %50, %52 : vector<8x32xf32>
    %58 = arith.addf %57, %54 : vector<8x32xf32>
    %59 = arith.addf %58, %56 : vector<8x32xf32>
    %60 = tpu.reciprocal %59 {approx = true} : vector<8x32xf32> -> vector<8x32xf32>
    %61 = arith.mulf %50, %42 : vector<8x32xf32>
    %62 = arith.mulf %52, %43 : vector<8x32xf32>
    %63 = arith.addf %61, %62 : vector<8x32xf32>
    %64 = arith.mulf %54, %44 : vector<8x32xf32>
    %65 = arith.addf %63, %64 : vector<8x32xf32>
    %66 = arith.mulf %56, %45 : vector<8x32xf32>
    %67 = arith.addf %65, %66 : vector<8x32xf32>
    %68 = arith.mulf %67, %60 : vector<8x32xf32>
    %69 = arith.truncf %68 : vector<8x32xf32> to vector<8x32xbf16>
    %c0_29 = arith.constant 0 : index
    %c0_30 = arith.constant 0 : index
    %70 = vector.load %arg14[%c0_29, %c0_30] : memref<32x128xbf16, #tpu.memory_space<vmem>>, vector<32x128xbf16>
    %cst_31 = arith.constant dense<0.000000e+00> : vector<8x128xf32>
    %71 = tpu.matmul %69, %70, %cst_31 {dimension_numbers = #tpu.dot_dimension_numbers<[1], [0], [0], [1], [0, 0, 1, 1], [], []>} : vector<8x32xbf16>, vector<32x128xbf16>, vector<8x128xf32> -> vector<8x128xf32>
    %c0_32 = arith.constant 0 : index
    %c0_33 = arith.constant 0 : index
    %72 = vector.load %arg15[%c0_32, %c0_33] : memref<1x128xf32, #tpu.memory_space<vmem>>, vector<1x128xf32>
    %73 = vector.broadcast %72 : vector<1x128xf32> to vector<8x128xf32>
    %74 = arith.addf %71, %73 : vector<8x128xf32>
    %c0_34 = arith.constant 0 : index
    %c0_35 = arith.constant 0 : index
    %75 = vector.load %arg5[%c0_34, %c0_35] : memref<8x128xf32, #tpu.memory_space<vmem>>, vector<8x128xf32>
    %76 = arith.addf %74, %75 : vector<8x128xf32>
    %c0_36 = arith.constant 0 : index
    %c0_37 = arith.constant 0 : index
    %77 = vector.load %arg16[%c0_36, %c0_37] : memref<8x128xf32, #tpu.memory_space<vmem>>, vector<8x128xf32>
    tpu.vector_store %arg16[%c0_36, %c0_37], %76 {strides = array<i32>} : memref<8x128xf32, #tpu.memory_space<vmem>>, vector<8x128xf32>,
    return
  }
  func.func @transform_0(%arg0: i32) -> (i32, i32) {
    %c0_i32 = arith.constant 0 : i32
    %c0_i32_0 = arith.constant 0 : i32
    return %arg0, %c0_i32 : i32, i32
  }
  func.func @transform_1(%arg0: i32) -> (i32, i32) {
    %c0_i32 = arith.constant 0 : i32
    %c0_i32_0 = arith.constant 0 : i32
    return %arg0, %c0_i32 : i32, i32
  }
  func.func @transform_2(%arg0: i32) -> (i32, i32) {
    %c0_i32 = arith.constant 0 : i32
    %c0_i32_0 = arith.constant 0 : i32
    return %arg0, %c0_i32 : i32, i32
  }
  func.func @transform_3(%arg0: i32) -> (i32, i32) {
    %c0_i32 = arith.constant 0 : i32
    %c0_i32_0 = arith.constant 0 : i32
    return %arg0, %c0_i32 : i32, i32
  }
  func.func @transform_4(%arg0: i32) -> (i32, i32) {
    %c0_i32 = arith.constant 0 : i32
    %c0_i32_0 = arith.constant 0 : i32
    return %arg0, %c0_i32 : i32, i32
  }
  func.func @transform_5(%arg0: i32) -> (i32, i32) {
    %c0_i32 = arith.constant 0 : i32
    %c0_i32_0 = arith.constant 0 : i32
    %c0_i32_1 = arith.constant 0 : i32
    return %c0_i32, %c0_i32_0 : i32, i32
  }
  func.func @transform_6(%arg0: i32) -> (i32, i32) {
    %c0_i32 = arith.constant 0 : i32
    %c0_i32_0 = arith.constant 0 : i32
    %c0_i32_1 = arith.constant 0 : i32
    return %c0_i32, %c0_i32_0 : i32, i32
  }
  func.func @transform_7(%arg0: i32) -> (i32, i32) {
    %c0_i32 = arith.constant 0 : i32
    %c0_i32_0 = arith.constant 0 : i32
    %c0_i32_1 = arith.constant 0 : i32
    return %c0_i32, %c0_i32_0 : i32, i32
  }
  func.func @transform_8(%arg0: i32) -> (i32, i32) {
    %c0_i32 = arith.constant 0 : i32
    %c0_i32_0 = arith.constant 0 : i32
    %c0_i32_1 = arith.constant 0 : i32
    return %c0_i32, %c0_i32_0 : i32, i32
  }
  func.func @transform_9(%arg0: i32) -> (i32, i32) {
    %c0_i32 = arith.constant 0 : i32
    %c0_i32_0 = arith.constant 0 : i32
    %c0_i32_1 = arith.constant 0 : i32
    return %c0_i32, %c0_i32_0 : i32, i32
  }
  func.func @transform_10(%arg0: i32) -> (i32, i32) {
    %c0_i32 = arith.constant 0 : i32
    %c0_i32_0 = arith.constant 0 : i32
    %c0_i32_1 = arith.constant 0 : i32
    return %c0_i32, %c0_i32_0 : i32, i32
  }
  func.func @transform_11(%arg0: i32) -> (i32, i32) {
    %c0_i32 = arith.constant 0 : i32
    %c0_i32_0 = arith.constant 0 : i32
    %c0_i32_1 = arith.constant 0 : i32
    return %c0_i32, %c0_i32_0 : i32, i32
  }
  func.func @transform_12(%arg0: i32) -> (i32, i32) {
    %c0_i32 = arith.constant 0 : i32
    %c0_i32_0 = arith.constant 0 : i32
    %c0_i32_1 = arith.constant 0 : i32
    return %c0_i32, %c0_i32_0 : i32, i32
  }
  func.func @transform_13(%arg0: i32) -> (i32, i32) {
    %c0_i32 = arith.constant 0 : i32
    %c0_i32_0 = arith.constant 0 : i32
    %c0_i32_1 = arith.constant 0 : i32
    return %c0_i32, %c0_i32_0 : i32, i32
  }
  func.func @transform_14(%arg0: i32) -> (i32, i32) {
    %c0_i32 = arith.constant 0 : i32
    %c0_i32_0 = arith.constant 0 : i32
    %c0_i32_1 = arith.constant 0 : i32
    return %c0_i32, %c0_i32_0 : i32, i32
  }
  func.func @transform_15(%arg0: i32) -> (i32, i32) {
    %c0_i32 = arith.constant 0 : i32
    %c0_i32_0 = arith.constant 0 : i32
    return %arg0, %c0_i32 : i32, i32
  }
}

module attributes {stable_mosaic.version = 11 : i64} {
  func.func @_mlp_kernel(%arg0: i32, %arg1: memref<8x128xf32, #tpu.memory_space<vmem>>, %arg2: memref<128x256xbf16, #tpu.memory_space<vmem>>, %arg3: memref<1x256xf32, #tpu.memory_space<vmem>>, %arg4: memref<256x256xbf16, #tpu.memory_space<vmem>>, %arg5: memref<1x256xf32, #tpu.memory_space<vmem>>, %arg6: memref<256x32xbf16, #tpu.memory_space<vmem>>, %arg7: memref<1x32xf32, #tpu.memory_space<vmem>>, %arg8: memref<8x32xf32, #tpu.memory_space<vmem>>) attributes {dimension_semantics = [#tpu.dimension_semantics<parallel>], iteration_bounds = array<i64: 1>, scalar_prefetch = 0 : i64, scratch_operands = 0 : i64, tpu.core_type = #tpu.core_type<tc>, window_params = [{transform_indices = @transform_0, window_bounds = array<i64: 8, 128>}, {pipeline_mode = #tpu.pipeline_mode<synchronous>, transform_indices = @transform_1, window_bounds = array<i64: 128, 256>}, {pipeline_mode = #tpu.pipeline_mode<synchronous>, transform_indices = @transform_2, window_bounds = array<i64: 1, 256>}, {pipeline_mode = #tpu.pipeline_mode<synchronous>, transform_indices = @transform_3, window_bounds = array<i64: 256, 256>}, {pipeline_mode = #tpu.pipeline_mode<synchronous>, transform_indices = @transform_4, window_bounds = array<i64: 1, 256>}, {pipeline_mode = #tpu.pipeline_mode<synchronous>, transform_indices = @transform_5, window_bounds = array<i64: 256, 32>}, {pipeline_mode = #tpu.pipeline_mode<synchronous>, transform_indices = @transform_6, window_bounds = array<i64: 1, 32>}, {transform_indices = @transform_7, window_bounds = array<i64: 8, 32>}]} {
    %c0 = arith.constant 0 : index
    %c0_0 = arith.constant 0 : index
    %0 = vector.load %arg1[%c0, %c0_0] : memref<8x128xf32, #tpu.memory_space<vmem>>, vector<8x128xf32>
    %1 = arith.truncf %0 : vector<8x128xf32> to vector<8x128xbf16>
    %c0_1 = arith.constant 0 : index
    %c0_2 = arith.constant 0 : index
    %2 = vector.load %arg2[%c0_1, %c0_2] : memref<128x256xbf16, #tpu.memory_space<vmem>>, vector<128x256xbf16>
    %cst = arith.constant dense<0.000000e+00> : vector<8x256xf32>
    %3 = tpu.matmul %1, %2, %cst {dimension_numbers = #tpu.dot_dimension_numbers<[1], [0], [0], [1], [0, 0, 1, 1], [], []>} : vector<8x128xbf16>, vector<128x256xbf16>, vector<8x256xf32> -> vector<8x256xf32>
    %c0_3 = arith.constant 0 : index
    %c0_4 = arith.constant 0 : index
    %4 = vector.load %arg3[%c0_3, %c0_4] : memref<1x256xf32, #tpu.memory_space<vmem>>, vector<1x256xf32>
    %5 = vector.broadcast %4 : vector<1x256xf32> to vector<8x256xf32>
    %6 = arith.addf %3, %5 : vector<8x256xf32>
    %cst_5 = arith.constant 0.000000e+00 : f32
    %7 = vector.broadcast %cst_5 : f32 to vector<8x256xf32>
    %8 = arith.maximumf %6, %7 : vector<8x256xf32>
    %9 = arith.truncf %8 : vector<8x256xf32> to vector<8x256xbf16>
    %c0_6 = arith.constant 0 : index
    %c0_7 = arith.constant 0 : index
    %10 = vector.load %arg4[%c0_6, %c0_7] : memref<256x256xbf16, #tpu.memory_space<vmem>>, vector<256x256xbf16>
    %cst_8 = arith.constant dense<0.000000e+00> : vector<8x256xf32>
    %11 = tpu.matmul %9, %10, %cst_8 {dimension_numbers = #tpu.dot_dimension_numbers<[1], [0], [0], [1], [0, 0, 1, 1], [], []>} : vector<8x256xbf16>, vector<256x256xbf16>, vector<8x256xf32> -> vector<8x256xf32>
    %c0_9 = arith.constant 0 : index
    %c0_10 = arith.constant 0 : index
    %12 = vector.load %arg5[%c0_9, %c0_10] : memref<1x256xf32, #tpu.memory_space<vmem>>, vector<1x256xf32>
    %13 = vector.broadcast %12 : vector<1x256xf32> to vector<8x256xf32>
    %14 = arith.addf %11, %13 : vector<8x256xf32>
    %cst_11 = arith.constant 0.000000e+00 : f32
    %15 = vector.broadcast %cst_11 : f32 to vector<8x256xf32>
    %16 = arith.maximumf %14, %15 : vector<8x256xf32>
    %17 = arith.truncf %16 : vector<8x256xf32> to vector<8x256xbf16>
    %c0_12 = arith.constant 0 : index
    %c0_13 = arith.constant 0 : index
    %18 = vector.load %arg6[%c0_12, %c0_13] : memref<256x32xbf16, #tpu.memory_space<vmem>>, vector<256x32xbf16>
    %cst_14 = arith.constant dense<0.000000e+00> : vector<8x32xf32>
    %19 = tpu.matmul %17, %18, %cst_14 {dimension_numbers = #tpu.dot_dimension_numbers<[1], [0], [0], [1], [0, 0, 1, 1], [], []>} : vector<8x256xbf16>, vector<256x32xbf16>, vector<8x32xf32> -> vector<8x32xf32>
    %c0_15 = arith.constant 0 : index
    %c0_16 = arith.constant 0 : index
    %20 = vector.load %arg7[%c0_15, %c0_16] : memref<1x32xf32, #tpu.memory_space<vmem>>, vector<1x32xf32>
    %21 = vector.broadcast %20 : vector<1x32xf32> to vector<8x32xf32>
    %22 = arith.addf %19, %21 : vector<8x32xf32>
    %c0_17 = arith.constant 0 : index
    %c0_18 = arith.constant 0 : index
    %23 = vector.load %arg8[%c0_17, %c0_18] : memref<8x32xf32, #tpu.memory_space<vmem>>, vector<8x32xf32>
    tpu.vector_store %arg8[%c0_17, %c0_18], %22 {strides = array<i32>} : memref<8x32xf32, #tpu.memory_space<vmem>>, vector<8x32xf32>,
    return
  }
  func.func @transform_0(%arg0: i32) -> (i32, i32) {
    %c0_i32 = arith.constant 0 : i32
    %c0_i32_0 = arith.constant 0 : i32
    return %arg0, %c0_i32 : i32, i32
  }
  func.func @transform_1(%arg0: i32) -> (i32, i32) {
    %c0_i32 = arith.constant 0 : i32
    %c0_i32_0 = arith.constant 0 : i32
    %c0_i32_1 = arith.constant 0 : i32
    return %c0_i32, %c0_i32_0 : i32, i32
  }
  func.func @transform_2(%arg0: i32) -> (i32, i32) {
    %c0_i32 = arith.constant 0 : i32
    %c0_i32_0 = arith.constant 0 : i32
    %c0_i32_1 = arith.constant 0 : i32
    return %c0_i32, %c0_i32_0 : i32, i32
  }
  func.func @transform_3(%arg0: i32) -> (i32, i32) {
    %c0_i32 = arith.constant 0 : i32
    %c0_i32_0 = arith.constant 0 : i32
    %c0_i32_1 = arith.constant 0 : i32
    return %c0_i32, %c0_i32_0 : i32, i32
  }
  func.func @transform_4(%arg0: i32) -> (i32, i32) {
    %c0_i32 = arith.constant 0 : i32
    %c0_i32_0 = arith.constant 0 : i32
    %c0_i32_1 = arith.constant 0 : i32
    return %c0_i32, %c0_i32_0 : i32, i32
  }
  func.func @transform_5(%arg0: i32) -> (i32, i32) {
    %c0_i32 = arith.constant 0 : i32
    %c0_i32_0 = arith.constant 0 : i32
    %c0_i32_1 = arith.constant 0 : i32
    return %c0_i32, %c0_i32_0 : i32, i32
  }
  func.func @transform_6(%arg0: i32) -> (i32, i32) {
    %c0_i32 = arith.constant 0 : i32
    %c0_i32_0 = arith.constant 0 : i32
    %c0_i32_1 = arith.constant 0 : i32
    return %c0_i32, %c0_i32_0 : i32, i32
  }
  func.func @transform_7(%arg0: i32) -> (i32, i32) {
    %c0_i32 = arith.constant 0 : i32
    %c0_i32_0 = arith.constant 0 : i32
    return %arg0, %c0_i32 : i32, i32
  }
}

</mosaic_0001>

<llo_original>
// kernel: neg.5
$region0: #{neg.5}
  #allocation0 [shape = 's32[1]{0}', space=sflag, size = 0x4, scoped, tag = 'scoped memory for neg.5']
  %s0 = inlined_call_operand.vmem [shape: f32[2,64,64], index: 0, kind: input, shape index: {}]
  %s1 = inlined_call_operand.vmem [shape: f32[2,64,64], index: 1, kind: output, shape index: {}]
  %v2 = vld [vmem:[%s0] sm:$0xff]
  %3 = xla_tuple %v2
  %4 = xla_tuple %3
  %v5 = vxor.u32 %v2, 2147483648
  %6 = xla_tuple %v5
  %7 = vst [vmem:[%s1] sm:$0xff] %v5
  %s8 = scalar_lea.vmem %s0, 64
  %v9 = vld [vmem:[%s8] sm:$0xff]
  %10 = xla_tuple %v9
  %11 = xla_tuple %10
  %v12 = vxor.u32 %v9, 2147483648
  %13 = xla_tuple %v12
  %s14 = scalar_lea.vmem %s1, 64
  %15 = vst [vmem:[%s14] sm:$0xff] %v12
  %s16 = scalar_lea.vmem %s0, 8
  %v17 = vld [vmem:[%s16] sm:$0xff]
  %18 = xla_tuple %v17
  %19 = xla_tuple %18
  %v20 = vxor.u32 %v17, 2147483648
  %21 = xla_tuple %v20
  %s22 = scalar_lea.vmem %s1, 8
  %23 = vst [vmem:[%s22] sm:$0xff] %v20
  %s24 = scalar_lea.vmem %s0, 72
  %v25 = vld [vmem:[%s24] sm:$0xff]
  %26 = xla_tuple %v25
  %27 = xla_tuple %26
  %v28 = vxor.u32 %v25, 2147483648
  %29 = xla_tuple %v28
  %s30 = scalar_lea.vmem %s1, 72
  %31 = vst [vmem:[%s30] sm:$0xff] %v28
  %s32 = scalar_lea.vmem %s0, 16
  %v33 = vld [vmem:[%s32] sm:$0xff]
  %34 = xla_tuple %v33
  %35 = xla_tuple %34
  %v36 = vxor.u32 %v33, 2147483648
  %37 = xla_tuple %v36
  %s38 = scalar_lea.vmem %s1, 16
  %39 = vst [vmem:[%s38] sm:$0xff] %v36
  %s40 = scalar_lea.vmem %s0, 80
  %v41 = vld [vmem:[%s40] sm:$0xff]
  %42 = xla_tuple %v41
  %43 = xla_tuple %42
  %v44 = vxor.u32 %v41, 2147483648
  %45 = xla_tuple %v44
  %s46 = scalar_lea.vmem %s1, 80
  %47 = vst [vmem:[%s46] sm:$0xff] %v44
  %s48 = scalar_lea.vmem %s0, 24
  %v49 = vld [vmem:[%s48] sm:$0xff]
  %50 = xla_tuple %v49
  %51 = xla_tuple %50
  %v52 = vxor.u32 %v49, 2147483648
  %53 = xla_tuple %v52
  %s54 = scalar_lea.vmem %s1, 24
  %55 = vst [vmem:[%s54] sm:$0xff] %v52
  %s56 = scalar_lea.vmem %s0, 88
  %v57 = vld [vmem:[%s56] sm:$0xff]
  %58 = xla_tuple %v57
  %59 = xla_tuple %58
  %v60 = vxor.u32 %v57, 2147483648
  %61 = xla_tuple %v60
  %s62 = scalar_lea.vmem %s1, 88
  %63 = vst [vmem:[%s62] sm:$0xff] %v60
  %s64 = scalar_lea.vmem %s0, 32
  %v65 = vld [vmem:[%s64] sm:$0xff]
  %66 = xla_tuple %v65
  %67 = xla_tuple %66
  %v68 = vxor.u32 %v65, 2147483648
  %69 = xla_tuple %v68
  %s70 = scalar_lea.vmem %s1, 32
  %71 = vst [vmem:[%s70] sm:$0xff] %v68
  %s72 = scalar_lea.vmem %s0, 96
  %v73 = vld [vmem:[%s72] sm:$0xff]
  %74 = xla_tuple %v73
  %75 = xla_tuple %74
  %v76 = vxor.u32 %v73, 2147483648
  %77 = xla_tuple %v76
  %s78 = scalar_lea.vmem %s1, 96
  %79 = vst [vmem:[%s78] sm:$0xff] %v76
  %s80 = scalar_lea.vmem %s0, 40
  %v81 = vld [vmem:[%s80] sm:$0xff]
  %82 = xla_tuple %v81
  %83 = xla_tuple %82
  %v84 = vxor.u32 %v81, 2147483648
  %85 = xla_tuple %v84
  %s86 = scalar_lea.vmem %s1, 40
  %87 = vst [vmem:[%s86] sm:$0xff] %v84
  %s88 = scalar_lea.vmem %s0, 104
  %v89 = vld [vmem:[%s88] sm:$0xff]
  %90 = xla_tuple %v89
  %91 = xla_tuple %90
  %v92 = vxor.u32 %v89, 2147483648
  %93 = xla_tuple %v92
  %s94 = scalar_lea.vmem %s1, 104
  %95 = vst [vmem:[%s94] sm:$0xff] %v92
  %s96 = scalar_lea.vmem %s0, 48
  %v97 = vld [vmem:[%s96] sm:$0xff]
  %98 = xla_tuple %v97
  %99 = xla_tuple %98
  %v100 = vxor.u32 %v97, 2147483648
  %101 = xla_tuple %v100
  %s102 = scalar_lea.vmem %s1, 48
  %103 = vst [vmem:[%s102] sm:$0xff] %v100
  %s104 = scalar_lea.vmem %s0, 112
  %v105 = vld [vmem:[%s104] sm:$0xff]
  %106 = xla_tuple %v105
  %107 = xla_tuple %106
  %v108 = vxor.u32 %v105, 2147483648
  %109 = xla_tuple %v108
  %s110 = scalar_lea.vmem %s1, 112
  %111 = vst [vmem:[%s110] sm:$0xff] %v108
  %s112 = scalar_lea.vmem %s0, 56
  %v113 = vld [vmem:[%s112] sm:$0xff]
  %114 = xla_tuple %v113
  %115 = xla_tuple %114
  %v116 = vxor.u32 %v113, 2147483648
  %117 = xla_tuple %v116
  %s118 = scalar_lea.vmem %s1, 56
  %119 = vst [vmem:[%s118] sm:$0xff] %v116
  %s120 = scalar_lea.vmem %s0, 120
  %v121 = vld [vmem:[%s120] sm:$0xff]
  %122 = xla_tuple %v121
  %123 = xla_tuple %122
  %v124 = vxor.u32 %v121, 2147483648
  %125 = xla_tuple %v124
  %s126 = scalar_lea.vmem %s1, 120
  %127 = vst [vmem:[%s126] sm:$0xff] %v124

// kernel: icosa_backbone_forward.11
$region0: #{icosa_backbone_forward.11}
  #allocation0 [shape = 'u32[]', space=smem, size = 0x4, offset = 0x4, fixed_abs, tag = 'smem constant byte address 0x4 - core index']
  #allocation1 [shape = 'u32[72,128]{1,0:T(1,128)}', space=vmem, size = 0x9000, scoped, tag = 'internal scratch']
  %s0 = inlined_call_operand.vmem [shape: f32[128,32], index: 0, kind: input, shape index: {}]
  %s1 = inlined_call_operand.vmem [shape: bf16[32,32], index: 1, kind: input, shape index: {}]
  %s2 = inlined_call_operand.vmem [shape: f32[1,32], index: 2, kind: input, shape index: {}]
  %s3 = inlined_call_operand.vmem [shape: bf16[32,96], index: 3, kind: input, shape index: {}]
  %s4 = inlined_call_operand.vmem [shape: f32[128,96], index: 4, kind: output, shape index: {}]
  %s5 = sld [smem:[#allocation0]]
  $region26: #{icosa_backbone_forward.11} parent=0
    _
  %s7 = ssub.s32 1, %s5
  %s8 = scalar_select 0, %s7, %s5
  // Predicated region
  $region2: #{icosa_backbone_forward.11} parent=0 // pred_check
    _
  $region3: #{icosa_backbone_forward.11} parent=0 // pred_check_branch
    %10 = sbr.rel (0) target = $region5
  $region4: #{icosa_backbone_forward.11} parent=0 // pred_region
    _
  $region5: #{icosa_backbone_forward.11} parent=0 // pred_fallthru
    _
  // Predicated region
  $region6: #{icosa_backbone_forward.11} parent=0 // pred_check
    _
  $region7: #{icosa_backbone_forward.11} parent=0 // pred_check_branch
    %12 = sbr.rel (0) target = $region9
  $region8: #{icosa_backbone_forward.11} parent=0 // pred_region
    _
  $region9: #{icosa_backbone_forward.11} parent=0 // pred_fallthru
    _
  // Predicated region
  $region10: #{icosa_backbone_forward.11} parent=0 // pred_check
    _
  $region11: #{icosa_backbone_forward.11} parent=0 // pred_check_branch
    %14 = sbr.rel (0) target = $region13
  $region12: #{icosa_backbone_forward.11} parent=0 // pred_region
    _
  $region13: #{icosa_backbone_forward.11} parent=0 // pred_fallthru
    _
  // Predicated region
  $region14: #{icosa_backbone_forward.11} parent=0 // pred_check
    _
  $region15: #{icosa_backbone_forward.11} parent=0 // pred_check_branch
    %16 = sbr.rel (0) target = $region17
  $region16: #{icosa_backbone_forward.11} parent=0 // pred_region
    _
  $region17: #{icosa_backbone_forward.11} parent=0 // pred_fallthru
    _
  %v18 = vld [vmem:[%s0] sm:$0xff]
  %v19 = vld [vmem:[%s0 + $0x8] sm:$0xff]
  %v20 = vld [vmem:[%s0 + $0x10] sm:$0xff]
  %v21 = vld [vmem:[%s0 + $0x18] sm:$0xff]
  %v22 = vld [vmem:[%s0 + $0x20] sm:$0xff]
  %v23 = vld [vmem:[%s0 + $0x28] sm:$0xff]
  %v24 = vld [vmem:[%s0 + $0x30] sm:$0xff]
  %v25 = vld [vmem:[%s0 + $0x38] sm:$0xff]
  %v26 = vld [vmem:[%s0 + $0x40] sm:$0xff]
  %v27 = vld [vmem:[%s0 + $0x48] sm:$0xff]
  %v28 = vld [vmem:[%s0 + $0x50] sm:$0xff]
  %v29 = vld [vmem:[%s0 + $0x58] sm:$0xff]
  %v30 = vld [vmem:[%s0 + $0x60] sm:$0xff]
  %v31 = vld [vmem:[%s0 + $0x68] sm:$0xff]
  %v32 = vld [vmem:[%s0 + $0x70] sm:$0xff]
  %v33 = vld [vmem:[%s0 + $0x78] sm:$0xff]
  %v34 = vpack.c.bf16 %v19, %v18
  %v35 = vpack.c.bf16 %v21, %v20
  %v36 = vpack.c.bf16 %v23, %v22
  %v37 = vpack.c.bf16 %v25, %v24
  %v38 = vpack.c.bf16 %v27, %v26
  %v39 = vpack.c.bf16 %v29, %v28
  %v40 = vpack.c.bf16 %v31, %v30
  %v41 = vpack.c.bf16 %v33, %v32
  %v42 = vld [vmem:[%s1] sm:$0xf]
  %v43 = vld [vmem:[%s1 + $0x4] sm:$0xf]
  %v44 = vld [vmem:[%s1 + $0x8] sm:$0xf]
  %v45 = vld [vmem:[%s1 + $0xc] sm:$0xf]
  %v46 = vld [vmem:[%s2] sm:$0x1]
  %v48 = vperm.slane %v46, 0
  %v54 = vunpack.c.l.b16 %v42
  %v55 = vunpack.c.l.b16 %v43
  %v56 = vunpack.c.l.b16 %v44
  %v57 = vunpack.c.l.b16 %v45
  %v58 = vpack.c.b16 %v55, %v54
  %v59 = vpack.c.b16 %v57, %v56
  %vm62 = vcmask 261120
  %v64 = vsel %vm62, %v34, 0
  %v67 = vsel %vm62, %v35, 0
  %v70 = vsel %vm62, %v36, 0
  %v73 = vsel %vm62, %v37, 0
  %v76 = vsel %vm62, %v38, 0
  %v79 = vsel %vm62, %v39, 0
  %v82 = vsel %vm62, %v40, 0
  %v85 = vsel %vm62, %v41, 0
  %87 = vmatpush.bf16.msra.mxu0 0
  %88 = vmatpush.bf16.msra.mxu0 0
  %89 = vmatpush.bf16.msra.mxu0 0
  %90 = vmatpush.bf16.msra.mxu0 0
  %91 = vmatpush.bf16.msra.mxu0 0
  %92 = vmatpush.bf16.msra.mxu0 0
  %93 = vmatpush.bf16.msra.mxu0 %v59
  %94 = vmatpush.bf16.msra.mxu0 %v58
  %95 = vmatmul.bf16.gmra.mxu0 %v64
  %v96 = vpop.f32.mrf.mxu0
  %v97 = vadd.f32 %v48, %v96
  %v98 = vpop.f32.mrf.mxu0
  %v99 = vadd.f32 %v48, %v98
  %100 = vmatmul.bf16.gmra.mxu0 %v67
  %v101 = vpop.f32.mrf.mxu0
  %v102 = vadd.f32 %v48, %v101
  %v103 = vpop.f32.mrf.mxu0
  %v104 = vadd.f32 %v48, %v103
  %105 = vmatmul.bf16.gmra.mxu0 %v70
  %v106 = vpop.f32.mrf.mxu0
  %v107 = vadd.f32 %v48, %v106
  %v108 = vpop.f32.mrf.mxu0
  %v109 = vadd.f32 %v48, %v108
  %110 = vmatmul.bf16.gmra.mxu0 %v73
  %v111 = vpop.f32.mrf.mxu0
  %v112 = vadd.f32 %v48, %v111
  %v113 = vpop.f32.mrf.mxu0
  %v114 = vadd.f32 %v48, %v113
  %115 = vmatmul.bf16.gmra.mxu0 %v76
  %v116 = vpop.f32.mrf.mxu0
  %v117 = vadd.f32 %v48, %v116
  %v118 = vpop.f32.mrf.mxu0
  %v119 = vadd.f32 %v48, %v118
  %120 = vmatmul.bf16.gmra.mxu0 %v79
  %v121 = vpop.f32.mrf.mxu0
  %v122 = vadd.f32 %v48, %v121
  %v123 = vpop.f32.mrf.mxu0
  %v124 = vadd.f32 %v48, %v123
  %125 = vmatmul.bf16.gmra.mxu0 %v82
  %v126 = vpop.f32.mrf.mxu0
  %v127 = vadd.f32 %v48, %v126
  %v128 = vpop.f32.mrf.mxu0
  %v129 = vadd.f32 %v48, %v128
  %130 = vmatmul.bf16.gmra.mxu0 %v85
  %v131 = vpop.f32.mrf.mxu0
  %v132 = vadd.f32 %v48, %v131
  %v133 = vpop.f32.mrf.mxu0
  %v134 = vadd.f32 %v48, %v133
  %135 = vdwg.mxu0
  %v136 = vpack.c.bf16 %v99, %v97
  %v137 = vpack.c.bf16 %v104, %v102
  %v138 = vpack.c.bf16 %v109, %v107
  %v139 = vpack.c.bf16 %v114, %v112
  %v140 = vpack.c.bf16 %v119, %v117
  %v141 = vpack.c.bf16 %v124, %v122
  %v142 = vpack.c.bf16 %v129, %v127
  %v143 = vpack.c.bf16 %v134, %v132
  %v144 = vld [vmem:[%s3] sm:$0xf]
  %v145 = vld [vmem:[%s3 + $0x4] sm:$0xf]
  %v146 = vld [vmem:[%s3 + $0x8] sm:$0xf]
  %v147 = vld [vmem:[%s3 + $0xc] sm:$0xf]
  %v152 = vunpack.c.l.b16 %v144
  %v153 = vunpack.c.l.b16 %v145
  %v154 = vunpack.c.l.b16 %v146
  %v155 = vunpack.c.l.b16 %v147
  %v156 = vpack.c.b16 %v153, %v152
  %v157 = vpack.c.b16 %v155, %v154
  %v161 = vsel %vm62, %v136, 0
  %v164 = vsel %vm62, %v137, 0
  %v167 = vsel %vm62, %v138, 0
  %v170 = vsel %vm62, %v139, 0
  %v173 = vsel %vm62, %v140, 0
  %v176 = vsel %vm62, %v141, 0
  %v179 = vsel %vm62, %v142, 0
  %v182 = vsel %vm62, %v143, 0
  %184 = vmatpush.bf16.msra.mxu0 0
  %185 = vmatpush.bf16.msra.mxu0 0
  %186 = vmatpush.bf16.msra.mxu0 0
  %187 = vmatpush.bf16.msra.mxu0 0
  %188 = vmatpush.bf16.msra.mxu0 0
  %189 = vmatpush.bf16.msra.mxu0 0
  %190 = vmatpush.bf16.msra.mxu0 %v157
  %191 = vmatpush.bf16.msra.mxu0 %v156
  %192 = vmatmul.bf16.gmra.mxu0 %v161
  %v193 = vpop.f32.mrf.mxu0
  %v194 = vadd.f32 0.0, %v193
  %v195 = vpop.f32.mrf.mxu0
  %v196 = vadd.f32 0.0, %v195
  %197 = vmatmul.bf16.gmra.mxu0 %v164
  %v198 = vpop.f32.mrf.mxu0
  %v199 = vadd.f32 0.0, %v198
  %v200 = vpop.f32.mrf.mxu0
  %v201 = vadd.f32 0.0, %v200
  %202 = vmatmul.bf16.gmra.mxu0 %v167
  %v203 = vpop.f32.mrf.mxu0
  %v204 = vadd.f32 0.0, %v203
  %v205 = vpop.f32.mrf.mxu0
  %v206 = vadd.f32 0.0, %v205
  %207 = vmatmul.bf16.gmra.mxu0 %v170
  %v208 = vpop.f32.mrf.mxu0
  %v209 = vadd.f32 0.0, %v208
  %v210 = vpop.f32.mrf.mxu0
  %v211 = vadd.f32 0.0, %v210
  %212 = vmatmul.bf16.gmra.mxu0 %v173
  %v213 = vpop.f32.mrf.mxu0
  %v214 = vadd.f32 0.0, %v213
  %v215 = vpop.f32.mrf.mxu0
  %v216 = vadd.f32 0.0, %v215
  %217 = vmatmul.bf16.gmra.mxu0 %v176
  %v218 = vpop.f32.mrf.mxu0
  %v219 = vadd.f32 0.0, %v218
  %v220 = vpop.f32.mrf.mxu0
  %v221 = vadd.f32 0.0, %v220
  %222 = vmatmul.bf16.gmra.mxu0 %v179
  %v223 = vpop.f32.mrf.mxu0
  %v224 = vadd.f32 0.0, %v223
  %v225 = vpop.f32.mrf.mxu0
  %v226 = vadd.f32 0.0, %v225
  %227 = vmatmul.bf16.gmra.mxu0 %v182
  %v228 = vpop.f32.mrf.mxu0
  %v229 = vadd.f32 0.0, %v228
  %v230 = vpop.f32.mrf.mxu0
  %v231 = vadd.f32 0.0, %v230
  %232 = vdwg.mxu0
  %vm233 = vcmask 785408
  %234 = vst.msk [vmem:[%s4] sm:$0xff] %vm233, %v194
  %235 = vst.msk [vmem:[%s4 + $0x8] sm:$0xff] %vm233, %v196
  %236 = vst.msk [vmem:[%s4 + $0x10] sm:$0xff] %vm233, %v199
  %237 = vst.msk [vmem:[%s4 + $0x18] sm:$0xff] %vm233, %v201
  %238 = vst.msk [vmem:[%s4 + $0x20] sm:$0xff] %vm233, %v204
  %239 = vst.msk [vmem:[%s4 + $0x28] sm:$0xff] %vm233, %v206
  %240 = vst.msk [vmem:[%s4 + $0x30] sm:$0xff] %vm233, %v209
  %241 = vst.msk [vmem:[%s4 + $0x38] sm:$0xff] %vm233, %v211
  %242 = vst.msk [vmem:[%s4 + $0x40] sm:$0xff] %vm233, %v214
  %243 = vst.msk [vmem:[%s4 + $0x48] sm:$0xff] %vm233, %v216
  %244 = vst.msk [vmem:[%s4 + $0x50] sm:$0xff] %vm233, %v219
  %245 = vst.msk [vmem:[%s4 + $0x58] sm:$0xff] %vm233, %v221
  %246 = vst.msk [vmem:[%s4 + $0x60] sm:$0xff] %vm233, %v224
  %247 = vst.msk [vmem:[%s4 + $0x68] sm:$0xff] %vm233, %v226
  %248 = vst.msk [vmem:[%s4 + $0x70] sm:$0xff] %vm233, %v229
  %249 = vst.msk [vmem:[%s4 + $0x78] sm:$0xff] %vm233, %v231
  // Predicated region
  $region18: #{icosa_backbone_forward.11} parent=0 // pred_check
    _
  $region19: #{icosa_backbone_forward.11} parent=0 // pred_check_branch
    %251 = sbr.rel (0) target = $region21
  $region20: #{icosa_backbone_forward.11} parent=0 // pred_region
    _
  $region21: #{icosa_backbone_forward.11} parent=0 // pred_fallthru
    _
  // Predicated region
  $region22: #{icosa_backbone_forward.11} parent=0 // pred_check
    _
  $region23: #{icosa_backbone_forward.11} parent=0 // pred_check_branch
    %253 = sbr.rel (0) target = $region25
  $region24: #{icosa_backbone_forward.11} parent=0 // pred_region
    _
  $region25: #{icosa_backbone_forward.11} parent=0 // pred_fallthru
    _

// kernel: icosa_backbone_forward.10
$region0: #{icosa_backbone_forward.10}
  #allocation0 [shape = 'u32[]', space=smem, size = 0x4, offset = 0x4, fixed_abs, tag = 'smem constant byte address 0x4 - core index']
  #allocation1 [shape = 'u32[72,128]{1,0:T(1,128)}', space=vmem, size = 0x9000, scoped, tag = 'internal scratch']
  %s0 = inlined_call_operand.vmem [shape: f32[128,6], index: 0, kind: input, shape index: {}]
  %s1 = inlined_call_operand.vmem [shape: bf16[6,32], index: 1, kind: input, shape index: {}]
  %s2 = inlined_call_operand.vmem [shape: f32[1,32], index: 2, kind: input, shape index: {}]
  %s3 = inlined_call_operand.vmem [shape: bf16[32,32], index: 3, kind: input, shape index: {}]
  %s4 = inlined_call_operand.vmem [shape: f32[1,32], index: 4, kind: input, shape index: {}]
  %s5 = inlined_call_operand.vmem [shape: f32[128,32], index: 5, kind: output, shape index: {}]
  %s6 = sld [smem:[#allocation0]]
  $region30: #{icosa_backbone_forward.10} parent=0
    _
  %s8 = ssub.s32 1, %s6
  %s9 = scalar_select 0, %s8, %s6
  // Predicated region
  $region2: #{icosa_backbone_forward.10} parent=0 // pred_check
    _
  $region3: #{icosa_backbone_forward.10} parent=0 // pred_check_branch
    %11 = sbr.rel (0) target = $region5
  $region4: #{icosa_backbone_forward.10} parent=0 // pred_region
    _
  $region5: #{icosa_backbone_forward.10} parent=0 // pred_fallthru
    _
  // Predicated region
  $region6: #{icosa_backbone_forward.10} parent=0 // pred_check
    _
  $region7: #{icosa_backbone_forward.10} parent=0 // pred_check_branch
    %13 = sbr.rel (0) target = $region9
  $region8: #{icosa_backbone_forward.10} parent=0 // pred_region
    _
  $region9: #{icosa_backbone_forward.10} parent=0 // pred_fallthru
    _
  // Predicated region
  $region10: #{icosa_backbone_forward.10} parent=0 // pred_check
    _
  $region11: #{icosa_backbone_forward.10} parent=0 // pred_check_branch
    %15 = sbr.rel (0) target = $region13
  $region12: #{icosa_backbone_forward.10} parent=0 // pred_region
    _
  $region13: #{icosa_backbone_forward.10} parent=0 // pred_fallthru
    _
  // Predicated region
  $region14: #{icosa_backbone_forward.10} parent=0 // pred_check
    _
  $region15: #{icosa_backbone_forward.10} parent=0 // pred_check_branch
    %17 = sbr.rel (0) target = $region17
  $region16: #{icosa_backbone_forward.10} parent=0 // pred_region
    _
  $region17: #{icosa_backbone_forward.10} parent=0 // pred_fallthru
    _
  // Predicated region
  $region18: #{icosa_backbone_forward.10} parent=0 // pred_check
    _
  $region19: #{icosa_backbone_forward.10} parent=0 // pred_check_branch
    %19 = sbr.rel (0) target = $region21
  $region20: #{icosa_backbone_forward.10} parent=0 // pred_region
    _
  $region21: #{icosa_backbone_forward.10} parent=0 // pred_fallthru
    _
  %v21 = vld [vmem:[%s0] sm:$0xff]
  %v22 = vld [vmem:[%s0 + $0x8] sm:$0xff]
  %v23 = vld [vmem:[%s0 + $0x10] sm:$0xff]
  %v24 = vld [vmem:[%s0 + $0x18] sm:$0xff]
  %v25 = vld [vmem:[%s0 + $0x20] sm:$0xff]
  %v26 = vld [vmem:[%s0 + $0x28] sm:$0xff]
  %v27 = vld [vmem:[%s0 + $0x30] sm:$0xff]
  %v28 = vld [vmem:[%s0 + $0x38] sm:$0xff]
  %v29 = vld [vmem:[%s0 + $0x40] sm:$0xff]
  %v30 = vld [vmem:[%s0 + $0x48] sm:$0xff]
  %v31 = vld [vmem:[%s0 + $0x50] sm:$0xff]
  %v32 = vld [vmem:[%s0 + $0x58] sm:$0xff]
  %v33 = vld [vmem:[%s0 + $0x60] sm:$0xff]
  %v34 = vld [vmem:[%s0 + $0x68] sm:$0xff]
  %v35 = vld [vmem:[%s0 + $0x70] sm:$0xff]
  %v36 = vld [vmem:[%s0 + $0x78] sm:$0xff]
  %v37 = vpack.c.bf16 %v22, %v21
  %v38 = vpack.c.bf16 %v24, %v23
  %v39 = vpack.c.bf16 %v26, %v25
  %v40 = vpack.c.bf16 %v28, %v27
  %v41 = vpack.c.bf16 %v30, %v29
  %v42 = vpack.c.bf16 %v32, %v31
  %v43 = vpack.c.bf16 %v34, %v33
  %v44 = vpack.c.bf16 %v36, %v35
  %v45 = vld [vmem:[%s1] sm:$0x7]
  %v46 = vld [vmem:[%s2] sm:$0x1]
  %v48 = vperm.slane %v46, 0
  %vm50 = vcmask 48128
  %v52 = vsel %vm50, %v37, 0
  %v55 = vsel %vm50, %v38, 0
  %v58 = vsel %vm50, %v39, 0
  %v61 = vsel %vm50, %v40, 0
  %v64 = vsel %vm50, %v41, 0
  %v67 = vsel %vm50, %v42, 0
  %v70 = vsel %vm50, %v43, 0
  %v73 = vsel %vm50, %v44, 0
  %vm75 = vcmask 1042432
  %v77 = vsel %vm75, %v45, 0
  %79 = vmatpush.bf16.msra.mxu0 0
  %80 = vmatpush.bf16.msra.mxu0 0
  %81 = vmatpush.bf16.msra.mxu0 0
  %82 = vmatpush.bf16.msra.mxu0 0
  %83 = vmatpush.bf16.msra.mxu0 0
  %84 = vmatpush.bf16.msra.mxu0 0
  %85 = vmatpush.bf16.msra.mxu0 0
  %86 = vmatpush.bf16.msra.mxu0 %v77
  %87 = vmatmul.bf16.gmra.mxu0 %v52
  %v88 = vpop.f32.mrf.mxu0
  %v89 = vadd.f32 %v48, %v88
  %v90 = vpop.f32.mrf.mxu0
  %v91 = vadd.f32 %v48, %v90
  %92 = vmatmul.bf16.gmra.mxu0 %v55
  %v93 = vpop.f32.mrf.mxu0
  %v94 = vadd.f32 %v48, %v93
  %v95 = vpop.f32.mrf.mxu0
  %v96 = vadd.f32 %v48, %v95
  %97 = vmatmul.bf16.gmra.mxu0 %v58
  %v98 = vpop.f32.mrf.mxu0
  %v99 = vadd.f32 %v48, %v98
  %v100 = vpop.f32.mrf.mxu0
  %v101 = vadd.f32 %v48, %v100
  %102 = vmatmul.bf16.gmra.mxu0 %v61
  %v103 = vpop.f32.mrf.mxu0
  %v104 = vadd.f32 %v48, %v103
  %v105 = vpop.f32.mrf.mxu0
  %v106 = vadd.f32 %v48, %v105
  %107 = vmatmul.bf16.gmra.mxu0 %v64
  %v108 = vpop.f32.mrf.mxu0
  %v109 = vadd.f32 %v48, %v108
  %v110 = vpop.f32.mrf.mxu0
  %v111 = vadd.f32 %v48, %v110
  %112 = vmatmul.bf16.gmra.mxu0 %v67
  %v113 = vpop.f32.mrf.mxu0
  %v114 = vadd.f32 %v48, %v113
  %v115 = vpop.f32.mrf.mxu0
  %v116 = vadd.f32 %v48, %v115
  %117 = vmatmul.bf16.gmra.mxu0 %v70
  %v118 = vpop.f32.mrf.mxu0
  %v119 = vadd.f32 %v48, %v118
  %v120 = vpop.f32.mrf.mxu0
  %v121 = vadd.f32 %v48, %v120
  %122 = vmatmul.bf16.gmra.mxu0 %v73
  %v123 = vpop.f32.mrf.mxu0
  %v124 = vadd.f32 %v48, %v123
  %v125 = vpop.f32.mrf.mxu0
  %v126 = vadd.f32 %v48, %v125
  %127 = vdwg.mxu0
  %v128 = vmax.f32 %v89, 0.0
  %v129 = vmax.f32 %v91, 0.0
  %v130 = vmax.f32 %v94, 0.0
  %v131 = vmax.f32 %v96, 0.0
  %v132 = vmax.f32 %v99, 0.0
  %v133 = vmax.f32 %v101, 0.0
  %v134 = vmax.f32 %v104, 0.0
  %v135 = vmax.f32 %v106, 0.0
  %v136 = vmax.f32 %v109, 0.0
  %v137 = vmax.f32 %v111, 0.0
  %v138 = vmax.f32 %v114, 0.0
  %v139 = vmax.f32 %v116, 0.0
  %v140 = vmax.f32 %v119, 0.0
  %v141 = vmax.f32 %v121, 0.0
  %v142 = vmax.f32 %v124, 0.0
  %v143 = vmax.f32 %v126, 0.0
  %v144 = vpack.c.bf16 %v129, %v128
  %v145 = vpack.c.bf16 %v131, %v130
  %v146 = vpack.c.bf16 %v133, %v132
  %v147 = vpack.c.bf16 %v135, %v134
  %v148 = vpack.c.bf16 %v137, %v136
  %v149 = vpack.c.bf16 %v139, %v138
  %v150 = vpack.c.bf16 %v141, %v140
  %v151 = vpack.c.bf16 %v143, %v142
  %v152 = vld [vmem:[%s3] sm:$0xf]
  %v153 = vld [vmem:[%s3 + $0x4] sm:$0xf]
  %v154 = vld [vmem:[%s3 + $0x8] sm:$0xf]
  %v155 = vld [vmem:[%s3 + $0xc] sm:$0xf]
  %v156 = vld [vmem:[%s4] sm:$0x1]
  %v158 = vperm.slane %v156, 0
  %v164 = vunpack.c.l.b16 %v152
  %v165 = vunpack.c.l.b16 %v153
  %v166 = vunpack.c.l.b16 %v154
  %v167 = vunpack.c.l.b16 %v155
  %v168 = vpack.c.b16 %v165, %v164
  %v169 = vpack.c.b16 %v167, %v166
  %vm172 = vcmask 261120
  %v174 = vsel %vm172, %v144, 0
  %v177 = vsel %vm172, %v145, 0
  %v180 = vsel %vm172, %v146, 0
  %v183 = vsel %vm172, %v147, 0
  %v186 = vsel %vm172, %v148, 0
  %v189 = vsel %vm172, %v149, 0
  %v192 = vsel %vm172, %v150, 0
  %v195 = vsel %vm172, %v151, 0
  %197 = vmatpush.bf16.msra.mxu0 0
  %198 = vmatpush.bf16.msra.mxu0 0
  %199 = vmatpush.bf16.msra.mxu0 0
  %200 = vmatpush.bf16.msra.mxu0 0
  %201 = vmatpush.bf16.msra.mxu0 0
  %202 = vmatpush.bf16.msra.mxu0 0
  %203 = vmatpush.bf16.msra.mxu0 %v169
  %204 = vmatpush.bf16.msra.mxu0 %v168
  %205 = vmatmul.bf16.gmra.mxu0 %v174
  %v206 = vpop.f32.mrf.mxu0
  %v207 = vadd.f32 %v158, %v206
  %v208 = vpop.f32.mrf.mxu0
  %v209 = vadd.f32 %v158, %v208
  %210 = vmatmul.bf16.gmra.mxu0 %v177
  %v211 = vpop.f32.mrf.mxu0
  %v212 = vadd.f32 %v158, %v211
  %v213 = vpop.f32.mrf.mxu0
  %v214 = vadd.f32 %v158, %v213
  %215 = vmatmul.bf16.gmra.mxu0 %v180
  %v216 = vpop.f32.mrf.mxu0
  %v217 = vadd.f32 %v158, %v216
  %v218 = vpop.f32.mrf.mxu0
  %v219 = vadd.f32 %v158, %v218
  %220 = vmatmul.bf16.gmra.mxu0 %v183
  %v221 = vpop.f32.mrf.mxu0
  %v222 = vadd.f32 %v158, %v221
  %v223 = vpop.f32.mrf.mxu0
  %v224 = vadd.f32 %v158, %v223
  %225 = vmatmul.bf16.gmra.mxu0 %v186
  %v226 = vpop.f32.mrf.mxu0
  %v227 = vadd.f32 %v158, %v226
  %v228 = vpop.f32.mrf.mxu0
  %v229 = vadd.f32 %v158, %v228
  %230 = vmatmul.bf16.gmra.mxu0 %v189
  %v231 = vpop.f32.mrf.mxu0
  %v232 = vadd.f32 %v158, %v231
  %v233 = vpop.f32.mrf.mxu0
  %v234 = vadd.f32 %v158, %v233
  %235 = vmatmul.bf16.gmra.mxu0 %v192
  %v236 = vpop.f32.mrf.mxu0
  %v237 = vadd.f32 %v158, %v236
  %v238 = vpop.f32.mrf.mxu0
  %v239 = vadd.f32 %v158, %v238
  %240 = vmatmul.bf16.gmra.mxu0 %v195
  %v241 = vpop.f32.mrf.mxu0
  %v242 = vadd.f32 %v158, %v241
  %v243 = vpop.f32.mrf.mxu0
  %v244 = vadd.f32 %v158, %v243
  %245 = vdwg.mxu0
  %246 = vst.msk [vmem:[%s5] sm:$0xff] %vm172, %v207
  %247 = vst.msk [vmem:[%s5 + $0x8] sm:$0xff] %vm172, %v209
  %248 = vst.msk [vmem:[%s5 + $0x10] sm:$0xff] %vm172, %v212
  %249 = vst.msk [vmem:[%s5 + $0x18] sm:$0xff] %vm172, %v214
  %250 = vst.msk [vmem:[%s5 + $0x20] sm:$0xff] %vm172, %v217
  %251 = vst.msk [vmem:[%s5 + $0x28] sm:$0xff] %vm172, %v219
  %252 = vst.msk [vmem:[%s5 + $0x30] sm:$0xff] %vm172, %v222
  %253 = vst.msk [vmem:[%s5 + $0x38] sm:$0xff] %vm172, %v224
  %254 = vst.msk [vmem:[%s5 + $0x40] sm:$0xff] %vm172, %v227
  %255 = vst.msk [vmem:[%s5 + $0x48] sm:$0xff] %vm172, %v229
  %256 = vst.msk [vmem:[%s5 + $0x50] sm:$0xff] %vm172, %v232
  %257 = vst.msk [vmem:[%s5 + $0x58] sm:$0xff] %vm172, %v234
  %258 = vst.msk [vmem:[%s5 + $0x60] sm:$0xff] %vm172, %v237
  %259 = vst.msk [vmem:[%s5 + $0x68] sm:$0xff] %vm172, %v239
  %260 = vst.msk [vmem:[%s5 + $0x70] sm:$0xff] %vm172, %v242
  %261 = vst.msk [vmem:[%s5 + $0x78] sm:$0xff] %vm172, %v244
  // Predicated region
  $region22: #{icosa_backbone_forward.10} parent=0 // pred_check
    _
  $region23: #{icosa_backbone_forward.10} parent=0 // pred_check_branch
    %263 = sbr.rel (0) target = $region25
  $region24: #{icosa_backbone_forward.10} parent=0 // pred_region
    _
  $region25: #{icosa_backbone_forward.10} parent=0 // pred_fallthru
    _
  // Predicated region
  $region26: #{icosa_backbone_forward.10} parent=0 // pred_check
    _
  $region27: #{icosa_backbone_forward.10} parent=0 // pred_check_branch
    %265 = sbr.rel (0) target = $region29
  $region28: #{icosa_backbone_forward.10} parent=0 // pred_region
    _
  $region29: #{icosa_backbone_forward.10} parent=0 // pred_fallthru
    _

// kernel: tile.63
$region0: #{tile.63}
  #allocation0 [shape = 's32[1]{0}', space=sflag, size = 0x4, scoped, tag = 'scoped memory for tile.63']
  %s0 = inlined_call_operand.vmem [shape: f32[32], index: 0, kind: input, shape index: {}]
  %s1 = inlined_call_operand.vmem [shape: f32[4,32], index: 1, kind: output, shape index: {}]
  // Predicated region
  $region2: #{tile.63} parent=0 // pred_check
    _
  $region3: #{tile.63} parent=0 // pred_check_branch
    %3 = sbr.rel (0) target = $region5
  $region4: #{tile.63} parent=0 // pred_region
    _
  $region5: #{tile.63} parent=0 // pred_fallthru
    _
  %v4 = vld [vmem:[%s0] ss:$0 sm:$0xff]
  %5 = vst [vmem:[%s1] sm:$0xf] %v4

// kernel: tile.64
$region0: #{tile.64}
  %s0 = inlined_call_operand.vmem [shape: f32[4,32], index: 0, kind: input, shape index: {}]
  %s1 = inlined_call_operand.vmem [shape: f32[1,128], index: 1, kind: output, shape index: {}]
  $region1: #{tile.64} parent=0
    #allocation0 [shape = 'u8[4096]{0}', space=vmem, size = 0x1000, scoped, tag = 'scoped mem for output reshape']
    #allocation1 [shape = 'u8[4096]{0}', space=vmem, size = 0x1000, scoped, tag = 'scoped mem for input reshape']
    %s3 = ssub.s32 16, 1
    %v4 = vld [vmem:[%s0] sm:%s3]
    %5 = vst [vmem:[#allocation1] sm:%s3] %v4
    %v6 = vld [vmem:[#allocation1] sm:$0x1]
    %vm7 = vcmask 261120
    %8 = vst.msk [vmem:[#allocation0] sm:$0x1] %vm7, %v6
    %s9 = scalar_lea.vmem [#allocation1], 3
    %v10 = vld [vmem:[%s9] sm:$0x1]
    %11 = vrot.lane.b32.xlu0 %v10, 96
    %v12 = vpop.permute.xlu0 %11
    %vm13 = vcmask 1048320
    %14 = vst.msk [vmem:[#allocation0] sm:$0x1] %vm13, %v12
    %s15 = scalar_lea.vmem [#allocation1], 2
    %v16 = vld [vmem:[%s15] sm:$0x1]
    %17 = vrot.lane.b32.xlu0 %v16, 64
    %v18 = vpop.permute.xlu0 %17
    %vm19 = vcmask 785920
    %20 = vst.msk [vmem:[#allocation0] sm:$0x1] %vm19, %v18
    %s21 = scalar_lea.vmem [#allocation1], 1
    %v22 = vld [vmem:[%s21] sm:$0x1]
    %23 = vrot.lane.b32.xlu0 %v22, 32
    %v24 = vpop.permute.xlu0 %23
    %vm25 = vcmask 523520
    %26 = vst.msk [vmem:[#allocation0] sm:$0x1] %vm25, %v24
    %s28 = ssub.s32 2, 1
    %v29 = vld [vmem:[#allocation0] sm:%s28]
    %s31 = ssub.s32 2, 1
    %32 = vst [vmem:[%s1] sm:%s31] %v29

// kernel: custom-call.38
$region0: #{custom-call.38}
  %s0 = inlined_call_operand.vmem [shape: s32[16,2], index: 0, kind: output, shape index: {}]

// kernel: custom-call.34
$region0: #{custom-call.34}
  %s0 = inlined_call_operand.vmem [shape: f32[2,64], index: 0, kind: output, shape index: {}]

// kernel: neg.6
$region0: #{neg.6}
  #allocation0 [shape = 's32[1]{0}', space=sflag, size = 0x4, scoped, tag = 'scoped memory for neg.6']
  %s0 = inlined_call_operand.vmem [shape: f32[2,16,64], index: 0, kind: input, shape index: {}]
  %s1 = inlined_call_operand.vmem [shape: f32[2,16,64], index: 1, kind: output, shape index: {}]
  %v2 = vld [vmem:[%s0] sm:$0xff]
  %3 = xla_tuple %v2
  %4 = xla_tuple %3
  %v5 = vxor.u32 %v2, 2147483648
  %6 = xla_tuple %v5
  %7 = vst [vmem:[%s1] sm:$0xff] %v5
  %s8 = scalar_lea.vmem %s0, 16
  %v9 = vld [vmem:[%s8] sm:$0xff]
  %10 = xla_tuple %v9
  %11 = xla_tuple %10
  %v12 = vxor.u32 %v9, 2147483648
  %13 = xla_tuple %v12
  %s14 = scalar_lea.vmem %s1, 16
  %15 = vst [vmem:[%s14] sm:$0xff] %v12
  %s16 = scalar_lea.vmem %s0, 8
  %v17 = vld [vmem:[%s16] sm:$0xff]
  %18 = xla_tuple %v17
  %19 = xla_tuple %18
  %v20 = vxor.u32 %v17, 2147483648
  %21 = xla_tuple %v20
  %s22 = scalar_lea.vmem %s1, 8
  %23 = vst [vmem:[%s22] sm:$0xff] %v20
  %s24 = scalar_lea.vmem %s0, 24
  %v25 = vld [vmem:[%s24] sm:$0xff]
  %26 = xla_tuple %v25
  %27 = xla_tuple %26
  %v28 = vxor.u32 %v25, 2147483648
  %29 = xla_tuple %v28
  %s30 = scalar_lea.vmem %s1, 24
  %31 = vst [vmem:[%s30] sm:$0xff] %v28

// kernel: icosa_backbone_forward.12
$region0: #{icosa_backbone_forward.12}
  #allocation0 [shape = 'u32[]', space=smem, size = 0x4, offset = 0x4, fixed_abs, tag = 'smem constant byte address 0x4 - core index']
  #allocation1 [shape = 'u32[72,128]{1,0:T(1,128)}', space=vmem, size = 0x9000, scoped, tag = 'internal scratch']
  %s0 = inlined_call_operand.vmem [shape: f32[128,32], index: 0, kind: input, shape index: {}]
  %s1 = inlined_call_operand.vmem [shape: f32[128,128], index: 1, kind: input, shape index: {}]
  %s2 = inlined_call_operand.vmem [shape: f32[128,128], index: 2, kind: input, shape index: {}]
  %s3 = inlined_call_operand.vmem [shape: f32[128,12], index: 3, kind: input, shape index: {}]
  %s4 = inlined_call_operand.vmem [shape: f32[128,32], index: 4, kind: input, shape index: {}]
  %s5 = inlined_call_operand.vmem [shape: bf16[12,128], index: 5, kind: input, shape index: {}]
  %s6 = inlined_call_operand.vmem [shape: f32[1,128], index: 6, kind: input, shape index: {}]
  %s7 = inlined_call_operand.vmem [shape: bf16[128,128], index: 7, kind: input, shape index: {}]
  %s8 = inlined_call_operand.vmem [shape: f32[1,128], index: 8, kind: input, shape index: {}]
  %s9 = inlined_call_operand.vmem [shape: bf16[128,128], index: 9, kind: input, shape index: {}]
  %s10 = inlined_call_operand.vmem [shape: f32[1,128], index: 10, kind: input, shape index: {}]
  %s11 = inlined_call_operand.vmem [shape: bf16[128,128], index: 11, kind: input, shape index: {}]
  %s12 = inlined_call_operand.vmem [shape: f32[1,128], index: 12, kind: input, shape index: {}]
  %s13 = inlined_call_operand.vmem [shape: bf16[32,32], index: 13, kind: input, shape index: {}]
  %s14 = inlined_call_operand.vmem [shape: f32[1,32], index: 14, kind: input, shape index: {}]
  %s15 = inlined_call_operand.vmem [shape: f32[128,32], index: 15, kind: output, shape index: {}]
  %s16 = sld [smem:[#allocation0]]
  $region70: #{icosa_backbone_forward.12} parent=0
    _
  %s18 = ssub.s32 1, %s16
  %s19 = scalar_select 0, %s18, %s16
  // Predicated region
  $region2: #{icosa_backbone_forward.12} parent=0 // pred_check
    _
  $region3: #{icosa_backbone_forward.12} parent=0 // pred_check_branch
    %21 = sbr.rel (0) target = $region5
  $region4: #{icosa_backbone_forward.12} parent=0 // pred_region
    _
  $region5: #{icosa_backbone_forward.12} parent=0 // pred_fallthru
    _
  // Predicated region
  $region6: #{icosa_backbone_forward.12} parent=0 // pred_check
    _
  $region7: #{icosa_backbone_forward.12} parent=0 // pred_check_branch
    %23 = sbr.rel (0) target = $region9
  $region8: #{icosa_backbone_forward.12} parent=0 // pred_region
    _
  $region9: #{icosa_backbone_forward.12} parent=0 // pred_fallthru
    _
  // Predicated region
  $region10: #{icosa_backbone_forward.12} parent=0 // pred_check
    _
  $region11: #{icosa_backbone_forward.12} parent=0 // pred_check_branch
    %25 = sbr.rel (0) target = $region13
  $region12: #{icosa_backbone_forward.12} parent=0 // pred_region
    _
  $region13: #{icosa_backbone_forward.12} parent=0 // pred_fallthru
    _
  // Predicated region
  $region14: #{icosa_backbone_forward.12} parent=0 // pred_check
    _
  $region15: #{icosa_backbone_forward.12} parent=0 // pred_check_branch
    %27 = sbr.rel (0) target = $region17
  $region16: #{icosa_backbone_forward.12} parent=0 // pred_region
    _
  $region17: #{icosa_backbone_forward.12} parent=0 // pred_fallthru
    _
  // Predicated region
  $region18: #{icosa_backbone_forward.12} parent=0 // pred_check
    _
  $region19: #{icosa_backbone_forward.12} parent=0 // pred_check_branch
    %29 = sbr.rel (0) target = $region21
  $region20: #{icosa_backbone_forward.12} parent=0 // pred_region
    _
  $region21: #{icosa_backbone_forward.12} parent=0 // pred_fallthru
    _
  // Predicated region
  $region22: #{icosa_backbone_forward.12} parent=0 // pred_check
    _
  $region23: #{icosa_backbone_forward.12} parent=0 // pred_check_branch
    %31 = sbr.rel (0) target = $region25
  $region24: #{icosa_backbone_forward.12} parent=0 // pred_region
    _
  $region25: #{icosa_backbone_forward.12} parent=0 // pred_fallthru
    _
  // Predicated region
  $region26: #{icosa_backbone_forward.12} parent=0 // pred_check
    _
  $region27: #{icosa_backbone_forward.12} parent=0 // pred_check_branch
    %33 = sbr.rel (0) target = $region29
  $region28: #{icosa_backbone_forward.12} parent=0 // pred_region
    _
  $region29: #{icosa_backbone_forward.12} parent=0 // pred_fallthru
    _
  // Predicated region
  $region30: #{icosa_backbone_forward.12} parent=0 // pred_check
    _
  $region31: #{icosa_backbone_forward.12} parent=0 // pred_check_branch
    %35 = sbr.rel (0) target = $region33
  $region32: #{icosa_backbone_forward.12} parent=0 // pred_region
    _
  $region33: #{icosa_backbone_forward.12} parent=0 // pred_fallthru
    _
  // Predicated region
  $region34: #{icosa_backbone_forward.12} parent=0 // pred_check
    _
  $region35: #{icosa_backbone_forward.12} parent=0 // pred_check_branch
    %37 = sbr.rel (0) target = $region37
  $region36: #{icosa_backbone_forward.12} parent=0 // pred_region
    _
  $region37: #{icosa_backbone_forward.12} parent=0 // pred_fallthru
    _
  // Predicated region
  $region38: #{icosa_backbone_forward.12} parent=0 // pred_check
    _
  $region39: #{icosa_backbone_forward.12} parent=0 // pred_check_branch
    %39 = sbr.rel (0) target = $region41
  $region40: #{icosa_backbone_forward.12} parent=0 // pred_region
    _
  $region41: #{icosa_backbone_forward.12} parent=0 // pred_fallthru
    _
  // Predicated region
  $region42: #{icosa_backbone_forward.12} parent=0 // pred_check
    _
  $region43: #{icosa_backbone_forward.12} parent=0 // pred_check_branch
    %41 = sbr.rel (0) target = $region45
  $region44: #{icosa_backbone_forward.12} parent=0 // pred_region
    _
  $region45: #{icosa_backbone_forward.12} parent=0 // pred_fallthru
    _
  // Predicated region
  $region46: #{icosa_backbone_forward.12} parent=0 // pred_check
    _
  $region47: #{icosa_backbone_forward.12} parent=0 // pred_check_branch
    %43 = sbr.rel (0) target = $region49
  $region48: #{icosa_backbone_forward.12} parent=0 // pred_region
    _
  $region49: #{icosa_backbone_forward.12} parent=0 // pred_fallthru
    _
  // Predicated region
  $region50: #{icosa_backbone_forward.12} parent=0 // pred_check
    _
  $region51: #{icosa_backbone_forward.12} parent=0 // pred_check_branch
    %45 = sbr.rel (0) target = $region53
  $region52: #{icosa_backbone_forward.12} parent=0 // pred_region
    _
  $region53: #{icosa_backbone_forward.12} parent=0 // pred_fallthru
    _
  // Predicated region
  $region54: #{icosa_backbone_forward.12} parent=0 // pred_check
    _
  $region55: #{icosa_backbone_forward.12} parent=0 // pred_check_branch
    %47 = sbr.rel (0) target = $region57
  $region56: #{icosa_backbone_forward.12} parent=0 // pred_region
    _
  $region57: #{icosa_backbone_forward.12} parent=0 // pred_fallthru
    _
  // Predicated region
  $region58: #{icosa_backbone_forward.12} parent=0 // pred_check
    _
  $region59: #{icosa_backbone_forward.12} parent=0 // pred_check_branch
    %49 = sbr.rel (0) target = $region61
  $region60: #{icosa_backbone_forward.12} parent=0 // pred_region
    _
  $region61: #{icosa_backbone_forward.12} parent=0 // pred_fallthru
    _
  %v51 = vld [vmem:[%s3] sm:$0xff]
  %v52 = vld [vmem:[%s3 + $0x8] sm:$0xff]
  %v53 = vld [vmem:[%s3 + $0x10] sm:$0xff]
  %v54 = vld [vmem:[%s3 + $0x18] sm:$0xff]
  %v55 = vld [vmem:[%s3 + $0x20] sm:$0xff]
  %v56 = vld [vmem:[%s3 + $0x28] sm:$0xff]
  %v57 = vld [vmem:[%s3 + $0x30] sm:$0xff]
  %v58 = vld [vmem:[%s3 + $0x38] sm:$0xff]
  %v59 = vld [vmem:[%s3 + $0x40] sm:$0xff]
  %v60 = vld [vmem:[%s3 + $0x48] sm:$0xff]
  %v61 = vld [vmem:[%s3 + $0x50] sm:$0xff]
  %v62 = vld [vmem:[%s3 + $0x58] sm:$0xff]
  %v63 = vld [vmem:[%s3 + $0x60] sm:$0xff]
  %v64 = vld [vmem:[%s3 + $0x68] sm:$0xff]
  %v65 = vld [vmem:[%s3 + $0x70] sm:$0xff]
  %v66 = vld [vmem:[%s3 + $0x78] sm:$0xff]
  %v67 = vpack.c.bf16 %v52, %v51
  %v68 = vpack.c.bf16 %v54, %v53
  %v69 = vpack.c.bf16 %v56, %v55
  %v70 = vpack.c.bf16 %v58, %v57
  %v71 = vpack.c.bf16 %v60, %v59
  %v72 = vpack.c.bf16 %v62, %v61
  %v73 = vpack.c.bf16 %v64, %v63
  %v74 = vpack.c.bf16 %v66, %v65
  %v75 = vld [vmem:[%s5] sm:$0xf]
  %v76 = vld [vmem:[%s5 + $0x4] sm:$0x3]
  %v77 = vld [vmem:[%s6] sm:$0x1]
  %v79 = vperm.slane %v77, 0
  %v83 = vunpack.c.l.b16 %v75
  %v84 = vunpack.c.l.b16 %v76
  %v85 = vpack.c.b16 %v84, %v83
  %vm86 = vcmask 97280
  %v88 = vsel %vm86, %v67, 0
  %v91 = vsel %vm86, %v68, 0
  %v94 = vsel %vm86, %v69, 0
  %v97 = vsel %vm86, %v70, 0
  %v100 = vsel %vm86, %v71, 0
  %v103 = vsel %vm86, %v72, 0
  %v106 = vsel %vm86, %v73, 0
  %v109 = vsel %vm86, %v74, 0
  %vm111 = vcmask 1045504
  %v113 = vsel %vm111, %v85, 0
  %115 = vmatpush.bf16.msra.mxu0 0
  %116 = vmatpush.bf16.msra.mxu0 0
  %117 = vmatpush.bf16.msra.mxu0 0
  %118 = vmatpush.bf16.msra.mxu0 0
  %119 = vmatpush.bf16.msra.mxu0 0
  %120 = vmatpush.bf16.msra.mxu0 0
  %121 = vmatpush.bf16.msra.mxu0 0
  %122 = vmatpush.bf16.msra.mxu0 %v113
  %123 = vmatmul.bf16.gmra.mxu0 %v88
  %v124 = vpop.f32.mrf.mxu0
  %v125 = vadd.f32 %v79, %v124
  %v126 = vpop.f32.mrf.mxu0
  %v127 = vadd.f32 %v79, %v126
  %128 = vmatmul.bf16.gmra.mxu0 %v91
  %v129 = vpop.f32.mrf.mxu0
  %v130 = vadd.f32 %v79, %v129
  %v131 = vpop.f32.mrf.mxu0
  %v132 = vadd.f32 %v79, %v131
  %133 = vmatmul.bf16.gmra.mxu0 %v94
  %v134 = vpop.f32.mrf.mxu0
  %v135 = vadd.f32 %v79, %v134
  %v136 = vpop.f32.mrf.mxu0
  %v137 = vadd.f32 %v79, %v136
  %138 = vmatmul.bf16.gmra.mxu0 %v97
  %v139 = vpop.f32.mrf.mxu0
  %v140 = vadd.f32 %v79, %v139
  %v141 = vpop.f32.mrf.mxu0
  %v142 = vadd.f32 %v79, %v141
  %143 = vmatmul.bf16.gmra.mxu0 %v100
  %v144 = vpop.f32.mrf.mxu0
  %v145 = vadd.f32 %v79, %v144
  %v146 = vpop.f32.mrf.mxu0
  %v147 = vadd.f32 %v79, %v146
  %148 = vmatmul.bf16.gmra.mxu0 %v103
  %v149 = vpop.f32.mrf.mxu0
  %v150 = vadd.f32 %v79, %v149
  %v151 = vpop.f32.mrf.mxu0
  %v152 = vadd.f32 %v79, %v151
  %153 = vmatmul.bf16.gmra.mxu0 %v106
  %v154 = vpop.f32.mrf.mxu0
  %v155 = vadd.f32 %v79, %v154
  %v156 = vpop.f32.mrf.mxu0
  %v157 = vadd.f32 %v79, %v156
  %158 = vmatmul.bf16.gmra.mxu0 %v109
  %v159 = vpop.f32.mrf.mxu0
  %v160 = vadd.f32 %v79, %v159
  %v161 = vpop.f32.mrf.mxu0
  %v162 = vadd.f32 %v79, %v161
  %163 = vdwg.mxu0
  %v164 = vmax.f32 %v125, 0.0
  %v165 = vmax.f32 %v127, 0.0
  %v166 = vmax.f32 %v130, 0.0
  %v167 = vmax.f32 %v132, 0.0
  %v168 = vmax.f32 %v135, 0.0
  %v169 = vmax.f32 %v137, 0.0
  %v170 = vmax.f32 %v140, 0.0
  %v171 = vmax.f32 %v142, 0.0
  %v172 = vmax.f32 %v145, 0.0
  %v173 = vmax.f32 %v147, 0.0
  %v174 = vmax.f32 %v150, 0.0
  %v175 = vmax.f32 %v152, 0.0
  %v176 = vmax.f32 %v155, 0.0
  %v177 = vmax.f32 %v157, 0.0
  %v178 = vmax.f32 %v160, 0.0
  %v179 = vmax.f32 %v162, 0.0
  %v180 = vpack.c.bf16 %v165, %v164
  %v181 = vpack.c.bf16 %v167, %v166
  %v182 = vpack.c.bf16 %v169, %v168
  %v183 = vpack.c.bf16 %v171, %v170
  %v184 = vpack.c.bf16 %v173, %v172
  %v185 = vpack.c.bf16 %v175, %v174
  %v186 = vpack.c.bf16 %v177, %v176
  %v187 = vpack.c.bf16 %v179, %v178
  %v188 = vld [vmem:[%s7] sm:$0xf]
  %v189 = vld [vmem:[%s7 + $0x4] sm:$0xf]
  %v190 = vld [vmem:[%s7 + $0x8] sm:$0xf]
  %v191 = vld [vmem:[%s7 + $0xc] sm:$0xf]
  %v192 = vld [vmem:[%s7 + $0x10] sm:$0xf]
  %v193 = vld [vmem:[%s7 + $0x14] sm:$0xf]
  %v194 = vld [vmem:[%s7 + $0x18] sm:$0xf]
  %v195 = vld [vmem:[%s7 + $0x1c] sm:$0xf]
  %v196 = vld [vmem:[%s7 + $0x20] sm:$0xf]
  %v197 = vld [vmem:[%s7 + $0x24] sm:$0xf]
  %v198 = vld [vmem:[%s7 + $0x28] sm:$0xf]
  %v199 = vld [vmem:[%s7 + $0x2c] sm:$0xf]
  %v200 = vld [vmem:[%s7 + $0x30] sm:$0xf]
  %v201 = vld [vmem:[%s7 + $0x34] sm:$0xf]
  %v202 = vld [vmem:[%s7 + $0x38] sm:$0xf]
  %v203 = vld [vmem:[%s7 + $0x3c] sm:$0xf]
  %v204 = vld [vmem:[%s8] sm:$0x1]
  %v206 = vperm.slane %v204, 0
  %v224 = vunpack.c.l.b16 %v188
  %v225 = vunpack.c.l.b16 %v189
  %v226 = vunpack.c.l.b16 %v190
  %v227 = vunpack.c.l.b16 %v191
  %v228 = vunpack.c.l.b16 %v192
  %v229 = vunpack.c.l.b16 %v193
  %v230 = vunpack.c.l.b16 %v194
  %v231 = vunpack.c.l.b16 %v195
  %v232 = vunpack.c.l.b16 %v196
  %v233 = vunpack.c.l.b16 %v197
  %v234 = vunpack.c.l.b16 %v198
  %v235 = vunpack.c.l.b16 %v199
  %v236 = vunpack.c.l.b16 %v200
  %v237 = vunpack.c.l.b16 %v201
  %v238 = vunpack.c.l.b16 %v202
  %v239 = vunpack.c.l.b16 %v203
  %v240 = vpack.c.b16 %v225, %v224
  %v241 = vpack.c.b16 %v227, %v226
  %v242 = vpack.c.b16 %v229, %v228
  %v243 = vpack.c.b16 %v231, %v230
  %v244 = vpack.c.b16 %v233, %v232
  %v245 = vpack.c.b16 %v235, %v234
  %v246 = vpack.c.b16 %v237, %v236
  %v247 = vpack.c.b16 %v239, %v238
  %256 = vmatpush.bf16.msra.mxu0 %v247
  %257 = vmatpush.bf16.msra.mxu0 %v246
  %258 = vmatpush.bf16.msra.mxu0 %v245
  %259 = vmatpush.bf16.msra.mxu0 %v244
  %260 = vmatpush.bf16.msra.mxu0 %v243
  %261 = vmatpush.bf16.msra.mxu0 %v242
  %262 = vmatpush.bf16.msra.mxu0 %v241
  %263 = vmatpush.bf16.msra.mxu0 %v240
  %264 = vmatmul.bf16.gmra.mxu0 %v180
  %v265 = vpop.f32.mrf.mxu0
  %v266 = vadd.f32 %v206, %v265
  %v267 = vpop.f32.mrf.mxu0
  %v268 = vadd.f32 %v206, %v267
  %269 = vmatmul.bf16.gmra.mxu0 %v181
  %v270 = vpop.f32.mrf.mxu0
  %v271 = vadd.f32 %v206, %v270
  %v272 = vpop.f32.mrf.mxu0
  %v273 = vadd.f32 %v206, %v272
  %274 = vmatmul.bf16.gmra.mxu0 %v182
  %v275 = vpop.f32.mrf.mxu0
  %v276 = vadd.f32 %v206, %v275
  %v277 = vpop.f32.mrf.mxu0
  %v278 = vadd.f32 %v206, %v277
  %279 = vmatmul.bf16.gmra.mxu0 %v183
  %v280 = vpop.f32.mrf.mxu0
  %v281 = vadd.f32 %v206, %v280
  %v282 = vpop.f32.mrf.mxu0
  %v283 = vadd.f32 %v206, %v282
  %284 = vmatmul.bf16.gmra.mxu0 %v184
  %v285 = vpop.f32.mrf.mxu0
  %v286 = vadd.f32 %v206, %v285
  %v287 = vpop.f32.mrf.mxu0
  %v288 = vadd.f32 %v206, %v287
  %289 = vmatmul.bf16.gmra.mxu0 %v185
  %v290 = vpop.f32.mrf.mxu0
  %v291 = vadd.f32 %v206, %v290
  %v292 = vpop.f32.mrf.mxu0
  %v293 = vadd.f32 %v206, %v292
  %294 = vmatmul.bf16.gmra.mxu0 %v186
  %v295 = vpop.f32.mrf.mxu0
  %v296 = vadd.f32 %v206, %v295
  %v297 = vpop.f32.mrf.mxu0
  %v298 = vadd.f32 %v206, %v297
  %299 = vmatmul.bf16.gmra.mxu0 %v187
  %v300 = vpop.f32.mrf.mxu0
  %v301 = vadd.f32 %v206, %v300
  %v302 = vpop.f32.mrf.mxu0
  %v303 = vadd.f32 %v206, %v302
  %304 = vdwg.mxu0
  %v305 = vld [vmem:[%s0] sm:$0xff]
  %v306 = vld [vmem:[%s0 + $0x8] sm:$0xff]
  %v307 = vld [vmem:[%s0 + $0x10] sm:$0xff]
  %v308 = vld [vmem:[%s0 + $0x18] sm:$0xff]
  %v309 = vld [vmem:[%s0 + $0x20] sm:$0xff]
  %v310 = vld [vmem:[%s0 + $0x28] sm:$0xff]
  %v311 = vld [vmem:[%s0 + $0x30] sm:$0xff]
  %v312 = vld [vmem:[%s0 + $0x38] sm:$0xff]
  %v313 = vld [vmem:[%s0 + $0x40] sm:$0xff]
  %v314 = vld [vmem:[%s0 + $0x48] sm:$0xff]
  %v315 = vld [vmem:[%s0 + $0x50] sm:$0xff]
  %v316 = vld [vmem:[%s0 + $0x58] sm:$0xff]
  %v317 = vld [vmem:[%s0 + $0x60] sm:$0xff]
  %v318 = vld [vmem:[%s0 + $0x68] sm:$0xff]
  %v319 = vld [vmem:[%s0 + $0x70] sm:$0xff]
  %v320 = vld [vmem:[%s0 + $0x78] sm:$0xff]
  %337 = vrot.lane.b32.xlu0 %v305, 32
  %v338 = vpop.permute.xlu0 %337
  %339 = vrot.lane.b32.xlu0 %v306, 32
  %v340 = vpop.permute.xlu0 %339
  %341 = vrot.lane.b32.xlu0 %v307, 32
  %v342 = vpop.permute.xlu0 %341
  %343 = vrot.lane.b32.xlu0 %v308, 32
  %v344 = vpop.permute.xlu0 %343
  %345 = vrot.lane.b32.xlu0 %v309, 32
  %v346 = vpop.permute.xlu0 %345
  %347 = vrot.lane.b32.xlu0 %v310, 32
  %v348 = vpop.permute.xlu0 %347
  %349 = vrot.lane.b32.xlu0 %v311, 32
  %v350 = vpop.permute.xlu0 %349
  %351 = vrot.lane.b32.xlu0 %v312, 32
  %v352 = vpop.permute.xlu0 %351
  %353 = vrot.lane.b32.xlu0 %v313, 32
  %v354 = vpop.permute.xlu0 %353
  %355 = vrot.lane.b32.xlu0 %v314, 32
  %v356 = vpop.permute.xlu0 %355
  %357 = vrot.lane.b32.xlu0 %v315, 32
  %v358 = vpop.permute.xlu0 %357
  %359 = vrot.lane.b32.xlu0 %v316, 32
  %v360 = vpop.permute.xlu0 %359
  %361 = vrot.lane.b32.xlu0 %v317, 32
  %v362 = vpop.permute.xlu0 %361
  %363 = vrot.lane.b32.xlu0 %v318, 32
  %v364 = vpop.permute.xlu0 %363
  %365 = vrot.lane.b32.xlu0 %v319, 32
  %v366 = vpop.permute.xlu0 %365
  %367 = vrot.lane.b32.xlu0 %v320, 32
  %v368 = vpop.permute.xlu0 %367
  %385 = vrot.lane.b32.xlu0 %v305, 64
  %v386 = vpop.permute.xlu0 %385
  %387 = vrot.lane.b32.xlu0 %v306, 64
  %v388 = vpop.permute.xlu0 %387
  %389 = vrot.lane.b32.xlu0 %v307, 64
  %v390 = vpop.permute.xlu0 %389
  %391 = vrot.lane.b32.xlu0 %v308, 64
  %v392 = vpop.permute.xlu0 %391
  %393 = vrot.lane.b32.xlu0 %v309, 64
  %v394 = vpop.permute.xlu0 %393
  %395 = vrot.lane.b32.xlu0 %v310, 64
  %v396 = vpop.permute.xlu0 %395
  %397 = vrot.lane.b32.xlu0 %v311, 64
  %v398 = vpop.permute.xlu0 %397
  %399 = vrot.lane.b32.xlu0 %v312, 64
  %v400 = vpop.permute.xlu0 %399
  %401 = vrot.lane.b32.xlu0 %v313, 64
  %v402 = vpop.permute.xlu0 %401
  %403 = vrot.lane.b32.xlu0 %v314, 64
  %v404 = vpop.permute.xlu0 %403
  %405 = vrot.lane.b32.xlu0 %v315, 64
  %v406 = vpop.permute.xlu0 %405
  %407 = vrot.lane.b32.xlu0 %v316, 64
  %v408 = vpop.permute.xlu0 %407
  %409 = vrot.lane.b32.xlu0 %v317, 64
  %v410 = vpop.permute.xlu0 %409
  %411 = vrot.lane.b32.xlu0 %v318, 64
  %v412 = vpop.permute.xlu0 %411
  %413 = vrot.lane.b32.xlu0 %v319, 64
  %v414 = vpop.permute.xlu0 %413
  %415 = vrot.lane.b32.xlu0 %v320, 64
  %v416 = vpop.permute.xlu0 %415
  %433 = vrot.lane.b32.xlu0 %v305, 96
  %v434 = vpop.permute.xlu0 %433
  %435 = vrot.lane.b32.xlu0 %v306, 96
  %v436 = vpop.permute.xlu0 %435
  %437 = vrot.lane.b32.xlu0 %v307, 96
  %v438 = vpop.permute.xlu0 %437
  %439 = vrot.lane.b32.xlu0 %v308, 96
  %v440 = vpop.permute.xlu0 %439
  %441 = vrot.lane.b32.xlu0 %v309, 96
  %v442 = vpop.permute.xlu0 %441
  %443 = vrot.lane.b32.xlu0 %v310, 96
  %v444 = vpop.permute.xlu0 %443
  %445 = vrot.lane.b32.xlu0 %v311, 96
  %v446 = vpop.permute.xlu0 %445
  %447 = vrot.lane.b32.xlu0 %v312, 96
  %v448 = vpop.permute.xlu0 %447
  %449 = vrot.lane.b32.xlu0 %v313, 96
  %v450 = vpop.permute.xlu0 %449
  %451 = vrot.lane.b32.xlu0 %v314, 96
  %v452 = vpop.permute.xlu0 %451
  %453 = vrot.lane.b32.xlu0 %v315, 96
  %v454 = vpop.permute.xlu0 %453
  %455 = vrot.lane.b32.xlu0 %v316, 96
  %v456 = vpop.permute.xlu0 %455
  %457 = vrot.lane.b32.xlu0 %v317, 96
  %v458 = vpop.permute.xlu0 %457
  %459 = vrot.lane.b32.xlu0 %v318, 96
  %v460 = vpop.permute.xlu0 %459
  %461 = vrot.lane.b32.xlu0 %v319, 96
  %v462 = vpop.permute.xlu0 %461
  %463 = vrot.lane.b32.xlu0 %v320, 96
  %v464 = vpop.permute.xlu0 %463
  %vm481 = vcmask 261120
  %v482 = vsel %vm481, %v305, %v338
  %v483 = vsel %vm481, %v306, %v340
  %v484 = vsel %vm481, %v307, %v342
  %v485 = vsel %vm481, %v308, %v344
  %v486 = vsel %vm481, %v309, %v346
  %v487 = vsel %vm481, %v310, %v348
  %v488 = vsel %vm481, %v311, %v350
  %v489 = vsel %vm481, %v312, %v352
  %v490 = vsel %vm481, %v313, %v354
  %v491 = vsel %vm481, %v314, %v356
  %v492 = vsel %vm481, %v315, %v358
  %v493 = vsel %vm481, %v316, %v360
  %v494 = vsel %vm481, %v317, %v362
  %v495 = vsel %vm481, %v318, %v364
  %v496 = vsel %vm481, %v319, %v366
  %v497 = vsel %vm481, %v320, %v368
  %vm498 = vcmask 523264
  %v499 = vsel %vm498, %v482, %v386
  %v500 = vsel %vm498, %v483, %v388
  %v501 = vsel %vm498, %v484, %v390
  %v502 = vsel %vm498, %v485, %v392
  %v503 = vsel %vm498, %v486, %v394
  %v504 = vsel %vm498, %v487, %v396
  %v505 = vsel %vm498, %v488, %v398
  %v506 = vsel %vm498, %v489, %v400
  %v507 = vsel %vm498, %v490, %v402
  %v508 = vsel %vm498, %v491, %v404
  %v509 = vsel %vm498, %v492, %v406
  %v510 = vsel %vm498, %v493, %v408
  %v511 = vsel %vm498, %v494, %v410
  %v512 = vsel %vm498, %v495, %v412
  %v513 = vsel %vm498, %v496, %v414
  %v514 = vsel %vm498, %v497, %v416
  %vm515 = vcmask 785408
  %v516 = vsel %vm515, %v499, %v434
  %v517 = vsel %vm515, %v500, %v436
  %v518 = vsel %vm515, %v501, %v438
  %v519 = vsel %vm515, %v502, %v440
  %v520 = vsel %vm515, %v503, %v442
  %v521 = vsel %vm515, %v504, %v444
  %v522 = vsel %vm515, %v505, %v446
  %v523 = vsel %vm515, %v506, %v448
  %v524 = vsel %vm515, %v507, %v450
  %v525 = vsel %vm515, %v508, %v452
  %v526 = vsel %vm515, %v509, %v454
  %v527 = vsel %vm515, %v510, %v456
  %v528 = vsel %vm515, %v511, %v458
  %v529 = vsel %vm515, %v512, %v460
  %v530 = vsel %vm515, %v513, %v462
  %v531 = vsel %vm515, %v514, %v464
  %v532 = vld [vmem:[%s1] sm:$0xff]
  %v533 = vld [vmem:[%s1 + $0x8] sm:$0xff]
  %v534 = vld [vmem:[%s1 + $0x10] sm:$0xff]
  %v535 = vld [vmem:[%s1 + $0x18] sm:$0xff]
  %v536 = vld [vmem:[%s1 + $0x20] sm:$0xff]
  %v537 = vld [vmem:[%s1 + $0x28] sm:$0xff]
  %v538 = vld [vmem:[%s1 + $0x30] sm:$0xff]
  %v539 = vld [vmem:[%s1 + $0x38] sm:$0xff]
  %v540 = vld [vmem:[%s1 + $0x40] sm:$0xff]
  %v541 = vld [vmem:[%s1 + $0x48] sm:$0xff]
  %v542 = vld [vmem:[%s1 + $0x50] sm:$0xff]
  %v543 = vld [vmem:[%s1 + $0x58] sm:$0xff]
  %v544 = vld [vmem:[%s1 + $0x60] sm:$0xff]
  %v545 = vld [vmem:[%s1 + $0x68] sm:$0xff]
  %v546 = vld [vmem:[%s1 + $0x70] sm:$0xff]
  %v547 = vld [vmem:[%s1 + $0x78] sm:$0xff]
  %v548 = vsub.f32 %v516, %v532
  %v549 = vsub.f32 %v517, %v533
  %v550 = vsub.f32 %v518, %v534
  %v551 = vsub.f32 %v519, %v535
  %v552 = vsub.f32 %v520, %v536
  %v553 = vsub.f32 %v521, %v537
  %v554 = vsub.f32 %v522, %v538
  %v555 = vsub.f32 %v523, %v539
  %v556 = vsub.f32 %v524, %v540
  %v557 = vsub.f32 %v525, %v541
  %v558 = vsub.f32 %v526, %v542
  %v559 = vsub.f32 %v527, %v543
  %v560 = vsub.f32 %v528, %v544
  %v561 = vsub.f32 %v529, %v545
  %v562 = vsub.f32 %v530, %v546
  %v563 = vsub.f32 %v531, %v547
  %v564 = vadd.f32 %v548, %v266
  %v565 = vadd.f32 %v549, %v268
  %v566 = vadd.f32 %v550, %v271
  %v567 = vadd.f32 %v551, %v273
  %v568 = vadd.f32 %v552, %v276
  %v569 = vadd.f32 %v553, %v278
  %v570 = vadd.f32 %v554, %v281
  %v571 = vadd.f32 %v555, %v283
  %v572 = vadd.f32 %v556, %v286
  %v573 = vadd.f32 %v557, %v288
  %v574 = vadd.f32 %v558, %v291
  %v575 = vadd.f32 %v559, %v293
  %v576 = vadd.f32 %v560, %v296
  %v577 = vadd.f32 %v561, %v298
  %v578 = vadd.f32 %v562, %v301
  %v579 = vadd.f32 %v563, %v303
  %v580 = vpack.c.bf16 %v565, %v564
  %v581 = vpack.c.bf16 %v567, %v566
  %v582 = vpack.c.bf16 %v569, %v568
  %v583 = vpack.c.bf16 %v571, %v570
  %v584 = vpack.c.bf16 %v573, %v572
  %v585 = vpack.c.bf16 %v575, %v574
  %v586 = vpack.c.bf16 %v577, %v576
  %v587 = vpack.c.bf16 %v579, %v578
  %v588 = vld [vmem:[%s9] sm:$0xf]
  %v589 = vld [vmem:[%s9 + $0x4] sm:$0xf]
  %v590 = vld [vmem:[%s9 + $0x8] sm:$0xf]
  %v591 = vld [vmem:[%s9 + $0xc] sm:$0xf]
  %v592 = vld [vmem:[%s9 + $0x10] sm:$0xf]
  %v593 = vld [vmem:[%s9 + $0x14] sm:$0xf]
  %v594 = vld [vmem:[%s9 + $0x18] sm:$0xf]
  %v595 = vld [vmem:[%s9 + $0x1c] sm:$0xf]
  %v596 = vld [vmem:[%s9 + $0x20] sm:$0xf]
  %v597 = vld [vmem:[%s9 + $0x24] sm:$0xf]
  %v598 = vld [vmem:[%s9 + $0x28] sm:$0xf]
  %v599 = vld [vmem:[%s9 + $0x2c] sm:$0xf]
  %v600 = vld [vmem:[%s9 + $0x30] sm:$0xf]
  %v601 = vld [vmem:[%s9 + $0x34] sm:$0xf]
  %v602 = vld [vmem:[%s9 + $0x38] sm:$0xf]
  %v603 = vld [vmem:[%s9 + $0x3c] sm:$0xf]
  %v604 = vld [vmem:[%s10] sm:$0x1]
  %v606 = vperm.slane %v604, 0
  %v624 = vunpack.c.l.b16 %v588
  %v625 = vunpack.c.l.b16 %v589
  %v626 = vunpack.c.l.b16 %v590
  %v627 = vunpack.c.l.b16 %v591
  %v628 = vunpack.c.l.b16 %v592
  %v629 = vunpack.c.l.b16 %v593
  %v630 = vunpack.c.l.b16 %v594
  %v631 = vunpack.c.l.b16 %v595
  %v632 = vunpack.c.l.b16 %v596
  %v633 = vunpack.c.l.b16 %v597
  %v634 = vunpack.c.l.b16 %v598
  %v635 = vunpack.c.l.b16 %v599
  %v636 = vunpack.c.l.b16 %v600
  %v637 = vunpack.c.l.b16 %v601
  %v638 = vunpack.c.l.b16 %v602
  %v639 = vunpack.c.l.b16 %v603
  %v640 = vpack.c.b16 %v625, %v624
  %v641 = vpack.c.b16 %v627, %v626
  %v642 = vpack.c.b16 %v629, %v628
  %v643 = vpack.c.b16 %v631, %v630
  %v644 = vpack.c.b16 %v633, %v632
  %v645 = vpack.c.b16 %v635, %v634
  %v646 = vpack.c.b16 %v637, %v636
  %v647 = vpack.c.b16 %v639, %v638
  %656 = vmatpush.bf16.msra.mxu0 %v647
  %657 = vmatpush.bf16.msra.mxu0 %v646
  %658 = vmatpush.bf16.msra.mxu0 %v645
  %659 = vmatpush.bf16.msra.mxu0 %v644
  %660 = vmatpush.bf16.msra.mxu0 %v643
  %661 = vmatpush.bf16.msra.mxu0 %v642
  %662 = vmatpush.bf16.msra.mxu0 %v641
  %663 = vmatpush.bf16.msra.mxu0 %v640
  %664 = vmatmul.bf16.gmra.mxu0 %v580
  %v665 = vpop.f32.mrf.mxu0
  %v666 = vadd.f32 %v606, %v665
  %v667 = vpop.f32.mrf.mxu0
  %v668 = vadd.f32 %v606, %v667
  %669 = vmatmul.bf16.gmra.mxu0 %v581
  %v670 = vpop.f32.mrf.mxu0
  %v671 = vadd.f32 %v606, %v670
  %v672 = vpop.f32.mrf.mxu0
  %v673 = vadd.f32 %v606, %v672
  %674 = vmatmul.bf16.gmra.mxu0 %v582
  %v675 = vpop.f32.mrf.mxu0
  %v676 = vadd.f32 %v606, %v675
  %v677 = vpop.f32.mrf.mxu0
  %v678 = vadd.f32 %v606, %v677
  %679 = vmatmul.bf16.gmra.mxu0 %v583
  %v680 = vpop.f32.mrf.mxu0
  %v681 = vadd.f32 %v606, %v680
  %v682 = vpop.f32.mrf.mxu0
  %v683 = vadd.f32 %v606, %v682
  %684 = vmatmul.bf16.gmra.mxu0 %v584
  %v685 = vpop.f32.mrf.mxu0
  %v686 = vadd.f32 %v606, %v685
  %v687 = vpop.f32.mrf.mxu0
  %v688 = vadd.f32 %v606, %v687
  %689 = vmatmul.bf16.gmra.mxu0 %v585
  %v690 = vpop.f32.mrf.mxu0
  %v691 = vadd.f32 %v606, %v690
  %v692 = vpop.f32.mrf.mxu0
  %v693 = vadd.f32 %v606, %v692
  %694 = vmatmul.bf16.gmra.mxu0 %v586
  %v695 = vpop.f32.mrf.mxu0
  %v696 = vadd.f32 %v606, %v695
  %v697 = vpop.f32.mrf.mxu0
  %v698 = vadd.f32 %v606, %v697
  %699 = vmatmul.bf16.gmra.mxu0 %v587
  %v700 = vpop.f32.mrf.mxu0
  %v701 = vadd.f32 %v606, %v700
  %v702 = vpop.f32.mrf.mxu0
  %v703 = vadd.f32 %v606, %v702
  %704 = vdwg.mxu0
  %v705 = vmax.f32 %v666, 0.0
  %v706 = vmax.f32 %v668, 0.0
  %v707 = vmax.f32 %v671, 0.0
  %v708 = vmax.f32 %v673, 0.0
  %v709 = vmax.f32 %v676, 0.0
  %v710 = vmax.f32 %v678, 0.0
  %v711 = vmax.f32 %v681, 0.0
  %v712 = vmax.f32 %v683, 0.0
  %v713 = vmax.f32 %v686, 0.0
  %v714 = vmax.f32 %v688, 0.0
  %v715 = vmax.f32 %v691, 0.0
  %v716 = vmax.f32 %v693, 0.0
  %v717 = vmax.f32 %v696, 0.0
  %v718 = vmax.f32 %v698, 0.0
  %v719 = vmax.f32 %v701, 0.0
  %v720 = vmax.f32 %v703, 0.0
  %v721 = vpack.c.bf16 %v706, %v705
  %v722 = vpack.c.bf16 %v708, %v707
  %v723 = vpack.c.bf16 %v710, %v709
  %v724 = vpack.c.bf16 %v712, %v711
  %v725 = vpack.c.bf16 %v714, %v713
  %v726 = vpack.c.bf16 %v716, %v715
  %v727 = vpack.c.bf16 %v718, %v717
  %v728 = vpack.c.bf16 %v720, %v719
  %v729 = vld [vmem:[%s11] sm:$0xf]
  %v730 = vld [vmem:[%s11 + $0x4] sm:$0xf]
  %v731 = vld [vmem:[%s11 + $0x8] sm:$0xf]
  %v732 = vld [vmem:[%s11 + $0xc] sm:$0xf]
  %v733 = vld [vmem:[%s11 + $0x10] sm:$0xf]
  %v734 = vld [vmem:[%s11 + $0x14] sm:$0xf]
  %v735 = vld [vmem:[%s11 + $0x18] sm:$0xf]
  %v736 = vld [vmem:[%s11 + $0x1c] sm:$0xf]
  %v737 = vld [vmem:[%s11 + $0x20] sm:$0xf]
  %v738 = vld [vmem:[%s11 + $0x24] sm:$0xf]
  %v739 = vld [vmem:[%s11 + $0x28] sm:$0xf]
  %v740 = vld [vmem:[%s11 + $0x2c] sm:$0xf]
  %v741 = vld [vmem:[%s11 + $0x30] sm:$0xf]
  %v742 = vld [vmem:[%s11 + $0x34] sm:$0xf]
  %v743 = vld [vmem:[%s11 + $0x38] sm:$0xf]
  %v744 = vld [vmem:[%s11 + $0x3c] sm:$0xf]
  %v745 = vld [vmem:[%s12] sm:$0x1]
  %v747 = vperm.slane %v745, 0
  %v765 = vunpack.c.l.b16 %v729
  %v766 = vunpack.c.l.b16 %v730
  %v767 = vunpack.c.l.b16 %v731
  %v768 = vunpack.c.l.b16 %v732
  %v769 = vunpack.c.l.b16 %v733
  %v770 = vunpack.c.l.b16 %v734
  %v771 = vunpack.c.l.b16 %v735
  %v772 = vunpack.c.l.b16 %v736
  %v773 = vunpack.c.l.b16 %v737
  %v774 = vunpack.c.l.b16 %v738
  %v775 = vunpack.c.l.b16 %v739
  %v776 = vunpack.c.l.b16 %v740
  %v777 = vunpack.c.l.b16 %v741
  %v778 = vunpack.c.l.b16 %v742
  %v779 = vunpack.c.l.b16 %v743
  %v780 = vunpack.c.l.b16 %v744
  %v781 = vpack.c.b16 %v766, %v765
  %v782 = vpack.c.b16 %v768, %v767
  %v783 = vpack.c.b16 %v770, %v769
  %v784 = vpack.c.b16 %v772, %v771
  %v785 = vpack.c.b16 %v774, %v773
  %v786 = vpack.c.b16 %v776, %v775
  %v787 = vpack.c.b16 %v778, %v777
  %v788 = vpack.c.b16 %v780, %v779
  %797 = vmatpush.bf16.msra.mxu0 %v788
  %798 = vmatpush.bf16.msra.mxu0 %v787
  %799 = vmatpush.bf16.msra.mxu0 %v786
  %800 = vmatpush.bf16.msra.mxu0 %v785
  %801 = vmatpush.bf16.msra.mxu0 %v784
  %802 = vmatpush.bf16.msra.mxu0 %v783
  %803 = vmatpush.bf16.msra.mxu0 %v782
  %804 = vmatpush.bf16.msra.mxu0 %v781
  %805 = vmatmul.bf16.gmra.mxu0 %v721
  %v806 = vpop.f32.mrf.mxu0
  %v807 = vadd.f32 %v747, %v806
  %v808 = vpop.f32.mrf.mxu0
  %v809 = vadd.f32 %v747, %v808
  %810 = vmatmul.bf16.gmra.mxu0 %v722
  %v811 = vpop.f32.mrf.mxu0
  %v812 = vadd.f32 %v747, %v811
  %v813 = vpop.f32.mrf.mxu0
  %v814 = vadd.f32 %v747, %v813
  %815 = vmatmul.bf16.gmra.mxu0 %v723
  %v816 = vpop.f32.mrf.mxu0
  %v817 = vadd.f32 %v747, %v816
  %v818 = vpop.f32.mrf.mxu0
  %v819 = vadd.f32 %v747, %v818
  %820 = vmatmul.bf16.gmra.mxu0 %v724
  %v821 = vpop.f32.mrf.mxu0
  %v822 = vadd.f32 %v747, %v821
  %v823 = vpop.f32.mrf.mxu0
  %v824 = vadd.f32 %v747, %v823
  %825 = vmatmul.bf16.gmra.mxu0 %v725
  %v826 = vpop.f32.mrf.mxu0
  %v827 = vadd.f32 %v747, %v826
  %v828 = vpop.f32.mrf.mxu0
  %v829 = vadd.f32 %v747, %v828
  %830 = vmatmul.bf16.gmra.mxu0 %v726
  %v831 = vpop.f32.mrf.mxu0
  %v832 = vadd.f32 %v747, %v831
  %v833 = vpop.f32.mrf.mxu0
  %v834 = vadd.f32 %v747, %v833
  %835 = vmatmul.bf16.gmra.mxu0 %v727
  %v836 = vpop.f32.mrf.mxu0
  %v837 = vadd.f32 %v747, %v836
  %v838 = vpop.f32.mrf.mxu0
  %v839 = vadd.f32 %v747, %v838
  %840 = vmatmul.bf16.gmra.mxu0 %v728
  %v841 = vpop.f32.mrf.mxu0
  %v842 = vadd.f32 %v747, %v841
  %v843 = vpop.f32.mrf.mxu0
  %v844 = vadd.f32 %v747, %v843
  %845 = vdwg.mxu0
  %v846 = vmul.f32 %v807, 0.17677669
  %v847 = vmul.f32 %v809, 0.17677669
  %v848 = vmul.f32 %v812, 0.17677669
  %v849 = vmul.f32 %v814, 0.17677669
  %v850 = vmul.f32 %v817, 0.17677669
  %v851 = vmul.f32 %v819, 0.17677669
  %v852 = vmul.f32 %v822, 0.17677669
  %v853 = vmul.f32 %v824, 0.17677669
  %v854 = vmul.f32 %v827, 0.17677669
  %v855 = vmul.f32 %v829, 0.17677669
  %v856 = vmul.f32 %v832, 0.17677669
  %v857 = vmul.f32 %v834, 0.17677669
  %v858 = vmul.f32 %v837, 0.17677669
  %v859 = vmul.f32 %v839, 0.17677669
  %v860 = vmul.f32 %v842, 0.17677669
  %v861 = vmul.f32 %v844, 0.17677669
  %v862 = vld [vmem:[%s2] sm:$0xff]
  %v863 = vld [vmem:[%s2 + $0x8] sm:$0xff]
  %v864 = vld [vmem:[%s2 + $0x10] sm:$0xff]
  %v865 = vld [vmem:[%s2 + $0x18] sm:$0xff]
  %v866 = vld [vmem:[%s2 + $0x20] sm:$0xff]
  %v867 = vld [vmem:[%s2 + $0x28] sm:$0xff]
  %v868 = vld [vmem:[%s2 + $0x30] sm:$0xff]
  %v869 = vld [vmem:[%s2 + $0x38] sm:$0xff]
  %v870 = vld [vmem:[%s2 + $0x40] sm:$0xff]
  %v871 = vld [vmem:[%s2 + $0x48] sm:$0xff]
  %v872 = vld [vmem:[%s2 + $0x50] sm:$0xff]
  %v873 = vld [vmem:[%s2 + $0x58] sm:$0xff]
  %v874 = vld [vmem:[%s2 + $0x60] sm:$0xff]
  %v875 = vld [vmem:[%s2 + $0x68] sm:$0xff]
  %v876 = vld [vmem:[%s2 + $0x70] sm:$0xff]
  %v877 = vld [vmem:[%s2 + $0x78] sm:$0xff]
  %v878 = vadd.f32 %v862, %v266
  %v879 = vadd.f32 %v863, %v268
  %v880 = vadd.f32 %v864, %v271
  %v881 = vadd.f32 %v865, %v273
  %v882 = vadd.f32 %v866, %v276
  %v883 = vadd.f32 %v867, %v278
  %v884 = vadd.f32 %v868, %v281
  %v885 = vadd.f32 %v869, %v283
  %v886 = vadd.f32 %v870, %v286
  %v887 = vadd.f32 %v871, %v288
  %v888 = vadd.f32 %v872, %v291
  %v889 = vadd.f32 %v873, %v293
  %v890 = vadd.f32 %v874, %v296
  %v891 = vadd.f32 %v875, %v298
  %v892 = vadd.f32 %v876, %v301
  %v893 = vadd.f32 %v877, %v303
  %910 = vrot.lane.b32.xlu0 %v846, 96
  %v911 = vpop.permute.xlu0 %910
  %912 = vrot.lane.b32.xlu0 %v847, 96
  %v913 = vpop.permute.xlu0 %912
  %914 = vrot.lane.b32.xlu0 %v848, 96
  %v915 = vpop.permute.xlu0 %914
  %916 = vrot.lane.b32.xlu0 %v849, 96
  %v917 = vpop.permute.xlu0 %916
  %918 = vrot.lane.b32.xlu0 %v850, 96
  %v919 = vpop.permute.xlu0 %918
  %920 = vrot.lane.b32.xlu0 %v851, 96
  %v921 = vpop.permute.xlu0 %920
  %922 = vrot.lane.b32.xlu0 %v852, 96
  %v923 = vpop.permute.xlu0 %922
  %924 = vrot.lane.b32.xlu0 %v853, 96
  %v925 = vpop.permute.xlu0 %924
  %926 = vrot.lane.b32.xlu0 %v854, 96
  %v927 = vpop.permute.xlu0 %926
  %928 = vrot.lane.b32.xlu0 %v855, 96
  %v929 = vpop.permute.xlu0 %928
  %930 = vrot.lane.b32.xlu0 %v856, 96
  %v931 = vpop.permute.xlu0 %930
  %932 = vrot.lane.b32.xlu0 %v857, 96
  %v933 = vpop.permute.xlu0 %932
  %934 = vrot.lane.b32.xlu0 %v858, 96
  %v935 = vpop.permute.xlu0 %934
  %936 = vrot.lane.b32.xlu0 %v859, 96
  %v937 = vpop.permute.xlu0 %936
  %938 = vrot.lane.b32.xlu0 %v860, 96
  %v939 = vpop.permute.xlu0 %938
  %940 = vrot.lane.b32.xlu0 %v861, 96
  %v941 = vpop.permute.xlu0 %940
  %v958 = vmax.f32 %v846, %v911
  %v959 = vmax.f32 %v847, %v913
  %v960 = vmax.f32 %v848, %v915
  %v961 = vmax.f32 %v849, %v917
  %v962 = vmax.f32 %v850, %v919
  %v963 = vmax.f32 %v851, %v921
  %v964 = vmax.f32 %v852, %v923
  %v965 = vmax.f32 %v853, %v925
  %v966 = vmax.f32 %v854, %v927
  %v967 = vmax.f32 %v855, %v929
  %v968 = vmax.f32 %v856, %v931
  %v969 = vmax.f32 %v857, %v933
  %v970 = vmax.f32 %v858, %v935
  %v971 = vmax.f32 %v859, %v937
  %v972 = vmax.f32 %v860, %v939
  %v973 = vmax.f32 %v861, %v941
  %974 = vrot.lane.b32.xlu0 %v846, 64
  %v975 = vpop.permute.xlu0 %974
  %976 = vrot.lane.b32.xlu0 %v847, 64
  %v977 = vpop.permute.xlu0 %976
  %978 = vrot.lane.b32.xlu0 %v848, 64
  %v979 = vpop.permute.xlu0 %978
  %980 = vrot.lane.b32.xlu0 %v849, 64
  %v981 = vpop.permute.xlu0 %980
  %982 = vrot.lane.b32.xlu0 %v850, 64
  %v983 = vpop.permute.xlu0 %982
  %984 = vrot.lane.b32.xlu0 %v851, 64
  %v985 = vpop.permute.xlu0 %984
  %986 = vrot.lane.b32.xlu0 %v852, 64
  %v987 = vpop.permute.xlu0 %986
  %988 = vrot.lane.b32.xlu0 %v853, 64
  %v989 = vpop.permute.xlu0 %988
  %990 = vrot.lane.b32.xlu0 %v854, 64
  %v991 = vpop.permute.xlu0 %990
  %992 = vrot.lane.b32.xlu0 %v855, 64
  %v993 = vpop.permute.xlu0 %992
  %994 = vrot.lane.b32.xlu0 %v856, 64
  %v995 = vpop.permute.xlu0 %994
  %996 = vrot.lane.b32.xlu0 %v857, 64
  %v997 = vpop.permute.xlu0 %996
  %998 = vrot.lane.b32.xlu0 %v858, 64
  %v999 = vpop.permute.xlu0 %998
  %1000 = vrot.lane.b32.xlu0 %v859, 64
  %v1001 = vpop.permute.xlu0 %1000
  %1002 = vrot.lane.b32.xlu0 %v860, 64
  %v1003 = vpop.permute.xlu0 %1002
  %1004 = vrot.lane.b32.xlu0 %v861, 64
  %v1005 = vpop.permute.xlu0 %1004
  %v1022 = vmax.f32 %v958, %v975
  %v1023 = vmax.f32 %v959, %v977
  %v1024 = vmax.f32 %v960, %v979
  %v1025 = vmax.f32 %v961, %v981
  %v1026 = vmax.f32 %v962, %v983
  %v1027 = vmax.f32 %v963, %v985
  %v1028 = vmax.f32 %v964, %v987
  %v1029 = vmax.f32 %v965, %v989
  %v1030 = vmax.f32 %v966, %v991
  %v1031 = vmax.f32 %v967, %v993
  %v1032 = vmax.f32 %v968, %v995
  %v1033 = vmax.f32 %v969, %v997
  %v1034 = vmax.f32 %v970, %v999
  %v1035 = vmax.f32 %v971, %v1001
  %v1036 = vmax.f32 %v972, %v1003
  %v1037 = vmax.f32 %v973, %v1005
  %1038 = vrot.lane.b32.xlu0 %v846, 32
  %v1039 = vpop.permute.xlu0 %1038
  %1040 = vrot.lane.b32.xlu0 %v847, 32
  %v1041 = vpop.permute.xlu0 %1040
  %1042 = vrot.lane.b32.xlu0 %v848, 32
  %v1043 = vpop.permute.xlu0 %1042
  %1044 = vrot.lane.b32.xlu0 %v849, 32
  %v1045 = vpop.permute.xlu0 %1044
  %1046 = vrot.lane.b32.xlu0 %v850, 32
  %v1047 = vpop.permute.xlu0 %1046
  %1048 = vrot.lane.b32.xlu0 %v851, 32
  %v1049 = vpop.permute.xlu0 %1048
  %1050 = vrot.lane.b32.xlu0 %v852, 32
  %v1051 = vpop.permute.xlu0 %1050
  %1052 = vrot.lane.b32.xlu0 %v853, 32
  %v1053 = vpop.permute.xlu0 %1052
  %1054 = vrot.lane.b32.xlu0 %v854, 32
  %v1055 = vpop.permute.xlu0 %1054
  %1056 = vrot.lane.b32.xlu0 %v855, 32
  %v1057 = vpop.permute.xlu0 %1056
  %1058 = vrot.lane.b32.xlu0 %v856, 32
  %v1059 = vpop.permute.xlu0 %1058
  %1060 = vrot.lane.b32.xlu0 %v857, 32
  %v1061 = vpop.permute.xlu0 %1060
  %1062 = vrot.lane.b32.xlu0 %v858, 32
  %v1063 = vpop.permute.xlu0 %1062
  %1064 = vrot.lane.b32.xlu0 %v859, 32
  %v1065 = vpop.permute.xlu0 %1064
  %1066 = vrot.lane.b32.xlu0 %v860, 32
  %v1067 = vpop.permute.xlu0 %1066
  %1068 = vrot.lane.b32.xlu0 %v861, 32
  %v1069 = vpop.permute.xlu0 %1068
  %v1086 = vmax.f32 %v1022, %v1039
  %v1087 = vmax.f32 %v1023, %v1041
  %v1088 = vmax.f32 %v1024, %v1043
  %v1089 = vmax.f32 %v1025, %v1045
  %v1090 = vmax.f32 %v1026, %v1047
  %v1091 = vmax.f32 %v1027, %v1049
  %v1092 = vmax.f32 %v1028, %v1051
  %v1093 = vmax.f32 %v1029, %v1053
  %v1094 = vmax.f32 %v1030, %v1055
  %v1095 = vmax.f32 %v1031, %v1057
  %v1096 = vmax.f32 %v1032, %v1059
  %v1097 = vmax.f32 %v1033, %v1061
  %v1098 = vmax.f32 %v1034, %v1063
  %v1099 = vmax.f32 %v1035, %v1065
  %v1100 = vmax.f32 %v1036, %v1067
  %v1101 = vmax.f32 %v1037, %v1069
  %v1102 = vsub.f32 %v846, %v1086
  %v1103 = vsub.f32 %v847, %v1087
  %v1104 = vsub.f32 %v848, %v1088
  %v1105 = vsub.f32 %v849, %v1089
  %v1106 = vsub.f32 %v850, %v1090
  %v1107 = vsub.f32 %v851, %v1091
  %v1108 = vsub.f32 %v852, %v1092
  %v1109 = vsub.f32 %v853, %v1093
  %v1110 = vsub.f32 %v854, %v1094
  %v1111 = vsub.f32 %v855, %v1095
  %v1112 = vsub.f32 %v856, %v1096
  %v1113 = vsub.f32 %v857, %v1097
  %v1114 = vsub.f32 %v858, %v1098
  %v1115 = vsub.f32 %v859, %v1099
  %v1116 = vsub.f32 %v860, %v1100
  %v1117 = vsub.f32 %v861, %v1101
  %v1118 = vmul.f32 %v1102, 1.442695
  %v1119 = vpow.pop %v1118
  %v1120 = vmul.f32 %v1103, 1.442695
  %v1121 = vpow.pop %v1120
  %v1122 = vmul.f32 %v1104, 1.442695
  %v1123 = vpow.pop %v1122
  %v1124 = vmul.f32 %v1105, 1.442695
  %v1125 = vpow.pop %v1124
  %v1126 = vmul.f32 %v1106, 1.442695
  %v1127 = vpow.pop %v1126
  %v1128 = vmul.f32 %v1107, 1.442695
  %v1129 = vpow.pop %v1128
  %v1130 = vmul.f32 %v1108, 1.442695
  %v1131 = vpow.pop %v1130
  %v1132 = vmul.f32 %v1109, 1.442695
  %v1133 = vpow.pop %v1132
  %v1134 = vmul.f32 %v1110, 1.442695
  %v1135 = vpow.pop %v1134
  %v1136 = vmul.f32 %v1111, 1.442695
  %v1137 = vpow.pop %v1136
  %v1138 = vmul.f32 %v1112, 1.442695
  %v1139 = vpow.pop %v1138
  %v1140 = vmul.f32 %v1113, 1.442695
  %v1141 = vpow.pop %v1140
  %v1142 = vmul.f32 %v1114, 1.442695
  %v1143 = vpow.pop %v1142
  %v1144 = vmul.f32 %v1115, 1.442695
  %v1145 = vpow.pop %v1144
  %v1146 = vmul.f32 %v1116, 1.442695
  %v1147 = vpow.pop %v1146
  %v1148 = vmul.f32 %v1117, 1.442695
  %v1149 = vpow.pop %v1148
  %1166 = vrot.lane.b32.xlu0 %v1086, 32
  %v1167 = vpop.permute.xlu0 %1166
  %1168 = vrot.lane.b32.xlu0 %v1087, 32
  %v1169 = vpop.permute.xlu0 %1168
  %1170 = vrot.lane.b32.xlu0 %v1088, 32
  %v1171 = vpop.permute.xlu0 %1170
  %1172 = vrot.lane.b32.xlu0 %v1089, 32
  %v1173 = vpop.permute.xlu0 %1172
  %1174 = vrot.lane.b32.xlu0 %v1090, 32
  %v1175 = vpop.permute.xlu0 %1174
  %1176 = vrot.lane.b32.xlu0 %v1091, 32
  %v1177 = vpop.permute.xlu0 %1176
  %1178 = vrot.lane.b32.xlu0 %v1092, 32
  %v1179 = vpop.permute.xlu0 %1178
  %1180 = vrot.lane.b32.xlu0 %v1093, 32
  %v1181 = vpop.permute.xlu0 %1180
  %1182 = vrot.lane.b32.xlu0 %v1094, 32
  %v1183 = vpop.permute.xlu0 %1182
  %1184 = vrot.lane.b32.xlu0 %v1095, 32
  %v1185 = vpop.permute.xlu0 %1184
  %1186 = vrot.lane.b32.xlu0 %v1096, 32
  %v1187 = vpop.permute.xlu0 %1186
  %1188 = vrot.lane.b32.xlu0 %v1097, 32
  %v1189 = vpop.permute.xlu0 %1188
  %1190 = vrot.lane.b32.xlu0 %v1098, 32
  %v1191 = vpop.permute.xlu0 %1190
  %1192 = vrot.lane.b32.xlu0 %v1099, 32
  %v1193 = vpop.permute.xlu0 %1192
  %1194 = vrot.lane.b32.xlu0 %v1100, 32
  %v1195 = vpop.permute.xlu0 %1194
  %1196 = vrot.lane.b32.xlu0 %v1101, 32
  %v1197 = vpop.permute.xlu0 %1196
  %v1214 = vsub.f32 %v846, %v1167
  %v1215 = vsub.f32 %v847, %v1169
  %v1216 = vsub.f32 %v848, %v1171
  %v1217 = vsub.f32 %v849, %v1173
  %v1218 = vsub.f32 %v850, %v1175
  %v1219 = vsub.f32 %v851, %v1177
  %v1220 = vsub.f32 %v852, %v1179
  %v1221 = vsub.f32 %v853, %v1181
  %v1222 = vsub.f32 %v854, %v1183
  %v1223 = vsub.f32 %v855, %v1185
  %v1224 = vsub.f32 %v856, %v1187
  %v1225 = vsub.f32 %v857, %v1189
  %v1226 = vsub.f32 %v858, %v1191
  %v1227 = vsub.f32 %v859, %v1193
  %v1228 = vsub.f32 %v860, %v1195
  %v1229 = vsub.f32 %v861, %v1197
  %v1230 = vmul.f32 %v1214, 1.442695
  %v1231 = vpow.pop %v1230
  %v1232 = vmul.f32 %v1215, 1.442695
  %v1233 = vpow.pop %v1232
  %v1234 = vmul.f32 %v1216, 1.442695
  %v1235 = vpow.pop %v1234
  %v1236 = vmul.f32 %v1217, 1.442695
  %v1237 = vpow.pop %v1236
  %v1238 = vmul.f32 %v1218, 1.442695
  %v1239 = vpow.pop %v1238
  %v1240 = vmul.f32 %v1219, 1.442695
  %v1241 = vpow.pop %v1240
  %v1242 = vmul.f32 %v1220, 1.442695
  %v1243 = vpow.pop %v1242
  %v1244 = vmul.f32 %v1221, 1.442695
  %v1245 = vpow.pop %v1244
  %v1246 = vmul.f32 %v1222, 1.442695
  %v1247 = vpow.pop %v1246
  %v1248 = vmul.f32 %v1223, 1.442695
  %v1249 = vpow.pop %v1248
  %v1250 = vmul.f32 %v1224, 1.442695
  %v1251 = vpow.pop %v1250
  %v1252 = vmul.f32 %v1225, 1.442695
  %v1253 = vpow.pop %v1252
  %v1254 = vmul.f32 %v1226, 1.442695
  %v1255 = vpow.pop %v1254
  %v1256 = vmul.f32 %v1227, 1.442695
  %v1257 = vpow.pop %v1256
  %v1258 = vmul.f32 %v1228, 1.442695
  %v1259 = vpow.pop %v1258
  %v1260 = vmul.f32 %v1229, 1.442695
  %v1261 = vpow.pop %v1260
  %1262 = vrot.lane.b32.xlu0 %v1086, 64
  %v1263 = vpop.permute.xlu0 %1262
  %1264 = vrot.lane.b32.xlu0 %v1087, 64
  %v1265 = vpop.permute.xlu0 %1264
  %1266 = vrot.lane.b32.xlu0 %v1088, 64
  %v1267 = vpop.permute.xlu0 %1266
  %1268 = vrot.lane.b32.xlu0 %v1089, 64
  %v1269 = vpop.permute.xlu0 %1268
  %1270 = vrot.lane.b32.xlu0 %v1090, 64
  %v1271 = vpop.permute.xlu0 %1270
  %1272 = vrot.lane.b32.xlu0 %v1091, 64
  %v1273 = vpop.permute.xlu0 %1272
  %1274 = vrot.lane.b32.xlu0 %v1092, 64
  %v1275 = vpop.permute.xlu0 %1274
  %1276 = vrot.lane.b32.xlu0 %v1093, 64
  %v1277 = vpop.permute.xlu0 %1276
  %1278 = vrot.lane.b32.xlu0 %v1094, 64
  %v1279 = vpop.permute.xlu0 %1278
  %1280 = vrot.lane.b32.xlu0 %v1095, 64
  %v1281 = vpop.permute.xlu0 %1280
  %1282 = vrot.lane.b32.xlu0 %v1096, 64
  %v1283 = vpop.permute.xlu0 %1282
  %1284 = vrot.lane.b32.xlu0 %v1097, 64
  %v1285 = vpop.permute.xlu0 %1284
  %1286 = vrot.lane.b32.xlu0 %v1098, 64
  %v1287 = vpop.permute.xlu0 %1286
  %1288 = vrot.lane.b32.xlu0 %v1099, 64
  %v1289 = vpop.permute.xlu0 %1288
  %1290 = vrot.lane.b32.xlu0 %v1100, 64
  %v1291 = vpop.permute.xlu0 %1290
  %1292 = vrot.lane.b32.xlu0 %v1101, 64
  %v1293 = vpop.permute.xlu0 %1292
  %v1310 = vsub.f32 %v846, %v1263
  %v1311 = vsub.f32 %v847, %v1265
  %v1312 = vsub.f32 %v848, %v1267
  %v1313 = vsub.f32 %v849, %v1269
  %v1314 = vsub.f32 %v850, %v1271
  %v1315 = vsub.f32 %v851, %v1273
  %v1316 = vsub.f32 %v852, %v1275
  %v1317 = vsub.f32 %v853, %v1277
  %v1318 = vsub.f32 %v854, %v1279
  %v1319 = vsub.f32 %v855, %v1281
  %v1320 = vsub.f32 %v856, %v1283
  %v1321 = vsub.f32 %v857, %v1285
  %v1322 = vsub.f32 %v858, %v1287
  %v1323 = vsub.f32 %v859, %v1289
  %v1324 = vsub.f32 %v860, %v1291
  %v1325 = vsub.f32 %v861, %v1293
  %v1326 = vmul.f32 %v1310, 1.442695
  %v1327 = vpow.pop %v1326
  %v1328 = vmul.f32 %v1311, 1.442695
  %v1329 = vpow.pop %v1328
  %v1330 = vmul.f32 %v1312, 1.442695
  %v1331 = vpow.pop %v1330
  %v1332 = vmul.f32 %v1313, 1.442695
  %v1333 = vpow.pop %v1332
  %v1334 = vmul.f32 %v1314, 1.442695
  %v1335 = vpow.pop %v1334
  %v1336 = vmul.f32 %v1315, 1.442695
  %v1337 = vpow.pop %v1336
  %v1338 = vmul.f32 %v1316, 1.442695
  %v1339 = vpow.pop %v1338
  %v1340 = vmul.f32 %v1317, 1.442695
  %v1341 = vpow.pop %v1340
  %v1342 = vmul.f32 %v1318, 1.442695
  %v1343 = vpow.pop %v1342
  %v1344 = vmul.f32 %v1319, 1.442695
  %v1345 = vpow.pop %v1344
  %v1346 = vmul.f32 %v1320, 1.442695
  %v1347 = vpow.pop %v1346
  %v1348 = vmul.f32 %v1321, 1.442695
  %v1349 = vpow.pop %v1348
  %v1350 = vmul.f32 %v1322, 1.442695
  %v1351 = vpow.pop %v1350
  %v1352 = vmul.f32 %v1323, 1.442695
  %v1353 = vpow.pop %v1352
  %v1354 = vmul.f32 %v1324, 1.442695
  %v1355 = vpow.pop %v1354
  %v1356 = vmul.f32 %v1325, 1.442695
  %v1357 = vpow.pop %v1356
  %1358 = vrot.lane.b32.xlu0 %v1086, 96
  %v1359 = vpop.permute.xlu0 %1358
  %1360 = vrot.lane.b32.xlu0 %v1087, 96
  %v1361 = vpop.permute.xlu0 %1360
  %1362 = vrot.lane.b32.xlu0 %v1088, 96
  %v1363 = vpop.permute.xlu0 %1362
  %1364 = vrot.lane.b32.xlu0 %v1089, 96
  %v1365 = vpop.permute.xlu0 %1364
  %1366 = vrot.lane.b32.xlu0 %v1090, 96
  %v1367 = vpop.permute.xlu0 %1366
  %1368 = vrot.lane.b32.xlu0 %v1091, 96
  %v1369 = vpop.permute.xlu0 %1368
  %1370 = vrot.lane.b32.xlu0 %v1092, 96
  %v1371 = vpop.permute.xlu0 %1370
  %1372 = vrot.lane.b32.xlu0 %v1093, 96
  %v1373 = vpop.permute.xlu0 %1372
  %1374 = vrot.lane.b32.xlu0 %v1094, 96
  %v1375 = vpop.permute.xlu0 %1374
  %1376 = vrot.lane.b32.xlu0 %v1095, 96
  %v1377 = vpop.permute.xlu0 %1376
  %1378 = vrot.lane.b32.xlu0 %v1096, 96
  %v1379 = vpop.permute.xlu0 %1378
  %1380 = vrot.lane.b32.xlu0 %v1097, 96
  %v1381 = vpop.permute.xlu0 %1380
  %1382 = vrot.lane.b32.xlu0 %v1098, 96
  %v1383 = vpop.permute.xlu0 %1382
  %1384 = vrot.lane.b32.xlu0 %v1099, 96
  %v1385 = vpop.permute.xlu0 %1384
  %1386 = vrot.lane.b32.xlu0 %v1100, 96
  %v1387 = vpop.permute.xlu0 %1386
  %1388 = vrot.lane.b32.xlu0 %v1101, 96
  %v1389 = vpop.permute.xlu0 %1388
  %v1406 = vsub.f32 %v846, %v1359
  %v1407 = vsub.f32 %v847, %v1361
  %v1408 = vsub.f32 %v848, %v1363
  %v1409 = vsub.f32 %v849, %v1365
  %v1410 = vsub.f32 %v850, %v1367
  %v1411 = vsub.f32 %v851, %v1369
  %v1412 = vsub.f32 %v852, %v1371
  %v1413 = vsub.f32 %v853, %v1373
  %v1414 = vsub.f32 %v854, %v1375
  %v1415 = vsub.f32 %v855, %v1377
  %v1416 = vsub.f32 %v856, %v1379
  %v1417 = vsub.f32 %v857, %v1381
  %v1418 = vsub.f32 %v858, %v1383
  %v1419 = vsub.f32 %v859, %v1385
  %v1420 = vsub.f32 %v860, %v1387
  %v1421 = vsub.f32 %v861, %v1389
  %v1422 = vmul.f32 %v1406, 1.442695
  %v1423 = vpow.pop %v1422
  %v1424 = vmul.f32 %v1407, 1.442695
  %v1425 = vpow.pop %v1424
  %v1426 = vmul.f32 %v1408, 1.442695
  %v1427 = vpow.pop %v1426
  %v1428 = vmul.f32 %v1409, 1.442695
  %v1429 = vpow.pop %v1428
  %v1430 = vmul.f32 %v1410, 1.442695
  %v1431 = vpow.pop %v1430
  %v1432 = vmul.f32 %v1411, 1.442695
  %v1433 = vpow.pop %v1432
  %v1434 = vmul.f32 %v1412, 1.442695
  %v1435 = vpow.pop %v1434
  %v1436 = vmul.f32 %v1413, 1.442695
  %v1437 = vpow.pop %v1436
  %v1438 = vmul.f32 %v1414, 1.442695
  %v1439 = vpow.pop %v1438
  %v1440 = vmul.f32 %v1415, 1.442695
  %v1441 = vpow.pop %v1440
  %v1442 = vmul.f32 %v1416, 1.442695
  %v1443 = vpow.pop %v1442
  %v1444 = vmul.f32 %v1417, 1.442695
  %v1445 = vpow.pop %v1444
  %v1446 = vmul.f32 %v1418, 1.442695
  %v1447 = vpow.pop %v1446
  %v1448 = vmul.f32 %v1419, 1.442695
  %v1449 = vpow.pop %v1448
  %v1450 = vmul.f32 %v1420, 1.442695
  %v1451 = vpow.pop %v1450
  %v1452 = vmul.f32 %v1421, 1.442695
  %v1453 = vpow.pop %v1452
  %1470 = vrot.lane.b32.xlu0 %v1231, 96
  %v1471 = vpop.permute.xlu0 %1470
  %1472 = vrot.lane.b32.xlu0 %v1233, 96
  %v1473 = vpop.permute.xlu0 %1472
  %1474 = vrot.lane.b32.xlu0 %v1235, 96
  %v1475 = vpop.permute.xlu0 %1474
  %1476 = vrot.lane.b32.xlu0 %v1237, 96
  %v1477 = vpop.permute.xlu0 %1476
  %1478 = vrot.lane.b32.xlu0 %v1239, 96
  %v1479 = vpop.permute.xlu0 %1478
  %1480 = vrot.lane.b32.xlu0 %v1241, 96
  %v1481 = vpop.permute.xlu0 %1480
  %1482 = vrot.lane.b32.xlu0 %v1243, 96
  %v1483 = vpop.permute.xlu0 %1482
  %1484 = vrot.lane.b32.xlu0 %v1245, 96
  %v1485 = vpop.permute.xlu0 %1484
  %1486 = vrot.lane.b32.xlu0 %v1247, 96
  %v1487 = vpop.permute.xlu0 %1486
  %1488 = vrot.lane.b32.xlu0 %v1249, 96
  %v1489 = vpop.permute.xlu0 %1488
  %1490 = vrot.lane.b32.xlu0 %v1251, 96
  %v1491 = vpop.permute.xlu0 %1490
  %1492 = vrot.lane.b32.xlu0 %v1253, 96
  %v1493 = vpop.permute.xlu0 %1492
  %1494 = vrot.lane.b32.xlu0 %v1255, 96
  %v1495 = vpop.permute.xlu0 %1494
  %1496 = vrot.lane.b32.xlu0 %v1257, 96
  %v1497 = vpop.permute.xlu0 %1496
  %1498 = vrot.lane.b32.xlu0 %v1259, 96
  %v1499 = vpop.permute.xlu0 %1498
  %1500 = vrot.lane.b32.xlu0 %v1261, 96
  %v1501 = vpop.permute.xlu0 %1500
  %v1518 = vadd.f32 %v1119, %v1471
  %v1519 = vadd.f32 %v1121, %v1473
  %v1520 = vadd.f32 %v1123, %v1475
  %v1521 = vadd.f32 %v1125, %v1477
  %v1522 = vadd.f32 %v1127, %v1479
  %v1523 = vadd.f32 %v1129, %v1481
  %v1524 = vadd.f32 %v1131, %v1483
  %v1525 = vadd.f32 %v1133, %v1485
  %v1526 = vadd.f32 %v1135, %v1487
  %v1527 = vadd.f32 %v1137, %v1489
  %v1528 = vadd.f32 %v1139, %v1491
  %v1529 = vadd.f32 %v1141, %v1493
  %v1530 = vadd.f32 %v1143, %v1495
  %v1531 = vadd.f32 %v1145, %v1497
  %v1532 = vadd.f32 %v1147, %v1499
  %v1533 = vadd.f32 %v1149, %v1501
  %1550 = vrot.lane.b32.xlu0 %v1327, 64
  %v1551 = vpop.permute.xlu0 %1550
  %1552 = vrot.lane.b32.xlu0 %v1329, 64
  %v1553 = vpop.permute.xlu0 %1552
  %1554 = vrot.lane.b32.xlu0 %v1331, 64
  %v1555 = vpop.permute.xlu0 %1554
  %1556 = vrot.lane.b32.xlu0 %v1333, 64
  %v1557 = vpop.permute.xlu0 %1556
  %1558 = vrot.lane.b32.xlu0 %v1335, 64
  %v1559 = vpop.permute.xlu0 %1558
  %1560 = vrot.lane.b32.xlu0 %v1337, 64
  %v1561 = vpop.permute.xlu0 %1560
  %1562 = vrot.lane.b32.xlu0 %v1339, 64
  %v1563 = vpop.permute.xlu0 %1562
  %1564 = vrot.lane.b32.xlu0 %v1341, 64
  %v1565 = vpop.permute.xlu0 %1564
  %1566 = vrot.lane.b32.xlu0 %v1343, 64
  %v1567 = vpop.permute.xlu0 %1566
  %1568 = vrot.lane.b32.xlu0 %v1345, 64
  %v1569 = vpop.permute.xlu0 %1568
  %1570 = vrot.lane.b32.xlu0 %v1347, 64
  %v1571 = vpop.permute.xlu0 %1570
  %1572 = vrot.lane.b32.xlu0 %v1349, 64
  %v1573 = vpop.permute.xlu0 %1572
  %1574 = vrot.lane.b32.xlu0 %v1351, 64
  %v1575 = vpop.permute.xlu0 %1574
  %1576 = vrot.lane.b32.xlu0 %v1353, 64
  %v1577 = vpop.permute.xlu0 %1576
  %1578 = vrot.lane.b32.xlu0 %v1355, 64
  %v1579 = vpop.permute.xlu0 %1578
  %1580 = vrot.lane.b32.xlu0 %v1357, 64
  %v1581 = vpop.permute.xlu0 %1580
  %v1598 = vadd.f32 %v1518, %v1551
  %v1599 = vadd.f32 %v1519, %v1553
  %v1600 = vadd.f32 %v1520, %v1555
  %v1601 = vadd.f32 %v1521, %v1557
  %v1602 = vadd.f32 %v1522, %v1559
  %v1603 = vadd.f32 %v1523, %v1561
  %v1604 = vadd.f32 %v1524, %v1563
  %v1605 = vadd.f32 %v1525, %v1565
  %v1606 = vadd.f32 %v1526, %v1567
  %v1607 = vadd.f32 %v1527, %v1569
  %v1608 = vadd.f32 %v1528, %v1571
  %v1609 = vadd.f32 %v1529, %v1573
  %v1610 = vadd.f32 %v1530, %v1575
  %v1611 = vadd.f32 %v1531, %v1577
  %v1612 = vadd.f32 %v1532, %v1579
  %v1613 = vadd.f32 %v1533, %v1581
  %1630 = vrot.lane.b32.xlu0 %v1423, 32
  %v1631 = vpop.permute.xlu0 %1630
  %1632 = vrot.lane.b32.xlu0 %v1425, 32
  %v1633 = vpop.permute.xlu0 %1632
  %1634 = vrot.lane.b32.xlu0 %v1427, 32
  %v1635 = vpop.permute.xlu0 %1634
  %1636 = vrot.lane.b32.xlu0 %v1429, 32
  %v1637 = vpop.permute.xlu0 %1636
  %1638 = vrot.lane.b32.xlu0 %v1431, 32
  %v1639 = vpop.permute.xlu0 %1638
  %1640 = vrot.lane.b32.xlu0 %v1433, 32
  %v1641 = vpop.permute.xlu0 %1640
  %1642 = vrot.lane.b32.xlu0 %v1435, 32
  %v1643 = vpop.permute.xlu0 %1642
  %1644 = vrot.lane.b32.xlu0 %v1437, 32
  %v1645 = vpop.permute.xlu0 %1644
  %1646 = vrot.lane.b32.xlu0 %v1439, 32
  %v1647 = vpop.permute.xlu0 %1646
  %1648 = vrot.lane.b32.xlu0 %v1441, 32
  %v1649 = vpop.permute.xlu0 %1648
  %1650 = vrot.lane.b32.xlu0 %v1443, 32
  %v1651 = vpop.permute.xlu0 %1650
  %1652 = vrot.lane.b32.xlu0 %v1445, 32
  %v1653 = vpop.permute.xlu0 %1652
  %1654 = vrot.lane.b32.xlu0 %v1447, 32
  %v1655 = vpop.permute.xlu0 %1654
  %1656 = vrot.lane.b32.xlu0 %v1449, 32
  %v1657 = vpop.permute.xlu0 %1656
  %1658 = vrot.lane.b32.xlu0 %v1451, 32
  %v1659 = vpop.permute.xlu0 %1658
  %1660 = vrot.lane.b32.xlu0 %v1453, 32
  %v1661 = vpop.permute.xlu0 %1660
  %v1678 = vadd.f32 %v1598, %v1631
  %v1679 = vadd.f32 %v1599, %v1633
  %v1680 = vadd.f32 %v1600, %v1635
  %v1681 = vadd.f32 %v1601, %v1637
  %v1682 = vadd.f32 %v1602, %v1639
  %v1683 = vadd.f32 %v1603, %v1641
  %v1684 = vadd.f32 %v1604, %v1643
  %v1685 = vadd.f32 %v1605, %v1645
  %v1686 = vadd.f32 %v1606, %v1647
  %v1687 = vadd.f32 %v1607, %v1649
  %v1688 = vadd.f32 %v1608, %v1651
  %v1689 = vadd.f32 %v1609, %v1653
  %v1690 = vadd.f32 %v1610, %v1655
  %v1691 = vadd.f32 %v1611, %v1657
  %v1692 = vadd.f32 %v1612, %v1659
  %v1693 = vadd.f32 %v1613, %v1661
  %v1694 = vrcp.pop %v1678
  %v1695 = vrcp.pop %v1679
  %v1696 = vrcp.pop %v1680
  %v1697 = vrcp.pop %v1681
  %v1698 = vrcp.pop %v1682
  %v1699 = vrcp.pop %v1683
  %v1700 = vrcp.pop %v1684
  %v1701 = vrcp.pop %v1685
  %v1702 = vrcp.pop %v1686
  %v1703 = vrcp.pop %v1687
  %v1704 = vrcp.pop %v1688
  %v1705 = vrcp.pop %v1689
  %v1706 = vrcp.pop %v1690
  %v1707 = vrcp.pop %v1691
  %v1708 = vrcp.pop %v1692
  %v1709 = vrcp.pop %v1693
  %v1710 = vmul.f32 %v1119, %v878
  %v1711 = vmul.f32 %v1121, %v879
  %v1712 = vmul.f32 %v1123, %v880
  %v1713 = vmul.f32 %v1125, %v881
  %v1714 = vmul.f32 %v1127, %v882
  %v1715 = vmul.f32 %v1129, %v883
  %v1716 = vmul.f32 %v1131, %v884
  %v1717 = vmul.f32 %v1133, %v885
  %v1718 = vmul.f32 %v1135, %v886
  %v1719 = vmul.f32 %v1137, %v887
  %v1720 = vmul.f32 %v1139, %v888
  %v1721 = vmul.f32 %v1141, %v889
  %v1722 = vmul.f32 %v1143, %v890
  %v1723 = vmul.f32 %v1145, %v891
  %v1724 = vmul.f32 %v1147, %v892
  %v1725 = vmul.f32 %v1149, %v893
  %v1726 = vmul.f32 %v1231, %v878
  %v1727 = vmul.f32 %v1233, %v879
  %v1728 = vmul.f32 %v1235, %v880
  %v1729 = vmul.f32 %v1237, %v881
  %v1730 = vmul.f32 %v1239, %v882
  %v1731 = vmul.f32 %v1241, %v883
  %v1732 = vmul.f32 %v1243, %v884
  %v1733 = vmul.f32 %v1245, %v885
  %v1734 = vmul.f32 %v1247, %v886
  %v1735 = vmul.f32 %v1249, %v887
  %v1736 = vmul.f32 %v1251, %v888
  %v1737 = vmul.f32 %v1253, %v889
  %v1738 = vmul.f32 %v1255, %v890
  %v1739 = vmul.f32 %v1257, %v891
  %v1740 = vmul.f32 %v1259, %v892
  %v1741 = vmul.f32 %v1261, %v893
  %1758 = vrot.lane.b32.xlu0 %v1726, 96
  %v1759 = vpop.permute.xlu0 %1758
  %1760 = vrot.lane.b32.xlu0 %v1727, 96
  %v1761 = vpop.permute.xlu0 %1760
  %1762 = vrot.lane.b32.xlu0 %v1728, 96
  %v1763 = vpop.permute.xlu0 %1762
  %1764 = vrot.lane.b32.xlu0 %v1729, 96
  %v1765 = vpop.permute.xlu0 %1764
  %1766 = vrot.lane.b32.xlu0 %v1730, 96
  %v1767 = vpop.permute.xlu0 %1766
  %1768 = vrot.lane.b32.xlu0 %v1731, 96
  %v1769 = vpop.permute.xlu0 %1768
  %1770 = vrot.lane.b32.xlu0 %v1732, 96
  %v1771 = vpop.permute.xlu0 %1770
  %1772 = vrot.lane.b32.xlu0 %v1733, 96
  %v1773 = vpop.permute.xlu0 %1772
  %1774 = vrot.lane.b32.xlu0 %v1734, 96
  %v1775 = vpop.permute.xlu0 %1774
  %1776 = vrot.lane.b32.xlu0 %v1735, 96
  %v1777 = vpop.permute.xlu0 %1776
  %1778 = vrot.lane.b32.xlu0 %v1736, 96
  %v1779 = vpop.permute.xlu0 %1778
  %1780 = vrot.lane.b32.xlu0 %v1737, 96
  %v1781 = vpop.permute.xlu0 %1780
  %1782 = vrot.lane.b32.xlu0 %v1738, 96
  %v1783 = vpop.permute.xlu0 %1782
  %1784 = vrot.lane.b32.xlu0 %v1739, 96
  %v1785 = vpop.permute.xlu0 %1784
  %1786 = vrot.lane.b32.xlu0 %v1740, 96
  %v1787 = vpop.permute.xlu0 %1786
  %1788 = vrot.lane.b32.xlu0 %v1741, 96
  %v1789 = vpop.permute.xlu0 %1788
  %v1806 = vadd.f32 %v1710, %v1759
  %v1807 = vadd.f32 %v1711, %v1761
  %v1808 = vadd.f32 %v1712, %v1763
  %v1809 = vadd.f32 %v1713, %v1765
  %v1810 = vadd.f32 %v1714, %v1767
  %v1811 = vadd.f32 %v1715, %v1769
  %v1812 = vadd.f32 %v1716, %v1771
  %v1813 = vadd.f32 %v1717, %v1773
  %v1814 = vadd.f32 %v1718, %v1775
  %v1815 = vadd.f32 %v1719, %v1777
  %v1816 = vadd.f32 %v1720, %v1779
  %v1817 = vadd.f32 %v1721, %v1781
  %v1818 = vadd.f32 %v1722, %v1783
  %v1819 = vadd.f32 %v1723, %v1785
  %v1820 = vadd.f32 %v1724, %v1787
  %v1821 = vadd.f32 %v1725, %v1789
  %v1822 = vmul.f32 %v1327, %v878
  %v1823 = vmul.f32 %v1329, %v879
  %v1824 = vmul.f32 %v1331, %v880
  %v1825 = vmul.f32 %v1333, %v881
  %v1826 = vmul.f32 %v1335, %v882
  %v1827 = vmul.f32 %v1337, %v883
  %v1828 = vmul.f32 %v1339, %v884
  %v1829 = vmul.f32 %v1341, %v885
  %v1830 = vmul.f32 %v1343, %v886
  %v1831 = vmul.f32 %v1345, %v887
  %v1832 = vmul.f32 %v1347, %v888
  %v1833 = vmul.f32 %v1349, %v889
  %v1834 = vmul.f32 %v1351, %v890
  %v1835 = vmul.f32 %v1353, %v891
  %v1836 = vmul.f32 %v1355, %v892
  %v1837 = vmul.f32 %v1357, %v893
  %1854 = vrot.lane.b32.xlu0 %v1822, 64
  %v1855 = vpop.permute.xlu0 %1854
  %1856 = vrot.lane.b32.xlu0 %v1823, 64
  %v1857 = vpop.permute.xlu0 %1856
  %1858 = vrot.lane.b32.xlu0 %v1824, 64
  %v1859 = vpop.permute.xlu0 %1858
  %1860 = vrot.lane.b32.xlu0 %v1825, 64
  %v1861 = vpop.permute.xlu0 %1860
  %1862 = vrot.lane.b32.xlu0 %v1826, 64
  %v1863 = vpop.permute.xlu0 %1862
  %1864 = vrot.lane.b32.xlu0 %v1827, 64
  %v1865 = vpop.permute.xlu0 %1864
  %1866 = vrot.lane.b32.xlu0 %v1828, 64
  %v1867 = vpop.permute.xlu0 %1866
  %1868 = vrot.lane.b32.xlu0 %v1829, 64
  %v1869 = vpop.permute.xlu0 %1868
  %1870 = vrot.lane.b32.xlu0 %v1830, 64
  %v1871 = vpop.permute.xlu0 %1870
  %1872 = vrot.lane.b32.xlu0 %v1831, 64
  %v1873 = vpop.permute.xlu0 %1872
  %1874 = vrot.lane.b32.xlu0 %v1832, 64
  %v1875 = vpop.permute.xlu0 %1874
  %1876 = vrot.lane.b32.xlu0 %v1833, 64
  %v1877 = vpop.permute.xlu0 %1876
  %1878 = vrot.lane.b32.xlu0 %v1834, 64
  %v1879 = vpop.permute.xlu0 %1878
  %1880 = vrot.lane.b32.xlu0 %v1835, 64
  %v1881 = vpop.permute.xlu0 %1880
  %1882 = vrot.lane.b32.xlu0 %v1836, 64
  %v1883 = vpop.permute.xlu0 %1882
  %1884 = vrot.lane.b32.xlu0 %v1837, 64
  %v1885 = vpop.permute.xlu0 %1884
  %v1902 = vadd.f32 %v1806, %v1855
  %v1903 = vadd.f32 %v1807, %v1857
  %v1904 = vadd.f32 %v1808, %v1859
  %v1905 = vadd.f32 %v1809, %v1861
  %v1906 = vadd.f32 %v1810, %v1863
  %v1907 = vadd.f32 %v1811, %v1865
  %v1908 = vadd.f32 %v1812, %v1867
  %v1909 = vadd.f32 %v1813, %v1869
  %v1910 = vadd.f32 %v1814, %v1871
  %v1911 = vadd.f32 %v1815, %v1873
  %v1912 = vadd.f32 %v1816, %v1875
  %v1913 = vadd.f32 %v1817, %v1877
  %v1914 = vadd.f32 %v1818, %v1879
  %v1915 = vadd.f32 %v1819, %v1881
  %v1916 = vadd.f32 %v1820, %v1883
  %v1917 = vadd.f32 %v1821, %v1885
  %v1918 = vmul.f32 %v1423, %v878
  %v1919 = vmul.f32 %v1425, %v879
  %v1920 = vmul.f32 %v1427, %v880
  %v1921 = vmul.f32 %v1429, %v881
  %v1922 = vmul.f32 %v1431, %v882
  %v1923 = vmul.f32 %v1433, %v883
  %v1924 = vmul.f32 %v1435, %v884
  %v1925 = vmul.f32 %v1437, %v885
  %v1926 = vmul.f32 %v1439, %v886
  %v1927 = vmul.f32 %v1441, %v887
  %v1928 = vmul.f32 %v1443, %v888
  %v1929 = vmul.f32 %v1445, %v889
  %v1930 = vmul.f32 %v1447, %v890
  %v1931 = vmul.f32 %v1449, %v891
  %v1932 = vmul.f32 %v1451, %v892
  %v1933 = vmul.f32 %v1453, %v893
  %1950 = vrot.lane.b32.xlu0 %v1918, 32
  %v1951 = vpop.permute.xlu0 %1950
  %1952 = vrot.lane.b32.xlu0 %v1919, 32
  %v1953 = vpop.permute.xlu0 %1952
  %1954 = vrot.lane.b32.xlu0 %v1920, 32
  %v1955 = vpop.permute.xlu0 %1954
  %1956 = vrot.lane.b32.xlu0 %v1921, 32
  %v1957 = vpop.permute.xlu0 %1956
  %1958 = vrot.lane.b32.xlu0 %v1922, 32
  %v1959 = vpop.permute.xlu0 %1958
  %1960 = vrot.lane.b32.xlu0 %v1923, 32
  %v1961 = vpop.permute.xlu0 %1960
  %1962 = vrot.lane.b32.xlu0 %v1924, 32
  %v1963 = vpop.permute.xlu0 %1962
  %1964 = vrot.lane.b32.xlu0 %v1925, 32
  %v1965 = vpop.permute.xlu0 %1964
  %1966 = vrot.lane.b32.xlu0 %v1926, 32
  %v1967 = vpop.permute.xlu0 %1966
  %1968 = vrot.lane.b32.xlu0 %v1927, 32
  %v1969 = vpop.permute.xlu0 %1968
  %1970 = vrot.lane.b32.xlu0 %v1928, 32
  %v1971 = vpop.permute.xlu0 %1970
  %1972 = vrot.lane.b32.xlu0 %v1929, 32
  %v1973 = vpop.permute.xlu0 %1972
  %1974 = vrot.lane.b32.xlu0 %v1930, 32
  %v1975 = vpop.permute.xlu0 %1974
  %1976 = vrot.lane.b32.xlu0 %v1931, 32
  %v1977 = vpop.permute.xlu0 %1976
  %1978 = vrot.lane.b32.xlu0 %v1932, 32
  %v1979 = vpop.permute.xlu0 %1978
  %1980 = vrot.lane.b32.xlu0 %v1933, 32
  %v1981 = vpop.permute.xlu0 %1980
  %v1998 = vadd.f32 %v1902, %v1951
  %v1999 = vadd.f32 %v1903, %v1953
  %v2000 = vadd.f32 %v1904, %v1955
  %v2001 = vadd.f32 %v1905, %v1957
  %v2002 = vadd.f32 %v1906, %v1959
  %v2003 = vadd.f32 %v1907, %v1961
  %v2004 = vadd.f32 %v1908, %v1963
  %v2005 = vadd.f32 %v1909, %v1965
  %v2006 = vadd.f32 %v1910, %v1967
  %v2007 = vadd.f32 %v1911, %v1969
  %v2008 = vadd.f32 %v1912, %v1971
  %v2009 = vadd.f32 %v1913, %v1973
  %v2010 = vadd.f32 %v1914, %v1975
  %v2011 = vadd.f32 %v1915, %v1977
  %v2012 = vadd.f32 %v1916, %v1979
  %v2013 = vadd.f32 %v1917, %v1981
  %v2014 = vmul.f32 %v1998, %v1694
  %v2015 = vmul.f32 %v1999, %v1695
  %v2016 = vmul.f32 %v2000, %v1696
  %v2017 = vmul.f32 %v2001, %v1697
  %v2018 = vmul.f32 %v2002, %v1698
  %v2019 = vmul.f32 %v2003, %v1699
  %v2020 = vmul.f32 %v2004, %v1700
  %v2021 = vmul.f32 %v2005, %v1701
  %v2022 = vmul.f32 %v2006, %v1702
  %v2023 = vmul.f32 %v2007, %v1703
  %v2024 = vmul.f32 %v2008, %v1704
  %v2025 = vmul.f32 %v2009, %v1705
  %v2026 = vmul.f32 %v2010, %v1706
  %v2027 = vmul.f32 %v2011, %v1707
  %v2028 = vmul.f32 %v2012, %v1708
  %v2029 = vmul.f32 %v2013, %v1709
  %v2030 = vpack.c.bf16 %v2015, %v2014
  %v2031 = vpack.c.bf16 %v2017, %v2016
  %v2032 = vpack.c.bf16 %v2019, %v2018
  %v2033 = vpack.c.bf16 %v2021, %v2020
  %v2034 = vpack.c.bf16 %v2023, %v2022
  %v2035 = vpack.c.bf16 %v2025, %v2024
  %v2036 = vpack.c.bf16 %v2027, %v2026
  %v2037 = vpack.c.bf16 %v2029, %v2028
  %v2038 = vld [vmem:[%s13] sm:$0xf]
  %v2039 = vld [vmem:[%s13 + $0x4] sm:$0xf]
  %v2040 = vld [vmem:[%s13 + $0x8] sm:$0xf]
  %v2041 = vld [vmem:[%s13 + $0xc] sm:$0xf]
  %v2042 = vld [vmem:[%s14] sm:$0x1]
  %v2044 = vperm.slane %v2042, 0
  %v2050 = vunpack.c.l.b16 %v2038
  %v2051 = vunpack.c.l.b16 %v2039
  %v2052 = vunpack.c.l.b16 %v2040
  %v2053 = vunpack.c.l.b16 %v2041
  %v2054 = vpack.c.b16 %v2051, %v2050
  %v2055 = vpack.c.b16 %v2053, %v2052
  %v2059 = vsel %vm481, %v2030, 0
  %v2062 = vsel %vm481, %v2031, 0
  %v2065 = vsel %vm481, %v2032, 0
  %v2068 = vsel %vm481, %v2033, 0
  %v2071 = vsel %vm481, %v2034, 0
  %v2074 = vsel %vm481, %v2035, 0
  %v2077 = vsel %vm481, %v2036, 0
  %v2080 = vsel %vm481, %v2037, 0
  %2082 = vmatpush.bf16.msra.mxu0 0
  %2083 = vmatpush.bf16.msra.mxu0 0
  %2084 = vmatpush.bf16.msra.mxu0 0
  %2085 = vmatpush.bf16.msra.mxu0 0
  %2086 = vmatpush.bf16.msra.mxu0 0
  %2087 = vmatpush.bf16.msra.mxu0 0
  %2088 = vmatpush.bf16.msra.mxu0 %v2055
  %2089 = vmatpush.bf16.msra.mxu0 %v2054
  %2090 = vmatmul.bf16.gmra.mxu0 %v2059
  %v2091 = vpop.f32.mrf.mxu0
  %v2092 = vadd.f32 %v2044, %v2091
  %v2093 = vpop.f32.mrf.mxu0
  %v2094 = vadd.f32 %v2044, %v2093
  %2095 = vmatmul.bf16.gmra.mxu0 %v2062
  %v2096 = vpop.f32.mrf.mxu0
  %v2097 = vadd.f32 %v2044, %v2096
  %v2098 = vpop.f32.mrf.mxu0
  %v2099 = vadd.f32 %v2044, %v2098
  %2100 = vmatmul.bf16.gmra.mxu0 %v2065
  %v2101 = vpop.f32.mrf.mxu0
  %v2102 = vadd.f32 %v2044, %v2101
  %v2103 = vpop.f32.mrf.mxu0
  %v2104 = vadd.f32 %v2044, %v2103
  %2105 = vmatmul.bf16.gmra.mxu0 %v2068
  %v2106 = vpop.f32.mrf.mxu0
  %v2107 = vadd.f32 %v2044, %v2106
  %v2108 = vpop.f32.mrf.mxu0
  %v2109 = vadd.f32 %v2044, %v2108
  %2110 = vmatmul.bf16.gmra.mxu0 %v2071
  %v2111 = vpop.f32.mrf.mxu0
  %v2112 = vadd.f32 %v2044, %v2111
  %v2113 = vpop.f32.mrf.mxu0
  %v2114 = vadd.f32 %v2044, %v2113
  %2115 = vmatmul.bf16.gmra.mxu0 %v2074
  %v2116 = vpop.f32.mrf.mxu0
  %v2117 = vadd.f32 %v2044, %v2116
  %v2118 = vpop.f32.mrf.mxu0
  %v2119 = vadd.f32 %v2044, %v2118
  %2120 = vmatmul.bf16.gmra.mxu0 %v2077
  %v2121 = vpop.f32.mrf.mxu0
  %v2122 = vadd.f32 %v2044, %v2121
  %v2123 = vpop.f32.mrf.mxu0
  %v2124 = vadd.f32 %v2044, %v2123
  %2125 = vmatmul.bf16.gmra.mxu0 %v2080
  %v2126 = vpop.f32.mrf.mxu0
  %v2127 = vadd.f32 %v2044, %v2126
  %v2128 = vpop.f32.mrf.mxu0
  %v2129 = vadd.f32 %v2044, %v2128
  %2130 = vdwg.mxu0
  %v2131 = vld [vmem:[%s4] sm:$0xff]
  %v2132 = vld [vmem:[%s4 + $0x8] sm:$0xff]
  %v2133 = vld [vmem:[%s4 + $0x10] sm:$0xff]
  %v2134 = vld [vmem:[%s4 + $0x18] sm:$0xff]
  %v2135 = vld [vmem:[%s4 + $0x20] sm:$0xff]
  %v2136 = vld [vmem:[%s4 + $0x28] sm:$0xff]
  %v2137 = vld [vmem:[%s4 + $0x30] sm:$0xff]
  %v2138 = vld [vmem:[%s4 + $0x38] sm:$0xff]
  %v2139 = vld [vmem:[%s4 + $0x40] sm:$0xff]
  %v2140 = vld [vmem:[%s4 + $0x48] sm:$0xff]
  %v2141 = vld [vmem:[%s4 + $0x50] sm:$0xff]
  %v2142 = vld [vmem:[%s4 + $0x58] sm:$0xff]
  %v2143 = vld [vmem:[%s4 + $0x60] sm:$0xff]
  %v2144 = vld [vmem:[%s4 + $0x68] sm:$0xff]
  %v2145 = vld [vmem:[%s4 + $0x70] sm:$0xff]
  %v2146 = vld [vmem:[%s4 + $0x78] sm:$0xff]
  %v2147 = vadd.f32 %v2092, %v2131
  %v2148 = vadd.f32 %v2094, %v2132
  %v2149 = vadd.f32 %v2097, %v2133
  %v2150 = vadd.f32 %v2099, %v2134
  %v2151 = vadd.f32 %v2102, %v2135
  %v2152 = vadd.f32 %v2104, %v2136
  %v2153 = vadd.f32 %v2107, %v2137
  %v2154 = vadd.f32 %v2109, %v2138
  %v2155 = vadd.f32 %v2112, %v2139
  %v2156 = vadd.f32 %v2114, %v2140
  %v2157 = vadd.f32 %v2117, %v2141
  %v2158 = vadd.f32 %v2119, %v2142
  %v2159 = vadd.f32 %v2122, %v2143
  %v2160 = vadd.f32 %v2124, %v2144
  %v2161 = vadd.f32 %v2127, %v2145
  %v2162 = vadd.f32 %v2129, %v2146
  %2163 = vst.msk [vmem:[%s15] sm:$0xff] %vm481, %v2147
  %2164 = vst.msk [vmem:[%s15 + $0x8] sm:$0xff] %vm481, %v2148
  %2165 = vst.msk [vmem:[%s15 + $0x10] sm:$0xff] %vm481, %v2149
  %2166 = vst.msk [vmem:[%s15 + $0x18] sm:$0xff] %vm481, %v2150
  %2167 = vst.msk [vmem:[%s15 + $0x20] sm:$0xff] %vm481, %v2151
  %2168 = vst.msk [vmem:[%s15 + $0x28] sm:$0xff] %vm481, %v2152
  %2169 = vst.msk [vmem:[%s15 + $0x30] sm:$0xff] %vm481, %v2153
  %2170 = vst.msk [vmem:[%s15 + $0x38] sm:$0xff] %vm481, %v2154
  %2171 = vst.msk [vmem:[%s15 + $0x40] sm:$0xff] %vm481, %v2155
  %2172 = vst.msk [vmem:[%s15 + $0x48] sm:$0xff] %vm481, %v2156
  %2173 = vst.msk [vmem:[%s15 + $0x50] sm:$0xff] %vm481, %v2157
  %2174 = vst.msk [vmem:[%s15 + $0x58] sm:$0xff] %vm481, %v2158
  %2175 = vst.msk [vmem:[%s15 + $0x60] sm:$0xff] %vm481, %v2159
  %2176 = vst.msk [vmem:[%s15 + $0x68] sm:$0xff] %vm481, %v2160
  %2177 = vst.msk [vmem:[%s15 + $0x70] sm:$0xff] %vm481, %v2161
  %2178 = vst.msk [vmem:[%s15 + $0x78] sm:$0xff] %vm481, %v2162
  // Predicated region
  $region62: #{icosa_backbone_forward.12} parent=0 // pred_check
    _
  $region63: #{icosa_backbone_forward.12} parent=0 // pred_check_branch
    %2180 = sbr.rel (0) target = $region65
  $region64: #{icosa_backbone_forward.12} parent=0 // pred_region
    _
  $region65: #{icosa_backbone_forward.12} parent=0 // pred_fallthru
    _
  // Predicated region
  $region66: #{icosa_backbone_forward.12} parent=0 // pred_check
    _
  $region67: #{icosa_backbone_forward.12} parent=0 // pred_check_branch
    %2182 = sbr.rel (0) target = $region69
  $region68: #{icosa_backbone_forward.12} parent=0 // pred_region
    _
  $region69: #{icosa_backbone_forward.12} parent=0 // pred_fallthru
    _

// kernel: neg.7
$region0: #{neg.7}
  #allocation0 [shape = 's32[1]{0}', space=sflag, size = 0x4, scoped, tag = 'scoped memory for neg.7']
  %s0 = inlined_call_operand.vmem [shape: f32[2,16,16], index: 0, kind: input, shape index: {}]
  %s1 = inlined_call_operand.vmem [shape: f32[2,16,16], index: 1, kind: output, shape index: {}]
  %v2 = vld [vmem:[%s0] sm:$0xff]
  %3 = xla_tuple %v2
  %4 = xla_tuple %3
  %v5 = vxor.u32 %v2, 2147483648
  %6 = xla_tuple %v5
  %7 = vst [vmem:[%s1] sm:$0xff] %v5
  %s8 = scalar_lea.vmem %s0, 16
  %v9 = vld [vmem:[%s8] sm:$0xff]
  %10 = xla_tuple %v9
  %11 = xla_tuple %10
  %v12 = vxor.u32 %v9, 2147483648
  %13 = xla_tuple %v12
  %s14 = scalar_lea.vmem %s1, 16
  %15 = vst [vmem:[%s14] sm:$0xff] %v12
  %s16 = scalar_lea.vmem %s0, 8
  %v17 = vld [vmem:[%s16] sm:$0xff]
  %18 = xla_tuple %v17
  %19 = xla_tuple %18
  %v20 = vxor.u32 %v17, 2147483648
  %21 = xla_tuple %v20
  %s22 = scalar_lea.vmem %s1, 8
  %23 = vst [vmem:[%s22] sm:$0xff] %v20
  %s24 = scalar_lea.vmem %s0, 24
  %v25 = vld [vmem:[%s24] sm:$0xff]
  %26 = xla_tuple %v25
  %27 = xla_tuple %26
  %v28 = vxor.u32 %v25, 2147483648
  %29 = xla_tuple %v28
  %s30 = scalar_lea.vmem %s1, 24
  %31 = vst [vmem:[%s30] sm:$0xff] %v28

// kernel: icosa_backbone_forward.13
$region0: #{icosa_backbone_forward.13}
  #allocation0 [shape = 'u32[]', space=smem, size = 0x4, offset = 0x4, fixed_abs, tag = 'smem constant byte address 0x4 - core index']
  #allocation1 [shape = 'u32[72,128]{1,0:T(1,128)}', space=vmem, size = 0x9000, scoped, tag = 'internal scratch']
  %s0 = inlined_call_operand.vmem [shape: f32[4,32,35], index: 0, kind: input, shape index: {}]
  %s1 = inlined_call_operand.vmem [shape: bf16[35,64], index: 1, kind: input, shape index: {}]
  %s2 = inlined_call_operand.vmem [shape: f32[1,64], index: 2, kind: input, shape index: {}]
  %s3 = inlined_call_operand.vmem [shape: bf16[64,64], index: 3, kind: input, shape index: {}]
  %s4 = inlined_call_operand.vmem [shape: f32[1,64], index: 4, kind: input, shape index: {}]
  %s5 = inlined_call_operand.vmem [shape: f32[32,64], index: 5, kind: output, shape index: {}]
  %s6 = sld [smem:[#allocation0]]
  $region30: #{icosa_backbone_forward.13} parent=0
    _
  %s8 = ssub.s32 1, %s6
  %s9 = scalar_select 0, %s8, %s6
  // Predicated region
  $region2: #{icosa_backbone_forward.13} parent=0 // pred_check
    _
  $region3: #{icosa_backbone_forward.13} parent=0 // pred_check_branch
    %11 = sbr.rel (0) target = $region5
  $region4: #{icosa_backbone_forward.13} parent=0 // pred_region
    _
  $region5: #{icosa_backbone_forward.13} parent=0 // pred_fallthru
    _
  // Predicated region
  $region6: #{icosa_backbone_forward.13} parent=0 // pred_check
    _
  $region7: #{icosa_backbone_forward.13} parent=0 // pred_check_branch
    %13 = sbr.rel (0) target = $region9
  $region8: #{icosa_backbone_forward.13} parent=0 // pred_region
    _
  $region9: #{icosa_backbone_forward.13} parent=0 // pred_fallthru
    _
  // Predicated region
  $region10: #{icosa_backbone_forward.13} parent=0 // pred_check
    _
  $region11: #{icosa_backbone_forward.13} parent=0 // pred_check_branch
    %15 = sbr.rel (0) target = $region13
  $region12: #{icosa_backbone_forward.13} parent=0 // pred_region
    _
  $region13: #{icosa_backbone_forward.13} parent=0 // pred_fallthru
    _
  // Predicated region
  $region14: #{icosa_backbone_forward.13} parent=0 // pred_check
    _
  $region15: #{icosa_backbone_forward.13} parent=0 // pred_check_branch
    %17 = sbr.rel (0) target = $region17
  $region16: #{icosa_backbone_forward.13} parent=0 // pred_region
    _
  $region17: #{icosa_backbone_forward.13} parent=0 // pred_fallthru
    _
  // Predicated region
  $region18: #{icosa_backbone_forward.13} parent=0 // pred_check
    _
  $region19: #{icosa_backbone_forward.13} parent=0 // pred_check_branch
    %19 = sbr.rel (0) target = $region21
  $region20: #{icosa_backbone_forward.13} parent=0 // pred_region
    _
  $region21: #{icosa_backbone_forward.13} parent=0 // pred_fallthru
    _
  %v21 = vld [vmem:[%s0] sm:$0xff]
  %v22 = vld [vmem:[%s0 + $0x8] sm:$0xff]
  %v23 = vld [vmem:[%s0 + $0x10] sm:$0xff]
  %v24 = vld [vmem:[%s0 + $0x18] sm:$0xff]
  %v25 = vpack.c.bf16 %v22, %v21
  %v26 = vpack.c.bf16 %v24, %v23
  %v27 = vld [vmem:[%s1] sm:$0xf]
  %v28 = vld [vmem:[%s1 + $0x4] sm:$0xf]
  %v29 = vld [vmem:[%s1 + $0x8] sm:$0xf]
  %v30 = vld [vmem:[%s1 + $0xc] sm:$0xf]
  %v31 = vld [vmem:[%s1 + $0x10] sm:$0x3]
  %v32 = vld [vmem:[%s2] sm:$0x1]
  %v34 = vperm.slane %v32, 0
  %v41 = vunpack.c.l.b16 %v27
  %v42 = vunpack.c.l.b16 %v28
  %v43 = vunpack.c.l.b16 %v29
  %v44 = vunpack.c.l.b16 %v30
  %v45 = vunpack.c.l.b16 %v31
  %v46 = vpack.c.b16 %v42, %v41
  %v47 = vpack.c.b16 %v44, %v43
  %v48 = vpack.c.b16 %v45, %v45
  %vm51 = vcmask 285696
  %v53 = vsel %vm51, %v25, 0
  %v56 = vsel %vm51, %v26, 0
  %vm58 = vcmask 1040384
  %vm59 = vcmask 1041408
  %v60 = vsel %vm58, 4294967295, 65535
  %v61 = vsel %vm59, %v60, 0
  %v63 = vand.u32 %v48, %v61
  %65 = vmatpush.bf16.msra.mxu0 0
  %66 = vmatpush.bf16.msra.mxu0 0
  %67 = vmatpush.bf16.msra.mxu0 0
  %68 = vmatpush.bf16.msra.mxu0 0
  %69 = vmatpush.bf16.msra.mxu0 0
  %70 = vmatpush.bf16.msra.mxu0 %v63
  %71 = vmatpush.bf16.msra.mxu0 %v47
  %72 = vmatpush.bf16.msra.mxu0 %v46
  %73 = vmatmul.bf16.gmra.mxu0 %v53
  %v74 = vpop.f32.mrf.mxu0
  %v75 = vadd.f32 %v34, %v74
  %v76 = vpop.f32.mrf.mxu0
  %v77 = vadd.f32 %v34, %v76
  %78 = vmatmul.bf16.gmra.mxu0 %v56
  %v79 = vpop.f32.mrf.mxu0
  %v80 = vadd.f32 %v34, %v79
  %v81 = vpop.f32.mrf.mxu0
  %v82 = vadd.f32 %v34, %v81
  %83 = vdwg.mxu0
  %v84 = vmax.f32 %v75, 0.0
  %v85 = vmax.f32 %v77, 0.0
  %v86 = vmax.f32 %v80, 0.0
  %v87 = vmax.f32 %v82, 0.0
  %v88 = vpack.c.bf16 %v85, %v84
  %v89 = vpack.c.bf16 %v87, %v86
  %v90 = vld [vmem:[%s3] sm:$0xf]
  %v91 = vld [vmem:[%s3 + $0x4] sm:$0xf]
  %v92 = vld [vmem:[%s3 + $0x8] sm:$0xf]
  %v93 = vld [vmem:[%s3 + $0xc] sm:$0xf]
  %v94 = vld [vmem:[%s3 + $0x10] sm:$0xf]
  %v95 = vld [vmem:[%s3 + $0x14] sm:$0xf]
  %v96 = vld [vmem:[%s3 + $0x18] sm:$0xf]
  %v97 = vld [vmem:[%s3 + $0x1c] sm:$0xf]
  %v98 = vld [vmem:[%s4] sm:$0x1]
  %v100 = vperm.slane %v98, 0
  %v110 = vunpack.c.l.b16 %v90
  %v111 = vunpack.c.l.b16 %v91
  %v112 = vunpack.c.l.b16 %v92
  %v113 = vunpack.c.l.b16 %v93
  %v114 = vunpack.c.l.b16 %v94
  %v115 = vunpack.c.l.b16 %v95
  %v116 = vunpack.c.l.b16 %v96
  %v117 = vunpack.c.l.b16 %v97
  %v118 = vpack.c.b16 %v111, %v110
  %v119 = vpack.c.b16 %v113, %v112
  %v120 = vpack.c.b16 %v115, %v114
  %v121 = vpack.c.b16 %v117, %v116
  %vm126 = vcmask 523264
  %v128 = vsel %vm126, %v88, 0
  %v131 = vsel %vm126, %v89, 0
  %133 = vmatpush.bf16.msra.mxu0 0
  %134 = vmatpush.bf16.msra.mxu0 0
  %135 = vmatpush.bf16.msra.mxu0 0
  %136 = vmatpush.bf16.msra.mxu0 0
  %137 = vmatpush.bf16.msra.mxu0 %v121
  %138 = vmatpush.bf16.msra.mxu0 %v120
  %139 = vmatpush.bf16.msra.mxu0 %v119
  %140 = vmatpush.bf16.msra.mxu0 %v118
  %141 = vmatmul.bf16.gmra.mxu0 %v128
  %v142 = vpop.f32.mrf.mxu0
  %v143 = vadd.f32 %v100, %v142
  %v144 = vpop.f32.mrf.mxu0
  %v145 = vadd.f32 %v100, %v144
  %146 = vmatmul.bf16.gmra.mxu0 %v131
  %v147 = vpop.f32.mrf.mxu0
  %v148 = vadd.f32 %v100, %v147
  %v149 = vpop.f32.mrf.mxu0
  %v150 = vadd.f32 %v100, %v149
  %151 = vdwg.mxu0
  %v152 = vmax.f32 %v143, 0.0
  %v153 = vmax.f32 %v145, 0.0
  %v154 = vmax.f32 %v148, 0.0
  %v155 = vmax.f32 %v150, 0.0
  %s156 = scalar_lea.vmem %s0, 32
  %v157 = vld [vmem:[%s156] sm:$0xff]
  %v158 = vld [vmem:[%s156 + $0x8] sm:$0xff]
  %v159 = vld [vmem:[%s156 + $0x10] sm:$0xff]
  %v160 = vld [vmem:[%s156 + $0x18] sm:$0xff]
  %v161 = vpack.c.bf16 %v158, %v157
  %v162 = vpack.c.bf16 %v160, %v159
  %v164 = vsel %vm51, %v161, 0
  %v167 = vsel %vm51, %v162, 0
  %169 = vmatpush.bf16.msra.mxu0 0
  %170 = vmatpush.bf16.msra.mxu0 0
  %171 = vmatpush.bf16.msra.mxu0 0
  %172 = vmatpush.bf16.msra.mxu0 0
  %173 = vmatpush.bf16.msra.mxu0 0
  %174 = vmatpush.bf16.msra.mxu0 %v63
  %175 = vmatpush.bf16.msra.mxu0 %v47
  %176 = vmatpush.bf16.msra.mxu0 %v46
  %177 = vmatmul.bf16.gmra.mxu0 %v164
  %v178 = vpop.f32.mrf.mxu0
  %v179 = vadd.f32 %v34, %v178
  %v180 = vpop.f32.mrf.mxu0
  %v181 = vadd.f32 %v34, %v180
  %182 = vmatmul.bf16.gmra.mxu0 %v167
  %v183 = vpop.f32.mrf.mxu0
  %v184 = vadd.f32 %v34, %v183
  %v185 = vpop.f32.mrf.mxu0
  %v186 = vadd.f32 %v34, %v185
  %187 = vdwg.mxu0
  %v188 = vmax.f32 %v179, 0.0
  %v189 = vmax.f32 %v181, 0.0
  %v190 = vmax.f32 %v184, 0.0
  %v191 = vmax.f32 %v186, 0.0
  %v192 = vpack.c.bf16 %v189, %v188
  %v193 = vpack.c.bf16 %v191, %v190
  %v195 = vsel %vm126, %v192, 0
  %v198 = vsel %vm126, %v193, 0
  %200 = vmatpush.bf16.msra.mxu0 0
  %201 = vmatpush.bf16.msra.mxu0 0
  %202 = vmatpush.bf16.msra.mxu0 0
  %203 = vmatpush.bf16.msra.mxu0 0
  %204 = vmatpush.bf16.msra.mxu0 %v121
  %205 = vmatpush.bf16.msra.mxu0 %v120
  %206 = vmatpush.bf16.msra.mxu0 %v119
  %207 = vmatpush.bf16.msra.mxu0 %v118
  %208 = vmatmul.bf16.gmra.mxu0 %v195
  %v209 = vpop.f32.mrf.mxu0
  %v210 = vadd.f32 %v100, %v209
  %v211 = vpop.f32.mrf.mxu0
  %v212 = vadd.f32 %v100, %v211
  %213 = vmatmul.bf16.gmra.mxu0 %v198
  %v214 = vpop.f32.mrf.mxu0
  %v215 = vadd.f32 %v100, %v214
  %v216 = vpop.f32.mrf.mxu0
  %v217 = vadd.f32 %v100, %v216
  %218 = vdwg.mxu0
  %v219 = vmax.f32 %v210, 0.0
  %v220 = vmax.f32 %v212, 0.0
  %v221 = vmax.f32 %v215, 0.0
  %v222 = vmax.f32 %v217, 0.0
  %v223 = vmax.f32 %v152, %v219
  %v224 = vmax.f32 %v153, %v220
  %v225 = vmax.f32 %v154, %v221
  %v226 = vmax.f32 %v155, %v222
  %s227 = scalar_lea.vmem %s0, 64
  %v228 = vld [vmem:[%s227] sm:$0xff]
  %v229 = vld [vmem:[%s227 + $0x8] sm:$0xff]
  %v230 = vld [vmem:[%s227 + $0x10] sm:$0xff]
  %v231 = vld [vmem:[%s227 + $0x18] sm:$0xff]
  %v232 = vpack.c.bf16 %v229, %v228
  %v233 = vpack.c.bf16 %v231, %v230
  %v235 = vsel %vm51, %v232, 0
  %v238 = vsel %vm51, %v233, 0
  %240 = vmatpush.bf16.msra.mxu0 0
  %241 = vmatpush.bf16.msra.mxu0 0
  %242 = vmatpush.bf16.msra.mxu0 0
  %243 = vmatpush.bf16.msra.mxu0 0
  %244 = vmatpush.bf16.msra.mxu0 0
  %245 = vmatpush.bf16.msra.mxu0 %v63
  %246 = vmatpush.bf16.msra.mxu0 %v47
  %247 = vmatpush.bf16.msra.mxu0 %v46
  %248 = vmatmul.bf16.gmra.mxu0 %v235
  %v249 = vpop.f32.mrf.mxu0
  %v250 = vadd.f32 %v34, %v249
  %v251 = vpop.f32.mrf.mxu0
  %v252 = vadd.f32 %v34, %v251
  %253 = vmatmul.bf16.gmra.mxu0 %v238
  %v254 = vpop.f32.mrf.mxu0
  %v255 = vadd.f32 %v34, %v254
  %v256 = vpop.f32.mrf.mxu0
  %v257 = vadd.f32 %v34, %v256
  %258 = vdwg.mxu0
  %v259 = vmax.f32 %v250, 0.0
  %v260 = vmax.f32 %v252, 0.0
  %v261 = vmax.f32 %v255, 0.0
  %v262 = vmax.f32 %v257, 0.0
  %v263 = vpack.c.bf16 %v260, %v259
  %v264 = vpack.c.bf16 %v262, %v261
  %v266 = vsel %vm126, %v263, 0
  %v269 = vsel %vm126, %v264, 0
  %271 = vmatpush.bf16.msra.mxu0 0
  %272 = vmatpush.bf16.msra.mxu0 0
  %273 = vmatpush.bf16.msra.mxu0 0
  %274 = vmatpush.bf16.msra.mxu0 0
  %275 = vmatpush.bf16.msra.mxu0 %v121
  %276 = vmatpush.bf16.msra.mxu0 %v120
  %277 = vmatpush.bf16.msra.mxu0 %v119
  %278 = vmatpush.bf16.msra.mxu0 %v118
  %279 = vmatmul.bf16.gmra.mxu0 %v266
  %v280 = vpop.f32.mrf.mxu0
  %v281 = vadd.f32 %v100, %v280
  %v282 = vpop.f32.mrf.mxu0
  %v283 = vadd.f32 %v100, %v282
  %284 = vmatmul.bf16.gmra.mxu0 %v269
  %v285 = vpop.f32.mrf.mxu0
  %v286 = vadd.f32 %v100, %v285
  %v287 = vpop.f32.mrf.mxu0
  %v288 = vadd.f32 %v100, %v287
  %289 = vdwg.mxu0
  %v290 = vmax.f32 %v281, 0.0
  %v291 = vmax.f32 %v283, 0.0
  %v292 = vmax.f32 %v286, 0.0
  %v293 = vmax.f32 %v288, 0.0
  %v294 = vmax.f32 %v223, %v290
  %v295 = vmax.f32 %v224, %v291
  %v296 = vmax.f32 %v225, %v292
  %v297 = vmax.f32 %v226, %v293
  %s298 = scalar_lea.vmem %s0, 96
  %v299 = vld [vmem:[%s298] sm:$0xff]
  %v300 = vld [vmem:[%s298 + $0x8] sm:$0xff]
  %v301 = vld [vmem:[%s298 + $0x10] sm:$0xff]
  %v302 = vld [vmem:[%s298 + $0x18] sm:$0xff]
  %v303 = vpack.c.bf16 %v300, %v299
  %v304 = vpack.c.bf16 %v302, %v301
  %v306 = vsel %vm51, %v303, 0
  %v309 = vsel %vm51, %v304, 0
  %311 = vmatpush.bf16.msra.mxu0 0
  %312 = vmatpush.bf16.msra.mxu0 0
  %313 = vmatpush.bf16.msra.mxu0 0
  %314 = vmatpush.bf16.msra.mxu0 0
  %315 = vmatpush.bf16.msra.mxu0 0
  %316 = vmatpush.bf16.msra.mxu0 %v63
  %317 = vmatpush.bf16.msra.mxu0 %v47
  %318 = vmatpush.bf16.msra.mxu0 %v46
  %319 = vmatmul.bf16.gmra.mxu0 %v306
  %v320 = vpop.f32.mrf.mxu0
  %v321 = vadd.f32 %v34, %v320
  %v322 = vpop.f32.mrf.mxu0
  %v323 = vadd.f32 %v34, %v322
  %324 = vmatmul.bf16.gmra.mxu0 %v309
  %v325 = vpop.f32.mrf.mxu0
  %v326 = vadd.f32 %v34, %v325
  %v327 = vpop.f32.mrf.mxu0
  %v328 = vadd.f32 %v34, %v327
  %329 = vdwg.mxu0
  %v330 = vmax.f32 %v321, 0.0
  %v331 = vmax.f32 %v323, 0.0
  %v332 = vmax.f32 %v326, 0.0
  %v333 = vmax.f32 %v328, 0.0
  %v334 = vpack.c.bf16 %v331, %v330
  %v335 = vpack.c.bf16 %v333, %v332
  %v337 = vsel %vm126, %v334, 0
  %v340 = vsel %vm126, %v335, 0
  %342 = vmatpush.bf16.msra.mxu0 0
  %343 = vmatpush.bf16.msra.mxu0 0
  %344 = vmatpush.bf16.msra.mxu0 0
  %345 = vmatpush.bf16.msra.mxu0 0
  %346 = vmatpush.bf16.msra.mxu0 %v121
  %347 = vmatpush.bf16.msra.mxu0 %v120
  %348 = vmatpush.bf16.msra.mxu0 %v119
  %349 = vmatpush.bf16.msra.mxu0 %v118
  %350 = vmatmul.bf16.gmra.mxu0 %v337
  %v351 = vpop.f32.mrf.mxu0
  %v352 = vadd.f32 %v100, %v351
  %v353 = vpop.f32.mrf.mxu0
  %v354 = vadd.f32 %v100, %v353
  %355 = vmatmul.bf16.gmra.mxu0 %v340
  %v356 = vpop.f32.mrf.mxu0
  %v357 = vadd.f32 %v100, %v356
  %v358 = vpop.f32.mrf.mxu0
  %v359 = vadd.f32 %v100, %v358
  %360 = vdwg.mxu0
  %v361 = vmax.f32 %v352, 0.0
  %v362 = vmax.f32 %v354, 0.0
  %v363 = vmax.f32 %v357, 0.0
  %v364 = vmax.f32 %v359, 0.0
  %v365 = vmax.f32 %v294, %v361
  %v366 = vmax.f32 %v295, %v362
  %v367 = vmax.f32 %v296, %v363
  %v368 = vmax.f32 %v297, %v364
  %369 = vst.msk [vmem:[%s5] sm:$0xff] %vm126, %v365
  %370 = vst.msk [vmem:[%s5 + $0x8] sm:$0xff] %vm126, %v366
  %371 = vst.msk [vmem:[%s5 + $0x10] sm:$0xff] %vm126, %v367
  %372 = vst.msk [vmem:[%s5 + $0x18] sm:$0xff] %vm126, %v368
  // Predicated region
  $region22: #{icosa_backbone_forward.13} parent=0 // pred_check
    _
  $region23: #{icosa_backbone_forward.13} parent=0 // pred_check_branch
    %374 = sbr.rel (0) target = $region25
  $region24: #{icosa_backbone_forward.13} parent=0 // pred_region
    _
  $region25: #{icosa_backbone_forward.13} parent=0 // pred_fallthru
    _
  // Predicated region
  $region26: #{icosa_backbone_forward.13} parent=0 // pred_check
    _
  $region27: #{icosa_backbone_forward.13} parent=0 // pred_check_branch
    %376 = sbr.rel (0) target = $region29
  $region28: #{icosa_backbone_forward.13} parent=0 // pred_region
    _
  $region29: #{icosa_backbone_forward.13} parent=0 // pred_fallthru
    _

// kernel: icosa_backbone_forward.14
$region0: #{icosa_backbone_forward.14}
  #allocation0 [shape = 'u32[]', space=smem, size = 0x4, offset = 0x4, fixed_abs, tag = 'smem constant byte address 0x4 - core index']
  #allocation1 [shape = 'u32[72,128]{1,0:T(1,128)}', space=vmem, size = 0x9000, scoped, tag = 'internal scratch']
  %s0 = inlined_call_operand.vmem [shape: f32[32,64], index: 0, kind: input, shape index: {}]
  %s1 = inlined_call_operand.vmem [shape: bf16[64,32], index: 1, kind: input, shape index: {}]
  %s2 = inlined_call_operand.vmem [shape: f32[1,32], index: 2, kind: input, shape index: {}]
  %s3 = inlined_call_operand.vmem [shape: bf16[32,96], index: 3, kind: input, shape index: {}]
  %s4 = inlined_call_operand.vmem [shape: f32[32,96], index: 4, kind: output, shape index: {}]
  %s5 = sld [smem:[#allocation0]]
  $region26: #{icosa_backbone_forward.14} parent=0
    _
  %s7 = ssub.s32 1, %s5
  %s8 = scalar_select 0, %s7, %s5
  // Predicated region
  $region2: #{icosa_backbone_forward.14} parent=0 // pred_check
    _
  $region3: #{icosa_backbone_forward.14} parent=0 // pred_check_branch
    %10 = sbr.rel (0) target = $region5
  $region4: #{icosa_backbone_forward.14} parent=0 // pred_region
    _
  $region5: #{icosa_backbone_forward.14} parent=0 // pred_fallthru
    _
  // Predicated region
  $region6: #{icosa_backbone_forward.14} parent=0 // pred_check
    _
  $region7: #{icosa_backbone_forward.14} parent=0 // pred_check_branch
    %12 = sbr.rel (0) target = $region9
  $region8: #{icosa_backbone_forward.14} parent=0 // pred_region
    _
  $region9: #{icosa_backbone_forward.14} parent=0 // pred_fallthru
    _
  // Predicated region
  $region10: #{icosa_backbone_forward.14} parent=0 // pred_check
    _
  $region11: #{icosa_backbone_forward.14} parent=0 // pred_check_branch
    %14 = sbr.rel (0) target = $region13
  $region12: #{icosa_backbone_forward.14} parent=0 // pred_region
    _
  $region13: #{icosa_backbone_forward.14} parent=0 // pred_fallthru
    _
  // Predicated region
  $region14: #{icosa_backbone_forward.14} parent=0 // pred_check
    _
  $region15: #{icosa_backbone_forward.14} parent=0 // pred_check_branch
    %16 = sbr.rel (0) target = $region17
  $region16: #{icosa_backbone_forward.14} parent=0 // pred_region
    _
  $region17: #{icosa_backbone_forward.14} parent=0 // pred_fallthru
    _
  %v18 = vld [vmem:[%s0] sm:$0xff]
  %v19 = vld [vmem:[%s0 + $0x8] sm:$0xff]
  %v20 = vld [vmem:[%s0 + $0x10] sm:$0xff]
  %v21 = vld [vmem:[%s0 + $0x18] sm:$0xff]
  %v22 = vpack.c.bf16 %v19, %v18
  %v23 = vpack.c.bf16 %v21, %v20
  %v24 = vld [vmem:[%s1] sm:$0xf]
  %v25 = vld [vmem:[%s1 + $0x4] sm:$0xf]
  %v26 = vld [vmem:[%s1 + $0x8] sm:$0xf]
  %v27 = vld [vmem:[%s1 + $0xc] sm:$0xf]
  %v28 = vld [vmem:[%s1 + $0x10] sm:$0xf]
  %v29 = vld [vmem:[%s1 + $0x14] sm:$0xf]
  %v30 = vld [vmem:[%s1 + $0x18] sm:$0xf]
  %v31 = vld [vmem:[%s1 + $0x1c] sm:$0xf]
  %v32 = vld [vmem:[%s2] sm:$0x1]
  %v34 = vperm.slane %v32, 0
  %v44 = vunpack.c.l.b16 %v24
  %v45 = vunpack.c.l.b16 %v25
  %v46 = vunpack.c.l.b16 %v26
  %v47 = vunpack.c.l.b16 %v27
  %v48 = vunpack.c.l.b16 %v28
  %v49 = vunpack.c.l.b16 %v29
  %v50 = vunpack.c.l.b16 %v30
  %v51 = vunpack.c.l.b16 %v31
  %v52 = vpack.c.b16 %v45, %v44
  %v53 = vpack.c.b16 %v47, %v46
  %v54 = vpack.c.b16 %v49, %v48
  %v55 = vpack.c.b16 %v51, %v50
  %vm60 = vcmask 523264
  %v62 = vsel %vm60, %v22, 0
  %v65 = vsel %vm60, %v23, 0
  %67 = vmatpush.bf16.msra.mxu0 0
  %68 = vmatpush.bf16.msra.mxu0 0
  %69 = vmatpush.bf16.msra.mxu0 0
  %70 = vmatpush.bf16.msra.mxu0 0
  %71 = vmatpush.bf16.msra.mxu0 %v55
  %72 = vmatpush.bf16.msra.mxu0 %v54
  %73 = vmatpush.bf16.msra.mxu0 %v53
  %74 = vmatpush.bf16.msra.mxu0 %v52
  %75 = vmatmul.bf16.gmra.mxu0 %v62
  %v76 = vpop.f32.mrf.mxu0
  %v77 = vadd.f32 %v34, %v76
  %v78 = vpop.f32.mrf.mxu0
  %v79 = vadd.f32 %v34, %v78
  %80 = vmatmul.bf16.gmra.mxu0 %v65
  %v81 = vpop.f32.mrf.mxu0
  %v82 = vadd.f32 %v34, %v81
  %v83 = vpop.f32.mrf.mxu0
  %v84 = vadd.f32 %v34, %v83
  %85 = vdwg.mxu0
  %v86 = vpack.c.bf16 %v79, %v77
  %v87 = vpack.c.bf16 %v84, %v82
  %v88 = vld [vmem:[%s3] sm:$0xf]
  %v89 = vld [vmem:[%s3 + $0x4] sm:$0xf]
  %v90 = vld [vmem:[%s3 + $0x8] sm:$0xf]
  %v91 = vld [vmem:[%s3 + $0xc] sm:$0xf]
  %v96 = vunpack.c.l.b16 %v88
  %v97 = vunpack.c.l.b16 %v89
  %v98 = vunpack.c.l.b16 %v90
  %v99 = vunpack.c.l.b16 %v91
  %v100 = vpack.c.b16 %v97, %v96
  %v101 = vpack.c.b16 %v99, %v98
  %vm104 = vcmask 261120
  %v106 = vsel %vm104, %v86, 0
  %v109 = vsel %vm104, %v87, 0
  %111 = vmatpush.bf16.msra.mxu0 0
  %112 = vmatpush.bf16.msra.mxu0 0
  %113 = vmatpush.bf16.msra.mxu0 0
  %114 = vmatpush.bf16.msra.mxu0 0
  %115 = vmatpush.bf16.msra.mxu0 0
  %116 = vmatpush.bf16.msra.mxu0 0
  %117 = vmatpush.bf16.msra.mxu0 %v101
  %118 = vmatpush.bf16.msra.mxu0 %v100
  %119 = vmatmul.bf16.gmra.mxu0 %v106
  %v120 = vpop.f32.mrf.mxu0
  %v121 = vadd.f32 0.0, %v120
  %v122 = vpop.f32.mrf.mxu0
  %v123 = vadd.f32 0.0, %v122
  %124 = vmatmul.bf16.gmra.mxu0 %v109
  %v125 = vpop.f32.mrf.mxu0
  %v126 = vadd.f32 0.0, %v125
  %v127 = vpop.f32.mrf.mxu0
  %v128 = vadd.f32 0.0, %v127
  %129 = vdwg.mxu0
  %vm130 = vcmask 785408
  %131 = vst.msk [vmem:[%s4] sm:$0xff] %vm130, %v121
  %132 = vst.msk [vmem:[%s4 + $0x8] sm:$0xff] %vm130, %v123
  %133 = vst.msk [vmem:[%s4 + $0x10] sm:$0xff] %vm130, %v126
  %134 = vst.msk [vmem:[%s4 + $0x18] sm:$0xff] %vm130, %v128
  // Predicated region
  $region18: #{icosa_backbone_forward.14} parent=0 // pred_check
    _
  $region19: #{icosa_backbone_forward.14} parent=0 // pred_check_branch
    %136 = sbr.rel (0) target = $region21
  $region20: #{icosa_backbone_forward.14} parent=0 // pred_region
    _
  $region21: #{icosa_backbone_forward.14} parent=0 // pred_fallthru
    _
  // Predicated region
  $region22: #{icosa_backbone_forward.14} parent=0 // pred_check
    _
  $region23: #{icosa_backbone_forward.14} parent=0 // pred_check_branch
    %138 = sbr.rel (0) target = $region25
  $region24: #{icosa_backbone_forward.14} parent=0 // pred_region
    _
  $region25: #{icosa_backbone_forward.14} parent=0 // pred_fallthru
    _

// kernel: custom-call.39
$region0: #{custom-call.39}
  %s0 = inlined_call_operand.vmem [shape: s32[4,2], index: 0, kind: output, shape index: {}]

// kernel: custom-call.35
$region0: #{custom-call.35}
  %s0 = inlined_call_operand.vmem [shape: f32[2,16], index: 0, kind: output, shape index: {}]

// kernel: neg.8
$region0: #{neg.8}
  #allocation0 [shape = 's32[1]{0}', space=sflag, size = 0x4, scoped, tag = 'scoped memory for neg.8']
  %s0 = inlined_call_operand.vmem [shape: f32[2,4,16], index: 0, kind: input, shape index: {}]
  %s1 = inlined_call_operand.vmem [shape: f32[2,4,16], index: 1, kind: output, shape index: {}]
  %v2 = vld [vmem:[%s0] sm:$0xf]
  %3 = xla_tuple %v2
  %4 = xla_tuple %3
  %v5 = vxor.u32 %v2, 2147483648
  %6 = xla_tuple %v5
  %7 = vst [vmem:[%s1] sm:$0xf] %v5
  %s8 = scalar_lea.vmem %s0, 4
  %v9 = vld [vmem:[%s8] sm:$0xf]
  %10 = xla_tuple %v9
  %11 = xla_tuple %10
  %v12 = vxor.u32 %v9, 2147483648
  %13 = xla_tuple %v12
  %s14 = scalar_lea.vmem %s1, 4
  %15 = vst [vmem:[%s14] sm:$0xf] %v12

// kernel: icosa_backbone_forward.15
$region0: #{icosa_backbone_forward.15}
  #allocation0 [shape = 'u32[]', space=smem, size = 0x4, offset = 0x4, fixed_abs, tag = 'smem constant byte address 0x4 - core index']
  #allocation1 [shape = 'u32[72,128]{1,0:T(1,128)}', space=vmem, size = 0x9000, scoped, tag = 'internal scratch']
  %s0 = inlined_call_operand.vmem [shape: f32[32,32], index: 0, kind: input, shape index: {}]
  %s1 = inlined_call_operand.vmem [shape: f32[32,128], index: 1, kind: input, shape index: {}]
  %s2 = inlined_call_operand.vmem [shape: f32[32,128], index: 2, kind: input, shape index: {}]
  %s3 = inlined_call_operand.vmem [shape: f32[32,12], index: 3, kind: input, shape index: {}]
  %s4 = inlined_call_operand.vmem [shape: f32[32,64], index: 4, kind: input, shape index: {}]
  %s5 = inlined_call_operand.vmem [shape: bf16[12,128], index: 5, kind: input, shape index: {}]
  %s6 = inlined_call_operand.vmem [shape: f32[1,128], index: 6, kind: input, shape index: {}]
  %s7 = inlined_call_operand.vmem [shape: bf16[128,128], index: 7, kind: input, shape index: {}]
  %s8 = inlined_call_operand.vmem [shape: f32[1,128], index: 8, kind: input, shape index: {}]
  %s9 = inlined_call_operand.vmem [shape: bf16[128,128], index: 9, kind: input, shape index: {}]
  %s10 = inlined_call_operand.vmem [shape: f32[1,128], index: 10, kind: input, shape index: {}]
  %s11 = inlined_call_operand.vmem [shape: bf16[128,128], index: 11, kind: input, shape index: {}]
  %s12 = inlined_call_operand.vmem [shape: f32[1,128], index: 12, kind: input, shape index: {}]
  %s13 = inlined_call_operand.vmem [shape: bf16[32,64], index: 13, kind: input, shape index: {}]
  %s14 = inlined_call_operand.vmem [shape: f32[1,64], index: 14, kind: input, shape index: {}]
  %s15 = inlined_call_operand.vmem [shape: f32[32,64], index: 15, kind: output, shape index: {}]
  %s16 = sld [smem:[#allocation0]]
  $region70: #{icosa_backbone_forward.15} parent=0
    _
  %s18 = ssub.s32 1, %s16
  %s19 = scalar_select 0, %s18, %s16
  // Predicated region
  $region2: #{icosa_backbone_forward.15} parent=0 // pred_check
    _
  $region3: #{icosa_backbone_forward.15} parent=0 // pred_check_branch
    %21 = sbr.rel (0) target = $region5
  $region4: #{icosa_backbone_forward.15} parent=0 // pred_region
    _
  $region5: #{icosa_backbone_forward.15} parent=0 // pred_fallthru
    _
  // Predicated region
  $region6: #{icosa_backbone_forward.15} parent=0 // pred_check
    _
  $region7: #{icosa_backbone_forward.15} parent=0 // pred_check_branch
    %23 = sbr.rel (0) target = $region9
  $region8: #{icosa_backbone_forward.15} parent=0 // pred_region
    _
  $region9: #{icosa_backbone_forward.15} parent=0 // pred_fallthru
    _
  // Predicated region
  $region10: #{icosa_backbone_forward.15} parent=0 // pred_check
    _
  $region11: #{icosa_backbone_forward.15} parent=0 // pred_check_branch
    %25 = sbr.rel (0) target = $region13
  $region12: #{icosa_backbone_forward.15} parent=0 // pred_region
    _
  $region13: #{icosa_backbone_forward.15} parent=0 // pred_fallthru
    _
  // Predicated region
  $region14: #{icosa_backbone_forward.15} parent=0 // pred_check
    _
  $region15: #{icosa_backbone_forward.15} parent=0 // pred_check_branch
    %27 = sbr.rel (0) target = $region17
  $region16: #{icosa_backbone_forward.15} parent=0 // pred_region
    _
  $region17: #{icosa_backbone_forward.15} parent=0 // pred_fallthru
    _
  // Predicated region
  $region18: #{icosa_backbone_forward.15} parent=0 // pred_check
    _
  $region19: #{icosa_backbone_forward.15} parent=0 // pred_check_branch
    %29 = sbr.rel (0) target = $region21
  $region20: #{icosa_backbone_forward.15} parent=0 // pred_region
    _
  $region21: #{icosa_backbone_forward.15} parent=0 // pred_fallthru
    _
  // Predicated region
  $region22: #{icosa_backbone_forward.15} parent=0 // pred_check
    _
  $region23: #{icosa_backbone_forward.15} parent=0 // pred_check_branch
    %31 = sbr.rel (0) target = $region25
  $region24: #{icosa_backbone_forward.15} parent=0 // pred_region
    _
  $region25: #{icosa_backbone_forward.15} parent=0 // pred_fallthru
    _
  // Predicated region
  $region26: #{icosa_backbone_forward.15} parent=0 // pred_check
    _
  $region27: #{icosa_backbone_forward.15} parent=0 // pred_check_branch
    %33 = sbr.rel (0) target = $region29
  $region28: #{icosa_backbone_forward.15} parent=0 // pred_region
    _
  $region29: #{icosa_backbone_forward.15} parent=0 // pred_fallthru
    _
  // Predicated region
  $region30: #{icosa_backbone_forward.15} parent=0 // pred_check
    _
  $region31: #{icosa_backbone_forward.15} parent=0 // pred_check_branch
    %35 = sbr.rel (0) target = $region33
  $region32: #{icosa_backbone_forward.15} parent=0 // pred_region
    _
  $region33: #{icosa_backbone_forward.15} parent=0 // pred_fallthru
    _
  // Predicated region
  $region34: #{icosa_backbone_forward.15} parent=0 // pred_check
    _
  $region35: #{icosa_backbone_forward.15} parent=0 // pred_check_branch
    %37 = sbr.rel (0) target = $region37
  $region36: #{icosa_backbone_forward.15} parent=0 // pred_region
    _
  $region37: #{icosa_backbone_forward.15} parent=0 // pred_fallthru
    _
  // Predicated region
  $region38: #{icosa_backbone_forward.15} parent=0 // pred_check
    _
  $region39: #{icosa_backbone_forward.15} parent=0 // pred_check_branch
    %39 = sbr.rel (0) target = $region41
  $region40: #{icosa_backbone_forward.15} parent=0 // pred_region
    _
  $region41: #{icosa_backbone_forward.15} parent=0 // pred_fallthru
    _
  // Predicated region
  $region42: #{icosa_backbone_forward.15} parent=0 // pred_check
    _
  $region43: #{icosa_backbone_forward.15} parent=0 // pred_check_branch
    %41 = sbr.rel (0) target = $region45
  $region44: #{icosa_backbone_forward.15} parent=0 // pred_region
    _
  $region45: #{icosa_backbone_forward.15} parent=0 // pred_fallthru
    _
  // Predicated region
  $region46: #{icosa_backbone_forward.15} parent=0 // pred_check
    _
  $region47: #{icosa_backbone_forward.15} parent=0 // pred_check_branch
    %43 = sbr.rel (0) target = $region49
  $region48: #{icosa_backbone_forward.15} parent=0 // pred_region
    _
  $region49: #{icosa_backbone_forward.15} parent=0 // pred_fallthru
    _
  // Predicated region
  $region50: #{icosa_backbone_forward.15} parent=0 // pred_check
    _
  $region51: #{icosa_backbone_forward.15} parent=0 // pred_check_branch
    %45 = sbr.rel (0) target = $region53
  $region52: #{icosa_backbone_forward.15} parent=0 // pred_region
    _
  $region53: #{icosa_backbone_forward.15} parent=0 // pred_fallthru
    _
  // Predicated region
  $region54: #{icosa_backbone_forward.15} parent=0 // pred_check
    _
  $region55: #{icosa_backbone_forward.15} parent=0 // pred_check_branch
    %47 = sbr.rel (0) target = $region57
  $region56: #{icosa_backbone_forward.15} parent=0 // pred_region
    _
  $region57: #{icosa_backbone_forward.15} parent=0 // pred_fallthru
    _
  // Predicated region
  $region58: #{icosa_backbone_forward.15} parent=0 // pred_check
    _
  $region59: #{icosa_backbone_forward.15} parent=0 // pred_check_branch
    %49 = sbr.rel (0) target = $region61
  $region60: #{icosa_backbone_forward.15} parent=0 // pred_region
    _
  $region61: #{icosa_backbone_forward.15} parent=0 // pred_fallthru
    _
  %v51 = vld [vmem:[%s3] sm:$0xff]
  %v52 = vld [vmem:[%s3 + $0x8] sm:$0xff]
  %v53 = vld [vmem:[%s3 + $0x10] sm:$0xff]
  %v54 = vld [vmem:[%s3 + $0x18] sm:$0xff]
  %v55 = vpack.c.bf16 %v52, %v51
  %v56 = vpack.c.bf16 %v54, %v53
  %v57 = vld [vmem:[%s5] sm:$0xf]
  %v58 = vld [vmem:[%s5 + $0x4] sm:$0x3]
  %v59 = vld [vmem:[%s6] sm:$0x1]
  %v61 = vperm.slane %v59, 0
  %v65 = vunpack.c.l.b16 %v57
  %v66 = vunpack.c.l.b16 %v58
  %v67 = vpack.c.b16 %v66, %v65
  %vm68 = vcmask 97280
  %v70 = vsel %vm68, %v55, 0
  %v73 = vsel %vm68, %v56, 0
  %vm75 = vcmask 1045504
  %v77 = vsel %vm75, %v67, 0
  %79 = vmatpush.bf16.msra.mxu0 0
  %80 = vmatpush.bf16.msra.mxu0 0
  %81 = vmatpush.bf16.msra.mxu0 0
  %82 = vmatpush.bf16.msra.mxu0 0
  %83 = vmatpush.bf16.msra.mxu0 0
  %84 = vmatpush.bf16.msra.mxu0 0
  %85 = vmatpush.bf16.msra.mxu0 0
  %86 = vmatpush.bf16.msra.mxu0 %v77
  %87 = vmatmul.bf16.gmra.mxu0 %v70
  %v88 = vpop.f32.mrf.mxu0
  %v89 = vadd.f32 %v61, %v88
  %v90 = vpop.f32.mrf.mxu0
  %v91 = vadd.f32 %v61, %v90
  %92 = vmatmul.bf16.gmra.mxu0 %v73
  %v93 = vpop.f32.mrf.mxu0
  %v94 = vadd.f32 %v61, %v93
  %v95 = vpop.f32.mrf.mxu0
  %v96 = vadd.f32 %v61, %v95
  %97 = vdwg.mxu0
  %v98 = vmax.f32 %v89, 0.0
  %v99 = vmax.f32 %v91, 0.0
  %v100 = vmax.f32 %v94, 0.0
  %v101 = vmax.f32 %v96, 0.0
  %v102 = vpack.c.bf16 %v99, %v98
  %v103 = vpack.c.bf16 %v101, %v100
  %v104 = vld [vmem:[%s7] sm:$0xf]
  %v105 = vld [vmem:[%s7 + $0x4] sm:$0xf]
  %v106 = vld [vmem:[%s7 + $0x8] sm:$0xf]
  %v107 = vld [vmem:[%s7 + $0xc] sm:$0xf]
  %v108 = vld [vmem:[%s7 + $0x10] sm:$0xf]
  %v109 = vld [vmem:[%s7 + $0x14] sm:$0xf]
  %v110 = vld [vmem:[%s7 + $0x18] sm:$0xf]
  %v111 = vld [vmem:[%s7 + $0x1c] sm:$0xf]
  %v112 = vld [vmem:[%s7 + $0x20] sm:$0xf]
  %v113 = vld [vmem:[%s7 + $0x24] sm:$0xf]
  %v114 = vld [vmem:[%s7 + $0x28] sm:$0xf]
  %v115 = vld [vmem:[%s7 + $0x2c] sm:$0xf]
  %v116 = vld [vmem:[%s7 + $0x30] sm:$0xf]
  %v117 = vld [vmem:[%s7 + $0x34] sm:$0xf]
  %v118 = vld [vmem:[%s7 + $0x38] sm:$0xf]
  %v119 = vld [vmem:[%s7 + $0x3c] sm:$0xf]
  %v120 = vld [vmem:[%s8] sm:$0x1]
  %v122 = vperm.slane %v120, 0
  %v140 = vunpack.c.l.b16 %v104
  %v141 = vunpack.c.l.b16 %v105
  %v142 = vunpack.c.l.b16 %v106
  %v143 = vunpack.c.l.b16 %v107
  %v144 = vunpack.c.l.b16 %v108
  %v145 = vunpack.c.l.b16 %v109
  %v146 = vunpack.c.l.b16 %v110
  %v147 = vunpack.c.l.b16 %v111
  %v148 = vunpack.c.l.b16 %v112
  %v149 = vunpack.c.l.b16 %v113
  %v150 = vunpack.c.l.b16 %v114
  %v151 = vunpack.c.l.b16 %v115
  %v152 = vunpack.c.l.b16 %v116
  %v153 = vunpack.c.l.b16 %v117
  %v154 = vunpack.c.l.b16 %v118
  %v155 = vunpack.c.l.b16 %v119
  %v156 = vpack.c.b16 %v141, %v140
  %v157 = vpack.c.b16 %v143, %v142
  %v158 = vpack.c.b16 %v145, %v144
  %v159 = vpack.c.b16 %v147, %v146
  %v160 = vpack.c.b16 %v149, %v148
  %v161 = vpack.c.b16 %v151, %v150
  %v162 = vpack.c.b16 %v153, %v152
  %v163 = vpack.c.b16 %v155, %v154
  %172 = vmatpush.bf16.msra.mxu0 %v163
  %173 = vmatpush.bf16.msra.mxu0 %v162
  %174 = vmatpush.bf16.msra.mxu0 %v161
  %175 = vmatpush.bf16.msra.mxu0 %v160
  %176 = vmatpush.bf16.msra.mxu0 %v159
  %177 = vmatpush.bf16.msra.mxu0 %v158
  %178 = vmatpush.bf16.msra.mxu0 %v157
  %179 = vmatpush.bf16.msra.mxu0 %v156
  %180 = vmatmul.bf16.gmra.mxu0 %v102
  %v181 = vpop.f32.mrf.mxu0
  %v182 = vadd.f32 %v122, %v181
  %v183 = vpop.f32.mrf.mxu0
  %v184 = vadd.f32 %v122, %v183
  %185 = vmatmul.bf16.gmra.mxu0 %v103
  %v186 = vpop.f32.mrf.mxu0
  %v187 = vadd.f32 %v122, %v186
  %v188 = vpop.f32.mrf.mxu0
  %v189 = vadd.f32 %v122, %v188
  %190 = vdwg.mxu0
  %v191 = vld [vmem:[%s0] sm:$0xff]
  %v192 = vld [vmem:[%s0 + $0x8] sm:$0xff]
  %v193 = vld [vmem:[%s0 + $0x10] sm:$0xff]
  %v194 = vld [vmem:[%s0 + $0x18] sm:$0xff]
  %199 = vrot.lane.b32.xlu0 %v191, 32
  %v200 = vpop.permute.xlu0 %199
  %201 = vrot.lane.b32.xlu0 %v192, 32
  %v202 = vpop.permute.xlu0 %201
  %203 = vrot.lane.b32.xlu0 %v193, 32
  %v204 = vpop.permute.xlu0 %203
  %205 = vrot.lane.b32.xlu0 %v194, 32
  %v206 = vpop.permute.xlu0 %205
  %211 = vrot.lane.b32.xlu0 %v191, 64
  %v212 = vpop.permute.xlu0 %211
  %213 = vrot.lane.b32.xlu0 %v192, 64
  %v214 = vpop.permute.xlu0 %213
  %215 = vrot.lane.b32.xlu0 %v193, 64
  %v216 = vpop.permute.xlu0 %215
  %217 = vrot.lane.b32.xlu0 %v194, 64
  %v218 = vpop.permute.xlu0 %217
  %223 = vrot.lane.b32.xlu0 %v191, 96
  %v224 = vpop.permute.xlu0 %223
  %225 = vrot.lane.b32.xlu0 %v192, 96
  %v226 = vpop.permute.xlu0 %225
  %227 = vrot.lane.b32.xlu0 %v193, 96
  %v228 = vpop.permute.xlu0 %227
  %229 = vrot.lane.b32.xlu0 %v194, 96
  %v230 = vpop.permute.xlu0 %229
  %vm235 = vcmask 261120
  %v236 = vsel %vm235, %v191, %v200
  %v237 = vsel %vm235, %v192, %v202
  %v238 = vsel %vm235, %v193, %v204
  %v239 = vsel %vm235, %v194, %v206
  %vm240 = vcmask 523264
  %v241 = vsel %vm240, %v236, %v212
  %v242 = vsel %vm240, %v237, %v214
  %v243 = vsel %vm240, %v238, %v216
  %v244 = vsel %vm240, %v239, %v218
  %vm245 = vcmask 785408
  %v246 = vsel %vm245, %v241, %v224
  %v247 = vsel %vm245, %v242, %v226
  %v248 = vsel %vm245, %v243, %v228
  %v249 = vsel %vm245, %v244, %v230
  %v250 = vld [vmem:[%s1] sm:$0xff]
  %v251 = vld [vmem:[%s1 + $0x8] sm:$0xff]
  %v252 = vld [vmem:[%s1 + $0x10] sm:$0xff]
  %v253 = vld [vmem:[%s1 + $0x18] sm:$0xff]
  %v254 = vsub.f32 %v246, %v250
  %v255 = vsub.f32 %v247, %v251
  %v256 = vsub.f32 %v248, %v252
  %v257 = vsub.f32 %v249, %v253
  %v258 = vadd.f32 %v254, %v182
  %v259 = vadd.f32 %v255, %v184
  %v260 = vadd.f32 %v256, %v187
  %v261 = vadd.f32 %v257, %v189
  %v262 = vpack.c.bf16 %v259, %v258
  %v263 = vpack.c.bf16 %v261, %v260
  %v264 = vld [vmem:[%s9] sm:$0xf]
  %v265 = vld [vmem:[%s9 + $0x4] sm:$0xf]
  %v266 = vld [vmem:[%s9 + $0x8] sm:$0xf]
  %v267 = vld [vmem:[%s9 + $0xc] sm:$0xf]
  %v268 = vld [vmem:[%s9 + $0x10] sm:$0xf]
  %v269 = vld [vmem:[%s9 + $0x14] sm:$0xf]
  %v270 = vld [vmem:[%s9 + $0x18] sm:$0xf]
  %v271 = vld [vmem:[%s9 + $0x1c] sm:$0xf]
  %v272 = vld [vmem:[%s9 + $0x20] sm:$0xf]
  %v273 = vld [vmem:[%s9 + $0x24] sm:$0xf]
  %v274 = vld [vmem:[%s9 + $0x28] sm:$0xf]
  %v275 = vld [vmem:[%s9 + $0x2c] sm:$0xf]
  %v276 = vld [vmem:[%s9 + $0x30] sm:$0xf]
  %v277 = vld [vmem:[%s9 + $0x34] sm:$0xf]
  %v278 = vld [vmem:[%s9 + $0x38] sm:$0xf]
  %v279 = vld [vmem:[%s9 + $0x3c] sm:$0xf]
  %v280 = vld [vmem:[%s10] sm:$0x1]
  %v282 = vperm.slane %v280, 0
  %v300 = vunpack.c.l.b16 %v264
  %v301 = vunpack.c.l.b16 %v265
  %v302 = vunpack.c.l.b16 %v266
  %v303 = vunpack.c.l.b16 %v267
  %v304 = vunpack.c.l.b16 %v268
  %v305 = vunpack.c.l.b16 %v269
  %v306 = vunpack.c.l.b16 %v270
  %v307 = vunpack.c.l.b16 %v271
  %v308 = vunpack.c.l.b16 %v272
  %v309 = vunpack.c.l.b16 %v273
  %v310 = vunpack.c.l.b16 %v274
  %v311 = vunpack.c.l.b16 %v275
  %v312 = vunpack.c.l.b16 %v276
  %v313 = vunpack.c.l.b16 %v277
  %v314 = vunpack.c.l.b16 %v278
  %v315 = vunpack.c.l.b16 %v279
  %v316 = vpack.c.b16 %v301, %v300
  %v317 = vpack.c.b16 %v303, %v302
  %v318 = vpack.c.b16 %v305, %v304
  %v319 = vpack.c.b16 %v307, %v306
  %v320 = vpack.c.b16 %v309, %v308
  %v321 = vpack.c.b16 %v311, %v310
  %v322 = vpack.c.b16 %v313, %v312
  %v323 = vpack.c.b16 %v315, %v314
  %332 = vmatpush.bf16.msra.mxu0 %v323
  %333 = vmatpush.bf16.msra.mxu0 %v322
  %334 = vmatpush.bf16.msra.mxu0 %v321
  %335 = vmatpush.bf16.msra.mxu0 %v320
  %336 = vmatpush.bf16.msra.mxu0 %v319
  %337 = vmatpush.bf16.msra.mxu0 %v318
  %338 = vmatpush.bf16.msra.mxu0 %v317
  %339 = vmatpush.bf16.msra.mxu0 %v316
  %340 = vmatmul.bf16.gmra.mxu0 %v262
  %v341 = vpop.f32.mrf.mxu0
  %v342 = vadd.f32 %v282, %v341
  %v343 = vpop.f32.mrf.mxu0
  %v344 = vadd.f32 %v282, %v343
  %345 = vmatmul.bf16.gmra.mxu0 %v263
  %v346 = vpop.f32.mrf.mxu0
  %v347 = vadd.f32 %v282, %v346
  %v348 = vpop.f32.mrf.mxu0
  %v349 = vadd.f32 %v282, %v348
  %350 = vdwg.mxu0
  %v351 = vmax.f32 %v342, 0.0
  %v352 = vmax.f32 %v344, 0.0
  %v353 = vmax.f32 %v347, 0.0
  %v354 = vmax.f32 %v349, 0.0
  %v355 = vpack.c.bf16 %v352, %v351
  %v356 = vpack.c.bf16 %v354, %v353
  %v357 = vld [vmem:[%s11] sm:$0xf]
  %v358 = vld [vmem:[%s11 + $0x4] sm:$0xf]
  %v359 = vld [vmem:[%s11 + $0x8] sm:$0xf]
  %v360 = vld [vmem:[%s11 + $0xc] sm:$0xf]
  %v361 = vld [vmem:[%s11 + $0x10] sm:$0xf]
  %v362 = vld [vmem:[%s11 + $0x14] sm:$0xf]
  %v363 = vld [vmem:[%s11 + $0x18] sm:$0xf]
  %v364 = vld [vmem:[%s11 + $0x1c] sm:$0xf]
  %v365 = vld [vmem:[%s11 + $0x20] sm:$0xf]
  %v366 = vld [vmem:[%s11 + $0x24] sm:$0xf]
  %v367 = vld [vmem:[%s11 + $0x28] sm:$0xf]
  %v368 = vld [vmem:[%s11 + $0x2c] sm:$0xf]
  %v369 = vld [vmem:[%s11 + $0x30] sm:$0xf]
  %v370 = vld [vmem:[%s11 + $0x34] sm:$0xf]
  %v371 = vld [vmem:[%s11 + $0x38] sm:$0xf]
  %v372 = vld [vmem:[%s11 + $0x3c] sm:$0xf]
  %v373 = vld [vmem:[%s12] sm:$0x1]
  %v375 = vperm.slane %v373, 0
  %v393 = vunpack.c.l.b16 %v357
  %v394 = vunpack.c.l.b16 %v358
  %v395 = vunpack.c.l.b16 %v359
  %v396 = vunpack.c.l.b16 %v360
  %v397 = vunpack.c.l.b16 %v361
  %v398 = vunpack.c.l.b16 %v362
  %v399 = vunpack.c.l.b16 %v363
  %v400 = vunpack.c.l.b16 %v364
  %v401 = vunpack.c.l.b16 %v365
  %v402 = vunpack.c.l.b16 %v366
  %v403 = vunpack.c.l.b16 %v367
  %v404 = vunpack.c.l.b16 %v368
  %v405 = vunpack.c.l.b16 %v369
  %v406 = vunpack.c.l.b16 %v370
  %v407 = vunpack.c.l.b16 %v371
  %v408 = vunpack.c.l.b16 %v372
  %v409 = vpack.c.b16 %v394, %v393
  %v410 = vpack.c.b16 %v396, %v395
  %v411 = vpack.c.b16 %v398, %v397
  %v412 = vpack.c.b16 %v400, %v399
  %v413 = vpack.c.b16 %v402, %v401
  %v414 = vpack.c.b16 %v404, %v403
  %v415 = vpack.c.b16 %v406, %v405
  %v416 = vpack.c.b16 %v408, %v407
  %425 = vmatpush.bf16.msra.mxu0 %v416
  %426 = vmatpush.bf16.msra.mxu0 %v415
  %427 = vmatpush.bf16.msra.mxu0 %v414
  %428 = vmatpush.bf16.msra.mxu0 %v413
  %429 = vmatpush.bf16.msra.mxu0 %v412
  %430 = vmatpush.bf16.msra.mxu0 %v411
  %431 = vmatpush.bf16.msra.mxu0 %v410
  %432 = vmatpush.bf16.msra.mxu0 %v409
  %433 = vmatmul.bf16.gmra.mxu0 %v355
  %v434 = vpop.f32.mrf.mxu0
  %v435 = vadd.f32 %v375, %v434
  %v436 = vpop.f32.mrf.mxu0
  %v437 = vadd.f32 %v375, %v436
  %438 = vmatmul.bf16.gmra.mxu0 %v356
  %v439 = vpop.f32.mrf.mxu0
  %v440 = vadd.f32 %v375, %v439
  %v441 = vpop.f32.mrf.mxu0
  %v442 = vadd.f32 %v375, %v441
  %443 = vdwg.mxu0
  %v444 = vmul.f32 %v435, 0.17677669
  %v445 = vmul.f32 %v437, 0.17677669
  %v446 = vmul.f32 %v440, 0.17677669
  %v447 = vmul.f32 %v442, 0.17677669
  %v448 = vld [vmem:[%s2] sm:$0xff]
  %v449 = vld [vmem:[%s2 + $0x8] sm:$0xff]
  %v450 = vld [vmem:[%s2 + $0x10] sm:$0xff]
  %v451 = vld [vmem:[%s2 + $0x18] sm:$0xff]
  %v452 = vadd.f32 %v448, %v182
  %v453 = vadd.f32 %v449, %v184
  %v454 = vadd.f32 %v450, %v187
  %v455 = vadd.f32 %v451, %v189
  %460 = vrot.lane.b32.xlu0 %v444, 96
  %v461 = vpop.permute.xlu0 %460
  %462 = vrot.lane.b32.xlu0 %v445, 96
  %v463 = vpop.permute.xlu0 %462
  %464 = vrot.lane.b32.xlu0 %v446, 96
  %v465 = vpop.permute.xlu0 %464
  %466 = vrot.lane.b32.xlu0 %v447, 96
  %v467 = vpop.permute.xlu0 %466
  %v472 = vmax.f32 %v444, %v461
  %v473 = vmax.f32 %v445, %v463
  %v474 = vmax.f32 %v446, %v465
  %v475 = vmax.f32 %v447, %v467
  %476 = vrot.lane.b32.xlu0 %v444, 64
  %v477 = vpop.permute.xlu0 %476
  %478 = vrot.lane.b32.xlu0 %v445, 64
  %v479 = vpop.permute.xlu0 %478
  %480 = vrot.lane.b32.xlu0 %v446, 64
  %v481 = vpop.permute.xlu0 %480
  %482 = vrot.lane.b32.xlu0 %v447, 64
  %v483 = vpop.permute.xlu0 %482
  %v488 = vmax.f32 %v472, %v477
  %v489 = vmax.f32 %v473, %v479
  %v490 = vmax.f32 %v474, %v481
  %v491 = vmax.f32 %v475, %v483
  %492 = vrot.lane.b32.xlu0 %v444, 32
  %v493 = vpop.permute.xlu0 %492
  %494 = vrot.lane.b32.xlu0 %v445, 32
  %v495 = vpop.permute.xlu0 %494
  %496 = vrot.lane.b32.xlu0 %v446, 32
  %v497 = vpop.permute.xlu0 %496
  %498 = vrot.lane.b32.xlu0 %v447, 32
  %v499 = vpop.permute.xlu0 %498
  %v504 = vmax.f32 %v488, %v493
  %v505 = vmax.f32 %v489, %v495
  %v506 = vmax.f32 %v490, %v497
  %v507 = vmax.f32 %v491, %v499
  %v508 = vsub.f32 %v444, %v504
  %v509 = vsub.f32 %v445, %v505
  %v510 = vsub.f32 %v446, %v506
  %v511 = vsub.f32 %v447, %v507
  %v512 = vmul.f32 %v508, 1.442695
  %v513 = vpow.pop %v512
  %v514 = vmul.f32 %v509, 1.442695
  %v515 = vpow.pop %v514
  %v516 = vmul.f32 %v510, 1.442695
  %v517 = vpow.pop %v516
  %v518 = vmul.f32 %v511, 1.442695
  %v519 = vpow.pop %v518
  %524 = vrot.lane.b32.xlu0 %v504, 32
  %v525 = vpop.permute.xlu0 %524
  %526 = vrot.lane.b32.xlu0 %v505, 32
  %v527 = vpop.permute.xlu0 %526
  %528 = vrot.lane.b32.xlu0 %v506, 32
  %v529 = vpop.permute.xlu0 %528
  %530 = vrot.lane.b32.xlu0 %v507, 32
  %v531 = vpop.permute.xlu0 %530
  %v536 = vsub.f32 %v444, %v525
  %v537 = vsub.f32 %v445, %v527
  %v538 = vsub.f32 %v446, %v529
  %v539 = vsub.f32 %v447, %v531
  %v540 = vmul.f32 %v536, 1.442695
  %v541 = vpow.pop %v540
  %v542 = vmul.f32 %v537, 1.442695
  %v543 = vpow.pop %v542
  %v544 = vmul.f32 %v538, 1.442695
  %v545 = vpow.pop %v544
  %v546 = vmul.f32 %v539, 1.442695
  %v547 = vpow.pop %v546
  %548 = vrot.lane.b32.xlu0 %v504, 64
  %v549 = vpop.permute.xlu0 %548
  %550 = vrot.lane.b32.xlu0 %v505, 64
  %v551 = vpop.permute.xlu0 %550
  %552 = vrot.lane.b32.xlu0 %v506, 64
  %v553 = vpop.permute.xlu0 %552
  %554 = vrot.lane.b32.xlu0 %v507, 64
  %v555 = vpop.permute.xlu0 %554
  %v560 = vsub.f32 %v444, %v549
  %v561 = vsub.f32 %v445, %v551
  %v562 = vsub.f32 %v446, %v553
  %v563 = vsub.f32 %v447, %v555
  %v564 = vmul.f32 %v560, 1.442695
  %v565 = vpow.pop %v564
  %v566 = vmul.f32 %v561, 1.442695
  %v567 = vpow.pop %v566
  %v568 = vmul.f32 %v562, 1.442695
  %v569 = vpow.pop %v568
  %v570 = vmul.f32 %v563, 1.442695
  %v571 = vpow.pop %v570
  %572 = vrot.lane.b32.xlu0 %v504, 96
  %v573 = vpop.permute.xlu0 %572
  %574 = vrot.lane.b32.xlu0 %v505, 96
  %v575 = vpop.permute.xlu0 %574
  %576 = vrot.lane.b32.xlu0 %v506, 96
  %v577 = vpop.permute.xlu0 %576
  %578 = vrot.lane.b32.xlu0 %v507, 96
  %v579 = vpop.permute.xlu0 %578
  %v584 = vsub.f32 %v444, %v573
  %v585 = vsub.f32 %v445, %v575
  %v586 = vsub.f32 %v446, %v577
  %v587 = vsub.f32 %v447, %v579
  %v588 = vmul.f32 %v584, 1.442695
  %v589 = vpow.pop %v588
  %v590 = vmul.f32 %v585, 1.442695
  %v591 = vpow.pop %v590
  %v592 = vmul.f32 %v586, 1.442695
  %v593 = vpow.pop %v592
  %v594 = vmul.f32 %v587, 1.442695
  %v595 = vpow.pop %v594
  %600 = vrot.lane.b32.xlu0 %v541, 96
  %v601 = vpop.permute.xlu0 %600
  %602 = vrot.lane.b32.xlu0 %v543, 96
  %v603 = vpop.permute.xlu0 %602
  %604 = vrot.lane.b32.xlu0 %v545, 96
  %v605 = vpop.permute.xlu0 %604
  %606 = vrot.lane.b32.xlu0 %v547, 96
  %v607 = vpop.permute.xlu0 %606
  %v612 = vadd.f32 %v513, %v601
  %v613 = vadd.f32 %v515, %v603
  %v614 = vadd.f32 %v517, %v605
  %v615 = vadd.f32 %v519, %v607
  %620 = vrot.lane.b32.xlu0 %v565, 64
  %v621 = vpop.permute.xlu0 %620
  %622 = vrot.lane.b32.xlu0 %v567, 64
  %v623 = vpop.permute.xlu0 %622
  %624 = vrot.lane.b32.xlu0 %v569, 64
  %v625 = vpop.permute.xlu0 %624
  %626 = vrot.lane.b32.xlu0 %v571, 64
  %v627 = vpop.permute.xlu0 %626
  %v632 = vadd.f32 %v612, %v621
  %v633 = vadd.f32 %v613, %v623
  %v634 = vadd.f32 %v614, %v625
  %v635 = vadd.f32 %v615, %v627
  %640 = vrot.lane.b32.xlu0 %v589, 32
  %v641 = vpop.permute.xlu0 %640
  %642 = vrot.lane.b32.xlu0 %v591, 32
  %v643 = vpop.permute.xlu0 %642
  %644 = vrot.lane.b32.xlu0 %v593, 32
  %v645 = vpop.permute.xlu0 %644
  %646 = vrot.lane.b32.xlu0 %v595, 32
  %v647 = vpop.permute.xlu0 %646
  %v652 = vadd.f32 %v632, %v641
  %v653 = vadd.f32 %v633, %v643
  %v654 = vadd.f32 %v634, %v645
  %v655 = vadd.f32 %v635, %v647
  %v656 = vrcp.pop %v652
  %v657 = vrcp.pop %v653
  %v658 = vrcp.pop %v654
  %v659 = vrcp.pop %v655
  %v660 = vmul.f32 %v513, %v452
  %v661 = vmul.f32 %v515, %v453
  %v662 = vmul.f32 %v517, %v454
  %v663 = vmul.f32 %v519, %v455
  %v664 = vmul.f32 %v541, %v452
  %v665 = vmul.f32 %v543, %v453
  %v666 = vmul.f32 %v545, %v454
  %v667 = vmul.f32 %v547, %v455
  %672 = vrot.lane.b32.xlu0 %v664, 96
  %v673 = vpop.permute.xlu0 %672
  %674 = vrot.lane.b32.xlu0 %v665, 96
  %v675 = vpop.permute.xlu0 %674
  %676 = vrot.lane.b32.xlu0 %v666, 96
  %v677 = vpop.permute.xlu0 %676
  %678 = vrot.lane.b32.xlu0 %v667, 96
  %v679 = vpop.permute.xlu0 %678
  %v684 = vadd.f32 %v660, %v673
  %v685 = vadd.f32 %v661, %v675
  %v686 = vadd.f32 %v662, %v677
  %v687 = vadd.f32 %v663, %v679
  %v688 = vmul.f32 %v565, %v452
  %v689 = vmul.f32 %v567, %v453
  %v690 = vmul.f32 %v569, %v454
  %v691 = vmul.f32 %v571, %v455
  %696 = vrot.lane.b32.xlu0 %v688, 64
  %v697 = vpop.permute.xlu0 %696
  %698 = vrot.lane.b32.xlu0 %v689, 64
  %v699 = vpop.permute.xlu0 %698
  %700 = vrot.lane.b32.xlu0 %v690, 64
  %v701 = vpop.permute.xlu0 %700
  %702 = vrot.lane.b32.xlu0 %v691, 64
  %v703 = vpop.permute.xlu0 %702
  %v708 = vadd.f32 %v684, %v697
  %v709 = vadd.f32 %v685, %v699
  %v710 = vadd.f32 %v686, %v701
  %v711 = vadd.f32 %v687, %v703
  %v712 = vmul.f32 %v589, %v452
  %v713 = vmul.f32 %v591, %v453
  %v714 = vmul.f32 %v593, %v454
  %v715 = vmul.f32 %v595, %v455
  %720 = vrot.lane.b32.xlu0 %v712, 32
  %v721 = vpop.permute.xlu0 %720
  %722 = vrot.lane.b32.xlu0 %v713, 32
  %v723 = vpop.permute.xlu0 %722
  %724 = vrot.lane.b32.xlu0 %v714, 32
  %v725 = vpop.permute.xlu0 %724
  %726 = vrot.lane.b32.xlu0 %v715, 32
  %v727 = vpop.permute.xlu0 %726
  %v732 = vadd.f32 %v708, %v721
  %v733 = vadd.f32 %v709, %v723
  %v734 = vadd.f32 %v710, %v725
  %v735 = vadd.f32 %v711, %v727
  %v736 = vmul.f32 %v732, %v656
  %v737 = vmul.f32 %v733, %v657
  %v738 = vmul.f32 %v734, %v658
  %v739 = vmul.f32 %v735, %v659
  %v740 = vpack.c.bf16 %v737, %v736
  %v741 = vpack.c.bf16 %v739, %v738
  %v742 = vld [vmem:[%s13] sm:$0xf]
  %v743 = vld [vmem:[%s13 + $0x4] sm:$0xf]
  %v744 = vld [vmem:[%s13 + $0x8] sm:$0xf]
  %v745 = vld [vmem:[%s13 + $0xc] sm:$0xf]
  %v746 = vld [vmem:[%s14] sm:$0x1]
  %v748 = vperm.slane %v746, 0
  %v754 = vunpack.c.l.b16 %v742
  %v755 = vunpack.c.l.b16 %v743
  %v756 = vunpack.c.l.b16 %v744
  %v757 = vunpack.c.l.b16 %v745
  %v758 = vpack.c.b16 %v755, %v754
  %v759 = vpack.c.b16 %v757, %v756
  %v763 = vsel %vm235, %v740, 0
  %v766 = vsel %vm235, %v741, 0
  %768 = vmatpush.bf16.msra.mxu0 0
  %769 = vmatpush.bf16.msra.mxu0 0
  %770 = vmatpush.bf16.msra.mxu0 0
  %771 = vmatpush.bf16.msra.mxu0 0
  %772 = vmatpush.bf16.msra.mxu0 0
  %773 = vmatpush.bf16.msra.mxu0 0
  %774 = vmatpush.bf16.msra.mxu0 %v759
  %775 = vmatpush.bf16.msra.mxu0 %v758
  %776 = vmatmul.bf16.gmra.mxu0 %v763
  %v777 = vpop.f32.mrf.mxu0
  %v778 = vadd.f32 %v748, %v777
  %v779 = vpop.f32.mrf.mxu0
  %v780 = vadd.f32 %v748, %v779
  %781 = vmatmul.bf16.gmra.mxu0 %v766
  %v782 = vpop.f32.mrf.mxu0
  %v783 = vadd.f32 %v748, %v782
  %v784 = vpop.f32.mrf.mxu0
  %v785 = vadd.f32 %v748, %v784
  %786 = vdwg.mxu0
  %v787 = vld [vmem:[%s4] sm:$0xff]
  %v788 = vld [vmem:[%s4 + $0x8] sm:$0xff]
  %v789 = vld [vmem:[%s4 + $0x10] sm:$0xff]
  %v790 = vld [vmem:[%s4 + $0x18] sm:$0xff]
  %v791 = vadd.f32 %v778, %v787
  %v792 = vadd.f32 %v780, %v788
  %v793 = vadd.f32 %v783, %v789
  %v794 = vadd.f32 %v785, %v790
  %795 = vst.msk [vmem:[%s15] sm:$0xff] %vm240, %v791
  %796 = vst.msk [vmem:[%s15 + $0x8] sm:$0xff] %vm240, %v792
  %797 = vst.msk [vmem:[%s15 + $0x10] sm:$0xff] %vm240, %v793
  %798 = vst.msk [vmem:[%s15 + $0x18] sm:$0xff] %vm240, %v794
  // Predicated region
  $region62: #{icosa_backbone_forward.15} parent=0 // pred_check
    _
  $region63: #{icosa_backbone_forward.15} parent=0 // pred_check_branch
    %800 = sbr.rel (0) target = $region65
  $region64: #{icosa_backbone_forward.15} parent=0 // pred_region
    _
  $region65: #{icosa_backbone_forward.15} parent=0 // pred_fallthru
    _
  // Predicated region
  $region66: #{icosa_backbone_forward.15} parent=0 // pred_check
    _
  $region67: #{icosa_backbone_forward.15} parent=0 // pred_check_branch
    %802 = sbr.rel (0) target = $region69
  $region68: #{icosa_backbone_forward.15} parent=0 // pred_region
    _
  $region69: #{icosa_backbone_forward.15} parent=0 // pred_fallthru
    _

// kernel: neg.9
$region0: #{neg.9}
  #allocation0 [shape = 's32[1]{0}', space=sflag, size = 0x4, scoped, tag = 'scoped memory for neg.9']
  %s0 = inlined_call_operand.vmem [shape: f32[2,4,4], index: 0, kind: input, shape index: {}]
  %s1 = inlined_call_operand.vmem [shape: f32[2,4,4], index: 1, kind: output, shape index: {}]
  %v2 = vld [vmem:[%s0] sm:$0xf]
  %3 = xla_tuple %v2
  %4 = xla_tuple %3
  %v5 = vxor.u32 %v2, 2147483648
  %6 = xla_tuple %v5
  %7 = vst [vmem:[%s1] sm:$0xf] %v5
  %s8 = scalar_lea.vmem %s0, 4
  %v9 = vld [vmem:[%s8] sm:$0xf]
  %10 = xla_tuple %v9
  %11 = xla_tuple %10
  %v12 = vxor.u32 %v9, 2147483648
  %13 = xla_tuple %v12
  %s14 = scalar_lea.vmem %s1, 4
  %15 = vst [vmem:[%s14] sm:$0xf] %v12

// kernel: icosa_backbone_forward.17
$region0: #{icosa_backbone_forward.17}
  #allocation0 [shape = 'u32[]', space=smem, size = 0x4, offset = 0x4, fixed_abs, tag = 'smem constant byte address 0x4 - core index']
  #allocation1 [shape = 'u32[72,128]{1,0:T(1,128)}', space=vmem, size = 0x9000, scoped, tag = 'internal scratch']
  %s0 = inlined_call_operand.vmem [shape: f32[8,128], index: 0, kind: input, shape index: {}]
  %s1 = inlined_call_operand.vmem [shape: bf16[128,32], index: 1, kind: input, shape index: {}]
  %s2 = inlined_call_operand.vmem [shape: f32[1,32], index: 2, kind: input, shape index: {}]
  %s3 = inlined_call_operand.vmem [shape: bf16[32,96], index: 3, kind: input, shape index: {}]
  %s4 = inlined_call_operand.vmem [shape: f32[8,96], index: 4, kind: output, shape index: {}]
  %s5 = sld [smem:[#allocation0]]
  $region26: #{icosa_backbone_forward.17} parent=0
    _
  %s7 = ssub.s32 1, %s5
  %s8 = scalar_select 0, %s7, %s5
  // Predicated region
  $region2: #{icosa_backbone_forward.17} parent=0 // pred_check
    _
  $region3: #{icosa_backbone_forward.17} parent=0 // pred_check_branch
    %10 = sbr.rel (0) target = $region5
  $region4: #{icosa_backbone_forward.17} parent=0 // pred_region
    _
  $region5: #{icosa_backbone_forward.17} parent=0 // pred_fallthru
    _
  // Predicated region
  $region6: #{icosa_backbone_forward.17} parent=0 // pred_check
    _
  $region7: #{icosa_backbone_forward.17} parent=0 // pred_check_branch
    %12 = sbr.rel (0) target = $region9
  $region8: #{icosa_backbone_forward.17} parent=0 // pred_region
    _
  $region9: #{icosa_backbone_forward.17} parent=0 // pred_fallthru
    _
  // Predicated region
  $region10: #{icosa_backbone_forward.17} parent=0 // pred_check
    _
  $region11: #{icosa_backbone_forward.17} parent=0 // pred_check_branch
    %14 = sbr.rel (0) target = $region13
  $region12: #{icosa_backbone_forward.17} parent=0 // pred_region
    _
  $region13: #{icosa_backbone_forward.17} parent=0 // pred_fallthru
    _
  // Predicated region
  $region14: #{icosa_backbone_forward.17} parent=0 // pred_check
    _
  $region15: #{icosa_backbone_forward.17} parent=0 // pred_check_branch
    %16 = sbr.rel (0) target = $region17
  $region16: #{icosa_backbone_forward.17} parent=0 // pred_region
    _
  $region17: #{icosa_backbone_forward.17} parent=0 // pred_fallthru
    _
  %v18 = vld [vmem:[%s0] sm:$0xff]
  %v19 = vpack.c.bf16 %v18, %v18
  %v20 = vld [vmem:[%s1] sm:$0xf]
  %v21 = vld [vmem:[%s1 + $0x4] sm:$0xf]
  %v22 = vld [vmem:[%s1 + $0x8] sm:$0xf]
  %v23 = vld [vmem:[%s1 + $0xc] sm:$0xf]
  %v24 = vld [vmem:[%s1 + $0x10] sm:$0xf]
  %v25 = vld [vmem:[%s1 + $0x14] sm:$0xf]
  %v26 = vld [vmem:[%s1 + $0x18] sm:$0xf]
  %v27 = vld [vmem:[%s1 + $0x1c] sm:$0xf]
  %v28 = vld [vmem:[%s1 + $0x20] sm:$0xf]
  %v29 = vld [vmem:[%s1 + $0x24] sm:$0xf]
  %v30 = vld [vmem:[%s1 + $0x28] sm:$0xf]
  %v31 = vld [vmem:[%s1 + $0x2c] sm:$0xf]
  %v32 = vld [vmem:[%s1 + $0x30] sm:$0xf]
  %v33 = vld [vmem:[%s1 + $0x34] sm:$0xf]
  %v34 = vld [vmem:[%s1 + $0x38] sm:$0xf]
  %v35 = vld [vmem:[%s1 + $0x3c] sm:$0xf]
  %v36 = vld [vmem:[%s2] sm:$0x1]
  %v38 = vperm.slane %v36, 0
  %v56 = vunpack.c.l.b16 %v20
  %v57 = vunpack.c.l.b16 %v21
  %v58 = vunpack.c.l.b16 %v22
  %v59 = vunpack.c.l.b16 %v23
  %v60 = vunpack.c.l.b16 %v24
  %v61 = vunpack.c.l.b16 %v25
  %v62 = vunpack.c.l.b16 %v26
  %v63 = vunpack.c.l.b16 %v27
  %v64 = vunpack.c.l.b16 %v28
  %v65 = vunpack.c.l.b16 %v29
  %v66 = vunpack.c.l.b16 %v30
  %v67 = vunpack.c.l.b16 %v31
  %v68 = vunpack.c.l.b16 %v32
  %v69 = vunpack.c.l.b16 %v33
  %v70 = vunpack.c.l.b16 %v34
  %v71 = vunpack.c.l.b16 %v35
  %v72 = vpack.c.b16 %v57, %v56
  %v73 = vpack.c.b16 %v59, %v58
  %v74 = vpack.c.b16 %v61, %v60
  %v75 = vpack.c.b16 %v63, %v62
  %v76 = vpack.c.b16 %v65, %v64
  %v77 = vpack.c.b16 %v67, %v66
  %v78 = vpack.c.b16 %v69, %v68
  %v79 = vpack.c.b16 %v71, %v70
  %88 = vmatpush.bf16.msra.mxu0 %v79
  %89 = vmatpush.bf16.msra.mxu0 %v78
  %90 = vmatpush.bf16.msra.mxu0 %v77
  %91 = vmatpush.bf16.msra.mxu0 %v76
  %92 = vmatpush.bf16.msra.mxu0 %v75
  %93 = vmatpush.bf16.msra.mxu0 %v74
  %94 = vmatpush.bf16.msra.mxu0 %v73
  %95 = vmatpush.bf16.msra.mxu0 %v72
  %96 = vmatmul.bf16.gmra.mxu0 %v19
  %v97 = vpop.f32.mrf.mxu0
  %v98 = vadd.f32 %v38, %v97
  %v99 = vpop.f32.mrf.mxu0
  %100 = vdwg.mxu0
  %v101 = vpack.c.bf16 %v98, %v98
  %v102 = vld [vmem:[%s3] sm:$0xf]
  %v103 = vld [vmem:[%s3 + $0x4] sm:$0xf]
  %v104 = vld [vmem:[%s3 + $0x8] sm:$0xf]
  %v105 = vld [vmem:[%s3 + $0xc] sm:$0xf]
  %v110 = vunpack.c.l.b16 %v102
  %v111 = vunpack.c.l.b16 %v103
  %v112 = vunpack.c.l.b16 %v104
  %v113 = vunpack.c.l.b16 %v105
  %v114 = vpack.c.b16 %v111, %v110
  %v115 = vpack.c.b16 %v113, %v112
  %vm118 = vcmask 261120
  %v120 = vsel %vm118, %v101, 0
  %122 = vmatpush.bf16.msra.mxu0 0
  %123 = vmatpush.bf16.msra.mxu0 0
  %124 = vmatpush.bf16.msra.mxu0 0
  %125 = vmatpush.bf16.msra.mxu0 0
  %126 = vmatpush.bf16.msra.mxu0 0
  %127 = vmatpush.bf16.msra.mxu0 0
  %128 = vmatpush.bf16.msra.mxu0 %v115
  %129 = vmatpush.bf16.msra.mxu0 %v114
  %130 = vmatmul.bf16.gmra.mxu0 %v120
  %v131 = vpop.f32.mrf.mxu0
  %v132 = vadd.f32 0.0, %v131
  %v133 = vpop.f32.mrf.mxu0
  %134 = vdwg.mxu0
  %vm135 = vcmask 785408
  %136 = vst.msk [vmem:[%s4] sm:$0xff] %vm135, %v132
  // Predicated region
  $region18: #{icosa_backbone_forward.17} parent=0 // pred_check
    _
  $region19: #{icosa_backbone_forward.17} parent=0 // pred_check_branch
    %138 = sbr.rel (0) target = $region21
  $region20: #{icosa_backbone_forward.17} parent=0 // pred_region
    _
  $region21: #{icosa_backbone_forward.17} parent=0 // pred_fallthru
    _
  // Predicated region
  $region22: #{icosa_backbone_forward.17} parent=0 // pred_check
    _
  $region23: #{icosa_backbone_forward.17} parent=0 // pred_check_branch
    %140 = sbr.rel (0) target = $region25
  $region24: #{icosa_backbone_forward.17} parent=0 // pred_region
    _
  $region25: #{icosa_backbone_forward.17} parent=0 // pred_fallthru
    _

// kernel: icosa_backbone_forward.16
$region0: #{icosa_backbone_forward.16}
  #allocation0 [shape = 'u32[]', space=smem, size = 0x4, offset = 0x4, fixed_abs, tag = 'smem constant byte address 0x4 - core index']
  #allocation1 [shape = 'u32[72,128]{1,0:T(1,128)}', space=vmem, size = 0x9000, scoped, tag = 'internal scratch']
  %s0 = inlined_call_operand.vmem [shape: f32[4,8,67], index: 0, kind: input, shape index: {}]
  %s1 = inlined_call_operand.vmem [shape: bf16[67,128], index: 1, kind: input, shape index: {}]
  %s2 = inlined_call_operand.vmem [shape: f32[1,128], index: 2, kind: input, shape index: {}]
  %s3 = inlined_call_operand.vmem [shape: bf16[128,128], index: 3, kind: input, shape index: {}]
  %s4 = inlined_call_operand.vmem [shape: f32[1,128], index: 4, kind: input, shape index: {}]
  %s5 = inlined_call_operand.vmem [shape: f32[8,128], index: 5, kind: output, shape index: {}]
  %s6 = sld [smem:[#allocation0]]
  $region30: #{icosa_backbone_forward.16} parent=0
    _
  %s8 = ssub.s32 1, %s6
  %s9 = scalar_select 0, %s8, %s6
  // Predicated region
  $region2: #{icosa_backbone_forward.16} parent=0 // pred_check
    _
  $region3: #{icosa_backbone_forward.16} parent=0 // pred_check_branch
    %11 = sbr.rel (0) target = $region5
  $region4: #{icosa_backbone_forward.16} parent=0 // pred_region
    _
  $region5: #{icosa_backbone_forward.16} parent=0 // pred_fallthru
    _
  // Predicated region
  $region6: #{icosa_backbone_forward.16} parent=0 // pred_check
    _
  $region7: #{icosa_backbone_forward.16} parent=0 // pred_check_branch
    %13 = sbr.rel (0) target = $region9
  $region8: #{icosa_backbone_forward.16} parent=0 // pred_region
    _
  $region9: #{icosa_backbone_forward.16} parent=0 // pred_fallthru
    _
  // Predicated region
  $region10: #{icosa_backbone_forward.16} parent=0 // pred_check
    _
  $region11: #{icosa_backbone_forward.16} parent=0 // pred_check_branch
    %15 = sbr.rel (0) target = $region13
  $region12: #{icosa_backbone_forward.16} parent=0 // pred_region
    _
  $region13: #{icosa_backbone_forward.16} parent=0 // pred_fallthru
    _
  // Predicated region
  $region14: #{icosa_backbone_forward.16} parent=0 // pred_check
    _
  $region15: #{icosa_backbone_forward.16} parent=0 // pred_check_branch
    %17 = sbr.rel (0) target = $region17
  $region16: #{icosa_backbone_forward.16} parent=0 // pred_region
    _
  $region17: #{icosa_backbone_forward.16} parent=0 // pred_fallthru
    _
  // Predicated region
  $region18: #{icosa_backbone_forward.16} parent=0 // pred_check
    _
  $region19: #{icosa_backbone_forward.16} parent=0 // pred_check_branch
    %19 = sbr.rel (0) target = $region21
  $region20: #{icosa_backbone_forward.16} parent=0 // pred_region
    _
  $region21: #{icosa_backbone_forward.16} parent=0 // pred_fallthru
    _
  %v21 = vld [vmem:[%s0] sm:$0xff]
  %v22 = vpack.c.bf16 %v21, %v21
  %v23 = vld [vmem:[%s1] sm:$0xf]
  %v24 = vld [vmem:[%s1 + $0x4] sm:$0xf]
  %v25 = vld [vmem:[%s1 + $0x8] sm:$0xf]
  %v26 = vld [vmem:[%s1 + $0xc] sm:$0xf]
  %v27 = vld [vmem:[%s1 + $0x10] sm:$0xf]
  %v28 = vld [vmem:[%s1 + $0x14] sm:$0xf]
  %v29 = vld [vmem:[%s1 + $0x18] sm:$0xf]
  %v30 = vld [vmem:[%s1 + $0x1c] sm:$0xf]
  %v31 = vld [vmem:[%s1 + $0x20] sm:$0x3]
  %v32 = vld [vmem:[%s2] sm:$0x1]
  %v34 = vperm.slane %v32, 0
  %v45 = vunpack.c.l.b16 %v23
  %v46 = vunpack.c.l.b16 %v24
  %v47 = vunpack.c.l.b16 %v25
  %v48 = vunpack.c.l.b16 %v26
  %v49 = vunpack.c.l.b16 %v27
  %v50 = vunpack.c.l.b16 %v28
  %v51 = vunpack.c.l.b16 %v29
  %v52 = vunpack.c.l.b16 %v30
  %v53 = vunpack.c.l.b16 %v31
  %v54 = vpack.c.b16 %v46, %v45
  %v55 = vpack.c.b16 %v48, %v47
  %v56 = vpack.c.b16 %v50, %v49
  %v57 = vpack.c.b16 %v52, %v51
  %v58 = vpack.c.b16 %v53, %v53
  %vm63 = vcmask 547840
  %v65 = vsel %vm63, %v22, 0
  %vm67 = vcmask 1040384
  %vm68 = vcmask 1041408
  %v69 = vsel %vm67, 4294967295, 65535
  %v70 = vsel %vm68, %v69, 0
  %v72 = vand.u32 %v58, %v70
  %74 = vmatpush.bf16.msra.mxu0 0
  %75 = vmatpush.bf16.msra.mxu0 0
  %76 = vmatpush.bf16.msra.mxu0 0
  %77 = vmatpush.bf16.msra.mxu0 %v72
  %78 = vmatpush.bf16.msra.mxu0 %v57
  %79 = vmatpush.bf16.msra.mxu0 %v56
  %80 = vmatpush.bf16.msra.mxu0 %v55
  %81 = vmatpush.bf16.msra.mxu0 %v54
  %82 = vmatmul.bf16.gmra.mxu0 %v65
  %v83 = vpop.f32.mrf.mxu0
  %v84 = vadd.f32 %v34, %v83
  %v85 = vpop.f32.mrf.mxu0
  %86 = vdwg.mxu0
  %v87 = vmax.f32 %v84, 0.0
  %v88 = vpack.c.bf16 %v87, %v87
  %v89 = vld [vmem:[%s3] sm:$0xf]
  %v90 = vld [vmem:[%s3 + $0x4] sm:$0xf]
  %v91 = vld [vmem:[%s3 + $0x8] sm:$0xf]
  %v92 = vld [vmem:[%s3 + $0xc] sm:$0xf]
  %v93 = vld [vmem:[%s3 + $0x10] sm:$0xf]
  %v94 = vld [vmem:[%s3 + $0x14] sm:$0xf]
  %v95 = vld [vmem:[%s3 + $0x18] sm:$0xf]
  %v96 = vld [vmem:[%s3 + $0x1c] sm:$0xf]
  %v97 = vld [vmem:[%s3 + $0x20] sm:$0xf]
  %v98 = vld [vmem:[%s3 + $0x24] sm:$0xf]
  %v99 = vld [vmem:[%s3 + $0x28] sm:$0xf]
  %v100 = vld [vmem:[%s3 + $0x2c] sm:$0xf]
  %v101 = vld [vmem:[%s3 + $0x30] sm:$0xf]
  %v102 = vld [vmem:[%s3 + $0x34] sm:$0xf]
  %v103 = vld [vmem:[%s3 + $0x38] sm:$0xf]
  %v104 = vld [vmem:[%s3 + $0x3c] sm:$0xf]
  %v105 = vld [vmem:[%s4] sm:$0x1]
  %v107 = vperm.slane %v105, 0
  %v125 = vunpack.c.l.b16 %v89
  %v126 = vunpack.c.l.b16 %v90
  %v127 = vunpack.c.l.b16 %v91
  %v128 = vunpack.c.l.b16 %v92
  %v129 = vunpack.c.l.b16 %v93
  %v130 = vunpack.c.l.b16 %v94
  %v131 = vunpack.c.l.b16 %v95
  %v132 = vunpack.c.l.b16 %v96
  %v133 = vunpack.c.l.b16 %v97
  %v134 = vunpack.c.l.b16 %v98
  %v135 = vunpack.c.l.b16 %v99
  %v136 = vunpack.c.l.b16 %v100
  %v137 = vunpack.c.l.b16 %v101
  %v138 = vunpack.c.l.b16 %v102
  %v139 = vunpack.c.l.b16 %v103
  %v140 = vunpack.c.l.b16 %v104
  %v141 = vpack.c.b16 %v126, %v125
  %v142 = vpack.c.b16 %v128, %v127
  %v143 = vpack.c.b16 %v130, %v129
  %v144 = vpack.c.b16 %v132, %v131
  %v145 = vpack.c.b16 %v134, %v133
  %v146 = vpack.c.b16 %v136, %v135
  %v147 = vpack.c.b16 %v138, %v137
  %v148 = vpack.c.b16 %v140, %v139
  %157 = vmatpush.bf16.msra.mxu0 %v148
  %158 = vmatpush.bf16.msra.mxu0 %v147
  %159 = vmatpush.bf16.msra.mxu0 %v146
  %160 = vmatpush.bf16.msra.mxu0 %v145
  %161 = vmatpush.bf16.msra.mxu0 %v144
  %162 = vmatpush.bf16.msra.mxu0 %v143
  %163 = vmatpush.bf16.msra.mxu0 %v142
  %164 = vmatpush.bf16.msra.mxu0 %v141
  %165 = vmatmul.bf16.gmra.mxu0 %v88
  %v166 = vpop.f32.mrf.mxu0
  %v167 = vadd.f32 %v107, %v166
  %v168 = vpop.f32.mrf.mxu0
  %169 = vdwg.mxu0
  %v170 = vmax.f32 %v167, 0.0
  %s171 = scalar_lea.vmem %s0, 8
  %v172 = vld [vmem:[%s171] sm:$0xff]
  %v173 = vpack.c.bf16 %v172, %v172
  %v175 = vsel %vm63, %v173, 0
  %177 = vmatpush.bf16.msra.mxu0 0
  %178 = vmatpush.bf16.msra.mxu0 0
  %179 = vmatpush.bf16.msra.mxu0 0
  %180 = vmatpush.bf16.msra.mxu0 %v72
  %181 = vmatpush.bf16.msra.mxu0 %v57
  %182 = vmatpush.bf16.msra.mxu0 %v56
  %183 = vmatpush.bf16.msra.mxu0 %v55
  %184 = vmatpush.bf16.msra.mxu0 %v54
  %185 = vmatmul.bf16.gmra.mxu0 %v175
  %v186 = vpop.f32.mrf.mxu0
  %v187 = vadd.f32 %v34, %v186
  %v188 = vpop.f32.mrf.mxu0
  %189 = vdwg.mxu0
  %v190 = vmax.f32 %v187, 0.0
  %v191 = vpack.c.bf16 %v190, %v190
  %192 = vmatpush.bf16.msra.mxu0 %v148
  %193 = vmatpush.bf16.msra.mxu0 %v147
  %194 = vmatpush.bf16.msra.mxu0 %v146
  %195 = vmatpush.bf16.msra.mxu0 %v145
  %196 = vmatpush.bf16.msra.mxu0 %v144
  %197 = vmatpush.bf16.msra.mxu0 %v143
  %198 = vmatpush.bf16.msra.mxu0 %v142
  %199 = vmatpush.bf16.msra.mxu0 %v141
  %200 = vmatmul.bf16.gmra.mxu0 %v191
  %v201 = vpop.f32.mrf.mxu0
  %v202 = vadd.f32 %v107, %v201
  %v203 = vpop.f32.mrf.mxu0
  %204 = vdwg.mxu0
  %v205 = vmax.f32 %v202, 0.0
  %v206 = vmax.f32 %v170, %v205
  %s207 = scalar_lea.vmem %s0, 16
  %v208 = vld [vmem:[%s207] sm:$0xff]
  %v209 = vpack.c.bf16 %v208, %v208
  %v211 = vsel %vm63, %v209, 0
  %213 = vmatpush.bf16.msra.mxu0 0
  %214 = vmatpush.bf16.msra.mxu0 0
  %215 = vmatpush.bf16.msra.mxu0 0
  %216 = vmatpush.bf16.msra.mxu0 %v72
  %217 = vmatpush.bf16.msra.mxu0 %v57
  %218 = vmatpush.bf16.msra.mxu0 %v56
  %219 = vmatpush.bf16.msra.mxu0 %v55
  %220 = vmatpush.bf16.msra.mxu0 %v54
  %221 = vmatmul.bf16.gmra.mxu0 %v211
  %v222 = vpop.f32.mrf.mxu0
  %v223 = vadd.f32 %v34, %v222
  %v224 = vpop.f32.mrf.mxu0
  %225 = vdwg.mxu0
  %v226 = vmax.f32 %v223, 0.0
  %v227 = vpack.c.bf16 %v226, %v226
  %228 = vmatpush.bf16.msra.mxu0 %v148
  %229 = vmatpush.bf16.msra.mxu0 %v147
  %230 = vmatpush.bf16.msra.mxu0 %v146
  %231 = vmatpush.bf16.msra.mxu0 %v145
  %232 = vmatpush.bf16.msra.mxu0 %v144
  %233 = vmatpush.bf16.msra.mxu0 %v143
  %234 = vmatpush.bf16.msra.mxu0 %v142
  %235 = vmatpush.bf16.msra.mxu0 %v141
  %236 = vmatmul.bf16.gmra.mxu0 %v227
  %v237 = vpop.f32.mrf.mxu0
  %v238 = vadd.f32 %v107, %v237
  %v239 = vpop.f32.mrf.mxu0
  %240 = vdwg.mxu0
  %v241 = vmax.f32 %v238, 0.0
  %v242 = vmax.f32 %v206, %v241
  %s243 = scalar_lea.vmem %s0, 24
  %v244 = vld [vmem:[%s243] sm:$0xff]
  %v245 = vpack.c.bf16 %v244, %v244
  %v247 = vsel %vm63, %v245, 0
  %249 = vmatpush.bf16.msra.mxu0 0
  %250 = vmatpush.bf16.msra.mxu0 0
  %251 = vmatpush.bf16.msra.mxu0 0
  %252 = vmatpush.bf16.msra.mxu0 %v72
  %253 = vmatpush.bf16.msra.mxu0 %v57
  %254 = vmatpush.bf16.msra.mxu0 %v56
  %255 = vmatpush.bf16.msra.mxu0 %v55
  %256 = vmatpush.bf16.msra.mxu0 %v54
  %257 = vmatmul.bf16.gmra.mxu0 %v247
  %v258 = vpop.f32.mrf.mxu0
  %v259 = vadd.f32 %v34, %v258
  %v260 = vpop.f32.mrf.mxu0
  %261 = vdwg.mxu0
  %v262 = vmax.f32 %v259, 0.0
  %v263 = vpack.c.bf16 %v262, %v262
  %264 = vmatpush.bf16.msra.mxu0 %v148
  %265 = vmatpush.bf16.msra.mxu0 %v147
  %266 = vmatpush.bf16.msra.mxu0 %v146
  %267 = vmatpush.bf16.msra.mxu0 %v145
  %268 = vmatpush.bf16.msra.mxu0 %v144
  %269 = vmatpush.bf16.msra.mxu0 %v143
  %270 = vmatpush.bf16.msra.mxu0 %v142
  %271 = vmatpush.bf16.msra.mxu0 %v141
  %272 = vmatmul.bf16.gmra.mxu0 %v263
  %v273 = vpop.f32.mrf.mxu0
  %v274 = vadd.f32 %v107, %v273
  %v275 = vpop.f32.mrf.mxu0
  %276 = vdwg.mxu0
  %v277 = vmax.f32 %v274, 0.0
  %v278 = vmax.f32 %v242, %v277
  %279 = vst [vmem:[%s5] sm:$0xff] %v278
  // Predicated region
  $region22: #{icosa_backbone_forward.16} parent=0 // pred_check
    _
  $region23: #{icosa_backbone_forward.16} parent=0 // pred_check_branch
    %281 = sbr.rel (0) target = $region25
  $region24: #{icosa_backbone_forward.16} parent=0 // pred_region
    _
  $region25: #{icosa_backbone_forward.16} parent=0 // pred_fallthru
    _
  // Predicated region
  $region26: #{icosa_backbone_forward.16} parent=0 // pred_check
    _
  $region27: #{icosa_backbone_forward.16} parent=0 // pred_check_branch
    %283 = sbr.rel (0) target = $region29
  $region28: #{icosa_backbone_forward.16} parent=0 // pred_region
    _
  $region29: #{icosa_backbone_forward.16} parent=0 // pred_fallthru
    _

// kernel: icosa_backbone_forward.18
$region0: #{icosa_backbone_forward.18}
  #allocation0 [shape = 'u32[]', space=smem, size = 0x4, offset = 0x4, fixed_abs, tag = 'smem constant byte address 0x4 - core index']
  #allocation1 [shape = 'u32[72,128]{1,0:T(1,128)}', space=vmem, size = 0x9000, scoped, tag = 'internal scratch']
  %s0 = inlined_call_operand.vmem [shape: f32[8,32], index: 0, kind: input, shape index: {}]
  %s1 = inlined_call_operand.vmem [shape: f32[8,128], index: 1, kind: input, shape index: {}]
  %s2 = inlined_call_operand.vmem [shape: f32[8,128], index: 2, kind: input, shape index: {}]
  %s3 = inlined_call_operand.vmem [shape: f32[8,12], index: 3, kind: input, shape index: {}]
  %s4 = inlined_call_operand.vmem [shape: f32[8,128], index: 4, kind: input, shape index: {}]
  %s5 = inlined_call_operand.vmem [shape: bf16[12,128], index: 5, kind: input, shape index: {}]
  %s6 = inlined_call_operand.vmem [shape: f32[1,128], index: 6, kind: input, shape index: {}]
  %s7 = inlined_call_operand.vmem [shape: bf16[128,128], index: 7, kind: input, shape index: {}]
  %s8 = inlined_call_operand.vmem [shape: f32[1,128], index: 8, kind: input, shape index: {}]
  %s9 = inlined_call_operand.vmem [shape: bf16[128,128], index: 9, kind: input, shape index: {}]
  %s10 = inlined_call_operand.vmem [shape: f32[1,128], index: 10, kind: input, shape index: {}]
  %s11 = inlined_call_operand.vmem [shape: bf16[128,128], index: 11, kind: input, shape index: {}]
  %s12 = inlined_call_operand.vmem [shape: f32[1,128], index: 12, kind: input, shape index: {}]
  %s13 = inlined_call_operand.vmem [shape: bf16[32,128], index: 13, kind: input, shape index: {}]
  %s14 = inlined_call_operand.vmem [shape: f32[1,128], index: 14, kind: input, shape index: {}]
  %s15 = inlined_call_operand.vmem [shape: f32[8,128], index: 15, kind: output, shape index: {}]
  %s16 = sld [smem:[#allocation0]]
  $region70: #{icosa_backbone_forward.18} parent=0
    _
  %s18 = ssub.s32 1, %s16
  %s19 = scalar_select 0, %s18, %s16
  // Predicated region
  $region2: #{icosa_backbone_forward.18} parent=0 // pred_check
    _
  $region3: #{icosa_backbone_forward.18} parent=0 // pred_check_branch
    %21 = sbr.rel (0) target = $region5
  $region4: #{icosa_backbone_forward.18} parent=0 // pred_region
    _
  $region5: #{icosa_backbone_forward.18} parent=0 // pred_fallthru
    _
  // Predicated region
  $region6: #{icosa_backbone_forward.18} parent=0 // pred_check
    _
  $region7: #{icosa_backbone_forward.18} parent=0 // pred_check_branch
    %23 = sbr.rel (0) target = $region9
  $region8: #{icosa_backbone_forward.18} parent=0 // pred_region
    _
  $region9: #{icosa_backbone_forward.18} parent=0 // pred_fallthru
    _
  // Predicated region
  $region10: #{icosa_backbone_forward.18} parent=0 // pred_check
    _
  $region11: #{icosa_backbone_forward.18} parent=0 // pred_check_branch
    %25 = sbr.rel (0) target = $region13
  $region12: #{icosa_backbone_forward.18} parent=0 // pred_region
    _
  $region13: #{icosa_backbone_forward.18} parent=0 // pred_fallthru
    _
  // Predicated region
  $region14: #{icosa_backbone_forward.18} parent=0 // pred_check
    _
  $region15: #{icosa_backbone_forward.18} parent=0 // pred_check_branch
    %27 = sbr.rel (0) target = $region17
  $region16: #{icosa_backbone_forward.18} parent=0 // pred_region
    _
  $region17: #{icosa_backbone_forward.18} parent=0 // pred_fallthru
    _
  // Predicated region
  $region18: #{icosa_backbone_forward.18} parent=0 // pred_check
    _
  $region19: #{icosa_backbone_forward.18} parent=0 // pred_check_branch
    %29 = sbr.rel (0) target = $region21
  $region20: #{icosa_backbone_forward.18} parent=0 // pred_region
    _
  $region21: #{icosa_backbone_forward.18} parent=0 // pred_fallthru
    _
  // Predicated region
  $region22: #{icosa_backbone_forward.18} parent=0 // pred_check
    _
  $region23: #{icosa_backbone_forward.18} parent=0 // pred_check_branch
    %31 = sbr.rel (0) target = $region25
  $region24: #{icosa_backbone_forward.18} parent=0 // pred_region
    _
  $region25: #{icosa_backbone_forward.18} parent=0 // pred_fallthru
    _
  // Predicated region
  $region26: #{icosa_backbone_forward.18} parent=0 // pred_check
    _
  $region27: #{icosa_backbone_forward.18} parent=0 // pred_check_branch
    %33 = sbr.rel (0) target = $region29
  $region28: #{icosa_backbone_forward.18} parent=0 // pred_region
    _
  $region29: #{icosa_backbone_forward.18} parent=0 // pred_fallthru
    _
  // Predicated region
  $region30: #{icosa_backbone_forward.18} parent=0 // pred_check
    _
  $region31: #{icosa_backbone_forward.18} parent=0 // pred_check_branch
    %35 = sbr.rel (0) target = $region33
  $region32: #{icosa_backbone_forward.18} parent=0 // pred_region
    _
  $region33: #{icosa_backbone_forward.18} parent=0 // pred_fallthru
    _
  // Predicated region
  $region34: #{icosa_backbone_forward.18} parent=0 // pred_check
    _
  $region35: #{icosa_backbone_forward.18} parent=0 // pred_check_branch
    %37 = sbr.rel (0) target = $region37
  $region36: #{icosa_backbone_forward.18} parent=0 // pred_region
    _
  $region37: #{icosa_backbone_forward.18} parent=0 // pred_fallthru
    _
  // Predicated region
  $region38: #{icosa_backbone_forward.18} parent=0 // pred_check
    _
  $region39: #{icosa_backbone_forward.18} parent=0 // pred_check_branch
    %39 = sbr.rel (0) target = $region41
  $region40: #{icosa_backbone_forward.18} parent=0 // pred_region
    _
  $region41: #{icosa_backbone_forward.18} parent=0 // pred_fallthru
    _
  // Predicated region
  $region42: #{icosa_backbone_forward.18} parent=0 // pred_check
    _
  $region43: #{icosa_backbone_forward.18} parent=0 // pred_check_branch
    %41 = sbr.rel (0) target = $region45
  $region44: #{icosa_backbone_forward.18} parent=0 // pred_region
    _
  $region45: #{icosa_backbone_forward.18} parent=0 // pred_fallthru
    _
  // Predicated region
  $region46: #{icosa_backbone_forward.18} parent=0 // pred_check
    _
  $region47: #{icosa_backbone_forward.18} parent=0 // pred_check_branch
    %43 = sbr.rel (0) target = $region49
  $region48: #{icosa_backbone_forward.18} parent=0 // pred_region
    _
  $region49: #{icosa_backbone_forward.18} parent=0 // pred_fallthru
    _
  // Predicated region
  $region50: #{icosa_backbone_forward.18} parent=0 // pred_check
    _
  $region51: #{icosa_backbone_forward.18} parent=0 // pred_check_branch
    %45 = sbr.rel (0) target = $region53
  $region52: #{icosa_backbone_forward.18} parent=0 // pred_region
    _
  $region53: #{icosa_backbone_forward.18} parent=0 // pred_fallthru
    _
  // Predicated region
  $region54: #{icosa_backbone_forward.18} parent=0 // pred_check
    _
  $region55: #{icosa_backbone_forward.18} parent=0 // pred_check_branch
    %47 = sbr.rel (0) target = $region57
  $region56: #{icosa_backbone_forward.18} parent=0 // pred_region
    _
  $region57: #{icosa_backbone_forward.18} parent=0 // pred_fallthru
    _
  // Predicated region
  $region58: #{icosa_backbone_forward.18} parent=0 // pred_check
    _
  $region59: #{icosa_backbone_forward.18} parent=0 // pred_check_branch
    %49 = sbr.rel (0) target = $region61
  $region60: #{icosa_backbone_forward.18} parent=0 // pred_region
    _
  $region61: #{icosa_backbone_forward.18} parent=0 // pred_fallthru
    _
  %v51 = vld [vmem:[%s3] sm:$0xff]
  %v52 = vpack.c.bf16 %v51, %v51
  %v53 = vld [vmem:[%s5] sm:$0xf]
  %v54 = vld [vmem:[%s5 + $0x4] sm:$0x3]
  %v55 = vld [vmem:[%s6] sm:$0x1]
  %v57 = vperm.slane %v55, 0
  %v61 = vunpack.c.l.b16 %v53
  %v62 = vunpack.c.l.b16 %v54
  %v63 = vpack.c.b16 %v62, %v61
  %vm64 = vcmask 97280
  %v66 = vsel %vm64, %v52, 0
  %vm68 = vcmask 1045504
  %v70 = vsel %vm68, %v63, 0
  %72 = vmatpush.bf16.msra.mxu0 0
  %73 = vmatpush.bf16.msra.mxu0 0
  %74 = vmatpush.bf16.msra.mxu0 0
  %75 = vmatpush.bf16.msra.mxu0 0
  %76 = vmatpush.bf16.msra.mxu0 0
  %77 = vmatpush.bf16.msra.mxu0 0
  %78 = vmatpush.bf16.msra.mxu0 0
  %79 = vmatpush.bf16.msra.mxu0 %v70
  %80 = vmatmul.bf16.gmra.mxu0 %v66
  %v81 = vpop.f32.mrf.mxu0
  %v82 = vadd.f32 %v57, %v81
  %v83 = vpop.f32.mrf.mxu0
  %84 = vdwg.mxu0
  %v85 = vmax.f32 %v82, 0.0
  %v86 = vpack.c.bf16 %v85, %v85
  %v87 = vld [vmem:[%s7] sm:$0xf]
  %v88 = vld [vmem:[%s7 + $0x4] sm:$0xf]
  %v89 = vld [vmem:[%s7 + $0x8] sm:$0xf]
  %v90 = vld [vmem:[%s7 + $0xc] sm:$0xf]
  %v91 = vld [vmem:[%s7 + $0x10] sm:$0xf]
  %v92 = vld [vmem:[%s7 + $0x14] sm:$0xf]
  %v93 = vld [vmem:[%s7 + $0x18] sm:$0xf]
  %v94 = vld [vmem:[%s7 + $0x1c] sm:$0xf]
  %v95 = vld [vmem:[%s7 + $0x20] sm:$0xf]
  %v96 = vld [vmem:[%s7 + $0x24] sm:$0xf]
  %v97 = vld [vmem:[%s7 + $0x28] sm:$0xf]
  %v98 = vld [vmem:[%s7 + $0x2c] sm:$0xf]
  %v99 = vld [vmem:[%s7 + $0x30] sm:$0xf]
  %v100 = vld [vmem:[%s7 + $0x34] sm:$0xf]
  %v101 = vld [vmem:[%s7 + $0x38] sm:$0xf]
  %v102 = vld [vmem:[%s7 + $0x3c] sm:$0xf]
  %v103 = vld [vmem:[%s8] sm:$0x1]
  %v105 = vperm.slane %v103, 0
  %v123 = vunpack.c.l.b16 %v87
  %v124 = vunpack.c.l.b16 %v88
  %v125 = vunpack.c.l.b16 %v89
  %v126 = vunpack.c.l.b16 %v90
  %v127 = vunpack.c.l.b16 %v91
  %v128 = vunpack.c.l.b16 %v92
  %v129 = vunpack.c.l.b16 %v93
  %v130 = vunpack.c.l.b16 %v94
  %v131 = vunpack.c.l.b16 %v95
  %v132 = vunpack.c.l.b16 %v96
  %v133 = vunpack.c.l.b16 %v97
  %v134 = vunpack.c.l.b16 %v98
  %v135 = vunpack.c.l.b16 %v99
  %v136 = vunpack.c.l.b16 %v100
  %v137 = vunpack.c.l.b16 %v101
  %v138 = vunpack.c.l.b16 %v102
  %v139 = vpack.c.b16 %v124, %v123
  %v140 = vpack.c.b16 %v126, %v125
  %v141 = vpack.c.b16 %v128, %v127
  %v142 = vpack.c.b16 %v130, %v129
  %v143 = vpack.c.b16 %v132, %v131
  %v144 = vpack.c.b16 %v134, %v133
  %v145 = vpack.c.b16 %v136, %v135
  %v146 = vpack.c.b16 %v138, %v137
  %155 = vmatpush.bf16.msra.mxu0 %v146
  %156 = vmatpush.bf16.msra.mxu0 %v145
  %157 = vmatpush.bf16.msra.mxu0 %v144
  %158 = vmatpush.bf16.msra.mxu0 %v143
  %159 = vmatpush.bf16.msra.mxu0 %v142
  %160 = vmatpush.bf16.msra.mxu0 %v141
  %161 = vmatpush.bf16.msra.mxu0 %v140
  %162 = vmatpush.bf16.msra.mxu0 %v139
  %163 = vmatmul.bf16.gmra.mxu0 %v86
  %v164 = vpop.f32.mrf.mxu0
  %v165 = vadd.f32 %v105, %v164
  %v166 = vpop.f32.mrf.mxu0
  %167 = vdwg.mxu0
  %v168 = vld [vmem:[%s0] sm:$0xff]
  %170 = vrot.lane.b32.xlu0 %v168, 32
  %v171 = vpop.permute.xlu0 %170
  %173 = vrot.lane.b32.xlu0 %v168, 64
  %v174 = vpop.permute.xlu0 %173
  %176 = vrot.lane.b32.xlu0 %v168, 96
  %v177 = vpop.permute.xlu0 %176
  %vm179 = vcmask 261120
  %v180 = vsel %vm179, %v168, %v171
  %vm181 = vcmask 523264
  %v182 = vsel %vm181, %v180, %v174
  %vm183 = vcmask 785408
  %v184 = vsel %vm183, %v182, %v177
  %v185 = vld [vmem:[%s1] sm:$0xff]
  %v186 = vsub.f32 %v184, %v185
  %v187 = vadd.f32 %v186, %v165
  %v188 = vpack.c.bf16 %v187, %v187
  %v189 = vld [vmem:[%s9] sm:$0xf]
  %v190 = vld [vmem:[%s9 + $0x4] sm:$0xf]
  %v191 = vld [vmem:[%s9 + $0x8] sm:$0xf]
  %v192 = vld [vmem:[%s9 + $0xc] sm:$0xf]
  %v193 = vld [vmem:[%s9 + $0x10] sm:$0xf]
  %v194 = vld [vmem:[%s9 + $0x14] sm:$0xf]
  %v195 = vld [vmem:[%s9 + $0x18] sm:$0xf]
  %v196 = vld [vmem:[%s9 + $0x1c] sm:$0xf]
  %v197 = vld [vmem:[%s9 + $0x20] sm:$0xf]
  %v198 = vld [vmem:[%s9 + $0x24] sm:$0xf]
  %v199 = vld [vmem:[%s9 + $0x28] sm:$0xf]
  %v200 = vld [vmem:[%s9 + $0x2c] sm:$0xf]
  %v201 = vld [vmem:[%s9 + $0x30] sm:$0xf]
  %v202 = vld [vmem:[%s9 + $0x34] sm:$0xf]
  %v203 = vld [vmem:[%s9 + $0x38] sm:$0xf]
  %v204 = vld [vmem:[%s9 + $0x3c] sm:$0xf]
  %v205 = vld [vmem:[%s10] sm:$0x1]
  %v207 = vperm.slane %v205, 0
  %v225 = vunpack.c.l.b16 %v189
  %v226 = vunpack.c.l.b16 %v190
  %v227 = vunpack.c.l.b16 %v191
  %v228 = vunpack.c.l.b16 %v192
  %v229 = vunpack.c.l.b16 %v193
  %v230 = vunpack.c.l.b16 %v194
  %v231 = vunpack.c.l.b16 %v195
  %v232 = vunpack.c.l.b16 %v196
  %v233 = vunpack.c.l.b16 %v197
  %v234 = vunpack.c.l.b16 %v198
  %v235 = vunpack.c.l.b16 %v199
  %v236 = vunpack.c.l.b16 %v200
  %v237 = vunpack.c.l.b16 %v201
  %v238 = vunpack.c.l.b16 %v202
  %v239 = vunpack.c.l.b16 %v203
  %v240 = vunpack.c.l.b16 %v204
  %v241 = vpack.c.b16 %v226, %v225
  %v242 = vpack.c.b16 %v228, %v227
  %v243 = vpack.c.b16 %v230, %v229
  %v244 = vpack.c.b16 %v232, %v231
  %v245 = vpack.c.b16 %v234, %v233
  %v246 = vpack.c.b16 %v236, %v235
  %v247 = vpack.c.b16 %v238, %v237
  %v248 = vpack.c.b16 %v240, %v239
  %257 = vmatpush.bf16.msra.mxu0 %v248
  %258 = vmatpush.bf16.msra.mxu0 %v247
  %259 = vmatpush.bf16.msra.mxu0 %v246
  %260 = vmatpush.bf16.msra.mxu0 %v245
  %261 = vmatpush.bf16.msra.mxu0 %v244
  %262 = vmatpush.bf16.msra.mxu0 %v243
  %263 = vmatpush.bf16.msra.mxu0 %v242
  %264 = vmatpush.bf16.msra.mxu0 %v241
  %265 = vmatmul.bf16.gmra.mxu0 %v188
  %v266 = vpop.f32.mrf.mxu0
  %v267 = vadd.f32 %v207, %v266
  %v268 = vpop.f32.mrf.mxu0
  %269 = vdwg.mxu0
  %v270 = vmax.f32 %v267, 0.0
  %v271 = vpack.c.bf16 %v270, %v270
  %v272 = vld [vmem:[%s11] sm:$0xf]
  %v273 = vld [vmem:[%s11 + $0x4] sm:$0xf]
  %v274 = vld [vmem:[%s11 + $0x8] sm:$0xf]
  %v275 = vld [vmem:[%s11 + $0xc] sm:$0xf]
  %v276 = vld [vmem:[%s11 + $0x10] sm:$0xf]
  %v277 = vld [vmem:[%s11 + $0x14] sm:$0xf]
  %v278 = vld [vmem:[%s11 + $0x18] sm:$0xf]
  %v279 = vld [vmem:[%s11 + $0x1c] sm:$0xf]
  %v280 = vld [vmem:[%s11 + $0x20] sm:$0xf]
  %v281 = vld [vmem:[%s11 + $0x24] sm:$0xf]
  %v282 = vld [vmem:[%s11 + $0x28] sm:$0xf]
  %v283 = vld [vmem:[%s11 + $0x2c] sm:$0xf]
  %v284 = vld [vmem:[%s11 + $0x30] sm:$0xf]
  %v285 = vld [vmem:[%s11 + $0x34] sm:$0xf]
  %v286 = vld [vmem:[%s11 + $0x38] sm:$0xf]
  %v287 = vld [vmem:[%s11 + $0x3c] sm:$0xf]
  %v288 = vld [vmem:[%s12] sm:$0x1]
  %v290 = vperm.slane %v288, 0
  %v308 = vunpack.c.l.b16 %v272
  %v309 = vunpack.c.l.b16 %v273
  %v310 = vunpack.c.l.b16 %v274
  %v311 = vunpack.c.l.b16 %v275
  %v312 = vunpack.c.l.b16 %v276
  %v313 = vunpack.c.l.b16 %v277
  %v314 = vunpack.c.l.b16 %v278
  %v315 = vunpack.c.l.b16 %v279
  %v316 = vunpack.c.l.b16 %v280
  %v317 = vunpack.c.l.b16 %v281
  %v318 = vunpack.c.l.b16 %v282
  %v319 = vunpack.c.l.b16 %v283
  %v320 = vunpack.c.l.b16 %v284
  %v321 = vunpack.c.l.b16 %v285
  %v322 = vunpack.c.l.b16 %v286
  %v323 = vunpack.c.l.b16 %v287
  %v324 = vpack.c.b16 %v309, %v308
  %v325 = vpack.c.b16 %v311, %v310
  %v326 = vpack.c.b16 %v313, %v312
  %v327 = vpack.c.b16 %v315, %v314
  %v328 = vpack.c.b16 %v317, %v316
  %v329 = vpack.c.b16 %v319, %v318
  %v330 = vpack.c.b16 %v321, %v320
  %v331 = vpack.c.b16 %v323, %v322
  %340 = vmatpush.bf16.msra.mxu0 %v331
  %341 = vmatpush.bf16.msra.mxu0 %v330
  %342 = vmatpush.bf16.msra.mxu0 %v329
  %343 = vmatpush.bf16.msra.mxu0 %v328
  %344 = vmatpush.bf16.msra.mxu0 %v327
  %345 = vmatpush.bf16.msra.mxu0 %v326
  %346 = vmatpush.bf16.msra.mxu0 %v325
  %347 = vmatpush.bf16.msra.mxu0 %v324
  %348 = vmatmul.bf16.gmra.mxu0 %v271
  %v349 = vpop.f32.mrf.mxu0
  %v350 = vadd.f32 %v290, %v349
  %v351 = vpop.f32.mrf.mxu0
  %352 = vdwg.mxu0
  %v353 = vmul.f32 %v350, 0.17677669
  %v354 = vld [vmem:[%s2] sm:$0xff]
  %v355 = vadd.f32 %v354, %v165
  %357 = vrot.lane.b32.xlu0 %v353, 96
  %v358 = vpop.permute.xlu0 %357
  %v360 = vmax.f32 %v353, %v358
  %361 = vrot.lane.b32.xlu0 %v353, 64
  %v362 = vpop.permute.xlu0 %361
  %v364 = vmax.f32 %v360, %v362
  %365 = vrot.lane.b32.xlu0 %v353, 32
  %v366 = vpop.permute.xlu0 %365
  %v368 = vmax.f32 %v364, %v366
  %v369 = vsub.f32 %v353, %v368
  %v370 = vmul.f32 %v369, 1.442695
  %v371 = vpow.pop %v370
  %373 = vrot.lane.b32.xlu0 %v368, 32
  %v374 = vpop.permute.xlu0 %373
  %v376 = vsub.f32 %v353, %v374
  %v377 = vmul.f32 %v376, 1.442695
  %v378 = vpow.pop %v377
  %379 = vrot.lane.b32.xlu0 %v368, 64
  %v380 = vpop.permute.xlu0 %379
  %v382 = vsub.f32 %v353, %v380
  %v383 = vmul.f32 %v382, 1.442695
  %v384 = vpow.pop %v383
  %385 = vrot.lane.b32.xlu0 %v368, 96
  %v386 = vpop.permute.xlu0 %385
  %v388 = vsub.f32 %v353, %v386
  %v389 = vmul.f32 %v388, 1.442695
  %v390 = vpow.pop %v389
  %392 = vrot.lane.b32.xlu0 %v378, 96
  %v393 = vpop.permute.xlu0 %392
  %v395 = vadd.f32 %v371, %v393
  %397 = vrot.lane.b32.xlu0 %v384, 64
  %v398 = vpop.permute.xlu0 %397
  %v400 = vadd.f32 %v395, %v398
  %402 = vrot.lane.b32.xlu0 %v390, 32
  %v403 = vpop.permute.xlu0 %402
  %v405 = vadd.f32 %v400, %v403
  %v406 = vrcp.pop %v405
  %v407 = vmul.f32 %v371, %v355
  %v408 = vmul.f32 %v378, %v355
  %410 = vrot.lane.b32.xlu0 %v408, 96
  %v411 = vpop.permute.xlu0 %410
  %v413 = vadd.f32 %v407, %v411
  %v414 = vmul.f32 %v384, %v355
  %416 = vrot.lane.b32.xlu0 %v414, 64
  %v417 = vpop.permute.xlu0 %416
  %v419 = vadd.f32 %v413, %v417
  %v420 = vmul.f32 %v390, %v355
  %422 = vrot.lane.b32.xlu0 %v420, 32
  %v423 = vpop.permute.xlu0 %422
  %v425 = vadd.f32 %v419, %v423
  %v426 = vmul.f32 %v425, %v406
  %v427 = vpack.c.bf16 %v426, %v426
  %v428 = vld [vmem:[%s13] sm:$0xf]
  %v429 = vld [vmem:[%s13 + $0x4] sm:$0xf]
  %v430 = vld [vmem:[%s13 + $0x8] sm:$0xf]
  %v431 = vld [vmem:[%s13 + $0xc] sm:$0xf]
  %v432 = vld [vmem:[%s14] sm:$0x1]
  %v434 = vperm.slane %v432, 0
  %v440 = vunpack.c.l.b16 %v428
  %v441 = vunpack.c.l.b16 %v429
  %v442 = vunpack.c.l.b16 %v430
  %v443 = vunpack.c.l.b16 %v431
  %v444 = vpack.c.b16 %v441, %v440
  %v445 = vpack.c.b16 %v443, %v442
  %v449 = vsel %vm179, %v427, 0
  %451 = vmatpush.bf16.msra.mxu0 0
  %452 = vmatpush.bf16.msra.mxu0 0
  %453 = vmatpush.bf16.msra.mxu0 0
  %454 = vmatpush.bf16.msra.mxu0 0
  %455 = vmatpush.bf16.msra.mxu0 0
  %456 = vmatpush.bf16.msra.mxu0 0
  %457 = vmatpush.bf16.msra.mxu0 %v445
  %458 = vmatpush.bf16.msra.mxu0 %v444
  %459 = vmatmul.bf16.gmra.mxu0 %v449
  %v460 = vpop.f32.mrf.mxu0
  %v461 = vadd.f32 %v434, %v460
  %v462 = vpop.f32.mrf.mxu0
  %463 = vdwg.mxu0
  %v464 = vld [vmem:[%s4] sm:$0xff]
  %v465 = vadd.f32 %v461, %v464
  %466 = vst [vmem:[%s15] sm:$0xff] %v465
  // Predicated region
  $region62: #{icosa_backbone_forward.18} parent=0 // pred_check
    _
  $region63: #{icosa_backbone_forward.18} parent=0 // pred_check_branch
    %468 = sbr.rel (0) target = $region65
  $region64: #{icosa_backbone_forward.18} parent=0 // pred_region
    _
  $region65: #{icosa_backbone_forward.18} parent=0 // pred_fallthru
    _
  // Predicated region
  $region66: #{icosa_backbone_forward.18} parent=0 // pred_check
    _
  $region67: #{icosa_backbone_forward.18} parent=0 // pred_check_branch
    %470 = sbr.rel (0) target = $region69
  $region68: #{icosa_backbone_forward.18} parent=0 // pred_region
    _
  $region69: #{icosa_backbone_forward.18} parent=0 // pred_fallthru
    _

// kernel: icosa_backbone_forward.19
$region0: #{icosa_backbone_forward.19}
  #allocation0 [shape = 'u32[]', space=smem, size = 0x4, offset = 0x4, fixed_abs, tag = 'smem constant byte address 0x4 - core index']
  #allocation1 [shape = 'u32[72,128]{1,0:T(1,128)}', space=vmem, size = 0x9000, scoped, tag = 'internal scratch']
  %s0 = inlined_call_operand.vmem [shape: f32[8,128], index: 0, kind: input, shape index: {}]
  %s1 = inlined_call_operand.vmem [shape: bf16[128,256], index: 1, kind: input, shape index: {}]
  %s2 = inlined_call_operand.vmem [shape: f32[1,256], index: 2, kind: input, shape index: {}]
  %s3 = inlined_call_operand.vmem [shape: bf16[256,256], index: 3, kind: input, shape index: {}]
  %s4 = inlined_call_operand.vmem [shape: f32[1,256], index: 4, kind: input, shape index: {}]
  %s5 = inlined_call_operand.vmem [shape: bf16[256,32], index: 5, kind: input, shape index: {}]
  %s6 = inlined_call_operand.vmem [shape: f32[1,32], index: 6, kind: input, shape index: {}]
  %s7 = inlined_call_operand.hbm [shape: f32[8,32], index: 7, kind: output, shape index: {}]
  %s8 = sld [smem:[#allocation0]]
  $region38: #{icosa_backbone_forward.19} parent=0
    _
  %s10 = ssub.s32 1, %s8
  %s11 = scalar_select 0, %s10, %s8
  $region1: #{icosa_backbone_forward.19} parent=0
    #allocation2 [shape = 'u8[4096]{0}', space=vmem, size = 0x1000, scoped, tag = 'output window, operand 0, single buffered']
    #allocation3 [shape = 's32[1]{0}', space=sflag, size = 0x4, scoped, tag = 'scoped memory for icosa_backbone_forward.19']
    %12 = vsyncpa [#allocation3], 0
    // Predicated region
    $region2: #{icosa_backbone_forward.19} parent=1 // pred_check
      _
    $region3: #{icosa_backbone_forward.19} parent=1 // pred_check_branch
      %14 = sbr.rel (0) target = $region5
    $region4: #{icosa_backbone_forward.19} parent=1 // pred_region
      _
    $region5: #{icosa_backbone_forward.19} parent=1 // pred_fallthru
      _
    // Predicated region
    $region6: #{icosa_backbone_forward.19} parent=1 // pred_check
      _
    $region7: #{icosa_backbone_forward.19} parent=1 // pred_check_branch
      %16 = sbr.rel (0) target = $region9
    $region8: #{icosa_backbone_forward.19} parent=1 // pred_region
      _
    $region9: #{icosa_backbone_forward.19} parent=1 // pred_fallthru
      _
    // Predicated region
    $region10: #{icosa_backbone_forward.19} parent=1 // pred_check
      _
    $region11: #{icosa_backbone_forward.19} parent=1 // pred_check_branch
      %18 = sbr.rel (0) target = $region13
    $region12: #{icosa_backbone_forward.19} parent=1 // pred_region
      _
    $region13: #{icosa_backbone_forward.19} parent=1 // pred_fallthru
      _
    // Predicated region
    $region14: #{icosa_backbone_forward.19} parent=1 // pred_check
      _
    $region15: #{icosa_backbone_forward.19} parent=1 // pred_check_branch
      %20 = sbr.rel (0) target = $region17
    $region16: #{icosa_backbone_forward.19} parent=1 // pred_region
      _
    $region17: #{icosa_backbone_forward.19} parent=1 // pred_fallthru
      _
    // Predicated region
    $region18: #{icosa_backbone_forward.19} parent=1 // pred_check
      _
    $region19: #{icosa_backbone_forward.19} parent=1 // pred_check_branch
      %22 = sbr.rel (0) target = $region21
    $region20: #{icosa_backbone_forward.19} parent=1 // pred_region
      _
    $region21: #{icosa_backbone_forward.19} parent=1 // pred_fallthru
      _
    // Predicated region
    $region22: #{icosa_backbone_forward.19} parent=1 // pred_check
      _
    $region23: #{icosa_backbone_forward.19} parent=1 // pred_check_branch
      %24 = sbr.rel (0) target = $region25
    $region24: #{icosa_backbone_forward.19} parent=1 // pred_region
      _
    $region25: #{icosa_backbone_forward.19} parent=1 // pred_fallthru
      _
    // Predicated region
    $region26: #{icosa_backbone_forward.19} parent=1 // pred_check
      _
    $region27: #{icosa_backbone_forward.19} parent=1 // pred_check_branch
      %26 = sbr.rel (0) target = $region29
    $region28: #{icosa_backbone_forward.19} parent=1 // pred_region
      _
    $region29: #{icosa_backbone_forward.19} parent=1 // pred_fallthru
      _
    %v27 = vld [vmem:[%s0] sm:$0xff]
    %v28 = vpack.c.bf16 %v27, %v27
    %v29 = vld [vmem:[%s1] sm:$0xff]
    %v30 = vld [vmem:[%s1 + $0x8] sm:$0xff]
    %v31 = vld [vmem:[%s1 + $0x10] sm:$0xff]
    %v32 = vld [vmem:[%s1 + $0x18] sm:$0xff]
    %v33 = vld [vmem:[%s1 + $0x20] sm:$0xff]
    %v34 = vld [vmem:[%s1 + $0x28] sm:$0xff]
    %v35 = vld [vmem:[%s1 + $0x30] sm:$0xff]
    %v36 = vld [vmem:[%s1 + $0x38] sm:$0xff]
    %v37 = vld [vmem:[%s1 + $0x40] sm:$0xff]
    %v38 = vld [vmem:[%s1 + $0x48] sm:$0xff]
    %v39 = vld [vmem:[%s1 + $0x50] sm:$0xff]
    %v40 = vld [vmem:[%s1 + $0x58] sm:$0xff]
    %v41 = vld [vmem:[%s1 + $0x60] sm:$0xff]
    %v42 = vld [vmem:[%s1 + $0x68] sm:$0xff]
    %v43 = vld [vmem:[%s1 + $0x70] sm:$0xff]
    %v44 = vld [vmem:[%s1 + $0x78] sm:$0xff]
    %v45 = vld [vmem:[%s2] sm:$0x3]
    %v47 = vperm.slane %v45, 0
    %v48 = vperm.slane %v45, 1
    %v67 = vunpack.c.l.b16 %v29
    %v68 = vunpack.c.h.b16 %v29
    %v69 = vunpack.c.l.b16 %v30
    %v70 = vunpack.c.h.b16 %v30
    %v71 = vunpack.c.l.b16 %v31
    %v72 = vunpack.c.h.b16 %v31
    %v73 = vunpack.c.l.b16 %v32
    %v74 = vunpack.c.h.b16 %v32
    %v75 = vunpack.c.l.b16 %v33
    %v76 = vunpack.c.h.b16 %v33
    %v77 = vunpack.c.l.b16 %v34
    %v78 = vunpack.c.h.b16 %v34
    %v79 = vunpack.c.l.b16 %v35
    %v80 = vunpack.c.h.b16 %v35
    %v81 = vunpack.c.l.b16 %v36
    %v82 = vunpack.c.h.b16 %v36
    %v83 = vunpack.c.l.b16 %v37
    %v84 = vunpack.c.h.b16 %v37
    %v85 = vunpack.c.l.b16 %v38
    %v86 = vunpack.c.h.b16 %v38
    %v87 = vunpack.c.l.b16 %v39
    %v88 = vunpack.c.h.b16 %v39
    %v89 = vunpack.c.l.b16 %v40
    %v90 = vunpack.c.h.b16 %v40
    %v91 = vunpack.c.l.b16 %v41
    %v92 = vunpack.c.h.b16 %v41
    %v93 = vunpack.c.l.b16 %v42
    %v94 = vunpack.c.h.b16 %v42
    %v95 = vunpack.c.l.b16 %v43
    %v96 = vunpack.c.h.b16 %v43
    %v97 = vunpack.c.l.b16 %v44
    %v98 = vunpack.c.h.b16 %v44
    %v99 = vpack.c.b16 %v69, %v67
    %v100 = vpack.c.b16 %v70, %v68
    %v101 = vpack.c.b16 %v73, %v71
    %v102 = vpack.c.b16 %v74, %v72
    %v103 = vpack.c.b16 %v77, %v75
    %v104 = vpack.c.b16 %v78, %v76
    %v105 = vpack.c.b16 %v81, %v79
    %v106 = vpack.c.b16 %v82, %v80
    %v107 = vpack.c.b16 %v85, %v83
    %v108 = vpack.c.b16 %v86, %v84
    %v109 = vpack.c.b16 %v89, %v87
    %v110 = vpack.c.b16 %v90, %v88
    %v111 = vpack.c.b16 %v93, %v91
    %v112 = vpack.c.b16 %v94, %v92
    %v113 = vpack.c.b16 %v97, %v95
    %v114 = vpack.c.b16 %v98, %v96
    %131 = vmatpush.bf16.msra.mxu0 %v113
    %132 = vmatpush.bf16.msra.mxu0 %v111
    %133 = vmatpush.bf16.msra.mxu0 %v109
    %134 = vmatpush.bf16.msra.mxu0 %v107
    %135 = vmatpush.bf16.msra.mxu0 %v105
    %136 = vmatpush.bf16.msra.mxu0 %v103
    %137 = vmatpush.bf16.msra.mxu0 %v101
    %138 = vmatpush.bf16.msra.mxu0 %v99
    %139 = vmatmul.bf16.gmra.mxu0 %v28
    %v140 = vpop.f32.mrf.mxu0
    %v141 = vadd.f32 %v47, %v140
    %v142 = vpop.f32.mrf.mxu0
    %143 = vdwg.mxu0
    %144 = vmatpush.bf16.msra.mxu0 %v114
    %145 = vmatpush.bf16.msra.mxu0 %v112
    %146 = vmatpush.bf16.msra.mxu0 %v110
    %147 = vmatpush.bf16.msra.mxu0 %v108
    %148 = vmatpush.bf16.msra.mxu0 %v106
    %149 = vmatpush.bf16.msra.mxu0 %v104
    %150 = vmatpush.bf16.msra.mxu0 %v102
    %151 = vmatpush.bf16.msra.mxu0 %v100
    %152 = vmatmul.bf16.gmra.mxu0 %v28
    %v153 = vpop.f32.mrf.mxu0
    %v154 = vadd.f32 %v48, %v153
    %v155 = vpop.f32.mrf.mxu0
    %156 = vdwg.mxu0
    %v157 = vmax.f32 %v141, 0.0
    %v158 = vmax.f32 %v154, 0.0
    %v159 = vpack.c.bf16 %v157, %v157
    %v160 = vpack.c.bf16 %v158, %v158
    %v161 = vld [vmem:[%s3] sm:$0xff]
    %v162 = vld [vmem:[%s3 + $0x8] sm:$0xff]
    %v163 = vld [vmem:[%s3 + $0x10] sm:$0xff]
    %v164 = vld [vmem:[%s3 + $0x18] sm:$0xff]
    %v165 = vld [vmem:[%s3 + $0x20] sm:$0xff]
    %v166 = vld [vmem:[%s3 + $0x28] sm:$0xff]
    %v167 = vld [vmem:[%s3 + $0x30] sm:$0xff]
    %v168 = vld [vmem:[%s3 + $0x38] sm:$0xff]
    %v169 = vld [vmem:[%s3 + $0x40] sm:$0xff]
    %v170 = vld [vmem:[%s3 + $0x48] sm:$0xff]
    %v171 = vld [vmem:[%s3 + $0x50] sm:$0xff]
    %v172 = vld [vmem:[%s3 + $0x58] sm:$0xff]
    %v173 = vld [vmem:[%s3 + $0x60] sm:$0xff]
    %v174 = vld [vmem:[%s3 + $0x68] sm:$0xff]
    %v175 = vld [vmem:[%s3 + $0x70] sm:$0xff]
    %v176 = vld [vmem:[%s3 + $0x78] sm:$0xff]
    %v177 = vld [vmem:[%s3 + $0x80] sm:$0xff]
    %v178 = vld [vmem:[%s3 + $0x88] sm:$0xff]
    %v179 = vld [vmem:[%s3 + $0x90] sm:$0xff]
    %v180 = vld [vmem:[%s3 + $0x98] sm:$0xff]
    %v181 = vld [vmem:[%s3 + $0xa0] sm:$0xff]
    %v182 = vld [vmem:[%s3 + $0xa8] sm:$0xff]
    %v183 = vld [vmem:[%s3 + $0xb0] sm:$0xff]
    %v184 = vld [vmem:[%s3 + $0xb8] sm:$0xff]
    %v185 = vld [vmem:[%s3 + $0xc0] sm:$0xff]
    %v186 = vld [vmem:[%s3 + $0xc8] sm:$0xff]
    %v187 = vld [vmem:[%s3 + $0xd0] sm:$0xff]
    %v188 = vld [vmem:[%s3 + $0xd8] sm:$0xff]
    %v189 = vld [vmem:[%s3 + $0xe0] sm:$0xff]
    %v190 = vld [vmem:[%s3 + $0xe8] sm:$0xff]
    %v191 = vld [vmem:[%s3 + $0xf0] sm:$0xff]
    %v192 = vld [vmem:[%s3 + $0xf8] sm:$0xff]
    %v193 = vld [vmem:[%s4] sm:$0x3]
    %v195 = vperm.slane %v193, 0
    %v196 = vperm.slane %v193, 1
    %v231 = vunpack.c.l.b16 %v161
    %v232 = vunpack.c.h.b16 %v161
    %v233 = vunpack.c.l.b16 %v162
    %v234 = vunpack.c.h.b16 %v162
    %v235 = vunpack.c.l.b16 %v163
    %v236 = vunpack.c.h.b16 %v163
    %v237 = vunpack.c.l.b16 %v164
    %v238 = vunpack.c.h.b16 %v164
    %v239 = vunpack.c.l.b16 %v165
    %v240 = vunpack.c.h.b16 %v165
    %v241 = vunpack.c.l.b16 %v166
    %v242 = vunpack.c.h.b16 %v166
    %v243 = vunpack.c.l.b16 %v167
    %v244 = vunpack.c.h.b16 %v167
    %v245 = vunpack.c.l.b16 %v168
    %v246 = vunpack.c.h.b16 %v168
    %v247 = vunpack.c.l.b16 %v169
    %v248 = vunpack.c.h.b16 %v169
    %v249 = vunpack.c.l.b16 %v170
    %v250 = vunpack.c.h.b16 %v170
    %v251 = vunpack.c.l.b16 %v171
    %v252 = vunpack.c.h.b16 %v171
    %v253 = vunpack.c.l.b16 %v172
    %v254 = vunpack.c.h.b16 %v172
    %v255 = vunpack.c.l.b16 %v173
    %v256 = vunpack.c.h.b16 %v173
    %v257 = vunpack.c.l.b16 %v174
    %v258 = vunpack.c.h.b16 %v174
    %v259 = vunpack.c.l.b16 %v175
    %v260 = vunpack.c.h.b16 %v175
    %v261 = vunpack.c.l.b16 %v176
    %v262 = vunpack.c.h.b16 %v176
    %v263 = vunpack.c.l.b16 %v177
    %v264 = vunpack.c.h.b16 %v177
    %v265 = vunpack.c.l.b16 %v178
    %v266 = vunpack.c.h.b16 %v178
    %v267 = vunpack.c.l.b16 %v179
    %v268 = vunpack.c.h.b16 %v179
    %v269 = vunpack.c.l.b16 %v180
    %v270 = vunpack.c.h.b16 %v180
    %v271 = vunpack.c.l.b16 %v181
    %v272 = vunpack.c.h.b16 %v181
    %v273 = vunpack.c.l.b16 %v182
    %v274 = vunpack.c.h.b16 %v182
    %v275 = vunpack.c.l.b16 %v183
    %v276 = vunpack.c.h.b16 %v183
    %v277 = vunpack.c.l.b16 %v184
    %v278 = vunpack.c.h.b16 %v184
    %v279 = vunpack.c.l.b16 %v185
    %v280 = vunpack.c.h.b16 %v185
    %v281 = vunpack.c.l.b16 %v186
    %v282 = vunpack.c.h.b16 %v186
    %v283 = vunpack.c.l.b16 %v187
    %v284 = vunpack.c.h.b16 %v187
    %v285 = vunpack.c.l.b16 %v188
    %v286 = vunpack.c.h.b16 %v188
    %v287 = vunpack.c.l.b16 %v189
    %v288 = vunpack.c.h.b16 %v189
    %v289 = vunpack.c.l.b16 %v190
    %v290 = vunpack.c.h.b16 %v190
    %v291 = vunpack.c.l.b16 %v191
    %v292 = vunpack.c.h.b16 %v191
    %v293 = vunpack.c.l.b16 %v192
    %v294 = vunpack.c.h.b16 %v192
    %v295 = vpack.c.b16 %v233, %v231
    %v296 = vpack.c.b16 %v234, %v232
    %v297 = vpack.c.b16 %v237, %v235
    %v298 = vpack.c.b16 %v238, %v236
    %v299 = vpack.c.b16 %v241, %v239
    %v300 = vpack.c.b16 %v242, %v240
    %v301 = vpack.c.b16 %v245, %v243
    %v302 = vpack.c.b16 %v246, %v244
    %v303 = vpack.c.b16 %v249, %v247
    %v304 = vpack.c.b16 %v250, %v248
    %v305 = vpack.c.b16 %v253, %v251
    %v306 = vpack.c.b16 %v254, %v252
    %v307 = vpack.c.b16 %v257, %v255
    %v308 = vpack.c.b16 %v258, %v256
    %v309 = vpack.c.b16 %v261, %v259
    %v310 = vpack.c.b16 %v262, %v260
    %v311 = vpack.c.b16 %v265, %v263
    %v312 = vpack.c.b16 %v266, %v264
    %v313 = vpack.c.b16 %v269, %v267
    %v314 = vpack.c.b16 %v270, %v268
    %v315 = vpack.c.b16 %v273, %v271
    %v316 = vpack.c.b16 %v274, %v272
    %v317 = vpack.c.b16 %v277, %v275
    %v318 = vpack.c.b16 %v278, %v276
    %v319 = vpack.c.b16 %v281, %v279
    %v320 = vpack.c.b16 %v282, %v280
    %v321 = vpack.c.b16 %v285, %v283
    %v322 = vpack.c.b16 %v286, %v284
    %v323 = vpack.c.b16 %v289, %v287
    %v324 = vpack.c.b16 %v290, %v288
    %v325 = vpack.c.b16 %v293, %v291
    %v326 = vpack.c.b16 %v294, %v292
    %359 = vmatpush.bf16.msra.mxu0 %v309
    %360 = vmatpush.bf16.msra.mxu0 %v307
    %361 = vmatpush.bf16.msra.mxu0 %v305
    %362 = vmatpush.bf16.msra.mxu0 %v303
    %363 = vmatpush.bf16.msra.mxu0 %v301
    %364 = vmatpush.bf16.msra.mxu0 %v299
    %365 = vmatpush.bf16.msra.mxu0 %v297
    %366 = vmatpush.bf16.msra.mxu0 %v295
    %367 = vmatmul.bf16.gmra.mxu0 %v159
    %v368 = vpop.f32.mrf.mxu0
    %v369 = vadd.f32 %v195, %v368
    %v370 = vpop.f32.mrf.mxu0
    %371 = vdwg.mxu0
    %372 = vmatpush.bf16.msra.mxu0 %v325
    %373 = vmatpush.bf16.msra.mxu0 %v323
    %374 = vmatpush.bf16.msra.mxu0 %v321
    %375 = vmatpush.bf16.msra.mxu0 %v319
    %376 = vmatpush.bf16.msra.mxu0 %v317
    %377 = vmatpush.bf16.msra.mxu0 %v315
    %378 = vmatpush.bf16.msra.mxu0 %v313
    %379 = vmatpush.bf16.msra.mxu0 %v311
    %380 = vmatmul.bf16.gmra.mxu0 %v160
    %v381 = vpop.f32.mrf.mxu0
    %v382 = vadd.f32 %v369, %v381
    %v383 = vpop.f32.mrf.mxu0
    %384 = vdwg.mxu0
    %385 = vmatpush.bf16.msra.mxu0 %v310
    %386 = vmatpush.bf16.msra.mxu0 %v308
    %387 = vmatpush.bf16.msra.mxu0 %v306
    %388 = vmatpush.bf16.msra.mxu0 %v304
    %389 = vmatpush.bf16.msra.mxu0 %v302
    %390 = vmatpush.bf16.msra.mxu0 %v300
    %391 = vmatpush.bf16.msra.mxu0 %v298
    %392 = vmatpush.bf16.msra.mxu0 %v296
    %393 = vmatmul.bf16.gmra.mxu0 %v159
    %v394 = vpop.f32.mrf.mxu0
    %v395 = vadd.f32 %v196, %v394
    %v396 = vpop.f32.mrf.mxu0
    %397 = vdwg.mxu0
    %398 = vmatpush.bf16.msra.mxu0 %v326
    %399 = vmatpush.bf16.msra.mxu0 %v324
    %400 = vmatpush.bf16.msra.mxu0 %v322
    %401 = vmatpush.bf16.msra.mxu0 %v320
    %402 = vmatpush.bf16.msra.mxu0 %v318
    %403 = vmatpush.bf16.msra.mxu0 %v316
    %404 = vmatpush.bf16.msra.mxu0 %v314
    %405 = vmatpush.bf16.msra.mxu0 %v312
    %406 = vmatmul.bf16.gmra.mxu0 %v160
    %v407 = vpop.f32.mrf.mxu0
    %v408 = vadd.f32 %v395, %v407
    %v409 = vpop.f32.mrf.mxu0
    %410 = vdwg.mxu0
    %v411 = vmax.f32 %v382, 0.0
    %v412 = vmax.f32 %v408, 0.0
    %v413 = vpack.c.bf16 %v411, %v411
    %v414 = vpack.c.bf16 %v412, %v412
    %v415 = vld [vmem:[%s5] sm:$0xf]
    %v416 = vld [vmem:[%s5 + $0x4] sm:$0xf]
    %v417 = vld [vmem:[%s5 + $0x8] sm:$0xf]
    %v418 = vld [vmem:[%s5 + $0xc] sm:$0xf]
    %v419 = vld [vmem:[%s5 + $0x10] sm:$0xf]
    %v420 = vld [vmem:[%s5 + $0x14] sm:$0xf]
    %v421 = vld [vmem:[%s5 + $0x18] sm:$0xf]
    %v422 = vld [vmem:[%s5 + $0x1c] sm:$0xf]
    %v423 = vld [vmem:[%s5 + $0x20] sm:$0xf]
    %v424 = vld [vmem:[%s5 + $0x24] sm:$0xf]
    %v425 = vld [vmem:[%s5 + $0x28] sm:$0xf]
    %v426 = vld [vmem:[%s5 + $0x2c] sm:$0xf]
    %v427 = vld [vmem:[%s5 + $0x30] sm:$0xf]
    %v428 = vld [vmem:[%s5 + $0x34] sm:$0xf]
    %v429 = vld [vmem:[%s5 + $0x38] sm:$0xf]
    %v430 = vld [vmem:[%s5 + $0x3c] sm:$0xf]
    %v431 = vld [vmem:[%s5 + $0x40] sm:$0xf]
    %v432 = vld [vmem:[%s5 + $0x44] sm:$0xf]
    %v433 = vld [vmem:[%s5 + $0x48] sm:$0xf]
    %v434 = vld [vmem:[%s5 + $0x4c] sm:$0xf]
    %v435 = vld [vmem:[%s5 + $0x50] sm:$0xf]
    %v436 = vld [vmem:[%s5 + $0x54] sm:$0xf]
    %v437 = vld [vmem:[%s5 + $0x58] sm:$0xf]
    %v438 = vld [vmem:[%s5 + $0x5c] sm:$0xf]
    %v439 = vld [vmem:[%s5 + $0x60] sm:$0xf]
    %v440 = vld [vmem:[%s5 + $0x64] sm:$0xf]
    %v441 = vld [vmem:[%s5 + $0x68] sm:$0xf]
    %v442 = vld [vmem:[%s5 + $0x6c] sm:$0xf]
    %v443 = vld [vmem:[%s5 + $0x70] sm:$0xf]
    %v444 = vld [vmem:[%s5 + $0x74] sm:$0xf]
    %v445 = vld [vmem:[%s5 + $0x78] sm:$0xf]
    %v446 = vld [vmem:[%s5 + $0x7c] sm:$0xf]
    %v447 = vld [vmem:[%s6] sm:$0x1]
    %v449 = vperm.slane %v447, 0
    %v483 = vunpack.c.l.b16 %v415
    %v484 = vunpack.c.l.b16 %v416
    %v485 = vunpack.c.l.b16 %v417
    %v486 = vunpack.c.l.b16 %v418
    %v487 = vunpack.c.l.b16 %v419
    %v488 = vunpack.c.l.b16 %v420
    %v489 = vunpack.c.l.b16 %v421
    %v490 = vunpack.c.l.b16 %v422
    %v491 = vunpack.c.l.b16 %v423
    %v492 = vunpack.c.l.b16 %v424
    %v493 = vunpack.c.l.b16 %v425
    %v494 = vunpack.c.l.b16 %v426
    %v495 = vunpack.c.l.b16 %v427
    %v496 = vunpack.c.l.b16 %v428
    %v497 = vunpack.c.l.b16 %v429
    %v498 = vunpack.c.l.b16 %v430
    %v499 = vunpack.c.l.b16 %v431
    %v500 = vunpack.c.l.b16 %v432
    %v501 = vunpack.c.l.b16 %v433
    %v502 = vunpack.c.l.b16 %v434
    %v503 = vunpack.c.l.b16 %v435
    %v504 = vunpack.c.l.b16 %v436
    %v505 = vunpack.c.l.b16 %v437
    %v506 = vunpack.c.l.b16 %v438
    %v507 = vunpack.c.l.b16 %v439
    %v508 = vunpack.c.l.b16 %v440
    %v509 = vunpack.c.l.b16 %v441
    %v510 = vunpack.c.l.b16 %v442
    %v511 = vunpack.c.l.b16 %v443
    %v512 = vunpack.c.l.b16 %v444
    %v513 = vunpack.c.l.b16 %v445
    %v514 = vunpack.c.l.b16 %v446
    %v515 = vpack.c.b16 %v484, %v483
    %v516 = vpack.c.b16 %v486, %v485
    %v517 = vpack.c.b16 %v488, %v487
    %v518 = vpack.c.b16 %v490, %v489
    %v519 = vpack.c.b16 %v492, %v491
    %v520 = vpack.c.b16 %v494, %v493
    %v521 = vpack.c.b16 %v496, %v495
    %v522 = vpack.c.b16 %v498, %v497
    %v523 = vpack.c.b16 %v500, %v499
    %v524 = vpack.c.b16 %v502, %v501
    %v525 = vpack.c.b16 %v504, %v503
    %v526 = vpack.c.b16 %v506, %v505
    %v527 = vpack.c.b16 %v508, %v507
    %v528 = vpack.c.b16 %v510, %v509
    %v529 = vpack.c.b16 %v512, %v511
    %v530 = vpack.c.b16 %v514, %v513
    %547 = vmatpush.bf16.msra.mxu0 %v522
    %548 = vmatpush.bf16.msra.mxu0 %v521
    %549 = vmatpush.bf16.msra.mxu0 %v520
    %550 = vmatpush.bf16.msra.mxu0 %v519
    %551 = vmatpush.bf16.msra.mxu0 %v518
    %552 = vmatpush.bf16.msra.mxu0 %v517
    %553 = vmatpush.bf16.msra.mxu0 %v516
    %554 = vmatpush.bf16.msra.mxu0 %v515
    %555 = vmatmul.bf16.gmra.mxu0 %v413
    %v556 = vpop.f32.mrf.mxu0
    %v557 = vadd.f32 %v449, %v556
    %v558 = vpop.f32.mrf.mxu0
    %559 = vdwg.mxu0
    %560 = vmatpush.bf16.msra.mxu0 %v530
    %561 = vmatpush.bf16.msra.mxu0 %v529
    %562 = vmatpush.bf16.msra.mxu0 %v528
    %563 = vmatpush.bf16.msra.mxu0 %v527
    %564 = vmatpush.bf16.msra.mxu0 %v526
    %565 = vmatpush.bf16.msra.mxu0 %v525
    %566 = vmatpush.bf16.msra.mxu0 %v524
    %567 = vmatpush.bf16.msra.mxu0 %v523
    %568 = vmatmul.bf16.gmra.mxu0 %v414
    %v569 = vpop.f32.mrf.mxu0
    %v570 = vadd.f32 %v557, %v569
    %v571 = vpop.f32.mrf.mxu0
    %572 = vdwg.mxu0
    %vm573 = vcmask 261120
    %574 = vst.msk [vmem:[#allocation2] sm:$0xff] %vm573, %v570
    // Predicated region
    $region30: #{icosa_backbone_forward.19} parent=1 // pred_check
      _
    $region31: #{icosa_backbone_forward.19} parent=1 // pred_check_branch
      %576 = sbr.rel (0) target = $region33
    $region32: #{icosa_backbone_forward.19} parent=1 // pred_region
      %578 = vsyncadd [#allocation3], 0
      %s580 = sshll.u32 [#allocation2], 4
      %s581 = int_to_ptr.vmem [resolvable:$true] %s580
      %s582 = sshll.u32 %s7, 4
      %s583 = int_to_ptr.hbm [resolvable:$true] %s582
      %585 = dma.vmem_to_hbm [thread:$0]  %s581, 128, %s583, [#allocation3]
    $region33: #{icosa_backbone_forward.19} parent=1 // pred_fallthru
      _
    // Predicated region
    $region34: #{icosa_backbone_forward.19} parent=1 // pred_check
      _
    $region35: #{icosa_backbone_forward.19} parent=1 // pred_check_branch
      %587 = sbr.rel (0) target = $region37
    $region36: #{icosa_backbone_forward.19} parent=1 // pred_region
      %589 = dma.done [#allocation3], 128
    $region37: #{icosa_backbone_forward.19} parent=1 // pred_fallthru
      _
    %590 = vsyncpa [#allocation3], 1

</llo_original>
